<compile_context>
chip_gen: v7x
topology: tpu7x:2x2x1
jax: 0.10.0
libtpu: 0.0.40
codegen_flags: <defaults>
</compile_context>

<pallas_src>
import functools

import jax
import jax.numpy as jnp
import numpy as np
from jax.experimental import pallas as pl
from jax.experimental.pallas import tpu as pltpu

NEG_SLOPE = 0.01  # nn.LeakyReLU default
NUM_LAYERS = 5


def _dense_block_kernel(coords_ref, x_ref, w1, w2, w3, w4, w5, b_ref,
                        o_ref, feat_ref, *, H, W, F, GC, tile_rows, halo):
    """One (batch, row-tile) step of the fused DenseBlock.

    coords_ref: (2, BUF)        int32  (local row, col) of every flat position
    x_ref:      (1, 1, F, BUF)  bf16   input rows (tile + 2*halo recompute halo)
    w1..w5:     (9*GC, cin_l)   bf16   packed conv weights (tap-major rows)
    b_ref:      (5, GC, 1)      f32    biases
    o_ref:      (1, GC, tile_rows*W)   conv5 output rows for this tile
    feat_ref:   (F+4*GC, BUF)   bf16   running channel-concat scratch
    """
    w_refs = (w1, w2, w3, w4, w5)
    BUF = (tile_rows + 2 * halo) * W

    # Stage the (already bf16) input into the concat scratch rows [0, F).
    feat_ref[:F, :] = x_ref[0, 0]

    # ---- boundary masks: built ONCE per grid step ---------------------------
    t = pl.program_id(1)
    row = coords_ref[0:1, :] + (t * tile_rows - halo)     # global image row
    col = coords_ref[1:2, :]                              # image column
    not_top = row >= 1
    not_bot = row <= H - 2
    not_left = col >= 1
    not_right = col <= W - 2
    tap_mask = {
        (0, 0): jnp.logical_and(not_top, not_left),
        (0, 1): not_top,
        (0, 2): jnp.logical_and(not_top, not_right),
        (1, 0): not_left,
        (1, 2): not_right,
        (2, 0): jnp.logical_and(not_bot, not_left),
        (2, 1): not_bot,
        (2, 2): jnp.logical_and(not_bot, not_right),
    }

    for layer in range(NUM_LAYERS):
        cin = F + layer * GC
        x_in = feat_ref[:cin, :]                           # bf16, no per-layer cast
        # One wide MXU matmul: all 9 taps' partial outputs at once.
        taps = jnp.dot(w_refs[layer][...], x_in,
                       preferred_element_type=jnp.float32)  # (9*GC, BUF) f32

        acc = taps[4 * GC:5 * GC, :]                       # centre tap: no roll/mask
        for dy in range(3):
            for dx in range(3):
                if dy == 1 and dx == 1:
                    continue
                g = dy * 3 + dx
                tg = taps[g * GC:(g + 1) * GC, :]
                off = (dy - 1) * W + (dx - 1)
                # out[p] needs this tap's value at p + off -> lane roll by -off.
                tg = pltpu.roll(tg, shift=(-off) % BUF, axis=1)
                acc = acc + jnp.where(tap_mask[(dy, dx)], tg, 0.0)

        acc = acc + b_ref[layer]                           # f32 epilogue
        if layer < NUM_LAYERS - 1:
            acc = jnp.where(acc >= 0, acc, NEG_SLOPE * acc)   # LeakyReLU in f32
            feat_ref[cin:cin + GC, :] = acc.astype(feat_ref.dtype)
        else:
            o_ref[0] = acc[:, halo * W: halo * W + tile_rows * W].astype(o_ref.dtype)


def _pick_tile_rows(H, W, N, target_pixels=4096):
    """Largest row-tile dividing H with tile_rows*W % 128 == 0 (lane-dense
    output stores) under ~target_pixels; keep >=2 grid steps for v7x megacore."""
    cands = [tr for tr in range(1, H + 1)
             if H % tr == 0 and (tr == H or (tr * W) % 128 == 0)]
    small = [tr for tr in cands if tr * W <= target_pixels] or [min(cands)]
    tr = max(small)
    if N * (H // tr) < 2:
        multi = [c for c in small if H // c >= 2]
        if multi:
            tr = max(multi)
    return tr


def _pick_halo(W):
    """Receptive-field halo is NUM_LAYERS rows; round up slightly when that
    makes the final output lane-slice start on a 128-lane boundary."""
    for h in range(NUM_LAYERS, NUM_LAYERS + 12):
        if (h * W) % 128 == 0:
            return h
    return NUM_LAYERS


def _pack_params(params, gc):
    """Per-layer weights as (9*gc, cin) bf16 (rows = tap*gc + out_ch, natural
    cin -> no lane slices, no K padding) and biases stacked as (5, gc, 1) f32."""
    ws, bs = [], []
    for i in range(1, NUM_LAYERS + 1):
        w, b = params[f"conv{i}"]                  # w: (3, 3, cin, gc) HWIO
        cin = w.shape[2]
        wt = jnp.transpose(w, (0, 1, 3, 2)).reshape(9 * gc, cin)
        ws.append(wt.astype(jnp.bfloat16))
        bs.append(b.reshape(gc, 1).astype(jnp.float32))
    return ws, jnp.stack(bs)


@functools.partial(jax.jit, static_argnames=("tile_rows",))
def dense_block(x_nchw, params, tile_rows=None):
    """DenseBlock forward: NCHW in -> NCHW out (matches the PyTorch module)."""
    N, F, H, W = x_nchw.shape
    GC = params["conv1"][0].shape[-1]
    CTOT = F + (NUM_LAYERS - 1) * GC
    if tile_rows is None:
        tile_rows = _pick_tile_rows(H, W, N)
    assert H % tile_rows == 0, (H, tile_rows)
    T = H // tile_rows
    halo = 0 if T == 1 else _pick_halo(W)
    buf_rows = tile_rows + 2 * halo
    BUF = buf_rows * W
    THW = tile_rows * W

    w_list, b_packed = _pack_params(params, GC)

    # Input tiles with a recompute halo; bf16, channels-major, spatial flattened.
    x_bf = x_nchw.astype(jnp.bfloat16)
    if T == 1:
        x_tiles = x_bf.reshape(N, 1, F, H * W)
    else:
        x_pad = jnp.pad(x_bf, ((0, 0), (0, 0), (halo, halo), (0, 0)))
        x_tiles = jnp.stack(
            [x_pad[:, :, t * tile_rows: t * tile_rows + buf_rows, :]
             for t in range(T)], axis=1).reshape(N, T, F, BUF)

    # (row, col) coordinates of every flattened buffer position (host constant:
    # avoids any in-kernel vector modulo / division for the boundary masks).
    rows = np.repeat(np.arange(buf_rows, dtype=np.int32), W)
    cols = np.tile(np.arange(W, dtype=np.int32), buf_rows)
    coords = jnp.asarray(np.stack([rows, cols]))          # (2, BUF) int32

    kernel = functools.partial(_dense_block_kernel, H=H, W=W, F=F, GC=GC,
                               tile_rows=tile_rows, halo=halo)

    cins = [F + i * GC for i in range(NUM_LAYERS)]
    w_bytes = sum(9 * GC * c * 2 for c in cins)
    est_vmem = (CTOT * BUF * 2            # feat scratch (bf16)
                + 2 * F * BUF * 2         # double-buffered input tile
                + 2 * GC * THW * 4        # double-buffered output tile
                + 2 * (w_bytes + NUM_LAYERS * GC * 4 + 2 * BUF * 4)
                + 9 * GC * BUF * 4        # f32 tap buffer
                + CTOT * BUF * 2)         # bf16 matmul operand temp
    vmem_limit = int(min(max(2 * est_vmem, 32 * 2**20), 64 * 2**20))

    flops = 2 * N * sum(9 * GC * c * H * W for c in cins)
    bytes_accessed = int(x_nchw.size * 2 + N * GC * H * W * 4 + w_bytes)

    in_specs = [
        pl.BlockSpec(coords.shape, lambda n, t: (0, 0)),
        # TODO(synk): if a trace on v5e shows exposed input DMA, add
        # pipeline_mode=pl.Buffered(3) on this input spec.
        pl.BlockSpec((1, 1, F, BUF), lambda n, t: (n, t, 0, 0)),
    ] + [
        pl.BlockSpec(w.shape, lambda n, t: (0, 0)) for w in w_list
    ] + [
        pl.BlockSpec(b_packed.shape, lambda n, t: (0, 0, 0)),
    ]

    out = pl.pallas_call(
        kernel,
        out_shape=jax.ShapeDtypeStruct((N, GC, H * W), x_nchw.dtype),
        grid_spec=pltpu.PrefetchScalarGridSpec(
            num_scalar_prefetch=0,
            grid=(N, T),
            in_specs=in_specs,
            out_specs=pl.BlockSpec((1, GC, THW), lambda n, t: (n, 0, t)),
            scratch_shapes=[pltpu.VMEM((CTOT, BUF), jnp.bfloat16)],
        ),
        compiler_params=pltpu.CompilerParams(
            dimension_semantics=("parallel", "parallel"),
            vmem_limit_bytes=vmem_limit),
        cost_estimate=pl.CostEstimate(flops=flops, transcendentals=0,
                                      bytes_accessed=bytes_accessed),
    )(coords, x_tiles, *w_list, b_packed)
    return out.reshape(N, GC, H, W)


def init_dense_block_params(key, filters=64, gc=32, dtype=jnp.float32):
    """Deterministic synthetic weights; conv weights stored as (3,3,Cin,Cout)."""
    params = {}
    cins = [filters + i * gc for i in range(NUM_LAYERS)]
    for i, cin in enumerate(cins, start=1):
        key, kw, kb = jax.random.split(key, 3)
        params[f"conv{i}"] = (
            jax.random.normal(kw, (3, 3, cin, gc), dtype) * 0.05,
            jax.random.normal(kb, (gc,), dtype) * 0.1,
        )
    return params


if __name__ == "__main__":
    filters, gc = 64, 32
    N, H, W = 2, 16, 16

    key = jax.random.PRNGKey(0)
    key, kx = jax.random.split(key)
    x = jax.random.normal(kx, (N, filters, H, W), jnp.float32)
    params = init_dense_block_params(key, filters=filters, gc=gc)

    # Exercise both the row-tiled path (2 tiles, halo) and the auto single-tile path.
    out_tiled = jax.block_until_ready(dense_block(x, params, tile_rows=8))
    out_auto = jax.block_until_ready(dense_block(x, params))
    assert out_tiled.shape == (N, gc, H, W), out_tiled.shape
    assert out_auto.shape == (N, gc, H, W), out_auto.shape

    # Reference: XLA convs at matching precision (bf16 inputs, f32 accumulation).
    def ref_conv(xh, w, b, lrelu):
        y = jax.lax.conv_general_dilated(
            xh.astype(jnp.bfloat16), w.astype(jnp.bfloat16),
            window_strides=(1, 1), padding="SAME",
            dimension_numbers=("NHWC", "HWIO", "NHWC"),
            preferred_element_type=jnp.float32)
        y = y + b
        return jnp.where(y >= 0, y, NEG_SLOPE * y) if lrelu else y

    xh = jnp.transpose(x, (0, 2, 3, 1))
    r1 = ref_conv(xh, *params["conv1"], True)
    r2 = ref_conv(jnp.concatenate([xh, r1], -1), *params["conv2"], True)
    r3 = ref_conv(jnp.concatenate([xh, r1, r2], -1), *params["conv3"], True)
    r4 = ref_conv(jnp.concatenate([xh, r1, r2, r3], -1), *params["conv4"], True)
    r5 = ref_conv(jnp.concatenate([xh, r1, r2, r3, r4], -1), *params["conv5"],
                  False)
    ref = jnp.transpose(r5, (0, 3, 1, 2))

    err_t = float(jnp.max(jnp.abs(out_tiled - ref)))
    err_a = float(jnp.max(jnp.abs(out_auto - ref)))
    assert jnp.allclose(out_tiled, ref, atol=2e-2, rtol=2e-2), err_t
    assert jnp.allclose(out_auto, ref, atol=2e-2, rtol=2e-2), err_a

    print("KERNEL_OK")
</pallas_src>

<mosaic_0001>
module attributes {stable_mosaic.version = 11 : i64} {
  func.func @_dense_block_kernel(%arg0: i32, %arg1: i32, %arg2: memref<2x384xi32, #tpu.memory_space<vmem>>, %arg3: memref<1x1x64x384xbf16, #tpu.memory_space<vmem>>, %arg4: memref<288x64xbf16, #tpu.memory_space<vmem>>, %arg5: memref<288x96xbf16, #tpu.memory_space<vmem>>, %arg6: memref<288x128xbf16, #tpu.memory_space<vmem>>, %arg7: memref<288x160xbf16, #tpu.memory_space<vmem>>, %arg8: memref<288x192xbf16, #tpu.memory_space<vmem>>, %arg9: memref<5x32x1xf32, #tpu.memory_space<vmem>>, %arg10: memref<1x32x128xf32, #tpu.memory_space<vmem>>, %arg11: memref<192x384xbf16, #tpu.memory_space<vmem>>) attributes {dimension_semantics = [#tpu.dimension_semantics<parallel>, #tpu.dimension_semantics<parallel>], iteration_bounds = array<i64: 2, 2>, scalar_prefetch = 0 : i64, scratch_operands = 1 : i64, tpu.core_type = #tpu.core_type<tc>, window_params = [{pipeline_mode = #tpu.pipeline_mode<synchronous>, transform_indices = @transform_0, window_bounds = array<i64: 2, 384>}, {transform_indices = @transform_1, window_bounds = array<i64: 1, 1, 64, 384>}, {pipeline_mode = #tpu.pipeline_mode<synchronous>, transform_indices = @transform_2, window_bounds = array<i64: 288, 64>}, {pipeline_mode = #tpu.pipeline_mode<synchronous>, transform_indices = @transform_3, window_bounds = array<i64: 288, 96>}, {pipeline_mode = #tpu.pipeline_mode<synchronous>, transform_indices = @transform_4, window_bounds = array<i64: 288, 128>}, {pipeline_mode = #tpu.pipeline_mode<synchronous>, transform_indices = @transform_5, window_bounds = array<i64: 288, 160>}, {pipeline_mode = #tpu.pipeline_mode<synchronous>, transform_indices = @transform_6, window_bounds = array<i64: 288, 192>}, {pipeline_mode = #tpu.pipeline_mode<synchronous>, transform_indices = @transform_7, window_bounds = array<i64: 5, 32, 1>}, {transform_indices = @transform_8, window_bounds = array<i64: 1, 32, 128>}]} {
    %c0 = arith.constant 0 : index
    %c0_0 = arith.constant 0 : index
    %c0_1 = arith.constant 0 : index
    %c0_2 = arith.constant 0 : index
    %0 = vector.load %arg3[%c0, %c0_0, %c0_1, %c0_2] : memref<1x1x64x384xbf16, #tpu.memory_space<vmem>>, vector<1x1x64x384xbf16>
    %1 = vector.shape_cast %0 : vector<1x1x64x384xbf16> to vector<64x384xbf16>
    %c0_3 = arith.constant 0 : index
    %c0_4 = arith.constant 0 : index
    %2 = vector.load %arg11[%c0_3, %c0_4] : memref<192x384xbf16, #tpu.memory_space<vmem>>, vector<64x384xbf16>
    tpu.vector_store %arg11[%c0_3, %c0_4], %1 {strides = array<i32>} : memref<192x384xbf16, #tpu.memory_space<vmem>>, vector<64x384xbf16>,
    %c0_5 = arith.constant 0 : index
    %c0_6 = arith.constant 0 : index
    %3 = vector.load %arg2[%c0_5, %c0_6] : memref<2x384xi32, #tpu.memory_space<vmem>>, vector<1x384xi32>
    %c8_i32 = arith.constant 8 : i32
    %4 = arith.muli %arg1, %c8_i32 : i32
    %c8_i32_7 = arith.constant 8 : i32
    %5 = arith.subi %4, %c8_i32_7 : i32
    %6 = vector.broadcast %5 : i32 to vector<1x384xi32>
    %7 = arith.addi %3, %6 : vector<1x384xi32>
    %c1 = arith.constant 1 : index
    %c0_8 = arith.constant 0 : index
    %8 = vector.load %arg2[%c1, %c0_8] : memref<2x384xi32, #tpu.memory_space<vmem>>, vector<1x384xi32>
    %c1_i32 = arith.constant 1 : i32
    %9 = vector.broadcast %c1_i32 : i32 to vector<1x384xi32>
    %10 = arith.cmpi sge, %7, %9 : vector<1x384xi32>
    %c14_i32 = arith.constant 14 : i32
    %11 = vector.broadcast %c14_i32 : i32 to vector<1x384xi32>
    %12 = arith.cmpi sle, %7, %11 : vector<1x384xi32>
    %c1_i32_9 = arith.constant 1 : i32
    %13 = vector.broadcast %c1_i32_9 : i32 to vector<1x384xi32>
    %14 = arith.cmpi sge, %8, %13 : vector<1x384xi32>
    %c14_i32_10 = arith.constant 14 : i32
    %15 = vector.broadcast %c14_i32_10 : i32 to vector<1x384xi32>
    %16 = arith.cmpi sle, %8, %15 : vector<1x384xi32>
    %17 = arith.andi %10, %14 : vector<1x384xi1>
    %18 = arith.andi %10, %16 : vector<1x384xi1>
    %19 = arith.andi %12, %14 : vector<1x384xi1>
    %20 = arith.andi %12, %16 : vector<1x384xi1>
    %c0_11 = arith.constant 0 : index
    %c0_12 = arith.constant 0 : index
    %21 = vector.load %arg11[%c0_11, %c0_12] : memref<192x384xbf16, #tpu.memory_space<vmem>>, vector<64x384xbf16>
    %c0_13 = arith.constant 0 : index
    %c0_14 = arith.constant 0 : index
    %22 = vector.load %arg4[%c0_13, %c0_14] : memref<288x64xbf16, #tpu.memory_space<vmem>>, vector<288x64xbf16>
    %cst = arith.constant dense<0.000000e+00> : vector<288x384xf32>
    %23 = tpu.matmul %22, %21, %cst {dimension_numbers = #tpu.dot_dimension_numbers<[1], [0], [0], [1], [0, 0, 1, 1], [], []>} : vector<288x64xbf16>, vector<64x384xbf16>, vector<288x384xf32> -> vector<288x384xf32>
    %24 = vector.extract_strided_slice %23 {offsets = [128, 0], sizes = [32, 384], strides = [1, 1]} : vector<288x384xf32> to vector<32x384xf32>
    %25 = vector.extract_strided_slice %23 {offsets = [0, 0], sizes = [32, 384], strides = [1, 1]} : vector<288x384xf32> to vector<32x384xf32>
    %c17_i32 = arith.constant 17 : i32
    %26 = tpu.dynamic_rotate %25 by %c17_i32 dim 1 : vector<32x384xf32>, i32 -> vector<32x384xf32>
    %cst_15 = arith.constant 0.000000e+00 : f32
    %27 = vector.shape_cast %17 : vector<1x384xi1> to vector<1x384xi1>
    %28 = vector.broadcast %27 : vector<1x384xi1> to vector<32x384xi1>
    %29 = vector.broadcast %cst_15 : f32 to vector<32x384xf32>
    %30 = arith.select %28, %26, %29 : vector<32x384xi1>, vector<32x384xf32>
    %31 = arith.addf %24, %30 : vector<32x384xf32>
    %32 = vector.extract_strided_slice %23 {offsets = [32, 0], sizes = [32, 384], strides = [1, 1]} : vector<288x384xf32> to vector<32x384xf32>
    %c16_i32 = arith.constant 16 : i32
    %33 = tpu.dynamic_rotate %32 by %c16_i32 dim 1 : vector<32x384xf32>, i32 -> vector<32x384xf32>
    %cst_16 = arith.constant 0.000000e+00 : f32
    %34 = vector.shape_cast %10 : vector<1x384xi1> to vector<1x384xi1>
    %35 = vector.broadcast %34 : vector<1x384xi1> to vector<32x384xi1>
    %36 = vector.broadcast %cst_16 : f32 to vector<32x384xf32>
    %37 = arith.select %35, %33, %36 : vector<32x384xi1>, vector<32x384xf32>
    %38 = arith.addf %31, %37 : vector<32x384xf32>
    %39 = vector.extract_strided_slice %23 {offsets = [64, 0], sizes = [32, 384], strides = [1, 1]} : vector<288x384xf32> to vector<32x384xf32>
    %c15_i32 = arith.constant 15 : i32
    %40 = tpu.dynamic_rotate %39 by %c15_i32 dim 1 : vector<32x384xf32>, i32 -> vector<32x384xf32>
    %cst_17 = arith.constant 0.000000e+00 : f32
    %41 = vector.shape_cast %18 : vector<1x384xi1> to vector<1x384xi1>
    %42 = vector.broadcast %41 : vector<1x384xi1> to vector<32x384xi1>
    %43 = vector.broadcast %cst_17 : f32 to vector<32x384xf32>
    %44 = arith.select %42, %40, %43 : vector<32x384xi1>, vector<32x384xf32>
    %45 = arith.addf %38, %44 : vector<32x384xf32>
    %46 = vector.extract_strided_slice %23 {offsets = [96, 0], sizes = [32, 384], strides = [1, 1]} : vector<288x384xf32> to vector<32x384xf32>
    %c1_i32_18 = arith.constant 1 : i32
    %47 = tpu.dynamic_rotate %46 by %c1_i32_18 dim 1 : vector<32x384xf32>, i32 -> vector<32x384xf32>
    %cst_19 = arith.constant 0.000000e+00 : f32
    %48 = vector.shape_cast %14 : vector<1x384xi1> to vector<1x384xi1>
    %49 = vector.broadcast %48 : vector<1x384xi1> to vector<32x384xi1>
    %50 = vector.broadcast %cst_19 : f32 to vector<32x384xf32>
    %51 = arith.select %49, %47, %50 : vector<32x384xi1>, vector<32x384xf32>
    %52 = arith.addf %45, %51 : vector<32x384xf32>
    %53 = vector.extract_strided_slice %23 {offsets = [160, 0], sizes = [32, 384], strides = [1, 1]} : vector<288x384xf32> to vector<32x384xf32>
    %c383_i32 = arith.constant 383 : i32
    %54 = tpu.dynamic_rotate %53 by %c383_i32 dim 1 : vector<32x384xf32>, i32 -> vector<32x384xf32>
    %cst_20 = arith.constant 0.000000e+00 : f32
    %55 = vector.shape_cast %16 : vector<1x384xi1> to vector<1x384xi1>
    %56 = vector.broadcast %55 : vector<1x384xi1> to vector<32x384xi1>
    %57 = vector.broadcast %cst_20 : f32 to vector<32x384xf32>
    %58 = arith.select %56, %54, %57 : vector<32x384xi1>, vector<32x384xf32>
    %59 = arith.addf %52, %58 : vector<32x384xf32>
    %60 = vector.extract_strided_slice %23 {offsets = [192, 0], sizes = [32, 384], strides = [1, 1]} : vector<288x384xf32> to vector<32x384xf32>
    %c369_i32 = arith.constant 369 : i32
    %61 = tpu.dynamic_rotate %60 by %c369_i32 dim 1 : vector<32x384xf32>, i32 -> vector<32x384xf32>
    %cst_21 = arith.constant 0.000000e+00 : f32
    %62 = vector.shape_cast %19 : vector<1x384xi1> to vector<1x384xi1>
    %63 = vector.broadcast %62 : vector<1x384xi1> to vector<32x384xi1>
    %64 = vector.broadcast %cst_21 : f32 to vector<32x384xf32>
    %65 = arith.select %63, %61, %64 : vector<32x384xi1>, vector<32x384xf32>
    %66 = arith.addf %59, %65 : vector<32x384xf32>
    %67 = vector.extract_strided_slice %23 {offsets = [224, 0], sizes = [32, 384], strides = [1, 1]} : vector<288x384xf32> to vector<32x384xf32>
    %c368_i32 = arith.constant 368 : i32
    %68 = tpu.dynamic_rotate %67 by %c368_i32 dim 1 : vector<32x384xf32>, i32 -> vector<32x384xf32>
    %cst_22 = arith.constant 0.000000e+00 : f32
    %69 = vector.shape_cast %12 : vector<1x384xi1> to vector<1x384xi1>
    %70 = vector.broadcast %69 : vector<1x384xi1> to vector<32x384xi1>
    %71 = vector.broadcast %cst_22 : f32 to vector<32x384xf32>
    %72 = arith.select %70, %68, %71 : vector<32x384xi1>, vector<32x384xf32>
    %73 = arith.addf %66, %72 : vector<32x384xf32>
    %74 = vector.extract_strided_slice %23 {offsets = [256, 0], sizes = [32, 384], strides = [1, 1]} : vector<288x384xf32> to vector<32x384xf32>
    %c367_i32 = arith.constant 367 : i32
    %75 = tpu.dynamic_rotate %74 by %c367_i32 dim 1 : vector<32x384xf32>, i32 -> vector<32x384xf32>
    %cst_23 = arith.constant 0.000000e+00 : f32
    %76 = vector.shape_cast %20 : vector<1x384xi1> to vector<1x384xi1>
    %77 = vector.broadcast %76 : vector<1x384xi1> to vector<32x384xi1>
    %78 = vector.broadcast %cst_23 : f32 to vector<32x384xf32>
    %79 = arith.select %77, %75, %78 : vector<32x384xi1>, vector<32x384xf32>
    %80 = arith.addf %73, %79 : vector<32x384xf32>
    %c0_24 = arith.constant 0 : index
    %c0_25 = arith.constant 0 : index
    %c0_26 = arith.constant 0 : index
    %81 = vector.load %arg9[%c0_24, %c0_25, %c0_26] : memref<5x32x1xf32, #tpu.memory_space<vmem>>, vector<1x32x1xf32>
    %82 = vector.shape_cast %81 : vector<1x32x1xf32> to vector<32x1xf32>
    %83 = vector.broadcast %82 : vector<32x1xf32> to vector<32x384xf32>
    %84 = arith.addf %80, %83 : vector<32x384xf32>
    %cst_27 = arith.constant 0.000000e+00 : f32
    %85 = vector.broadcast %cst_27 : f32 to vector<32x384xf32>
    %86 = arith.cmpf oge, %84, %85 : vector<32x384xf32>
    %cst_28 = arith.constant 0.00999999977 : f32
    %87 = vector.broadcast %cst_28 : f32 to vector<32x384xf32>
    %88 = arith.mulf %87, %84 : vector<32x384xf32>
    %89 = arith.select %86, %84, %88 : vector<32x384xi1>, vector<32x384xf32>
    %90 = arith.truncf %89 : vector<32x384xf32> to vector<32x384xbf16>
    %c64 = arith.constant 64 : index
    %c0_29 = arith.constant 0 : index
    %91 = vector.load %arg11[%c64, %c0_29] : memref<192x384xbf16, #tpu.memory_space<vmem>>, vector<32x384xbf16>
    tpu.vector_store %arg11[%c64, %c0_29], %90 {strides = array<i32>} : memref<192x384xbf16, #tpu.memory_space<vmem>>, vector<32x384xbf16>,
    %c0_30 = arith.constant 0 : index
    %c0_31 = arith.constant 0 : index
    %92 = vector.load %arg11[%c0_30, %c0_31] : memref<192x384xbf16, #tpu.memory_space<vmem>>, vector<96x384xbf16>
    %c0_32 = arith.constant 0 : index
    %c0_33 = arith.constant 0 : index
    %93 = vector.load %arg5[%c0_32, %c0_33] : memref<288x96xbf16, #tpu.memory_space<vmem>>, vector<288x96xbf16>
    %cst_34 = arith.constant dense<0.000000e+00> : vector<288x384xf32>
    %94 = tpu.matmul %93, %92, %cst_34 {dimension_numbers = #tpu.dot_dimension_numbers<[1], [0], [0], [1], [0, 0, 1, 1], [], []>} : vector<288x96xbf16>, vector<96x384xbf16>, vector<288x384xf32> -> vector<288x384xf32>
    %95 = vector.extract_strided_slice %94 {offsets = [128, 0], sizes = [32, 384], strides = [1, 1]} : vector<288x384xf32> to vector<32x384xf32>
    %96 = vector.extract_strided_slice %94 {offsets = [0, 0], sizes = [32, 384], strides = [1, 1]} : vector<288x384xf32> to vector<32x384xf32>
    %c17_i32_35 = arith.constant 17 : i32
    %97 = tpu.dynamic_rotate %96 by %c17_i32_35 dim 1 : vector<32x384xf32>, i32 -> vector<32x384xf32>
    %cst_36 = arith.constant 0.000000e+00 : f32
    %98 = vector.shape_cast %17 : vector<1x384xi1> to vector<1x384xi1>
    %99 = vector.broadcast %98 : vector<1x384xi1> to vector<32x384xi1>
    %100 = vector.broadcast %cst_36 : f32 to vector<32x384xf32>
    %101 = arith.select %99, %97, %100 : vector<32x384xi1>, vector<32x384xf32>
    %102 = arith.addf %95, %101 : vector<32x384xf32>
    %103 = vector.extract_strided_slice %94 {offsets = [32, 0], sizes = [32, 384], strides = [1, 1]} : vector<288x384xf32> to vector<32x384xf32>
    %c16_i32_37 = arith.constant 16 : i32
    %104 = tpu.dynamic_rotate %103 by %c16_i32_37 dim 1 : vector<32x384xf32>, i32 -> vector<32x384xf32>
    %cst_38 = arith.constant 0.000000e+00 : f32
    %105 = vector.shape_cast %10 : vector<1x384xi1> to vector<1x384xi1>
    %106 = vector.broadcast %105 : vector<1x384xi1> to vector<32x384xi1>
    %107 = vector.broadcast %cst_38 : f32 to vector<32x384xf32>
    %108 = arith.select %106, %104, %107 : vector<32x384xi1>, vector<32x384xf32>
    %109 = arith.addf %102, %108 : vector<32x384xf32>
    %110 = vector.extract_strided_slice %94 {offsets = [64, 0], sizes = [32, 384], strides = [1, 1]} : vector<288x384xf32> to vector<32x384xf32>
    %c15_i32_39 = arith.constant 15 : i32
    %111 = tpu.dynamic_rotate %110 by %c15_i32_39 dim 1 : vector<32x384xf32>, i32 -> vector<32x384xf32>
    %cst_40 = arith.constant 0.000000e+00 : f32
    %112 = vector.shape_cast %18 : vector<1x384xi1> to vector<1x384xi1>
    %113 = vector.broadcast %112 : vector<1x384xi1> to vector<32x384xi1>
    %114 = vector.broadcast %cst_40 : f32 to vector<32x384xf32>
    %115 = arith.select %113, %111, %114 : vector<32x384xi1>, vector<32x384xf32>
    %116 = arith.addf %109, %115 : vector<32x384xf32>
    %117 = vector.extract_strided_slice %94 {offsets = [96, 0], sizes = [32, 384], strides = [1, 1]} : vector<288x384xf32> to vector<32x384xf32>
    %c1_i32_41 = arith.constant 1 : i32
    %118 = tpu.dynamic_rotate %117 by %c1_i32_41 dim 1 : vector<32x384xf32>, i32 -> vector<32x384xf32>
    %cst_42 = arith.constant 0.000000e+00 : f32
    %119 = vector.shape_cast %14 : vector<1x384xi1> to vector<1x384xi1>
    %120 = vector.broadcast %119 : vector<1x384xi1> to vector<32x384xi1>
    %121 = vector.broadcast %cst_42 : f32 to vector<32x384xf32>
    %122 = arith.select %120, %118, %121 : vector<32x384xi1>, vector<32x384xf32>
    %123 = arith.addf %116, %122 : vector<32x384xf32>
    %124 = vector.extract_strided_slice %94 {offsets = [160, 0], sizes = [32, 384], strides = [1, 1]} : vector<288x384xf32> to vector<32x384xf32>
    %c383_i32_43 = arith.constant 383 : i32
    %125 = tpu.dynamic_rotate %124 by %c383_i32_43 dim 1 : vector<32x384xf32>, i32 -> vector<32x384xf32>
    %cst_44 = arith.constant 0.000000e+00 : f32
    %126 = vector.shape_cast %16 : vector<1x384xi1> to vector<1x384xi1>
    %127 = vector.broadcast %126 : vector<1x384xi1> to vector<32x384xi1>
    %128 = vector.broadcast %cst_44 : f32 to vector<32x384xf32>
    %129 = arith.select %127, %125, %128 : vector<32x384xi1>, vector<32x384xf32>
    %130 = arith.addf %123, %129 : vector<32x384xf32>
    %131 = vector.extract_strided_slice %94 {offsets = [192, 0], sizes = [32, 384], strides = [1, 1]} : vector<288x384xf32> to vector<32x384xf32>
    %c369_i32_45 = arith.constant 369 : i32
    %132 = tpu.dynamic_rotate %131 by %c369_i32_45 dim 1 : vector<32x384xf32>, i32 -> vector<32x384xf32>
    %cst_46 = arith.constant 0.000000e+00 : f32
    %133 = vector.shape_cast %19 : vector<1x384xi1> to vector<1x384xi1>
    %134 = vector.broadcast %133 : vector<1x384xi1> to vector<32x384xi1>
    %135 = vector.broadcast %cst_46 : f32 to vector<32x384xf32>
    %136 = arith.select %134, %132, %135 : vector<32x384xi1>, vector<32x384xf32>
    %137 = arith.addf %130, %136 : vector<32x384xf32>
    %138 = vector.extract_strided_slice %94 {offsets = [224, 0], sizes = [32, 384], strides = [1, 1]} : vector<288x384xf32> to vector<32x384xf32>
    %c368_i32_47 = arith.constant 368 : i32
    %139 = tpu.dynamic_rotate %138 by %c368_i32_47 dim 1 : vector<32x384xf32>, i32 -> vector<32x384xf32>
    %cst_48 = arith.constant 0.000000e+00 : f32
    %140 = vector.shape_cast %12 : vector<1x384xi1> to vector<1x384xi1>
    %141 = vector.broadcast %140 : vector<1x384xi1> to vector<32x384xi1>
    %142 = vector.broadcast %cst_48 : f32 to vector<32x384xf32>
    %143 = arith.select %141, %139, %142 : vector<32x384xi1>, vector<32x384xf32>
    %144 = arith.addf %137, %143 : vector<32x384xf32>
    %145 = vector.extract_strided_slice %94 {offsets = [256, 0], sizes = [32, 384], strides = [1, 1]} : vector<288x384xf32> to vector<32x384xf32>
    %c367_i32_49 = arith.constant 367 : i32
    %146 = tpu.dynamic_rotate %145 by %c367_i32_49 dim 1 : vector<32x384xf32>, i32 -> vector<32x384xf32>
    %cst_50 = arith.constant 0.000000e+00 : f32
    %147 = vector.shape_cast %20 : vector<1x384xi1> to vector<1x384xi1>
    %148 = vector.broadcast %147 : vector<1x384xi1> to vector<32x384xi1>
    %149 = vector.broadcast %cst_50 : f32 to vector<32x384xf32>
    %150 = arith.select %148, %146, %149 : vector<32x384xi1>, vector<32x384xf32>
    %151 = arith.addf %144, %150 : vector<32x384xf32>
    %c1_51 = arith.constant 1 : index
    %c0_52 = arith.constant 0 : index
    %c0_53 = arith.constant 0 : index
    %152 = vector.load %arg9[%c1_51, %c0_52, %c0_53] : memref<5x32x1xf32, #tpu.memory_space<vmem>>, vector<1x32x1xf32>
    %153 = vector.shape_cast %152 : vector<1x32x1xf32> to vector<32x1xf32>
    %154 = vector.broadcast %153 : vector<32x1xf32> to vector<32x384xf32>
    %155 = arith.addf %151, %154 : vector<32x384xf32>
    %cst_54 = arith.constant 0.000000e+00 : f32
    %156 = vector.broadcast %cst_54 : f32 to vector<32x384xf32>
    %157 = arith.cmpf oge, %155, %156 : vector<32x384xf32>
    %cst_55 = arith.constant 0.00999999977 : f32
    %158 = vector.broadcast %cst_55 : f32 to vector<32x384xf32>
    %159 = arith.mulf %158, %155 : vector<32x384xf32>
    %160 = arith.select %157, %155, %159 : vector<32x384xi1>, vector<32x384xf32>
    %161 = arith.truncf %160 : vector<32x384xf32> to vector<32x384xbf16>
    %c96 = arith.constant 96 : index
    %c0_56 = arith.constant 0 : index
    %162 = vector.load %arg11[%c96, %c0_56] : memref<192x384xbf16, #tpu.memory_space<vmem>>, vector<32x384xbf16>
    tpu.vector_store %arg11[%c96, %c0_56], %161 {strides = array<i32>} : memref<192x384xbf16, #tpu.memory_space<vmem>>, vector<32x384xbf16>,
    %c0_57 = arith.constant 0 : index
    %c0_58 = arith.constant 0 : index
    %163 = vector.load %arg11[%c0_57, %c0_58] : memref<192x384xbf16, #tpu.memory_space<vmem>>, vector<128x384xbf16>
    %c0_59 = arith.constant 0 : index
    %c0_60 = arith.constant 0 : index
    %164 = vector.load %arg6[%c0_59, %c0_60] : memref<288x128xbf16, #tpu.memory_space<vmem>>, vector<288x128xbf16>
    %cst_61 = arith.constant dense<0.000000e+00> : vector<288x384xf32>
    %165 = tpu.matmul %164, %163, %cst_61 {dimension_numbers = #tpu.dot_dimension_numbers<[1], [0], [0], [1], [0, 0, 1, 1], [], []>} : vector<288x128xbf16>, vector<128x384xbf16>, vector<288x384xf32> -> vector<288x384xf32>
    %166 = vector.extract_strided_slice %165 {offsets = [128, 0], sizes = [32, 384], strides = [1, 1]} : vector<288x384xf32> to vector<32x384xf32>
    %167 = vector.extract_strided_slice %165 {offsets = [0, 0], sizes = [32, 384], strides = [1, 1]} : vector<288x384xf32> to vector<32x384xf32>
    %c17_i32_62 = arith.constant 17 : i32
    %168 = tpu.dynamic_rotate %167 by %c17_i32_62 dim 1 : vector<32x384xf32>, i32 -> vector<32x384xf32>
    %cst_63 = arith.constant 0.000000e+00 : f32
    %169 = vector.shape_cast %17 : vector<1x384xi1> to vector<1x384xi1>
    %170 = vector.broadcast %169 : vector<1x384xi1> to vector<32x384xi1>
    %171 = vector.broadcast %cst_63 : f32 to vector<32x384xf32>
    %172 = arith.select %170, %168, %171 : vector<32x384xi1>, vector<32x384xf32>
    %173 = arith.addf %166, %172 : vector<32x384xf32>
    %174 = vector.extract_strided_slice %165 {offsets = [32, 0], sizes = [32, 384], strides = [1, 1]} : vector<288x384xf32> to vector<32x384xf32>
    %c16_i32_64 = arith.constant 16 : i32
    %175 = tpu.dynamic_rotate %174 by %c16_i32_64 dim 1 : vector<32x384xf32>, i32 -> vector<32x384xf32>
    %cst_65 = arith.constant 0.000000e+00 : f32
    %176 = vector.shape_cast %10 : vector<1x384xi1> to vector<1x384xi1>
    %177 = vector.broadcast %176 : vector<1x384xi1> to vector<32x384xi1>
    %178 = vector.broadcast %cst_65 : f32 to vector<32x384xf32>
    %179 = arith.select %177, %175, %178 : vector<32x384xi1>, vector<32x384xf32>
    %180 = arith.addf %173, %179 : vector<32x384xf32>
    %181 = vector.extract_strided_slice %165 {offsets = [64, 0], sizes = [32, 384], strides = [1, 1]} : vector<288x384xf32> to vector<32x384xf32>
    %c15_i32_66 = arith.constant 15 : i32
    %182 = tpu.dynamic_rotate %181 by %c15_i32_66 dim 1 : vector<32x384xf32>, i32 -> vector<32x384xf32>
    %cst_67 = arith.constant 0.000000e+00 : f32
    %183 = vector.shape_cast %18 : vector<1x384xi1> to vector<1x384xi1>
    %184 = vector.broadcast %183 : vector<1x384xi1> to vector<32x384xi1>
    %185 = vector.broadcast %cst_67 : f32 to vector<32x384xf32>
    %186 = arith.select %184, %182, %185 : vector<32x384xi1>, vector<32x384xf32>
    %187 = arith.addf %180, %186 : vector<32x384xf32>
    %188 = vector.extract_strided_slice %165 {offsets = [96, 0], sizes = [32, 384], strides = [1, 1]} : vector<288x384xf32> to vector<32x384xf32>
    %c1_i32_68 = arith.constant 1 : i32
    %189 = tpu.dynamic_rotate %188 by %c1_i32_68 dim 1 : vector<32x384xf32>, i32 -> vector<32x384xf32>
    %cst_69 = arith.constant 0.000000e+00 : f32
    %190 = vector.shape_cast %14 : vector<1x384xi1> to vector<1x384xi1>
    %191 = vector.broadcast %190 : vector<1x384xi1> to vector<32x384xi1>
    %192 = vector.broadcast %cst_69 : f32 to vector<32x384xf32>
    %193 = arith.select %191, %189, %192 : vector<32x384xi1>, vector<32x384xf32>
    %194 = arith.addf %187, %193 : vector<32x384xf32>
    %195 = vector.extract_strided_slice %165 {offsets = [160, 0], sizes = [32, 384], strides = [1, 1]} : vector<288x384xf32> to vector<32x384xf32>
    %c383_i32_70 = arith.constant 383 : i32
    %196 = tpu.dynamic_rotate %195 by %c383_i32_70 dim 1 : vector<32x384xf32>, i32 -> vector<32x384xf32>
    %cst_71 = arith.constant 0.000000e+00 : f32
    %197 = vector.shape_cast %16 : vector<1x384xi1> to vector<1x384xi1>
    %198 = vector.broadcast %197 : vector<1x384xi1> to vector<32x384xi1>
    %199 = vector.broadcast %cst_71 : f32 to vector<32x384xf32>
    %200 = arith.select %198, %196, %199 : vector<32x384xi1>, vector<32x384xf32>
    %201 = arith.addf %194, %200 : vector<32x384xf32>
    %202 = vector.extract_strided_slice %165 {offsets = [192, 0], sizes = [32, 384], strides = [1, 1]} : vector<288x384xf32> to vector<32x384xf32>
    %c369_i32_72 = arith.constant 369 : i32
    %203 = tpu.dynamic_rotate %202 by %c369_i32_72 dim 1 : vector<32x384xf32>, i32 -> vector<32x384xf32>
    %cst_73 = arith.constant 0.000000e+00 : f32
    %204 = vector.shape_cast %19 : vector<1x384xi1> to vector<1x384xi1>
    %205 = vector.broadcast %204 : vector<1x384xi1> to vector<32x384xi1>
    %206 = vector.broadcast %cst_73 : f32 to vector<32x384xf32>
    %207 = arith.select %205, %203, %206 : vector<32x384xi1>, vector<32x384xf32>
    %208 = arith.addf %201, %207 : vector<32x384xf32>
    %209 = vector.extract_strided_slice %165 {offsets = [224, 0], sizes = [32, 384], strides = [1, 1]} : vector<288x384xf32> to vector<32x384xf32>
    %c368_i32_74 = arith.constant 368 : i32
    %210 = tpu.dynamic_rotate %209 by %c368_i32_74 dim 1 : vector<32x384xf32>, i32 -> vector<32x384xf32>
    %cst_75 = arith.constant 0.000000e+00 : f32
    %211 = vector.shape_cast %12 : vector<1x384xi1> to vector<1x384xi1>
    %212 = vector.broadcast %211 : vector<1x384xi1> to vector<32x384xi1>
    %213 = vector.broadcast %cst_75 : f32 to vector<32x384xf32>
    %214 = arith.select %212, %210, %213 : vector<32x384xi1>, vector<32x384xf32>
    %215 = arith.addf %208, %214 : vector<32x384xf32>
    %216 = vector.extract_strided_slice %165 {offsets = [256, 0], sizes = [32, 384], strides = [1, 1]} : vector<288x384xf32> to vector<32x384xf32>
    %c367_i32_76 = arith.constant 367 : i32
    %217 = tpu.dynamic_rotate %216 by %c367_i32_76 dim 1 : vector<32x384xf32>, i32 -> vector<32x384xf32>
    %cst_77 = arith.constant 0.000000e+00 : f32
    %218 = vector.shape_cast %20 : vector<1x384xi1> to vector<1x384xi1>
    %219 = vector.broadcast %218 : vector<1x384xi1> to vector<32x384xi1>
    %220 = vector.broadcast %cst_77 : f32 to vector<32x384xf32>
    %221 = arith.select %219, %217, %220 : vector<32x384xi1>, vector<32x384xf32>
    %222 = arith.addf %215, %221 : vector<32x384xf32>
    %c2 = arith.constant 2 : index
    %c0_78 = arith.constant 0 : index
    %c0_79 = arith.constant 0 : index
    %223 = vector.load %arg9[%c2, %c0_78, %c0_79] : memref<5x32x1xf32, #tpu.memory_space<vmem>>, vector<1x32x1xf32>
    %224 = vector.shape_cast %223 : vector<1x32x1xf32> to vector<32x1xf32>
    %225 = vector.broadcast %224 : vector<32x1xf32> to vector<32x384xf32>
    %226 = arith.addf %222, %225 : vector<32x384xf32>
    %cst_80 = arith.constant 0.000000e+00 : f32
    %227 = vector.broadcast %cst_80 : f32 to vector<32x384xf32>
    %228 = arith.cmpf oge, %226, %227 : vector<32x384xf32>
    %cst_81 = arith.constant 0.00999999977 : f32
    %229 = vector.broadcast %cst_81 : f32 to vector<32x384xf32>
    %230 = arith.mulf %229, %226 : vector<32x384xf32>
    %231 = arith.select %228, %226, %230 : vector<32x384xi1>, vector<32x384xf32>
    %232 = arith.truncf %231 : vector<32x384xf32> to vector<32x384xbf16>
    %c128 = arith.constant 128 : index
    %c0_82 = arith.constant 0 : index
    %233 = vector.load %arg11[%c128, %c0_82] : memref<192x384xbf16, #tpu.memory_space<vmem>>, vector<32x384xbf16>
    tpu.vector_store %arg11[%c128, %c0_82], %232 {strides = array<i32>} : memref<192x384xbf16, #tpu.memory_space<vmem>>, vector<32x384xbf16>,
    %c0_83 = arith.constant 0 : index
    %c0_84 = arith.constant 0 : index
    %234 = vector.load %arg11[%c0_83, %c0_84] : memref<192x384xbf16, #tpu.memory_space<vmem>>, vector<160x384xbf16>
    %c0_85 = arith.constant 0 : index
    %c0_86 = arith.constant 0 : index
    %235 = vector.load %arg7[%c0_85, %c0_86] : memref<288x160xbf16, #tpu.memory_space<vmem>>, vector<288x160xbf16>
    %cst_87 = arith.constant dense<0.000000e+00> : vector<288x384xf32>
    %236 = tpu.matmul %235, %234, %cst_87 {dimension_numbers = #tpu.dot_dimension_numbers<[1], [0], [0], [1], [0, 0, 1, 1], [], []>} : vector<288x160xbf16>, vector<160x384xbf16>, vector<288x384xf32> -> vector<288x384xf32>
    %237 = vector.extract_strided_slice %236 {offsets = [128, 0], sizes = [32, 384], strides = [1, 1]} : vector<288x384xf32> to vector<32x384xf32>
    %238 = vector.extract_strided_slice %236 {offsets = [0, 0], sizes = [32, 384], strides = [1, 1]} : vector<288x384xf32> to vector<32x384xf32>
    %c17_i32_88 = arith.constant 17 : i32
    %239 = tpu.dynamic_rotate %238 by %c17_i32_88 dim 1 : vector<32x384xf32>, i32 -> vector<32x384xf32>
    %cst_89 = arith.constant 0.000000e+00 : f32
    %240 = vector.shape_cast %17 : vector<1x384xi1> to vector<1x384xi1>
    %241 = vector.broadcast %240 : vector<1x384xi1> to vector<32x384xi1>
    %242 = vector.broadcast %cst_89 : f32 to vector<32x384xf32>
    %243 = arith.select %241, %239, %242 : vector<32x384xi1>, vector<32x384xf32>
    %244 = arith.addf %237, %243 : vector<32x384xf32>
    %245 = vector.extract_strided_slice %236 {offsets = [32, 0], sizes = [32, 384], strides = [1, 1]} : vector<288x384xf32> to vector<32x384xf32>
    %c16_i32_90 = arith.constant 16 : i32
    %246 = tpu.dynamic_rotate %245 by %c16_i32_90 dim 1 : vector<32x384xf32>, i32 -> vector<32x384xf32>
    %cst_91 = arith.constant 0.000000e+00 : f32
    %247 = vector.shape_cast %10 : vector<1x384xi1> to vector<1x384xi1>
    %248 = vector.broadcast %247 : vector<1x384xi1> to vector<32x384xi1>
    %249 = vector.broadcast %cst_91 : f32 to vector<32x384xf32>
    %250 = arith.select %248, %246, %249 : vector<32x384xi1>, vector<32x384xf32>
    %251 = arith.addf %244, %250 : vector<32x384xf32>
    %252 = vector.extract_strided_slice %236 {offsets = [64, 0], sizes = [32, 384], strides = [1, 1]} : vector<288x384xf32> to vector<32x384xf32>
    %c15_i32_92 = arith.constant 15 : i32
    %253 = tpu.dynamic_rotate %252 by %c15_i32_92 dim 1 : vector<32x384xf32>, i32 -> vector<32x384xf32>
    %cst_93 = arith.constant 0.000000e+00 : f32
    %254 = vector.shape_cast %18 : vector<1x384xi1> to vector<1x384xi1>
    %255 = vector.broadcast %254 : vector<1x384xi1> to vector<32x384xi1>
    %256 = vector.broadcast %cst_93 : f32 to vector<32x384xf32>
    %257 = arith.select %255, %253, %256 : vector<32x384xi1>, vector<32x384xf32>
    %258 = arith.addf %251, %257 : vector<32x384xf32>
    %259 = vector.extract_strided_slice %236 {offsets = [96, 0], sizes = [32, 384], strides = [1, 1]} : vector<288x384xf32> to vector<32x384xf32>
    %c1_i32_94 = arith.constant 1 : i32
    %260 = tpu.dynamic_rotate %259 by %c1_i32_94 dim 1 : vector<32x384xf32>, i32 -> vector<32x384xf32>
    %cst_95 = arith.constant 0.000000e+00 : f32
    %261 = vector.shape_cast %14 : vector<1x384xi1> to vector<1x384xi1>
    %262 = vector.broadcast %261 : vector<1x384xi1> to vector<32x384xi1>
    %263 = vector.broadcast %cst_95 : f32 to vector<32x384xf32>
    %264 = arith.select %262, %260, %263 : vector<32x384xi1>, vector<32x384xf32>
    %265 = arith.addf %258, %264 : vector<32x384xf32>
    %266 = vector.extract_strided_slice %236 {offsets = [160, 0], sizes = [32, 384], strides = [1, 1]} : vector<288x384xf32> to vector<32x384xf32>
    %c383_i32_96 = arith.constant 383 : i32
    %267 = tpu.dynamic_rotate %266 by %c383_i32_96 dim 1 : vector<32x384xf32>, i32 -> vector<32x384xf32>
    %cst_97 = arith.constant 0.000000e+00 : f32
    %268 = vector.shape_cast %16 : vector<1x384xi1> to vector<1x384xi1>
    %269 = vector.broadcast %268 : vector<1x384xi1> to vector<32x384xi1>
    %270 = vector.broadcast %cst_97 : f32 to vector<32x384xf32>
    %271 = arith.select %269, %267, %270 : vector<32x384xi1>, vector<32x384xf32>
    %272 = arith.addf %265, %271 : vector<32x384xf32>
    %273 = vector.extract_strided_slice %236 {offsets = [192, 0], sizes = [32, 384], strides = [1, 1]} : vector<288x384xf32> to vector<32x384xf32>
    %c369_i32_98 = arith.constant 369 : i32
    %274 = tpu.dynamic_rotate %273 by %c369_i32_98 dim 1 : vector<32x384xf32>, i32 -> vector<32x384xf32>
    %cst_99 = arith.constant 0.000000e+00 : f32
    %275 = vector.shape_cast %19 : vector<1x384xi1> to vector<1x384xi1>
    %276 = vector.broadcast %275 : vector<1x384xi1> to vector<32x384xi1>
    %277 = vector.broadcast %cst_99 : f32 to vector<32x384xf32>
    %278 = arith.select %276, %274, %277 : vector<32x384xi1>, vector<32x384xf32>
    %279 = arith.addf %272, %278 : vector<32x384xf32>
    %280 = vector.extract_strided_slice %236 {offsets = [224, 0], sizes = [32, 384], strides = [1, 1]} : vector<288x384xf32> to vector<32x384xf32>
    %c368_i32_100 = arith.constant 368 : i32
    %281 = tpu.dynamic_rotate %280 by %c368_i32_100 dim 1 : vector<32x384xf32>, i32 -> vector<32x384xf32>
    %cst_101 = arith.constant 0.000000e+00 : f32
    %282 = vector.shape_cast %12 : vector<1x384xi1> to vector<1x384xi1>
    %283 = vector.broadcast %282 : vector<1x384xi1> to vector<32x384xi1>
    %284 = vector.broadcast %cst_101 : f32 to vector<32x384xf32>
    %285 = arith.select %283, %281, %284 : vector<32x384xi1>, vector<32x384xf32>
    %286 = arith.addf %279, %285 : vector<32x384xf32>
    %287 = vector.extract_strided_slice %236 {offsets = [256, 0], sizes = [32, 384], strides = [1, 1]} : vector<288x384xf32> to vector<32x384xf32>
    %c367_i32_102 = arith.constant 367 : i32
    %288 = tpu.dynamic_rotate %287 by %c367_i32_102 dim 1 : vector<32x384xf32>, i32 -> vector<32x384xf32>
    %cst_103 = arith.constant 0.000000e+00 : f32
    %289 = vector.shape_cast %20 : vector<1x384xi1> to vector<1x384xi1>
    %290 = vector.broadcast %289 : vector<1x384xi1> to vector<32x384xi1>
    %291 = vector.broadcast %cst_103 : f32 to vector<32x384xf32>
    %292 = arith.select %290, %288, %291 : vector<32x384xi1>, vector<32x384xf32>
    %293 = arith.addf %286, %292 : vector<32x384xf32>
    %c3 = arith.constant 3 : index
    %c0_104 = arith.constant 0 : index
    %c0_105 = arith.constant 0 : index
    %294 = vector.load %arg9[%c3, %c0_104, %c0_105] : memref<5x32x1xf32, #tpu.memory_space<vmem>>, vector<1x32x1xf32>
    %295 = vector.shape_cast %294 : vector<1x32x1xf32> to vector<32x1xf32>
    %296 = vector.broadcast %295 : vector<32x1xf32> to vector<32x384xf32>
    %297 = arith.addf %293, %296 : vector<32x384xf32>
    %cst_106 = arith.constant 0.000000e+00 : f32
    %298 = vector.broadcast %cst_106 : f32 to vector<32x384xf32>
    %299 = arith.cmpf oge, %297, %298 : vector<32x384xf32>
    %cst_107 = arith.constant 0.00999999977 : f32
    %300 = vector.broadcast %cst_107 : f32 to vector<32x384xf32>
    %301 = arith.mulf %300, %297 : vector<32x384xf32>
    %302 = arith.select %299, %297, %301 : vector<32x384xi1>, vector<32x384xf32>
    %303 = arith.truncf %302 : vector<32x384xf32> to vector<32x384xbf16>
    %c160 = arith.constant 160 : index
    %c0_108 = arith.constant 0 : index
    %304 = vector.load %arg11[%c160, %c0_108] : memref<192x384xbf16, #tpu.memory_space<vmem>>, vector<32x384xbf16>
    tpu.vector_store %arg11[%c160, %c0_108], %303 {strides = array<i32>} : memref<192x384xbf16, #tpu.memory_space<vmem>>, vector<32x384xbf16>,
    %c0_109 = arith.constant 0 : index
    %c0_110 = arith.constant 0 : index
    %305 = vector.load %arg11[%c0_109, %c0_110] : memref<192x384xbf16, #tpu.memory_space<vmem>>, vector<192x384xbf16>
    %c0_111 = arith.constant 0 : index
    %c0_112 = arith.constant 0 : index
    %306 = vector.load %arg8[%c0_111, %c0_112] : memref<288x192xbf16, #tpu.memory_space<vmem>>, vector<288x192xbf16>
    %cst_113 = arith.constant dense<0.000000e+00> : vector<288x384xf32>
    %307 = tpu.matmul %306, %305, %cst_113 {dimension_numbers = #tpu.dot_dimension_numbers<[1], [0], [0], [1], [0, 0, 1, 1], [], []>} : vector<288x192xbf16>, vector<192x384xbf16>, vector<288x384xf32> -> vector<288x384xf32>
    %308 = vector.extract_strided_slice %307 {offsets = [128, 0], sizes = [32, 384], strides = [1, 1]} : vector<288x384xf32> to vector<32x384xf32>
    %309 = vector.extract_strided_slice %307 {offsets = [0, 0], sizes = [32, 384], strides = [1, 1]} : vector<288x384xf32> to vector<32x384xf32>
    %c17_i32_114 = arith.constant 17 : i32
    %310 = tpu.dynamic_rotate %309 by %c17_i32_114 dim 1 : vector<32x384xf32>, i32 -> vector<32x384xf32>
    %cst_115 = arith.constant 0.000000e+00 : f32
    %311 = vector.shape_cast %17 : vector<1x384xi1> to vector<1x384xi1>
    %312 = vector.broadcast %311 : vector<1x384xi1> to vector<32x384xi1>
    %313 = vector.broadcast %cst_115 : f32 to vector<32x384xf32>
    %314 = arith.select %312, %310, %313 : vector<32x384xi1>, vector<32x384xf32>
    %315 = arith.addf %308, %314 : vector<32x384xf32>
    %316 = vector.extract_strided_slice %307 {offsets = [32, 0], sizes = [32, 384], strides = [1, 1]} : vector<288x384xf32> to vector<32x384xf32>
    %c16_i32_116 = arith.constant 16 : i32
    %317 = tpu.dynamic_rotate %316 by %c16_i32_116 dim 1 : vector<32x384xf32>, i32 -> vector<32x384xf32>
    %cst_117 = arith.constant 0.000000e+00 : f32
    %318 = vector.shape_cast %10 : vector<1x384xi1> to vector<1x384xi1>
    %319 = vector.broadcast %318 : vector<1x384xi1> to vector<32x384xi1>
    %320 = vector.broadcast %cst_117 : f32 to vector<32x384xf32>
    %321 = arith.select %319, %317, %320 : vector<32x384xi1>, vector<32x384xf32>
    %322 = arith.addf %315, %321 : vector<32x384xf32>
    %323 = vector.extract_strided_slice %307 {offsets = [64, 0], sizes = [32, 384], strides = [1, 1]} : vector<288x384xf32> to vector<32x384xf32>
    %c15_i32_118 = arith.constant 15 : i32
    %324 = tpu.dynamic_rotate %323 by %c15_i32_118 dim 1 : vector<32x384xf32>, i32 -> vector<32x384xf32>
    %cst_119 = arith.constant 0.000000e+00 : f32
    %325 = vector.shape_cast %18 : vector<1x384xi1> to vector<1x384xi1>
    %326 = vector.broadcast %325 : vector<1x384xi1> to vector<32x384xi1>
    %327 = vector.broadcast %cst_119 : f32 to vector<32x384xf32>
    %328 = arith.select %326, %324, %327 : vector<32x384xi1>, vector<32x384xf32>
    %329 = arith.addf %322, %328 : vector<32x384xf32>
    %330 = vector.extract_strided_slice %307 {offsets = [96, 0], sizes = [32, 384], strides = [1, 1]} : vector<288x384xf32> to vector<32x384xf32>
    %c1_i32_120 = arith.constant 1 : i32
    %331 = tpu.dynamic_rotate %330 by %c1_i32_120 dim 1 : vector<32x384xf32>, i32 -> vector<32x384xf32>
    %cst_121 = arith.constant 0.000000e+00 : f32
    %332 = vector.shape_cast %14 : vector<1x384xi1> to vector<1x384xi1>
    %333 = vector.broadcast %332 : vector<1x384xi1> to vector<32x384xi1>
    %334 = vector.broadcast %cst_121 : f32 to vector<32x384xf32>
    %335 = arith.select %333, %331, %334 : vector<32x384xi1>, vector<32x384xf32>
    %336 = arith.addf %329, %335 : vector<32x384xf32>
    %337 = vector.extract_strided_slice %307 {offsets = [160, 0], sizes = [32, 384], strides = [1, 1]} : vector<288x384xf32> to vector<32x384xf32>
    %c383_i32_122 = arith.constant 383 : i32
    %338 = tpu.dynamic_rotate %337 by %c383_i32_122 dim 1 : vector<32x384xf32>, i32 -> vector<32x384xf32>
    %cst_123 = arith.constant 0.000000e+00 : f32
    %339 = vector.shape_cast %16 : vector<1x384xi1> to vector<1x384xi1>
    %340 = vector.broadcast %339 : vector<1x384xi1> to vector<32x384xi1>
    %341 = vector.broadcast %cst_123 : f32 to vector<32x384xf32>
    %342 = arith.select %340, %338, %341 : vector<32x384xi1>, vector<32x384xf32>
    %343 = arith.addf %336, %342 : vector<32x384xf32>
    %344 = vector.extract_strided_slice %307 {offsets = [192, 0], sizes = [32, 384], strides = [1, 1]} : vector<288x384xf32> to vector<32x384xf32>
    %c369_i32_124 = arith.constant 369 : i32
    %345 = tpu.dynamic_rotate %344 by %c369_i32_124 dim 1 : vector<32x384xf32>, i32 -> vector<32x384xf32>
    %cst_125 = arith.constant 0.000000e+00 : f32
    %346 = vector.shape_cast %19 : vector<1x384xi1> to vector<1x384xi1>
    %347 = vector.broadcast %346 : vector<1x384xi1> to vector<32x384xi1>
    %348 = vector.broadcast %cst_125 : f32 to vector<32x384xf32>
    %349 = arith.select %347, %345, %348 : vector<32x384xi1>, vector<32x384xf32>
    %350 = arith.addf %343, %349 : vector<32x384xf32>
    %351 = vector.extract_strided_slice %307 {offsets = [224, 0], sizes = [32, 384], strides = [1, 1]} : vector<288x384xf32> to vector<32x384xf32>
    %c368_i32_126 = arith.constant 368 : i32
    %352 = tpu.dynamic_rotate %351 by %c368_i32_126 dim 1 : vector<32x384xf32>, i32 -> vector<32x384xf32>
    %cst_127 = arith.constant 0.000000e+00 : f32
    %353 = vector.shape_cast %12 : vector<1x384xi1> to vector<1x384xi1>
    %354 = vector.broadcast %353 : vector<1x384xi1> to vector<32x384xi1>
    %355 = vector.broadcast %cst_127 : f32 to vector<32x384xf32>
    %356 = arith.select %354, %352, %355 : vector<32x384xi1>, vector<32x384xf32>
    %357 = arith.addf %350, %356 : vector<32x384xf32>
    %358 = vector.extract_strided_slice %307 {offsets = [256, 0], sizes = [32, 384], strides = [1, 1]} : vector<288x384xf32> to vector<32x384xf32>
    %c367_i32_128 = arith.constant 367 : i32
    %359 = tpu.dynamic_rotate %358 by %c367_i32_128 dim 1 : vector<32x384xf32>, i32 -> vector<32x384xf32>
    %cst_129 = arith.constant 0.000000e+00 : f32
    %360 = vector.shape_cast %20 : vector<1x384xi1> to vector<1x384xi1>
    %361 = vector.broadcast %360 : vector<1x384xi1> to vector<32x384xi1>
    %362 = vector.broadcast %cst_129 : f32 to vector<32x384xf32>
    %363 = arith.select %361, %359, %362 : vector<32x384xi1>, vector<32x384xf32>
    %364 = arith.addf %357, %363 : vector<32x384xf32>
    %c4 = arith.constant 4 : index
    %c0_130 = arith.constant 0 : index
    %c0_131 = arith.constant 0 : index
    %365 = vector.load %arg9[%c4, %c0_130, %c0_131] : memref<5x32x1xf32, #tpu.memory_space<vmem>>, vector<1x32x1xf32>
    %366 = vector.shape_cast %365 : vector<1x32x1xf32> to vector<32x1xf32>
    %367 = vector.broadcast %366 : vector<32x1xf32> to vector<32x384xf32>
    %368 = arith.addf %364, %367 : vector<32x384xf32>
    %369 = vector.extract_strided_slice %368 {offsets = [0, 128], sizes = [32, 128], strides = [1, 1]} : vector<32x384xf32> to vector<32x128xf32>
    %c0_132 = arith.constant 0 : index
    %c0_133 = arith.constant 0 : index
    %c0_134 = arith.constant 0 : index
    %370 = vector.load %arg10[%c0_132, %c0_133, %c0_134] : memref<1x32x128xf32, #tpu.memory_space<vmem>>, vector<1x32x128xf32>
    %371 = vector.shape_cast %370 : vector<1x32x128xf32> to vector<32x128xf32>
    %372 = vector.shape_cast %369 : vector<32x128xf32> to vector<1x32x128xf32>
    tpu.vector_store %arg10[%c0_132, %c0_133, %c0_134], %372 {strides = array<i32>} : memref<1x32x128xf32, #tpu.memory_space<vmem>>, vector<1x32x128xf32>,
    return
  }
  func.func @transform_0(%arg0: i32, %arg1: i32) -> (i32, i32) {
    %c0_i32 = arith.constant 0 : i32
    %c0_i32_0 = arith.constant 0 : i32
    %c0_i32_1 = arith.constant 0 : i32
    return %c0_i32, %c0_i32_0 : i32, i32
  }
  func.func @transform_1(%arg0: i32, %arg1: i32) -> (i32, i32, i32, i32) {
    %c0_i32 = arith.constant 0 : i32
    %c0_i32_0 = arith.constant 0 : i32
    %c0_i32_1 = arith.constant 0 : i32
    return %arg0, %arg1, %c0_i32, %c0_i32_0 : i32, i32, i32, i32
  }
  func.func @transform_2(%arg0: i32, %arg1: i32) -> (i32, i32) {
    %c0_i32 = arith.constant 0 : i32
    %c0_i32_0 = arith.constant 0 : i32
    %c0_i32_1 = arith.constant 0 : i32
    return %c0_i32, %c0_i32_0 : i32, i32
  }
  func.func @transform_3(%arg0: i32, %arg1: i32) -> (i32, i32) {
    %c0_i32 = arith.constant 0 : i32
    %c0_i32_0 = arith.constant 0 : i32
    %c0_i32_1 = arith.constant 0 : i32
    return %c0_i32, %c0_i32_0 : i32, i32
  }
  func.func @transform_4(%arg0: i32, %arg1: i32) -> (i32, i32) {
    %c0_i32 = arith.constant 0 : i32
    %c0_i32_0 = arith.constant 0 : i32
    %c0_i32_1 = arith.constant 0 : i32
    return %c0_i32, %c0_i32_0 : i32, i32
  }
  func.func @transform_5(%arg0: i32, %arg1: i32) -> (i32, i32) {
    %c0_i32 = arith.constant 0 : i32
    %c0_i32_0 = arith.constant 0 : i32
    %c0_i32_1 = arith.constant 0 : i32
    return %c0_i32, %c0_i32_0 : i32, i32
  }
  func.func @transform_6(%arg0: i32, %arg1: i32) -> (i32, i32) {
    %c0_i32 = arith.constant 0 : i32
    %c0_i32_0 = arith.constant 0 : i32
    %c0_i32_1 = arith.constant 0 : i32
    return %c0_i32, %c0_i32_0 : i32, i32
  }
  func.func @transform_7(%arg0: i32, %arg1: i32) -> (i32, i32, i32) {
    %c0_i32 = arith.constant 0 : i32
    %c0_i32_0 = arith.constant 0 : i32
    %c0_i32_1 = arith.constant 0 : i32
    %c0_i32_2 = arith.constant 0 : i32
    return %c0_i32, %c0_i32_0, %c0_i32_1 : i32, i32, i32
  }
  func.func @transform_8(%arg0: i32, %arg1: i32) -> (i32, i32, i32) {
    %c0_i32 = arith.constant 0 : i32
    %c0_i32_0 = arith.constant 0 : i32
    return %arg0, %c0_i32, %arg1 : i32, i32, i32
  }
}

</mosaic_0001>

<llo_original>
// kernel: dense_block.1
$region0: #{dense_block.1}
  #allocation0 [shape = 'u32[]', space=smem, size = 0x4, offset = 0x4, fixed_abs, tag = 'smem constant byte address 0x4 - core index']
  #allocation1 [shape = 'u32[144,128]{1,0:T(1,128)}', space=vmem, size = 0x12000, scoped, tag = 'internal scratch']
  #allocation2 [shape = 'bf16[192,384]{1,0:T(16,128)(2,1)}', space=vmem, size = 0x24000, scoped, tag = 'scratch operand']
  %s0 = inlined_call_operand.vmem [shape: s32[2,384], index: 0, kind: input, shape index: {}]
  %s1 = inlined_call_operand.vmem [shape: bf16[2,2,64,384], index: 1, kind: input, shape index: {}]
  %s2 = inlined_call_operand.vmem [shape: bf16[288,64], index: 2, kind: input, shape index: {}]
  %s3 = inlined_call_operand.vmem [shape: bf16[288,96], index: 3, kind: input, shape index: {}]
  %s4 = inlined_call_operand.vmem [shape: bf16[288,128], index: 4, kind: input, shape index: {}]
  %s5 = inlined_call_operand.vmem [shape: bf16[288,160], index: 5, kind: input, shape index: {}]
  %s6 = inlined_call_operand.vmem [shape: bf16[288,192], index: 6, kind: input, shape index: {}]
  %s7 = inlined_call_operand.vmem [shape: f32[5,32,1], index: 7, kind: input, shape index: {}]
  %s8 = inlined_call_operand.vmem [shape: f32[2,32,256], index: 8, kind: output, shape index: {}]
  %s9 = sld [smem:[#allocation0]]
  $region99: #{dense_block.1} parent=0
    _
  %s11 = ssub.s32 1, %s9
  %s12 = scalar_select 0, %s11, %s9
  $region1: #{dense_block.1} parent=0
    #allocation3 [shape = 'u8[32768]{0}', space=vmem, size = 0x8000, scoped, tag = 'output window, operand 0']
    loop: start=0, step=1, limit=6
    $region2: #{dense_block.1} parent=1 // loop_pre_header
      _
    $region3: #{dense_block.1} parent=1 // loop_header
      %s14 = sphi 0, %s18
      %p15 = scmp.ge.s32.totalorder %s14, 6
      %s21 = sphi 0, %s33
      %s22 = sphi 0, %s29
      %s23 = sphi 0, %s21
      %s24 = sphi 0, %s22
      %s25 = sphi 0, %s23
      %s26 = sphi 0, %s24
      %s34 = sphi 0, %s34
      %s36 = sphi 0, %s34
      %s37 = sphi 0, %s36
      %s51 = sphi 0, %s37
      %s59 = sphi 0, %s61
      %s62 = sphi 0, %s59
      %s63 = sphi 0, %s62
      %s79 = sphi 0, %s63
      %s83 = sphi 0, %s83
      %s85 = sphi 0, %s83
      %s86 = sphi 0, %s85
      %s100 = sphi 0, %s86
      %s104 = sphi 0, %s104
      %s106 = sphi 0, %s104
      %s107 = sphi 0, %s106
      %s121 = sphi 0, %s107
      %s125 = sphi 0, %s125
      %s127 = sphi 0, %s125
      %s128 = sphi 0, %s127
      %s142 = sphi 0, %s128
      %s146 = sphi 0, %s146
      %s148 = sphi 0, %s146
      %s149 = sphi 0, %s148
      %s163 = sphi 0, %s149
      %s167 = sphi 0, %s167
      %s169 = sphi 0, %s167
      %s170 = sphi 0, %s169
      %s184 = sphi 0, %s170
      %s188 = sphi 0, %s188
      %s190 = sphi 0, %s188
      %s191 = sphi 0, %s190
      %s205 = sphi 0, %s191
      %s213 = sphi 0, %s215
      %s216 = sphi 0, %s213
      %s217 = sphi 0, %s216
      %s233 = sphi 0, %s217
    $region4: #{dense_block.1} parent=1 // loop_header_branch
      %17 = sbr.rel (%p15) target = $region8
    $region5: #{dense_block.1} parent=1 // loop_body
      %s19 = ssub.s32 %s14, 1
      %s20 = ssub.s32 %s14, 2
      %s27 = sadd.s32 1, %s22
      %p28 = scmp.ge.s32.totalorder %s27, 2
      %s29 = scalar_select %p28, 0, %s27
      %s30 = sadd.s32 1, %s21
      %s31 = scalar_select %p28, %s30, %s21
      %p32 = scmp.ge.s32.totalorder %s31, 2
      %s33 = scalar_select %p32, 0, %s31
      %s35 = sadd.s32 %s34, 1
      %p38 = scmp.eq.s32.totalorder %s14, 3
      %p39 = scmp.ne.s32.totalorder %s34, %s36
      %p40 = scmp.eq.s32.totalorder %s14, 0
      %p41 = por %p39, %p40
      %p42 = scmp.ne.s32.totalorder %s34, %s36
      %p43 = scmp.eq.s32.totalorder %s19, 3
      %p44 = por %p42, %p43
      %p45 = scmp.ne.s32.totalorder %s36, %s37
      %p46 = scmp.eq.s32.totalorder %s19, 0
      %p47 = por %p45, %p46
      %p48 = scmp.ne.s32.totalorder %s36, %s37
      %p49 = scmp.eq.s32.totalorder %s20, 3
      %p50 = por %p48, %p49
      %p52 = scmp.ne.s32.totalorder %s37, %s51
      %p53 = scmp.eq.s32.totalorder %s20, 0
      %p54 = por %p52, %p53
      %s55 = ssub.s32 %s21, %s33
      %s56 = ssub.s32 %s22, %s29
      %s57 = sor.u32 %s55, %s56
      %p58 = scmp.eq.s32.totalorder %s57, 0
      %s60 = sadd.s32 %s59, 1
      %s61 = scalar_select %p58, %s59, %s60
      %p64 = pneg %p58
      %p65 = scmp.eq.s32.totalorder %s14, 3
      %p66 = por %p64, %p65
      %p67 = scmp.ne.s32.totalorder %s59, %s62
      %p68 = scmp.eq.s32.totalorder %s14, 0
      %p69 = por %p67, %p68
      %p70 = scmp.ne.s32.totalorder %s59, %s62
      %p71 = scmp.eq.s32.totalorder %s19, 3
      %p72 = por %p70, %p71
      %p73 = scmp.ne.s32.totalorder %s62, %s63
      %p74 = scmp.eq.s32.totalorder %s19, 0
      %p75 = por %p73, %p74
      %p76 = scmp.ne.s32.totalorder %s62, %s63
      %p77 = scmp.eq.s32.totalorder %s20, 3
      %p78 = por %p76, %p77
      %p80 = scmp.ne.s32.totalorder %s63, %s79
      %p81 = scmp.eq.s32.totalorder %s20, 0
      %p82 = por %p80, %p81
      %s84 = sadd.s32 %s83, 1
      %p87 = scmp.eq.s32.totalorder %s14, 3
      %p88 = scmp.ne.s32.totalorder %s83, %s85
      %p89 = scmp.eq.s32.totalorder %s14, 0
      %p90 = por %p88, %p89
      %p91 = scmp.ne.s32.totalorder %s83, %s85
      %p92 = scmp.eq.s32.totalorder %s19, 3
      %p93 = por %p91, %p92
      %p94 = scmp.ne.s32.totalorder %s85, %s86
      %p95 = scmp.eq.s32.totalorder %s19, 0
      %p96 = por %p94, %p95
      %p97 = scmp.ne.s32.totalorder %s85, %s86
      %p98 = scmp.eq.s32.totalorder %s20, 3
      %p99 = por %p97, %p98
      %p101 = scmp.ne.s32.totalorder %s86, %s100
      %p102 = scmp.eq.s32.totalorder %s20, 0
      %p103 = por %p101, %p102
      %s105 = sadd.s32 %s104, 1
      %p108 = scmp.eq.s32.totalorder %s14, 3
      %p109 = scmp.ne.s32.totalorder %s104, %s106
      %p110 = scmp.eq.s32.totalorder %s14, 0
      %p111 = por %p109, %p110
      %p112 = scmp.ne.s32.totalorder %s104, %s106
      %p113 = scmp.eq.s32.totalorder %s19, 3
      %p114 = por %p112, %p113
      %p115 = scmp.ne.s32.totalorder %s106, %s107
      %p116 = scmp.eq.s32.totalorder %s19, 0
      %p117 = por %p115, %p116
      %p118 = scmp.ne.s32.totalorder %s106, %s107
      %p119 = scmp.eq.s32.totalorder %s20, 3
      %p120 = por %p118, %p119
      %p122 = scmp.ne.s32.totalorder %s107, %s121
      %p123 = scmp.eq.s32.totalorder %s20, 0
      %p124 = por %p122, %p123
      %s126 = sadd.s32 %s125, 1
      %p129 = scmp.eq.s32.totalorder %s14, 3
      %p130 = scmp.ne.s32.totalorder %s125, %s127
      %p131 = scmp.eq.s32.totalorder %s14, 0
      %p132 = por %p130, %p131
      %p133 = scmp.ne.s32.totalorder %s125, %s127
      %p134 = scmp.eq.s32.totalorder %s19, 3
      %p135 = por %p133, %p134
      %p136 = scmp.ne.s32.totalorder %s127, %s128
      %p137 = scmp.eq.s32.totalorder %s19, 0
      %p138 = por %p136, %p137
      %p139 = scmp.ne.s32.totalorder %s127, %s128
      %p140 = scmp.eq.s32.totalorder %s20, 3
      %p141 = por %p139, %p140
      %p143 = scmp.ne.s32.totalorder %s128, %s142
      %p144 = scmp.eq.s32.totalorder %s20, 0
      %p145 = por %p143, %p144
      %s147 = sadd.s32 %s146, 1
      %p150 = scmp.eq.s32.totalorder %s14, 3
      %p151 = scmp.ne.s32.totalorder %s146, %s148
      %p152 = scmp.eq.s32.totalorder %s14, 0
      %p153 = por %p151, %p152
      %p154 = scmp.ne.s32.totalorder %s146, %s148
      %p155 = scmp.eq.s32.totalorder %s19, 3
      %p156 = por %p154, %p155
      %p157 = scmp.ne.s32.totalorder %s148, %s149
      %p158 = scmp.eq.s32.totalorder %s19, 0
      %p159 = por %p157, %p158
      %p160 = scmp.ne.s32.totalorder %s148, %s149
      %p161 = scmp.eq.s32.totalorder %s20, 3
      %p162 = por %p160, %p161
      %p164 = scmp.ne.s32.totalorder %s149, %s163
      %p165 = scmp.eq.s32.totalorder %s20, 0
      %p166 = por %p164, %p165
      %s168 = sadd.s32 %s167, 1
      %p171 = scmp.eq.s32.totalorder %s14, 3
      %p172 = scmp.ne.s32.totalorder %s167, %s169
      %p173 = scmp.eq.s32.totalorder %s14, 0
      %p174 = por %p172, %p173
      %p175 = scmp.ne.s32.totalorder %s167, %s169
      %p176 = scmp.eq.s32.totalorder %s19, 3
      %p177 = por %p175, %p176
      %p178 = scmp.ne.s32.totalorder %s169, %s170
      %p179 = scmp.eq.s32.totalorder %s19, 0
      %p180 = por %p178, %p179
      %p181 = scmp.ne.s32.totalorder %s169, %s170
      %p182 = scmp.eq.s32.totalorder %s20, 3
      %p183 = por %p181, %p182
      %p185 = scmp.ne.s32.totalorder %s170, %s184
      %p186 = scmp.eq.s32.totalorder %s20, 0
      %p187 = por %p185, %p186
      %s189 = sadd.s32 %s188, 1
      %p192 = scmp.eq.s32.totalorder %s14, 3
      %p193 = scmp.ne.s32.totalorder %s188, %s190
      %p194 = scmp.eq.s32.totalorder %s14, 0
      %p195 = por %p193, %p194
      %p196 = scmp.ne.s32.totalorder %s188, %s190
      %p197 = scmp.eq.s32.totalorder %s19, 3
      %p198 = por %p196, %p197
      %p199 = scmp.ne.s32.totalorder %s190, %s191
      %p200 = scmp.eq.s32.totalorder %s19, 0
      %p201 = por %p199, %p200
      %p202 = scmp.ne.s32.totalorder %s190, %s191
      %p203 = scmp.eq.s32.totalorder %s20, 3
      %p204 = por %p202, %p203
      %p206 = scmp.ne.s32.totalorder %s191, %s205
      %p207 = scmp.eq.s32.totalorder %s20, 0
      %p208 = por %p206, %p207
      %s209 = ssub.s32 %s21, %s33
      %s210 = ssub.s32 %s22, %s29
      %s211 = sor.u32 %s209, %s210
      %p212 = scmp.eq.s32.totalorder %s211, 0
      %s214 = sadd.s32 %s213, 1
      %s215 = scalar_select %p212, %s213, %s214
      %p218 = pneg %p212
      %p219 = scmp.eq.s32.totalorder %s14, 3
      %p220 = por %p218, %p219
      %p221 = scmp.ne.s32.totalorder %s213, %s216
      %p222 = scmp.eq.s32.totalorder %s14, 0
      %p223 = por %p221, %p222
      %p224 = scmp.ne.s32.totalorder %s213, %s216
      %p225 = scmp.eq.s32.totalorder %s19, 3
      %p226 = por %p224, %p225
      %p227 = scmp.ne.s32.totalorder %s216, %s217
      %p228 = scmp.eq.s32.totalorder %s19, 0
      %p229 = por %p227, %p228
      %p230 = scmp.ne.s32.totalorder %s216, %s217
      %p231 = scmp.eq.s32.totalorder %s20, 3
      %p232 = por %p230, %p231
      %p234 = scmp.ne.s32.totalorder %s217, %s233
      %p235 = scmp.eq.s32.totalorder %s20, 0
      %p236 = por %p234, %p235
      %p237 = scmp.le.s32.totalorder 1, %s14
      %p238 = scmp.lt.s32.totalorder %s14, 5
      %p239 = pnand %p237, %p238
      %p240 = pneg %p239
      // Predicated region
      $region9: #{dense_block.1} parent=5 // pred_check
        _
      $region10: #{dense_block.1} parent=5 // pred_check_branch
        %242 = sbr.rel (%p239) target = $region12
      $region11: #{dense_block.1} parent=5 // pred_region
        %s243 = ssub.s32 %s14, 1
        // Predicated region
        $region13: #{dense_block.1} parent=11 // pred_check
          %p244 = pneg %p47
        $region14: #{dense_block.1} parent=11 // pred_check_branch
          %246 = sbr.rel (%p244) target = $region16
        $region15: #{dense_block.1} parent=11 // pred_region
          _
        $region16: #{dense_block.1} parent=11 // pred_fallthru
          _
        // Predicated region
        $region17: #{dense_block.1} parent=11 // pred_check
          %p247 = pneg %p96
        $region18: #{dense_block.1} parent=11 // pred_check_branch
          %249 = sbr.rel (%p247) target = $region20
        $region19: #{dense_block.1} parent=11 // pred_region
          _
        $region20: #{dense_block.1} parent=11 // pred_fallthru
          _
        // Predicated region
        $region21: #{dense_block.1} parent=11 // pred_check
          %p250 = pneg %p117
        $region22: #{dense_block.1} parent=11 // pred_check_branch
          %252 = sbr.rel (%p250) target = $region24
        $region23: #{dense_block.1} parent=11 // pred_region
          _
        $region24: #{dense_block.1} parent=11 // pred_fallthru
          _
        // Predicated region
        $region25: #{dense_block.1} parent=11 // pred_check
          %p253 = pneg %p138
        $region26: #{dense_block.1} parent=11 // pred_check_branch
          %255 = sbr.rel (%p253) target = $region28
        $region27: #{dense_block.1} parent=11 // pred_region
          _
        $region28: #{dense_block.1} parent=11 // pred_fallthru
          _
        // Predicated region
        $region29: #{dense_block.1} parent=11 // pred_check
          %p256 = pneg %p159
        $region30: #{dense_block.1} parent=11 // pred_check_branch
          %258 = sbr.rel (%p256) target = $region32
        $region31: #{dense_block.1} parent=11 // pred_region
          _
        $region32: #{dense_block.1} parent=11 // pred_fallthru
          _
        // Predicated region
        $region33: #{dense_block.1} parent=11 // pred_check
          %p259 = pneg %p180
        $region34: #{dense_block.1} parent=11 // pred_check_branch
          %261 = sbr.rel (%p259) target = $region36
        $region35: #{dense_block.1} parent=11 // pred_region
          _
        $region36: #{dense_block.1} parent=11 // pred_fallthru
          _
        // Predicated region
        $region37: #{dense_block.1} parent=11 // pred_check
          %p262 = pneg %p201
        $region38: #{dense_block.1} parent=11 // pred_check_branch
          %264 = sbr.rel (%p262) target = $region40
        $region39: #{dense_block.1} parent=11 // pred_region
          _
        $region40: #{dense_block.1} parent=11 // pred_fallthru
          _
      $region12: #{dense_block.1} parent=5 // pred_fallthru
        _
      %p265 = scmp.lt.s32.totalorder %s14, 4
      // Predicated region
      $region41: #{dense_block.1} parent=5 // pred_check
        %p266 = pneg %p265
      $region42: #{dense_block.1} parent=5 // pred_check_branch
        %268 = sbr.rel (%p266) target = $region44
      $region43: #{dense_block.1} parent=5 // pred_region
        // Predicated region
        $region45: #{dense_block.1} parent=43 // pred_check
          %p269 = pneg %p69
        $region46: #{dense_block.1} parent=43 // pred_check_branch
          %271 = sbr.rel (%p269) target = $region48
        $region47: #{dense_block.1} parent=43 // pred_region
          %p272 = scmp.lt.s32.totalorder %s21, 1
          %s273 = scalar_select %p272, %s21, 1
          %p274 = scmp.lt.s32.totalorder %s22, 1
          %s275 = scalar_select %p274, %s22, 1
          %s276 = smul.addr %s275, 24
          %s277 = smul.addr %s273, 48
          %s278 = sadd.s32 %s276, %s277
          %s279 = smul.addr %s278, 4
          %s280 = scalar_lea.vmem %s1, %s279
        $region48: #{dense_block.1} parent=43 // pred_fallthru
          _
      $region44: #{dense_block.1} parent=5 // pred_fallthru
        _
      %p281 = scmp.le.s32.totalorder 1, %s14
      %p282 = scmp.lt.s32.totalorder %s14, 5
      %p283 = pnand %p281, %p282
      %p284 = pneg %p283
      // Predicated region
      $region49: #{dense_block.1} parent=5 // pred_check
        _
      $region50: #{dense_block.1} parent=5 // pred_check_branch
        %286 = sbr.rel (%p283) target = $region52
      $region51: #{dense_block.1} parent=5 // pred_region
        %s287 = ssub.s32 %s14, 1
        %p288 = pneg %p47
        %p289 = pneg %p44
        %p290 = scmp.lt.s32.totalorder %s23, 1
        %s291 = scalar_select %p290, %s23, 1
        %p292 = scmp.lt.s32.totalorder %s24, 1
        %s293 = scalar_select %p292, %s24, 1
        %s294 = smul.addr %s293, 24
        %s295 = smul.addr %s291, 48
        %s296 = sadd.s32 %s294, %s295
        %s297 = smul.addr %s296, 4
        %s298 = scalar_lea.vmem %s1, %s297
        %p299 = pneg %p75
        %p300 = pneg %p72
        %p301 = pneg %p96
        %p302 = pneg %p93
        %p303 = pneg %p117
        %p304 = pneg %p114
        %p305 = pneg %p138
        %p306 = pneg %p135
        %p307 = pneg %p159
        %p308 = pneg %p156
        %p309 = pneg %p180
        %p310 = pneg %p177
        %p311 = pneg %p201
        %p312 = pneg %p198
        %p313 = pneg %p229
        %p314 = pneg %p226
        %s315 = sand.u32 %s216, 1
        %s316 = sand.u32 %s216, 1
        %s317 = smul.addr %s316, 32
        %s318 = scalar_lea.vmem [#allocation3], %s317
        %p319 = scmp.lt.s32.totalorder %s23, 1
        %s320 = scalar_select %p319, %s23, 1
        %p321 = scmp.lt.s32.totalorder %s24, 1
        %s322 = scalar_select %p321, %s24, 1
        %s323 = smul.addr %s322, 24
        %s324 = smul.addr %s320, 48
        %s325 = sadd.s32 %s323, %s324
        %s326 = smul.addr %s325, 4
        %s327 = scalar_lea.vmem %s1, %s326
        %v329 = vld [vmem:[%s327] sm:$0xff]
        %v330 = vld [vmem:[%s327 + $0x8] sm:$0xf]
        %v331 = vld [vmem:[%s327 + $0xc] sm:$0xff]
        %v332 = vld [vmem:[%s327 + $0x14] sm:$0xf]
        %v333 = vld [vmem:[%s327 + $0x18] sm:$0xff]
        %v334 = vld [vmem:[%s327 + $0x20] sm:$0xf]
        %v335 = vld [vmem:[%s327 + $0x24] sm:$0xff]
        %v336 = vld [vmem:[%s327 + $0x2c] sm:$0xf]
        %v337 = vld [vmem:[%s327 + $0x30] sm:$0xff]
        %v338 = vld [vmem:[%s327 + $0x38] sm:$0xf]
        %v339 = vld [vmem:[%s327 + $0x3c] sm:$0xff]
        %v340 = vld [vmem:[%s327 + $0x44] sm:$0xf]
        %v341 = vld [vmem:[%s327 + $0x48] sm:$0xff]
        %v342 = vld [vmem:[%s327 + $0x50] sm:$0xf]
        %v343 = vld [vmem:[%s327 + $0x54] sm:$0xff]
        %v344 = vld [vmem:[%s327 + $0x5c] sm:$0xf]
        %v361 = vunpack.c.l.b16 %v329
        %v362 = vunpack.c.h.b16 %v329
        %v363 = vunpack.c.l.b16 %v330
        %v364 = vunpack.c.l.b16 %v331
        %v365 = vunpack.c.h.b16 %v331
        %v366 = vunpack.c.l.b16 %v332
        %v367 = vunpack.c.l.b16 %v333
        %v368 = vunpack.c.h.b16 %v333
        %v369 = vunpack.c.l.b16 %v334
        %v370 = vunpack.c.l.b16 %v335
        %v371 = vunpack.c.h.b16 %v335
        %v372 = vunpack.c.l.b16 %v336
        %v373 = vunpack.c.l.b16 %v337
        %v374 = vunpack.c.h.b16 %v337
        %v375 = vunpack.c.l.b16 %v338
        %v376 = vunpack.c.l.b16 %v339
        %v377 = vunpack.c.h.b16 %v339
        %v378 = vunpack.c.l.b16 %v340
        %v379 = vunpack.c.l.b16 %v341
        %v380 = vunpack.c.h.b16 %v341
        %v381 = vunpack.c.l.b16 %v342
        %v382 = vunpack.c.l.b16 %v343
        %v383 = vunpack.c.h.b16 %v343
        %v384 = vunpack.c.l.b16 %v344
        %v385 = vpack.c.b16 %v364, %v361
        %v386 = vpack.c.b16 %v365, %v362
        %v387 = vpack.c.b16 %v366, %v363
        %v388 = vpack.c.b16 %v370, %v367
        %v389 = vpack.c.b16 %v371, %v368
        %v390 = vpack.c.b16 %v372, %v369
        %v391 = vpack.c.b16 %v376, %v373
        %v392 = vpack.c.b16 %v377, %v374
        %v393 = vpack.c.b16 %v378, %v375
        %v394 = vpack.c.b16 %v382, %v379
        %v395 = vpack.c.b16 %v383, %v380
        %v396 = vpack.c.b16 %v384, %v381
        %409 = vst [vmem:[#allocation2] sm:$0xff] %v385
        %410 = vst [vmem:[#allocation2 + $0x8] sm:$0xff] %v386
        %411 = vst [vmem:[#allocation2 + $0x10] sm:$0xff] %v387
        %412 = vst [vmem:[#allocation2 + $0x18] sm:$0xff] %v388
        %413 = vst [vmem:[#allocation2 + $0x20] sm:$0xff] %v389
        %414 = vst [vmem:[#allocation2 + $0x28] sm:$0xff] %v390
        %415 = vst [vmem:[#allocation2 + $0x30] sm:$0xff] %v391
        %416 = vst [vmem:[#allocation2 + $0x38] sm:$0xff] %v392
        %417 = vst [vmem:[#allocation2 + $0x40] sm:$0xff] %v393
        %418 = vst [vmem:[#allocation2 + $0x48] sm:$0xff] %v394
        %419 = vst [vmem:[#allocation2 + $0x50] sm:$0xff] %v395
        %420 = vst [vmem:[#allocation2 + $0x58] sm:$0xff] %v396
        %v421 = vld [vmem:[%s0] ss:$2 sm:$0x7]
        %s422 = smul.u32 %s24, 8
        %s423 = ssub.s32 %s422, 8
        %v424 = vstv %s423
        %v425 = vadd.s32 %v421, %v424
        %s426 = scalar_lea.vmem %s0, 1
        %v427 = vld [vmem:[%s426] ss:$2 sm:$0x7]
        %vm428 = vcmp.ge.s32.totalorder %v425, 1
        %vm429 = vcmp.le.s32.totalorder %v425, 14
        %vm430 = vcmp.ge.s32.totalorder %v427, 1
        %vm431 = vcmp.le.s32.totalorder %v427, 14
        %vm432 = vmand %vm428, %vm430
        %vm433 = vmand %vm428, %vm431
        %vm434 = vmand %vm429, %vm430
        %vm435 = vmand %vm429, %vm431
        %v436 = vld [vmem:[#allocation2] sm:$0xff]
        %v437 = vld [vmem:[#allocation2 + $0x8] sm:$0xff]
        %v438 = vld [vmem:[#allocation2 + $0x10] sm:$0xff]
        %v439 = vld [vmem:[#allocation2 + $0x18] sm:$0xff]
        %v440 = vld [vmem:[#allocation2 + $0x20] sm:$0xff]
        %v441 = vld [vmem:[#allocation2 + $0x28] sm:$0xff]
        %v442 = vld [vmem:[#allocation2 + $0x30] sm:$0xff]
        %v443 = vld [vmem:[#allocation2 + $0x38] sm:$0xff]
        %v444 = vld [vmem:[#allocation2 + $0x40] sm:$0xff]
        %v445 = vld [vmem:[#allocation2 + $0x48] sm:$0xff]
        %v446 = vld [vmem:[#allocation2 + $0x50] sm:$0xff]
        %v447 = vld [vmem:[#allocation2 + $0x58] sm:$0xff]
        %v448 = vld [vmem:[%s2] sm:$0xf]
        %v449 = vld [vmem:[%s2 + $0x4] sm:$0xf]
        %v450 = vld [vmem:[%s2 + $0x8] sm:$0xf]
        %v451 = vld [vmem:[%s2 + $0xc] sm:$0xf]
        %v452 = vld [vmem:[%s2 + $0x10] sm:$0xf]
        %v453 = vld [vmem:[%s2 + $0x14] sm:$0xf]
        %v454 = vld [vmem:[%s2 + $0x18] sm:$0xf]
        %v455 = vld [vmem:[%s2 + $0x1c] sm:$0xf]
        %v456 = vld [vmem:[%s2 + $0x20] sm:$0xf]
        %v457 = vld [vmem:[%s2 + $0x24] sm:$0xf]
        %v458 = vld [vmem:[%s2 + $0x28] sm:$0xf]
        %v459 = vld [vmem:[%s2 + $0x2c] sm:$0xf]
        %v460 = vld [vmem:[%s2 + $0x30] sm:$0xf]
        %v461 = vld [vmem:[%s2 + $0x34] sm:$0xf]
        %v462 = vld [vmem:[%s2 + $0x38] sm:$0xf]
        %v463 = vld [vmem:[%s2 + $0x3c] sm:$0xf]
        %v464 = vld [vmem:[%s2 + $0x40] sm:$0xf]
        %v465 = vld [vmem:[%s2 + $0x44] sm:$0xf]
        %v466 = vld [vmem:[%s2 + $0x48] sm:$0xf]
        %v467 = vld [vmem:[%s2 + $0x4c] sm:$0xf]
        %v468 = vld [vmem:[%s2 + $0x50] sm:$0xf]
        %v469 = vld [vmem:[%s2 + $0x54] sm:$0xf]
        %v470 = vld [vmem:[%s2 + $0x58] sm:$0xf]
        %v471 = vld [vmem:[%s2 + $0x5c] sm:$0xf]
        %v472 = vld [vmem:[%s2 + $0x60] sm:$0xf]
        %v473 = vld [vmem:[%s2 + $0x64] sm:$0xf]
        %v474 = vld [vmem:[%s2 + $0x68] sm:$0xf]
        %v475 = vld [vmem:[%s2 + $0x6c] sm:$0xf]
        %v476 = vld [vmem:[%s2 + $0x70] sm:$0xf]
        %v477 = vld [vmem:[%s2 + $0x74] sm:$0xf]
        %v478 = vld [vmem:[%s2 + $0x78] sm:$0xf]
        %v479 = vld [vmem:[%s2 + $0x7c] sm:$0xf]
        %v480 = vld [vmem:[%s2 + $0x80] sm:$0xf]
        %v481 = vld [vmem:[%s2 + $0x84] sm:$0xf]
        %v482 = vld [vmem:[%s2 + $0x88] sm:$0xf]
        %v483 = vld [vmem:[%s2 + $0x8c] sm:$0xf]
        %v520 = vunpack.c.l.b16 %v448
        %v521 = vunpack.c.l.b16 %v449
        %v522 = vunpack.c.l.b16 %v450
        %v523 = vunpack.c.l.b16 %v451
        %v524 = vunpack.c.l.b16 %v452
        %v525 = vunpack.c.l.b16 %v453
        %v526 = vunpack.c.l.b16 %v454
        %v527 = vunpack.c.l.b16 %v455
        %v528 = vunpack.c.l.b16 %v456
        %v529 = vunpack.c.l.b16 %v457
        %v530 = vunpack.c.l.b16 %v458
        %v531 = vunpack.c.l.b16 %v459
        %v532 = vunpack.c.l.b16 %v460
        %v533 = vunpack.c.l.b16 %v461
        %v534 = vunpack.c.l.b16 %v462
        %v535 = vunpack.c.l.b16 %v463
        %v536 = vunpack.c.l.b16 %v464
        %v537 = vunpack.c.l.b16 %v465
        %v538 = vunpack.c.l.b16 %v466
        %v539 = vunpack.c.l.b16 %v467
        %v540 = vunpack.c.l.b16 %v468
        %v541 = vunpack.c.l.b16 %v469
        %v542 = vunpack.c.l.b16 %v470
        %v543 = vunpack.c.l.b16 %v471
        %v544 = vunpack.c.l.b16 %v472
        %v545 = vunpack.c.l.b16 %v473
        %v546 = vunpack.c.l.b16 %v474
        %v547 = vunpack.c.l.b16 %v475
        %v548 = vunpack.c.l.b16 %v476
        %v549 = vunpack.c.l.b16 %v477
        %v550 = vunpack.c.l.b16 %v478
        %v551 = vunpack.c.l.b16 %v479
        %v552 = vunpack.c.l.b16 %v480
        %v553 = vunpack.c.l.b16 %v481
        %v554 = vunpack.c.l.b16 %v482
        %v555 = vunpack.c.l.b16 %v483
        %v556 = vpack.c.b16 %v521, %v520
        %v557 = vpack.c.b16 %v523, %v522
        %v558 = vpack.c.b16 %v525, %v524
        %v559 = vpack.c.b16 %v527, %v526
        %v560 = vpack.c.b16 %v529, %v528
        %v561 = vpack.c.b16 %v531, %v530
        %v562 = vpack.c.b16 %v533, %v532
        %v563 = vpack.c.b16 %v535, %v534
        %v564 = vpack.c.b16 %v537, %v536
        %v565 = vpack.c.b16 %v539, %v538
        %v566 = vpack.c.b16 %v541, %v540
        %v567 = vpack.c.b16 %v543, %v542
        %v568 = vpack.c.b16 %v545, %v544
        %v569 = vpack.c.b16 %v547, %v546
        %v570 = vpack.c.b16 %v549, %v548
        %v571 = vpack.c.b16 %v551, %v550
        %v572 = vpack.c.b16 %v553, %v552
        %v573 = vpack.c.b16 %v555, %v554
        %vm574 = vcmask 523264
        %v576 = vsel %vm574, %v556, 0
        %v579 = vsel %vm574, %v557, 0
        %v582 = vsel %vm574, %v558, 0
        %v585 = vsel %vm574, %v559, 0
        %v588 = vsel %vm574, %v560, 0
        %v591 = vsel %vm574, %v561, 0
        %v594 = vsel %vm574, %v562, 0
        %v597 = vsel %vm574, %v563, 0
        %v600 = vsel %vm574, %v564, 0
        %v603 = vsel %vm574, %v565, 0
        %v606 = vsel %vm574, %v566, 0
        %v609 = vsel %vm574, %v567, 0
        %v612 = vsel %vm574, %v568, 0
        %v615 = vsel %vm574, %v569, 0
        %v618 = vsel %vm574, %v570, 0
        %v621 = vsel %vm574, %v571, 0
        %v624 = vsel %vm574, %v572, 0
        %v627 = vsel %vm574, %v573, 0
        %629 = vmatprep.subr.bf16.mxu0 %v437
        %630 = vmatpush1.bf16.msra.mxu0 %v436
        %631 = vmatprep.subr.bf16.mxu0 %v440
        %632 = vmatpush1.bf16.msra.mxu0 %v439
        %633 = vmatprep.subr.bf16.mxu0 %v443
        %634 = vmatpush1.bf16.msra.mxu0 %v442
        %635 = vmatprep.subr.bf16.mxu0 %v446
        %636 = vmatpush1.bf16.msra.mxu0 %v445
        %637 = vmatprep.subr.bf16.mxu0 0
        %638 = vmatpush1.bf16.msra.mxu0 0
        %639 = vmatprep.subr.bf16.mxu0 0
        %640 = vmatpush1.bf16.msra.mxu0 0
        %641 = vmatprep.subr.bf16.mxu0 0
        %642 = vmatpush1.bf16.msra.mxu0 0
        %643 = vmatprep.subr.bf16.mxu0 0
        %644 = vmatpush1.bf16.msra.mxu0 0
        %645 = vmatprep.subr.bf16.mxu0 0
        %646 = vmatpush1.bf16.msra.mxu0 0
        %647 = vmatprep.subr.bf16.mxu0 0
        %648 = vmatpush1.bf16.msra.mxu0 0
        %649 = vmatprep.subr.bf16.mxu0 0
        %650 = vmatpush1.bf16.msra.mxu0 0
        %651 = vmatprep.subr.bf16.mxu0 0
        %652 = vmatpush1.bf16.msra.mxu0 0
        %653 = vmatprep.subr.bf16.mxu0 0
        %654 = vmatpush1.bf16.msra.mxu0 0
        %655 = vmatprep.subr.bf16.mxu0 0
        %656 = vmatpush1.bf16.msra.mxu0 0
        %657 = vmatprep.subr.bf16.mxu0 0
        %658 = vmatpush1.bf16.msra.mxu0 0
        %659 = vmatprep.subr.bf16.mxu0 0
        %660 = vmatpush1.bf16.msra.mxu0 0
        %661 = vmatprep.mubr.bf16.mxu0 0
        %662 = vmatmul.mubr.bf16.gmra.mrb[0].mxu0 %v576
        %v663 = vpop.f32.mrb[0].mxu0
        %v664 = vadd.f32 0.0, %v663
        %v665 = vpop.f32.mrb[0].mxu0
        %v666 = vadd.f32 0.0, %v665
        %v667 = vpop.f32.mrb[0].mxu0
        %v668 = vadd.f32 0.0, %v667
        %v669 = vpop.f32.mrb[0].mxu0
        %v670 = vadd.f32 0.0, %v669
        %671 = vmatprep.mubr.bf16.mxu0 0
        %672 = vmatmul.mubr.bf16.gmra.mrb[0].mxu0 %v579
        %v673 = vpop.f32.mrb[0].mxu0
        %v674 = vadd.f32 0.0, %v673
        %v675 = vpop.f32.mrb[0].mxu0
        %v676 = vadd.f32 0.0, %v675
        %v677 = vpop.f32.mrb[0].mxu0
        %v678 = vadd.f32 0.0, %v677
        %v679 = vpop.f32.mrb[0].mxu0
        %v680 = vadd.f32 0.0, %v679
        %681 = vmatprep.mubr.bf16.mxu0 0
        %682 = vmatmul.mubr.bf16.gmra.mrb[0].mxu0 %v582
        %v683 = vpop.f32.mrb[0].mxu0
        %v684 = vadd.f32 0.0, %v683
        %v685 = vpop.f32.mrb[0].mxu0
        %v686 = vadd.f32 0.0, %v685
        %v687 = vpop.f32.mrb[0].mxu0
        %v688 = vadd.f32 0.0, %v687
        %v689 = vpop.f32.mrb[0].mxu0
        %v690 = vadd.f32 0.0, %v689
        %691 = vmatprep.mubr.bf16.mxu0 0
        %692 = vmatmul.mubr.bf16.gmra.mrb[0].mxu0 %v585
        %v693 = vpop.f32.mrb[0].mxu0
        %v694 = vadd.f32 0.0, %v693
        %v695 = vpop.f32.mrb[0].mxu0
        %v696 = vadd.f32 0.0, %v695
        %v697 = vpop.f32.mrb[0].mxu0
        %v698 = vadd.f32 0.0, %v697
        %v699 = vpop.f32.mrb[0].mxu0
        %v700 = vadd.f32 0.0, %v699
        %701 = vmatprep.mubr.bf16.mxu0 0
        %702 = vmatmul.mubr.bf16.gmra.mrb[0].mxu0 %v588
        %v703 = vpop.f32.mrb[0].mxu0
        %v704 = vadd.f32 0.0, %v703
        %v705 = vpop.f32.mrb[0].mxu0
        %v706 = vadd.f32 0.0, %v705
        %v707 = vpop.f32.mrb[0].mxu0
        %v708 = vadd.f32 0.0, %v707
        %v709 = vpop.f32.mrb[0].mxu0
        %v710 = vadd.f32 0.0, %v709
        %711 = vmatprep.mubr.bf16.mxu0 0
        %712 = vmatmul.mubr.bf16.gmra.mrb[0].mxu0 %v591
        %v713 = vpop.f32.mrb[0].mxu0
        %v714 = vadd.f32 0.0, %v713
        %v715 = vpop.f32.mrb[0].mxu0
        %v716 = vadd.f32 0.0, %v715
        %v717 = vpop.f32.mrb[0].mxu0
        %v718 = vadd.f32 0.0, %v717
        %v719 = vpop.f32.mrb[0].mxu0
        %v720 = vadd.f32 0.0, %v719
        %721 = vmatprep.mubr.bf16.mxu0 0
        %722 = vmatmul.mubr.bf16.gmra.mrb[0].mxu0 %v594
        %v723 = vpop.f32.mrb[0].mxu0
        %v724 = vadd.f32 0.0, %v723
        %v725 = vpop.f32.mrb[0].mxu0
        %v726 = vadd.f32 0.0, %v725
        %v727 = vpop.f32.mrb[0].mxu0
        %v728 = vadd.f32 0.0, %v727
        %v729 = vpop.f32.mrb[0].mxu0
        %v730 = vadd.f32 0.0, %v729
        %731 = vmatprep.mubr.bf16.mxu0 0
        %732 = vmatmul.mubr.bf16.gmra.mrb[0].mxu0 %v597
        %v733 = vpop.f32.mrb[0].mxu0
        %v734 = vadd.f32 0.0, %v733
        %v735 = vpop.f32.mrb[0].mxu0
        %v736 = vadd.f32 0.0, %v735
        %v737 = vpop.f32.mrb[0].mxu0
        %v738 = vadd.f32 0.0, %v737
        %v739 = vpop.f32.mrb[0].mxu0
        %v740 = vadd.f32 0.0, %v739
        %741 = vmatprep.mubr.bf16.mxu0 0
        %742 = vmatmul.mubr.bf16.gmra.mrb[0].mxu0 %v600
        %v743 = vpop.f32.mrb[0].mxu0
        %v744 = vadd.f32 0.0, %v743
        %v745 = vpop.f32.mrb[0].mxu0
        %v746 = vadd.f32 0.0, %v745
        %v747 = vpop.f32.mrb[0].mxu0
        %v748 = vadd.f32 0.0, %v747
        %v749 = vpop.f32.mrb[0].mxu0
        %v750 = vadd.f32 0.0, %v749
        %751 = vmatprep.mubr.bf16.mxu0 0
        %752 = vmatmul.mubr.bf16.gmra.mrb[0].mxu0 %v603
        %v753 = vpop.f32.mrb[0].mxu0
        %v754 = vadd.f32 0.0, %v753
        %v755 = vpop.f32.mrb[0].mxu0
        %v756 = vadd.f32 0.0, %v755
        %v757 = vpop.f32.mrb[0].mxu0
        %v758 = vadd.f32 0.0, %v757
        %v759 = vpop.f32.mrb[0].mxu0
        %v760 = vadd.f32 0.0, %v759
        %761 = vmatprep.mubr.bf16.mxu0 0
        %762 = vmatmul.mubr.bf16.gmra.mrb[0].mxu0 %v606
        %v763 = vpop.f32.mrb[0].mxu0
        %v764 = vadd.f32 0.0, %v763
        %v765 = vpop.f32.mrb[0].mxu0
        %v766 = vadd.f32 0.0, %v765
        %v767 = vpop.f32.mrb[0].mxu0
        %v768 = vadd.f32 0.0, %v767
        %v769 = vpop.f32.mrb[0].mxu0
        %v770 = vadd.f32 0.0, %v769
        %771 = vmatprep.mubr.bf16.mxu0 0
        %772 = vmatmul.mubr.bf16.gmra.mrb[0].mxu0 %v609
        %v773 = vpop.f32.mrb[0].mxu0
        %v774 = vadd.f32 0.0, %v773
        %v775 = vpop.f32.mrb[0].mxu0
        %v776 = vadd.f32 0.0, %v775
        %v777 = vpop.f32.mrb[0].mxu0
        %v778 = vadd.f32 0.0, %v777
        %v779 = vpop.f32.mrb[0].mxu0
        %v780 = vadd.f32 0.0, %v779
        %781 = vmatprep.mubr.bf16.mxu0 0
        %782 = vmatmul.mubr.bf16.gmra.mrb[0].mxu0 %v612
        %v783 = vpop.f32.mrb[0].mxu0
        %v784 = vadd.f32 0.0, %v783
        %v785 = vpop.f32.mrb[0].mxu0
        %v786 = vadd.f32 0.0, %v785
        %v787 = vpop.f32.mrb[0].mxu0
        %v788 = vadd.f32 0.0, %v787
        %v789 = vpop.f32.mrb[0].mxu0
        %v790 = vadd.f32 0.0, %v789
        %791 = vmatprep.mubr.bf16.mxu0 0
        %792 = vmatmul.mubr.bf16.gmra.mrb[0].mxu0 %v615
        %v793 = vpop.f32.mrb[0].mxu0
        %v794 = vadd.f32 0.0, %v793
        %v795 = vpop.f32.mrb[0].mxu0
        %v796 = vadd.f32 0.0, %v795
        %v797 = vpop.f32.mrb[0].mxu0
        %v798 = vadd.f32 0.0, %v797
        %v799 = vpop.f32.mrb[0].mxu0
        %v800 = vadd.f32 0.0, %v799
        %801 = vmatprep.mubr.bf16.mxu0 0
        %802 = vmatmul.mubr.bf16.gmra.mrb[0].mxu0 %v618
        %v803 = vpop.f32.mrb[0].mxu0
        %v804 = vadd.f32 0.0, %v803
        %v805 = vpop.f32.mrb[0].mxu0
        %v806 = vadd.f32 0.0, %v805
        %v807 = vpop.f32.mrb[0].mxu0
        %v808 = vadd.f32 0.0, %v807
        %v809 = vpop.f32.mrb[0].mxu0
        %v810 = vadd.f32 0.0, %v809
        %811 = vmatprep.mubr.bf16.mxu0 0
        %812 = vmatmul.mubr.bf16.gmra.mrb[0].mxu0 %v621
        %v813 = vpop.f32.mrb[0].mxu0
        %v814 = vadd.f32 0.0, %v813
        %v815 = vpop.f32.mrb[0].mxu0
        %v816 = vadd.f32 0.0, %v815
        %v817 = vpop.f32.mrb[0].mxu0
        %v818 = vadd.f32 0.0, %v817
        %v819 = vpop.f32.mrb[0].mxu0
        %v820 = vadd.f32 0.0, %v819
        %821 = vmatprep.mubr.bf16.mxu0 0
        %822 = vmatmul.mubr.bf16.gmra.mrb[0].mxu0 %v624
        %v823 = vpop.f32.mrb[0].mxu0
        %v824 = vadd.f32 0.0, %v823
        %v825 = vpop.f32.mrb[0].mxu0
        %v826 = vadd.f32 0.0, %v825
        %v827 = vpop.f32.mrb[0].mxu0
        %v828 = vadd.f32 0.0, %v827
        %v829 = vpop.f32.mrb[0].mxu0
        %v830 = vadd.f32 0.0, %v829
        %831 = vmatprep.mubr.bf16.mxu0 0
        %832 = vmatmul.mubr.bf16.gmra.mrb[0].mxu0 %v627
        %v833 = vpop.f32.mrb[0].mxu0
        %v834 = vadd.f32 0.0, %v833
        %v835 = vpop.f32.mrb[0].mxu0
        %v836 = vadd.f32 0.0, %v835
        %v837 = vpop.f32.mrb[0].mxu0
        %v838 = vadd.f32 0.0, %v837
        %v839 = vpop.f32.mrb[0].mxu0
        %v840 = vadd.f32 0.0, %v839
        %841 = vdwg.mxu0
        %842 = vmatprep.subr.bf16.mxu0 0
        %843 = vmatpush1.bf16.msra.mxu0 %v438
        %844 = vmatprep.subr.bf16.mxu0 0
        %845 = vmatpush1.bf16.msra.mxu0 %v441
        %846 = vmatprep.subr.bf16.mxu0 0
        %847 = vmatpush1.bf16.msra.mxu0 %v444
        %848 = vmatprep.subr.bf16.mxu0 0
        %849 = vmatpush1.bf16.msra.mxu0 %v447
        %850 = vmatprep.subr.bf16.mxu0 0
        %851 = vmatpush1.bf16.msra.mxu0 0
        %852 = vmatprep.subr.bf16.mxu0 0
        %853 = vmatpush1.bf16.msra.mxu0 0
        %854 = vmatprep.subr.bf16.mxu0 0
        %855 = vmatpush1.bf16.msra.mxu0 0
        %856 = vmatprep.subr.bf16.mxu0 0
        %857 = vmatpush1.bf16.msra.mxu0 0
        %858 = vmatprep.subr.bf16.mxu0 0
        %859 = vmatpush1.bf16.msra.mxu0 0
        %860 = vmatprep.subr.bf16.mxu0 0
        %861 = vmatpush1.bf16.msra.mxu0 0
        %862 = vmatprep.subr.bf16.mxu0 0
        %863 = vmatpush1.bf16.msra.mxu0 0
        %864 = vmatprep.subr.bf16.mxu0 0
        %865 = vmatpush1.bf16.msra.mxu0 0
        %866 = vmatprep.subr.bf16.mxu0 0
        %867 = vmatpush1.bf16.msra.mxu0 0
        %868 = vmatprep.subr.bf16.mxu0 0
        %869 = vmatpush1.bf16.msra.mxu0 0
        %870 = vmatprep.subr.bf16.mxu0 0
        %871 = vmatpush1.bf16.msra.mxu0 0
        %872 = vmatprep.subr.bf16.mxu0 0
        %873 = vmatpush1.bf16.msra.mxu0 0
        %874 = vmatprep.mubr.bf16.mxu0 0
        %875 = vmatmul.mubr.bf16.gmra.mrb[0].mxu0 %v576
        %v876 = vpop.f32.mrb[0].mxu0
        %v877 = vadd.f32 0.0, %v876
        %v878 = vpop.f32.mrb[0].mxu0
        %v879 = vpop.f32.mrb[0].mxu0
        %v880 = vadd.f32 0.0, %v879
        %v881 = vpop.f32.mrb[0].mxu0
        %882 = vmatprep.mubr.bf16.mxu0 0
        %883 = vmatmul.mubr.bf16.gmra.mrb[0].mxu0 %v579
        %v884 = vpop.f32.mrb[0].mxu0
        %v885 = vadd.f32 0.0, %v884
        %v886 = vpop.f32.mrb[0].mxu0
        %v887 = vpop.f32.mrb[0].mxu0
        %v888 = vadd.f32 0.0, %v887
        %v889 = vpop.f32.mrb[0].mxu0
        %890 = vmatprep.mubr.bf16.mxu0 0
        %891 = vmatmul.mubr.bf16.gmra.mrb[0].mxu0 %v582
        %v892 = vpop.f32.mrb[0].mxu0
        %v893 = vadd.f32 0.0, %v892
        %v894 = vpop.f32.mrb[0].mxu0
        %v895 = vpop.f32.mrb[0].mxu0
        %v896 = vadd.f32 0.0, %v895
        %v897 = vpop.f32.mrb[0].mxu0
        %898 = vmatprep.mubr.bf16.mxu0 0
        %899 = vmatmul.mubr.bf16.gmra.mrb[0].mxu0 %v585
        %v900 = vpop.f32.mrb[0].mxu0
        %v901 = vadd.f32 0.0, %v900
        %v902 = vpop.f32.mrb[0].mxu0
        %v903 = vpop.f32.mrb[0].mxu0
        %v904 = vadd.f32 0.0, %v903
        %v905 = vpop.f32.mrb[0].mxu0
        %906 = vmatprep.mubr.bf16.mxu0 0
        %907 = vmatmul.mubr.bf16.gmra.mrb[0].mxu0 %v588
        %v908 = vpop.f32.mrb[0].mxu0
        %v909 = vadd.f32 0.0, %v908
        %v910 = vpop.f32.mrb[0].mxu0
        %v911 = vpop.f32.mrb[0].mxu0
        %v912 = vadd.f32 0.0, %v911
        %v913 = vpop.f32.mrb[0].mxu0
        %914 = vmatprep.mubr.bf16.mxu0 0
        %915 = vmatmul.mubr.bf16.gmra.mrb[0].mxu0 %v591
        %v916 = vpop.f32.mrb[0].mxu0
        %v917 = vadd.f32 0.0, %v916
        %v918 = vpop.f32.mrb[0].mxu0
        %v919 = vpop.f32.mrb[0].mxu0
        %v920 = vadd.f32 0.0, %v919
        %v921 = vpop.f32.mrb[0].mxu0
        %922 = vmatprep.mubr.bf16.mxu0 0
        %923 = vmatmul.mubr.bf16.gmra.mrb[0].mxu0 %v594
        %v924 = vpop.f32.mrb[0].mxu0
        %v925 = vadd.f32 0.0, %v924
        %v926 = vpop.f32.mrb[0].mxu0
        %v927 = vpop.f32.mrb[0].mxu0
        %v928 = vadd.f32 0.0, %v927
        %v929 = vpop.f32.mrb[0].mxu0
        %930 = vmatprep.mubr.bf16.mxu0 0
        %931 = vmatmul.mubr.bf16.gmra.mrb[0].mxu0 %v597
        %v932 = vpop.f32.mrb[0].mxu0
        %v933 = vadd.f32 0.0, %v932
        %v934 = vpop.f32.mrb[0].mxu0
        %v935 = vpop.f32.mrb[0].mxu0
        %v936 = vadd.f32 0.0, %v935
        %v937 = vpop.f32.mrb[0].mxu0
        %938 = vmatprep.mubr.bf16.mxu0 0
        %939 = vmatmul.mubr.bf16.gmra.mrb[0].mxu0 %v600
        %v940 = vpop.f32.mrb[0].mxu0
        %v941 = vadd.f32 0.0, %v940
        %v942 = vpop.f32.mrb[0].mxu0
        %v943 = vpop.f32.mrb[0].mxu0
        %v944 = vadd.f32 0.0, %v943
        %v945 = vpop.f32.mrb[0].mxu0
        %946 = vmatprep.mubr.bf16.mxu0 0
        %947 = vmatmul.mubr.bf16.gmra.mrb[0].mxu0 %v603
        %v948 = vpop.f32.mrb[0].mxu0
        %v949 = vadd.f32 0.0, %v948
        %v950 = vpop.f32.mrb[0].mxu0
        %v951 = vpop.f32.mrb[0].mxu0
        %v952 = vadd.f32 0.0, %v951
        %v953 = vpop.f32.mrb[0].mxu0
        %954 = vmatprep.mubr.bf16.mxu0 0
        %955 = vmatmul.mubr.bf16.gmra.mrb[0].mxu0 %v606
        %v956 = vpop.f32.mrb[0].mxu0
        %v957 = vadd.f32 0.0, %v956
        %v958 = vpop.f32.mrb[0].mxu0
        %v959 = vpop.f32.mrb[0].mxu0
        %v960 = vadd.f32 0.0, %v959
        %v961 = vpop.f32.mrb[0].mxu0
        %962 = vmatprep.mubr.bf16.mxu0 0
        %963 = vmatmul.mubr.bf16.gmra.mrb[0].mxu0 %v609
        %v964 = vpop.f32.mrb[0].mxu0
        %v965 = vadd.f32 0.0, %v964
        %v966 = vpop.f32.mrb[0].mxu0
        %v967 = vpop.f32.mrb[0].mxu0
        %v968 = vadd.f32 0.0, %v967
        %v969 = vpop.f32.mrb[0].mxu0
        %970 = vmatprep.mubr.bf16.mxu0 0
        %971 = vmatmul.mubr.bf16.gmra.mrb[0].mxu0 %v612
        %v972 = vpop.f32.mrb[0].mxu0
        %v973 = vadd.f32 0.0, %v972
        %v974 = vpop.f32.mrb[0].mxu0
        %v975 = vpop.f32.mrb[0].mxu0
        %v976 = vadd.f32 0.0, %v975
        %v977 = vpop.f32.mrb[0].mxu0
        %978 = vmatprep.mubr.bf16.mxu0 0
        %979 = vmatmul.mubr.bf16.gmra.mrb[0].mxu0 %v615
        %v980 = vpop.f32.mrb[0].mxu0
        %v981 = vadd.f32 0.0, %v980
        %v982 = vpop.f32.mrb[0].mxu0
        %v983 = vpop.f32.mrb[0].mxu0
        %v984 = vadd.f32 0.0, %v983
        %v985 = vpop.f32.mrb[0].mxu0
        %986 = vmatprep.mubr.bf16.mxu0 0
        %987 = vmatmul.mubr.bf16.gmra.mrb[0].mxu0 %v618
        %v988 = vpop.f32.mrb[0].mxu0
        %v989 = vadd.f32 0.0, %v988
        %v990 = vpop.f32.mrb[0].mxu0
        %v991 = vpop.f32.mrb[0].mxu0
        %v992 = vadd.f32 0.0, %v991
        %v993 = vpop.f32.mrb[0].mxu0
        %994 = vmatprep.mubr.bf16.mxu0 0
        %995 = vmatmul.mubr.bf16.gmra.mrb[0].mxu0 %v621
        %v996 = vpop.f32.mrb[0].mxu0
        %v997 = vadd.f32 0.0, %v996
        %v998 = vpop.f32.mrb[0].mxu0
        %v999 = vpop.f32.mrb[0].mxu0
        %v1000 = vadd.f32 0.0, %v999
        %v1001 = vpop.f32.mrb[0].mxu0
        %1002 = vmatprep.mubr.bf16.mxu0 0
        %1003 = vmatmul.mubr.bf16.gmra.mrb[0].mxu0 %v624
        %v1004 = vpop.f32.mrb[0].mxu0
        %v1005 = vadd.f32 0.0, %v1004
        %v1006 = vpop.f32.mrb[0].mxu0
        %v1007 = vpop.f32.mrb[0].mxu0
        %v1008 = vadd.f32 0.0, %v1007
        %v1009 = vpop.f32.mrb[0].mxu0
        %1010 = vmatprep.mubr.bf16.mxu0 0
        %1011 = vmatmul.mubr.bf16.gmra.mrb[0].mxu0 %v627
        %v1012 = vpop.f32.mrb[0].mxu0
        %v1013 = vadd.f32 0.0, %v1012
        %v1014 = vpop.f32.mrb[0].mxu0
        %v1015 = vpop.f32.mrb[0].mxu0
        %v1016 = vadd.f32 0.0, %v1015
        %v1017 = vpop.f32.mrb[0].mxu0
        %1018 = vdwg.mxu0
        %1019 = vrot.lane.b32.xlu0 %v664, 17
        %v1020 = vpop.permute.xlu0 %1019
        %1021 = vrot.lane.b32.xlu0 %v668, 17
        %v1022 = vpop.permute.xlu0 %1021
        %1023 = vrot.lane.b32.xlu0 %v674, 17
        %v1024 = vpop.permute.xlu0 %1023
        %1025 = vrot.lane.b32.xlu0 %v678, 17
        %v1026 = vpop.permute.xlu0 %1025
        %1027 = vrot.lane.b32.xlu0 %v666, 17
        %v1028 = vpop.permute.xlu0 %1027
        %1029 = vrot.lane.b32.xlu0 %v670, 17
        %v1030 = vpop.permute.xlu0 %1029
        %1031 = vrot.lane.b32.xlu0 %v676, 17
        %v1032 = vpop.permute.xlu0 %1031
        %1033 = vrot.lane.b32.xlu0 %v680, 17
        %v1034 = vpop.permute.xlu0 %1033
        %1035 = vrot.lane.b32.xlu0 %v877, 17
        %v1036 = vpop.permute.xlu0 %1035
        %1037 = vrot.lane.b32.xlu0 %v880, 17
        %v1038 = vpop.permute.xlu0 %1037
        %1039 = vrot.lane.b32.xlu0 %v885, 17
        %v1040 = vpop.permute.xlu0 %1039
        %1041 = vrot.lane.b32.xlu0 %v888, 17
        %v1042 = vpop.permute.xlu0 %1041
        %v1043 = vlaneseq
        %v1044 = vand.u32 %v1043, 127
        %vm1045 = vcmp.lt.s32.totalorder %v1044, 17
        %v1046 = vsel %vm1045, %v1028, %v1036
        %v1047 = vsel %vm1045, %v1030, %v1038
        %v1048 = vsel %vm1045, %v1032, %v1040
        %v1049 = vsel %vm1045, %v1034, %v1042
        %v1050 = vsel %vm1045, %v1020, %v1028
        %v1051 = vsel %vm1045, %v1022, %v1030
        %v1052 = vsel %vm1045, %v1024, %v1032
        %v1053 = vsel %vm1045, %v1026, %v1034
        %v1054 = vsel %vm1045, %v1036, %v1020
        %v1055 = vsel %vm1045, %v1038, %v1022
        %v1056 = vsel %vm1045, %v1040, %v1024
        %v1057 = vsel %vm1045, %v1042, %v1026
        %v1058 = vsel %vm432, 1, 0
        %v1059 = vlaneseq
        %v1060 = vshrl.u32 %v1059, 7
        %v1061 = vsub.s32 0, %v1060
        %v1062 = vrot.slane %v1058, %v1061
        %v1063 = vlaneseq
        %v1064 = vshrl.u32 %v1063, 7
        %v1065 = vsub.s32 1, %v1064
        %v1066 = vrot.slane %v1058, %v1065
        %v1067 = vlaneseq
        %v1068 = vshrl.u32 %v1067, 7
        %v1069 = vsub.s32 2, %v1068
        %v1070 = vrot.slane %v1058, %v1069
        %vm1071 = vcmp.eq.s32.totalorder %v1062, 1
        %vm1072 = vcmp.eq.s32.totalorder %v1066, 1
        %vm1073 = vcmp.eq.s32.totalorder %v1070, 1
        %v1074 = vsel %vm1071, %v1054, 0.0
        %v1075 = vsel %vm1072, %v1050, 0.0
        %v1076 = vsel %vm1073, %v1046, 0.0
        %v1077 = vsel %vm1071, %v1055, 0.0
        %v1078 = vsel %vm1072, %v1051, 0.0
        %v1079 = vsel %vm1073, %v1047, 0.0
        %v1080 = vsel %vm1071, %v1056, 0.0
        %v1081 = vsel %vm1072, %v1052, 0.0
        %v1082 = vsel %vm1073, %v1048, 0.0
        %v1083 = vsel %vm1071, %v1057, 0.0
        %v1084 = vsel %vm1072, %v1053, 0.0
        %v1085 = vsel %vm1073, %v1049, 0.0
        %v1086 = vadd.f32 %v744, %v1074
        %v1087 = vadd.f32 %v746, %v1075
        %v1088 = vadd.f32 %v941, %v1076
        %v1089 = vadd.f32 %v748, %v1077
        %v1090 = vadd.f32 %v750, %v1078
        %v1091 = vadd.f32 %v944, %v1079
        %v1092 = vadd.f32 %v754, %v1080
        %v1093 = vadd.f32 %v756, %v1081
        %v1094 = vadd.f32 %v949, %v1082
        %v1095 = vadd.f32 %v758, %v1083
        %v1096 = vadd.f32 %v760, %v1084
        %v1097 = vadd.f32 %v952, %v1085
        %1098 = vrot.lane.b32.xlu0 %v684, 16
        %v1099 = vpop.permute.xlu0 %1098
        %1100 = vrot.lane.b32.xlu0 %v688, 16
        %v1101 = vpop.permute.xlu0 %1100
        %1102 = vrot.lane.b32.xlu0 %v694, 16
        %v1103 = vpop.permute.xlu0 %1102
        %1104 = vrot.lane.b32.xlu0 %v698, 16
        %v1105 = vpop.permute.xlu0 %1104
        %1106 = vrot.lane.b32.xlu0 %v686, 16
        %v1107 = vpop.permute.xlu0 %1106
        %1108 = vrot.lane.b32.xlu0 %v690, 16
        %v1109 = vpop.permute.xlu0 %1108
        %1110 = vrot.lane.b32.xlu0 %v696, 16
        %v1111 = vpop.permute.xlu0 %1110
        %1112 = vrot.lane.b32.xlu0 %v700, 16
        %v1113 = vpop.permute.xlu0 %1112
        %1114 = vrot.lane.b32.xlu0 %v893, 16
        %v1115 = vpop.permute.xlu0 %1114
        %1116 = vrot.lane.b32.xlu0 %v896, 16
        %v1117 = vpop.permute.xlu0 %1116
        %1118 = vrot.lane.b32.xlu0 %v901, 16
        %v1119 = vpop.permute.xlu0 %1118
        %1120 = vrot.lane.b32.xlu0 %v904, 16
        %v1121 = vpop.permute.xlu0 %1120
        %vm1122 = vcmp.lt.s32.totalorder %v1044, 16
        %v1123 = vsel %vm1122, %v1107, %v1115
        %v1124 = vsel %vm1122, %v1109, %v1117
        %v1125 = vsel %vm1122, %v1111, %v1119
        %v1126 = vsel %vm1122, %v1113, %v1121
        %v1127 = vsel %vm1122, %v1099, %v1107
        %v1128 = vsel %vm1122, %v1101, %v1109
        %v1129 = vsel %vm1122, %v1103, %v1111
        %v1130 = vsel %vm1122, %v1105, %v1113
        %v1131 = vsel %vm1122, %v1115, %v1099
        %v1132 = vsel %vm1122, %v1117, %v1101
        %v1133 = vsel %vm1122, %v1119, %v1103
        %v1134 = vsel %vm1122, %v1121, %v1105
        %v1135 = vsel %vm428, 1, 0
        %v1136 = vlaneseq
        %v1137 = vshrl.u32 %v1136, 7
        %v1138 = vsub.s32 0, %v1137
        %v1139 = vrot.slane %v1135, %v1138
        %v1140 = vlaneseq
        %v1141 = vshrl.u32 %v1140, 7
        %v1142 = vsub.s32 1, %v1141
        %v1143 = vrot.slane %v1135, %v1142
        %v1144 = vlaneseq
        %v1145 = vshrl.u32 %v1144, 7
        %v1146 = vsub.s32 2, %v1145
        %v1147 = vrot.slane %v1135, %v1146
        %vm1148 = vcmp.eq.s32.totalorder %v1139, 1
        %vm1149 = vcmp.eq.s32.totalorder %v1143, 1
        %vm1150 = vcmp.eq.s32.totalorder %v1147, 1
        %v1151 = vsel %vm1148, %v1131, 0.0
        %v1152 = vsel %vm1149, %v1127, 0.0
        %v1153 = vsel %vm1150, %v1123, 0.0
        %v1154 = vsel %vm1148, %v1132, 0.0
        %v1155 = vsel %vm1149, %v1128, 0.0
        %v1156 = vsel %vm1150, %v1124, 0.0
        %v1157 = vsel %vm1148, %v1133, 0.0
        %v1158 = vsel %vm1149, %v1129, 0.0
        %v1159 = vsel %vm1150, %v1125, 0.0
        %v1160 = vsel %vm1148, %v1134, 0.0
        %v1161 = vsel %vm1149, %v1130, 0.0
        %v1162 = vsel %vm1150, %v1126, 0.0
        %v1163 = vadd.f32 %v1086, %v1151
        %v1164 = vadd.f32 %v1087, %v1152
        %v1165 = vadd.f32 %v1088, %v1153
        %v1166 = vadd.f32 %v1089, %v1154
        %v1167 = vadd.f32 %v1090, %v1155
        %v1168 = vadd.f32 %v1091, %v1156
        %v1169 = vadd.f32 %v1092, %v1157
        %v1170 = vadd.f32 %v1093, %v1158
        %v1171 = vadd.f32 %v1094, %v1159
        %v1172 = vadd.f32 %v1095, %v1160
        %v1173 = vadd.f32 %v1096, %v1161
        %v1174 = vadd.f32 %v1097, %v1162
        %1175 = vrot.lane.b32.xlu0 %v704, 15
        %v1176 = vpop.permute.xlu0 %1175
        %1177 = vrot.lane.b32.xlu0 %v708, 15
        %v1178 = vpop.permute.xlu0 %1177
        %1179 = vrot.lane.b32.xlu0 %v714, 15
        %v1180 = vpop.permute.xlu0 %1179
        %1181 = vrot.lane.b32.xlu0 %v718, 15
        %v1182 = vpop.permute.xlu0 %1181
        %1183 = vrot.lane.b32.xlu0 %v706, 15
        %v1184 = vpop.permute.xlu0 %1183
        %1185 = vrot.lane.b32.xlu0 %v710, 15
        %v1186 = vpop.permute.xlu0 %1185
        %1187 = vrot.lane.b32.xlu0 %v716, 15
        %v1188 = vpop.permute.xlu0 %1187
        %1189 = vrot.lane.b32.xlu0 %v720, 15
        %v1190 = vpop.permute.xlu0 %1189
        %1191 = vrot.lane.b32.xlu0 %v909, 15
        %v1192 = vpop.permute.xlu0 %1191
        %1193 = vrot.lane.b32.xlu0 %v912, 15
        %v1194 = vpop.permute.xlu0 %1193
        %1195 = vrot.lane.b32.xlu0 %v917, 15
        %v1196 = vpop.permute.xlu0 %1195
        %1197 = vrot.lane.b32.xlu0 %v920, 15
        %v1198 = vpop.permute.xlu0 %1197
        %vm1199 = vcmp.lt.s32.totalorder %v1044, 15
        %v1200 = vsel %vm1199, %v1184, %v1192
        %v1201 = vsel %vm1199, %v1186, %v1194
        %v1202 = vsel %vm1199, %v1188, %v1196
        %v1203 = vsel %vm1199, %v1190, %v1198
        %v1204 = vsel %vm1199, %v1176, %v1184
        %v1205 = vsel %vm1199, %v1178, %v1186
        %v1206 = vsel %vm1199, %v1180, %v1188
        %v1207 = vsel %vm1199, %v1182, %v1190
        %v1208 = vsel %vm1199, %v1192, %v1176
        %v1209 = vsel %vm1199, %v1194, %v1178
        %v1210 = vsel %vm1199, %v1196, %v1180
        %v1211 = vsel %vm1199, %v1198, %v1182
        %v1212 = vsel %vm433, 1, 0
        %v1213 = vlaneseq
        %v1214 = vshrl.u32 %v1213, 7
        %v1215 = vsub.s32 0, %v1214
        %v1216 = vrot.slane %v1212, %v1215
        %v1217 = vlaneseq
        %v1218 = vshrl.u32 %v1217, 7
        %v1219 = vsub.s32 1, %v1218
        %v1220 = vrot.slane %v1212, %v1219
        %v1221 = vlaneseq
        %v1222 = vshrl.u32 %v1221, 7
        %v1223 = vsub.s32 2, %v1222
        %v1224 = vrot.slane %v1212, %v1223
        %vm1225 = vcmp.eq.s32.totalorder %v1216, 1
        %vm1226 = vcmp.eq.s32.totalorder %v1220, 1
        %vm1227 = vcmp.eq.s32.totalorder %v1224, 1
        %v1228 = vsel %vm1225, %v1208, 0.0
        %v1229 = vsel %vm1226, %v1204, 0.0
        %v1230 = vsel %vm1227, %v1200, 0.0
        %v1231 = vsel %vm1225, %v1209, 0.0
        %v1232 = vsel %vm1226, %v1205, 0.0
        %v1233 = vsel %vm1227, %v1201, 0.0
        %v1234 = vsel %vm1225, %v1210, 0.0
        %v1235 = vsel %vm1226, %v1206, 0.0
        %v1236 = vsel %vm1227, %v1202, 0.0
        %v1237 = vsel %vm1225, %v1211, 0.0
        %v1238 = vsel %vm1226, %v1207, 0.0
        %v1239 = vsel %vm1227, %v1203, 0.0
        %v1240 = vadd.f32 %v1163, %v1228
        %v1241 = vadd.f32 %v1164, %v1229
        %v1242 = vadd.f32 %v1165, %v1230
        %v1243 = vadd.f32 %v1166, %v1231
        %v1244 = vadd.f32 %v1167, %v1232
        %v1245 = vadd.f32 %v1168, %v1233
        %v1246 = vadd.f32 %v1169, %v1234
        %v1247 = vadd.f32 %v1170, %v1235
        %v1248 = vadd.f32 %v1171, %v1236
        %v1249 = vadd.f32 %v1172, %v1237
        %v1250 = vadd.f32 %v1173, %v1238
        %v1251 = vadd.f32 %v1174, %v1239
        %1252 = vrot.lane.b32.xlu0 %v724, 1
        %v1253 = vpop.permute.xlu0 %1252
        %1254 = vrot.lane.b32.xlu0 %v728, 1
        %v1255 = vpop.permute.xlu0 %1254
        %1256 = vrot.lane.b32.xlu0 %v734, 1
        %v1257 = vpop.permute.xlu0 %1256
        %1258 = vrot.lane.b32.xlu0 %v738, 1
        %v1259 = vpop.permute.xlu0 %1258
        %1260 = vrot.lane.b32.xlu0 %v726, 1
        %v1261 = vpop.permute.xlu0 %1260
        %1262 = vrot.lane.b32.xlu0 %v730, 1
        %v1263 = vpop.permute.xlu0 %1262
        %1264 = vrot.lane.b32.xlu0 %v736, 1
        %v1265 = vpop.permute.xlu0 %1264
        %1266 = vrot.lane.b32.xlu0 %v740, 1
        %v1267 = vpop.permute.xlu0 %1266
        %1268 = vrot.lane.b32.xlu0 %v925, 1
        %v1269 = vpop.permute.xlu0 %1268
        %1270 = vrot.lane.b32.xlu0 %v928, 1
        %v1271 = vpop.permute.xlu0 %1270
        %1272 = vrot.lane.b32.xlu0 %v933, 1
        %v1273 = vpop.permute.xlu0 %1272
        %1274 = vrot.lane.b32.xlu0 %v936, 1
        %v1275 = vpop.permute.xlu0 %1274
        %vm1276 = vcmp.lt.s32.totalorder %v1044, 1
        %v1277 = vsel %vm1276, %v1261, %v1269
        %v1278 = vsel %vm1276, %v1263, %v1271
        %v1279 = vsel %vm1276, %v1265, %v1273
        %v1280 = vsel %vm1276, %v1267, %v1275
        %v1281 = vsel %vm1276, %v1253, %v1261
        %v1282 = vsel %vm1276, %v1255, %v1263
        %v1283 = vsel %vm1276, %v1257, %v1265
        %v1284 = vsel %vm1276, %v1259, %v1267
        %v1285 = vsel %vm1276, %v1269, %v1253
        %v1286 = vsel %vm1276, %v1271, %v1255
        %v1287 = vsel %vm1276, %v1273, %v1257
        %v1288 = vsel %vm1276, %v1275, %v1259
        %v1289 = vsel %vm430, 1, 0
        %v1290 = vlaneseq
        %v1291 = vshrl.u32 %v1290, 7
        %v1292 = vsub.s32 0, %v1291
        %v1293 = vrot.slane %v1289, %v1292
        %v1294 = vlaneseq
        %v1295 = vshrl.u32 %v1294, 7
        %v1296 = vsub.s32 1, %v1295
        %v1297 = vrot.slane %v1289, %v1296
        %v1298 = vlaneseq
        %v1299 = vshrl.u32 %v1298, 7
        %v1300 = vsub.s32 2, %v1299
        %v1301 = vrot.slane %v1289, %v1300
        %vm1302 = vcmp.eq.s32.totalorder %v1293, 1
        %vm1303 = vcmp.eq.s32.totalorder %v1297, 1
        %vm1304 = vcmp.eq.s32.totalorder %v1301, 1
        %v1305 = vsel %vm1302, %v1285, 0.0
        %v1306 = vsel %vm1303, %v1281, 0.0
        %v1307 = vsel %vm1304, %v1277, 0.0
        %v1308 = vsel %vm1302, %v1286, 0.0
        %v1309 = vsel %vm1303, %v1282, 0.0
        %v1310 = vsel %vm1304, %v1278, 0.0
        %v1311 = vsel %vm1302, %v1287, 0.0
        %v1312 = vsel %vm1303, %v1283, 0.0
        %v1313 = vsel %vm1304, %v1279, 0.0
        %v1314 = vsel %vm1302, %v1288, 0.0
        %v1315 = vsel %vm1303, %v1284, 0.0
        %v1316 = vsel %vm1304, %v1280, 0.0
        %v1317 = vadd.f32 %v1240, %v1305
        %v1318 = vadd.f32 %v1241, %v1306
        %v1319 = vadd.f32 %v1242, %v1307
        %v1320 = vadd.f32 %v1243, %v1308
        %v1321 = vadd.f32 %v1244, %v1309
        %v1322 = vadd.f32 %v1245, %v1310
        %v1323 = vadd.f32 %v1246, %v1311
        %v1324 = vadd.f32 %v1247, %v1312
        %v1325 = vadd.f32 %v1248, %v1313
        %v1326 = vadd.f32 %v1249, %v1314
        %v1327 = vadd.f32 %v1250, %v1315
        %v1328 = vadd.f32 %v1251, %v1316
        %1329 = vrot.lane.b32.xlu0 %v764, 127
        %v1330 = vpop.permute.xlu0 %1329
        %1331 = vrot.lane.b32.xlu0 %v768, 127
        %v1332 = vpop.permute.xlu0 %1331
        %1333 = vrot.lane.b32.xlu0 %v774, 127
        %v1334 = vpop.permute.xlu0 %1333
        %1335 = vrot.lane.b32.xlu0 %v778, 127
        %v1336 = vpop.permute.xlu0 %1335
        %1337 = vrot.lane.b32.xlu0 %v766, 127
        %v1338 = vpop.permute.xlu0 %1337
        %1339 = vrot.lane.b32.xlu0 %v770, 127
        %v1340 = vpop.permute.xlu0 %1339
        %1341 = vrot.lane.b32.xlu0 %v776, 127
        %v1342 = vpop.permute.xlu0 %1341
        %1343 = vrot.lane.b32.xlu0 %v780, 127
        %v1344 = vpop.permute.xlu0 %1343
        %1345 = vrot.lane.b32.xlu0 %v957, 127
        %v1346 = vpop.permute.xlu0 %1345
        %1347 = vrot.lane.b32.xlu0 %v960, 127
        %v1348 = vpop.permute.xlu0 %1347
        %1349 = vrot.lane.b32.xlu0 %v965, 127
        %v1350 = vpop.permute.xlu0 %1349
        %1351 = vrot.lane.b32.xlu0 %v968, 127
        %v1352 = vpop.permute.xlu0 %1351
        %vm1353 = vcmp.lt.s32.totalorder %v1044, 127
        %v1354 = vsel %vm1353, %v1338, %v1346
        %v1355 = vsel %vm1353, %v1340, %v1348
        %v1356 = vsel %vm1353, %v1342, %v1350
        %v1357 = vsel %vm1353, %v1344, %v1352
        %v1358 = vsel %vm1353, %v1330, %v1338
        %v1359 = vsel %vm1353, %v1332, %v1340
        %v1360 = vsel %vm1353, %v1334, %v1342
        %v1361 = vsel %vm1353, %v1336, %v1344
        %v1362 = vsel %vm1353, %v1346, %v1330
        %v1363 = vsel %vm1353, %v1348, %v1332
        %v1364 = vsel %vm1353, %v1350, %v1334
        %v1365 = vsel %vm1353, %v1352, %v1336
        %v1366 = vsel %vm431, 1, 0
        %v1367 = vlaneseq
        %v1368 = vshrl.u32 %v1367, 7
        %v1369 = vsub.s32 0, %v1368
        %v1370 = vrot.slane %v1366, %v1369
        %v1371 = vlaneseq
        %v1372 = vshrl.u32 %v1371, 7
        %v1373 = vsub.s32 1, %v1372
        %v1374 = vrot.slane %v1366, %v1373
        %v1375 = vlaneseq
        %v1376 = vshrl.u32 %v1375, 7
        %v1377 = vsub.s32 2, %v1376
        %v1378 = vrot.slane %v1366, %v1377
        %vm1379 = vcmp.eq.s32.totalorder %v1370, 1
        %vm1380 = vcmp.eq.s32.totalorder %v1374, 1
        %vm1381 = vcmp.eq.s32.totalorder %v1378, 1
        %v1382 = vsel %vm1379, %v1358, 0.0
        %v1383 = vsel %vm1380, %v1354, 0.0
        %v1384 = vsel %vm1381, %v1362, 0.0
        %v1385 = vsel %vm1379, %v1359, 0.0
        %v1386 = vsel %vm1380, %v1355, 0.0
        %v1387 = vsel %vm1381, %v1363, 0.0
        %v1388 = vsel %vm1379, %v1360, 0.0
        %v1389 = vsel %vm1380, %v1356, 0.0
        %v1390 = vsel %vm1381, %v1364, 0.0
        %v1391 = vsel %vm1379, %v1361, 0.0
        %v1392 = vsel %vm1380, %v1357, 0.0
        %v1393 = vsel %vm1381, %v1365, 0.0
        %v1394 = vadd.f32 %v1317, %v1382
        %v1395 = vadd.f32 %v1318, %v1383
        %v1396 = vadd.f32 %v1319, %v1384
        %v1397 = vadd.f32 %v1320, %v1385
        %v1398 = vadd.f32 %v1321, %v1386
        %v1399 = vadd.f32 %v1322, %v1387
        %v1400 = vadd.f32 %v1323, %v1388
        %v1401 = vadd.f32 %v1324, %v1389
        %v1402 = vadd.f32 %v1325, %v1390
        %v1403 = vadd.f32 %v1326, %v1391
        %v1404 = vadd.f32 %v1327, %v1392
        %v1405 = vadd.f32 %v1328, %v1393
        %1406 = vrot.lane.b32.xlu0 %v784, 113
        %v1407 = vpop.permute.xlu0 %1406
        %1408 = vrot.lane.b32.xlu0 %v788, 113
        %v1409 = vpop.permute.xlu0 %1408
        %1410 = vrot.lane.b32.xlu0 %v794, 113
        %v1411 = vpop.permute.xlu0 %1410
        %1412 = vrot.lane.b32.xlu0 %v798, 113
        %v1413 = vpop.permute.xlu0 %1412
        %1414 = vrot.lane.b32.xlu0 %v786, 113
        %v1415 = vpop.permute.xlu0 %1414
        %1416 = vrot.lane.b32.xlu0 %v790, 113
        %v1417 = vpop.permute.xlu0 %1416
        %1418 = vrot.lane.b32.xlu0 %v796, 113
        %v1419 = vpop.permute.xlu0 %1418
        %1420 = vrot.lane.b32.xlu0 %v800, 113
        %v1421 = vpop.permute.xlu0 %1420
        %1422 = vrot.lane.b32.xlu0 %v973, 113
        %v1423 = vpop.permute.xlu0 %1422
        %1424 = vrot.lane.b32.xlu0 %v976, 113
        %v1425 = vpop.permute.xlu0 %1424
        %1426 = vrot.lane.b32.xlu0 %v981, 113
        %v1427 = vpop.permute.xlu0 %1426
        %1428 = vrot.lane.b32.xlu0 %v984, 113
        %v1429 = vpop.permute.xlu0 %1428
        %vm1430 = vcmp.lt.s32.totalorder %v1044, 113
        %v1431 = vsel %vm1430, %v1415, %v1423
        %v1432 = vsel %vm1430, %v1417, %v1425
        %v1433 = vsel %vm1430, %v1419, %v1427
        %v1434 = vsel %vm1430, %v1421, %v1429
        %v1435 = vsel %vm1430, %v1407, %v1415
        %v1436 = vsel %vm1430, %v1409, %v1417
        %v1437 = vsel %vm1430, %v1411, %v1419
        %v1438 = vsel %vm1430, %v1413, %v1421
        %v1439 = vsel %vm1430, %v1423, %v1407
        %v1440 = vsel %vm1430, %v1425, %v1409
        %v1441 = vsel %vm1430, %v1427, %v1411
        %v1442 = vsel %vm1430, %v1429, %v1413
        %v1443 = vsel %vm434, 1, 0
        %v1444 = vlaneseq
        %v1445 = vshrl.u32 %v1444, 7
        %v1446 = vsub.s32 0, %v1445
        %v1447 = vrot.slane %v1443, %v1446
        %v1448 = vlaneseq
        %v1449 = vshrl.u32 %v1448, 7
        %v1450 = vsub.s32 1, %v1449
        %v1451 = vrot.slane %v1443, %v1450
        %v1452 = vlaneseq
        %v1453 = vshrl.u32 %v1452, 7
        %v1454 = vsub.s32 2, %v1453
        %v1455 = vrot.slane %v1443, %v1454
        %vm1456 = vcmp.eq.s32.totalorder %v1447, 1
        %vm1457 = vcmp.eq.s32.totalorder %v1451, 1
        %vm1458 = vcmp.eq.s32.totalorder %v1455, 1
        %v1459 = vsel %vm1456, %v1435, 0.0
        %v1460 = vsel %vm1457, %v1431, 0.0
        %v1461 = vsel %vm1458, %v1439, 0.0
        %v1462 = vsel %vm1456, %v1436, 0.0
        %v1463 = vsel %vm1457, %v1432, 0.0
        %v1464 = vsel %vm1458, %v1440, 0.0
        %v1465 = vsel %vm1456, %v1437, 0.0
        %v1466 = vsel %vm1457, %v1433, 0.0
        %v1467 = vsel %vm1458, %v1441, 0.0
        %v1468 = vsel %vm1456, %v1438, 0.0
        %v1469 = vsel %vm1457, %v1434, 0.0
        %v1470 = vsel %vm1458, %v1442, 0.0
        %v1471 = vadd.f32 %v1394, %v1459
        %v1472 = vadd.f32 %v1395, %v1460
        %v1473 = vadd.f32 %v1396, %v1461
        %v1474 = vadd.f32 %v1397, %v1462
        %v1475 = vadd.f32 %v1398, %v1463
        %v1476 = vadd.f32 %v1399, %v1464
        %v1477 = vadd.f32 %v1400, %v1465
        %v1478 = vadd.f32 %v1401, %v1466
        %v1479 = vadd.f32 %v1402, %v1467
        %v1480 = vadd.f32 %v1403, %v1468
        %v1481 = vadd.f32 %v1404, %v1469
        %v1482 = vadd.f32 %v1405, %v1470
        %1483 = vrot.lane.b32.xlu0 %v804, 112
        %v1484 = vpop.permute.xlu0 %1483
        %1485 = vrot.lane.b32.xlu0 %v808, 112
        %v1486 = vpop.permute.xlu0 %1485
        %1487 = vrot.lane.b32.xlu0 %v814, 112
        %v1488 = vpop.permute.xlu0 %1487
        %1489 = vrot.lane.b32.xlu0 %v818, 112
        %v1490 = vpop.permute.xlu0 %1489
        %1491 = vrot.lane.b32.xlu0 %v806, 112
        %v1492 = vpop.permute.xlu0 %1491
        %1493 = vrot.lane.b32.xlu0 %v810, 112
        %v1494 = vpop.permute.xlu0 %1493
        %1495 = vrot.lane.b32.xlu0 %v816, 112
        %v1496 = vpop.permute.xlu0 %1495
        %1497 = vrot.lane.b32.xlu0 %v820, 112
        %v1498 = vpop.permute.xlu0 %1497
        %1499 = vrot.lane.b32.xlu0 %v989, 112
        %v1500 = vpop.permute.xlu0 %1499
        %1501 = vrot.lane.b32.xlu0 %v992, 112
        %v1502 = vpop.permute.xlu0 %1501
        %1503 = vrot.lane.b32.xlu0 %v997, 112
        %v1504 = vpop.permute.xlu0 %1503
        %1505 = vrot.lane.b32.xlu0 %v1000, 112
        %v1506 = vpop.permute.xlu0 %1505
        %vm1507 = vcmp.lt.s32.totalorder %v1044, 112
        %v1508 = vsel %vm1507, %v1492, %v1500
        %v1509 = vsel %vm1507, %v1494, %v1502
        %v1510 = vsel %vm1507, %v1496, %v1504
        %v1511 = vsel %vm1507, %v1498, %v1506
        %v1512 = vsel %vm1507, %v1484, %v1492
        %v1513 = vsel %vm1507, %v1486, %v1494
        %v1514 = vsel %vm1507, %v1488, %v1496
        %v1515 = vsel %vm1507, %v1490, %v1498
        %v1516 = vsel %vm1507, %v1500, %v1484
        %v1517 = vsel %vm1507, %v1502, %v1486
        %v1518 = vsel %vm1507, %v1504, %v1488
        %v1519 = vsel %vm1507, %v1506, %v1490
        %v1520 = vsel %vm429, 1, 0
        %v1521 = vlaneseq
        %v1522 = vshrl.u32 %v1521, 7
        %v1523 = vsub.s32 0, %v1522
        %v1524 = vrot.slane %v1520, %v1523
        %v1525 = vlaneseq
        %v1526 = vshrl.u32 %v1525, 7
        %v1527 = vsub.s32 1, %v1526
        %v1528 = vrot.slane %v1520, %v1527
        %v1529 = vlaneseq
        %v1530 = vshrl.u32 %v1529, 7
        %v1531 = vsub.s32 2, %v1530
        %v1532 = vrot.slane %v1520, %v1531
        %vm1533 = vcmp.eq.s32.totalorder %v1524, 1
        %vm1534 = vcmp.eq.s32.totalorder %v1528, 1
        %vm1535 = vcmp.eq.s32.totalorder %v1532, 1
        %v1536 = vsel %vm1533, %v1512, 0.0
        %v1537 = vsel %vm1534, %v1508, 0.0
        %v1538 = vsel %vm1535, %v1516, 0.0
        %v1539 = vsel %vm1533, %v1513, 0.0
        %v1540 = vsel %vm1534, %v1509, 0.0
        %v1541 = vsel %vm1535, %v1517, 0.0
        %v1542 = vsel %vm1533, %v1514, 0.0
        %v1543 = vsel %vm1534, %v1510, 0.0
        %v1544 = vsel %vm1535, %v1518, 0.0
        %v1545 = vsel %vm1533, %v1515, 0.0
        %v1546 = vsel %vm1534, %v1511, 0.0
        %v1547 = vsel %vm1535, %v1519, 0.0
        %v1548 = vadd.f32 %v1471, %v1536
        %v1549 = vadd.f32 %v1472, %v1537
        %v1550 = vadd.f32 %v1473, %v1538
        %v1551 = vadd.f32 %v1474, %v1539
        %v1552 = vadd.f32 %v1475, %v1540
        %v1553 = vadd.f32 %v1476, %v1541
        %v1554 = vadd.f32 %v1477, %v1542
        %v1555 = vadd.f32 %v1478, %v1543
        %v1556 = vadd.f32 %v1479, %v1544
        %v1557 = vadd.f32 %v1480, %v1545
        %v1558 = vadd.f32 %v1481, %v1546
        %v1559 = vadd.f32 %v1482, %v1547
        %1560 = vrot.lane.b32.xlu0 %v824, 111
        %v1561 = vpop.permute.xlu0 %1560
        %1562 = vrot.lane.b32.xlu0 %v828, 111
        %v1563 = vpop.permute.xlu0 %1562
        %1564 = vrot.lane.b32.xlu0 %v834, 111
        %v1565 = vpop.permute.xlu0 %1564
        %1566 = vrot.lane.b32.xlu0 %v838, 111
        %v1567 = vpop.permute.xlu0 %1566
        %1568 = vrot.lane.b32.xlu0 %v826, 111
        %v1569 = vpop.permute.xlu0 %1568
        %1570 = vrot.lane.b32.xlu0 %v830, 111
        %v1571 = vpop.permute.xlu0 %1570
        %1572 = vrot.lane.b32.xlu0 %v836, 111
        %v1573 = vpop.permute.xlu0 %1572
        %1574 = vrot.lane.b32.xlu0 %v840, 111
        %v1575 = vpop.permute.xlu0 %1574
        %1576 = vrot.lane.b32.xlu0 %v1005, 111
        %v1577 = vpop.permute.xlu0 %1576
        %1578 = vrot.lane.b32.xlu0 %v1008, 111
        %v1579 = vpop.permute.xlu0 %1578
        %1580 = vrot.lane.b32.xlu0 %v1013, 111
        %v1581 = vpop.permute.xlu0 %1580
        %1582 = vrot.lane.b32.xlu0 %v1016, 111
        %v1583 = vpop.permute.xlu0 %1582
        %vm1584 = vcmp.lt.s32.totalorder %v1044, 111
        %v1585 = vsel %vm1584, %v1569, %v1577
        %v1586 = vsel %vm1584, %v1571, %v1579
        %v1587 = vsel %vm1584, %v1573, %v1581
        %v1588 = vsel %vm1584, %v1575, %v1583
        %v1589 = vsel %vm1584, %v1561, %v1569
        %v1590 = vsel %vm1584, %v1563, %v1571
        %v1591 = vsel %vm1584, %v1565, %v1573
        %v1592 = vsel %vm1584, %v1567, %v1575
        %v1593 = vsel %vm1584, %v1577, %v1561
        %v1594 = vsel %vm1584, %v1579, %v1563
        %v1595 = vsel %vm1584, %v1581, %v1565
        %v1596 = vsel %vm1584, %v1583, %v1567
        %v1597 = vsel %vm435, 1, 0
        %v1598 = vlaneseq
        %v1599 = vshrl.u32 %v1598, 7
        %v1600 = vsub.s32 0, %v1599
        %v1601 = vrot.slane %v1597, %v1600
        %v1602 = vlaneseq
        %v1603 = vshrl.u32 %v1602, 7
        %v1604 = vsub.s32 1, %v1603
        %v1605 = vrot.slane %v1597, %v1604
        %v1606 = vlaneseq
        %v1607 = vshrl.u32 %v1606, 7
        %v1608 = vsub.s32 2, %v1607
        %v1609 = vrot.slane %v1597, %v1608
        %vm1610 = vcmp.eq.s32.totalorder %v1601, 1
        %vm1611 = vcmp.eq.s32.totalorder %v1605, 1
        %vm1612 = vcmp.eq.s32.totalorder %v1609, 1
        %v1613 = vsel %vm1610, %v1589, 0.0
        %v1614 = vsel %vm1611, %v1585, 0.0
        %v1615 = vsel %vm1612, %v1593, 0.0
        %v1616 = vsel %vm1610, %v1590, 0.0
        %v1617 = vsel %vm1611, %v1586, 0.0
        %v1618 = vsel %vm1612, %v1594, 0.0
        %v1619 = vsel %vm1610, %v1591, 0.0
        %v1620 = vsel %vm1611, %v1587, 0.0
        %v1621 = vsel %vm1612, %v1595, 0.0
        %v1622 = vsel %vm1610, %v1592, 0.0
        %v1623 = vsel %vm1611, %v1588, 0.0
        %v1624 = vsel %vm1612, %v1596, 0.0
        %v1625 = vadd.f32 %v1548, %v1613
        %v1626 = vadd.f32 %v1549, %v1614
        %v1627 = vadd.f32 %v1550, %v1615
        %v1628 = vadd.f32 %v1551, %v1616
        %v1629 = vadd.f32 %v1552, %v1617
        %v1630 = vadd.f32 %v1553, %v1618
        %v1631 = vadd.f32 %v1554, %v1619
        %v1632 = vadd.f32 %v1555, %v1620
        %v1633 = vadd.f32 %v1556, %v1621
        %v1634 = vadd.f32 %v1557, %v1622
        %v1635 = vadd.f32 %v1558, %v1623
        %v1636 = vadd.f32 %v1559, %v1624
        %v1637 = vld [vmem:[%s7] sm:$0xff]
        %v1638 = vld [vmem:[%s7 + $0x8] sm:$0xff]
        %v1639 = vld [vmem:[%s7 + $0x10] sm:$0xff]
        %v1640 = vld [vmem:[%s7 + $0x18] sm:$0xff]
        %1642 = vset.pattern.permute.xlu0 0
        %1643 = vperm.xlu0 %1642, %v1637
        %v1644 = vpop.permute.xlu0 %1643
        %1647 = vset.pattern.permute.xlu0 0
        %1648 = vperm.xlu0 %1647, %v1638
        %v1649 = vpop.permute.xlu0 %1648
        %1652 = vset.pattern.permute.xlu0 0
        %1653 = vperm.xlu0 %1652, %v1639
        %v1654 = vpop.permute.xlu0 %1653
        %1657 = vset.pattern.permute.xlu0 0
        %1658 = vperm.xlu0 %1657, %v1640
        %v1659 = vpop.permute.xlu0 %1658
        %v1661 = vadd.f32 %v1625, %v1644
        %v1662 = vadd.f32 %v1626, %v1644
        %v1663 = vadd.f32 %v1627, %v1644
        %v1664 = vadd.f32 %v1628, %v1649
        %v1665 = vadd.f32 %v1629, %v1649
        %v1666 = vadd.f32 %v1630, %v1649
        %v1667 = vadd.f32 %v1631, %v1654
        %v1668 = vadd.f32 %v1632, %v1654
        %v1669 = vadd.f32 %v1633, %v1654
        %v1670 = vadd.f32 %v1634, %v1659
        %v1671 = vadd.f32 %v1635, %v1659
        %v1672 = vadd.f32 %v1636, %v1659
        %vm1673 = vcmp.ge.f32.partialorder %v1661, 0.0
        %vm1674 = vcmp.ge.f32.partialorder %v1662, 0.0
        %vm1675 = vcmp.ge.f32.partialorder %v1663, 0.0
        %vm1676 = vcmp.ge.f32.partialorder %v1664, 0.0
        %vm1677 = vcmp.ge.f32.partialorder %v1665, 0.0
        %vm1678 = vcmp.ge.f32.partialorder %v1666, 0.0
        %vm1679 = vcmp.ge.f32.partialorder %v1667, 0.0
        %vm1680 = vcmp.ge.f32.partialorder %v1668, 0.0
        %vm1681 = vcmp.ge.f32.partialorder %v1669, 0.0
        %vm1682 = vcmp.ge.f32.partialorder %v1670, 0.0
        %vm1683 = vcmp.ge.f32.partialorder %v1671, 0.0
        %vm1684 = vcmp.ge.f32.partialorder %v1672, 0.0
        %v1685 = vmul.f32 %v1661, 0.01
        %v1686 = vmul.f32 %v1662, 0.01
        %v1687 = vmul.f32 %v1663, 0.01
        %v1688 = vmul.f32 %v1664, 0.01
        %v1689 = vmul.f32 %v1665, 0.01
        %v1690 = vmul.f32 %v1666, 0.01
        %v1691 = vmul.f32 %v1667, 0.01
        %v1692 = vmul.f32 %v1668, 0.01
        %v1693 = vmul.f32 %v1669, 0.01
        %v1694 = vmul.f32 %v1670, 0.01
        %v1695 = vmul.f32 %v1671, 0.01
        %v1696 = vmul.f32 %v1672, 0.01
        %v1697 = vsel %vm1673, %v1661, %v1685
        %v1698 = vsel %vm1674, %v1662, %v1686
        %v1699 = vsel %vm1675, %v1663, %v1687
        %v1700 = vsel %vm1676, %v1664, %v1688
        %v1701 = vsel %vm1677, %v1665, %v1689
        %v1702 = vsel %vm1678, %v1666, %v1690
        %v1703 = vsel %vm1679, %v1667, %v1691
        %v1704 = vsel %vm1680, %v1668, %v1692
        %v1705 = vsel %vm1681, %v1669, %v1693
        %v1706 = vsel %vm1682, %v1670, %v1694
        %v1707 = vsel %vm1683, %v1671, %v1695
        %v1708 = vsel %vm1684, %v1672, %v1696
        %v1709 = vpack.c.bf16 %v1700, %v1697
        %v1710 = vpack.c.bf16 %v1701, %v1698
        %v1711 = vpack.c.bf16 %v1702, %v1699
        %v1712 = vpack.c.bf16 %v1706, %v1703
        %v1713 = vpack.c.bf16 %v1707, %v1704
        %v1714 = vpack.c.bf16 %v1708, %v1705
        %1715 = vst [vmem:[#allocation2 + $0x60] sm:$0xff] %v1709
        %1716 = vst [vmem:[#allocation2 + $0x68] sm:$0xff] %v1710
        %1717 = vst [vmem:[#allocation2 + $0x70] sm:$0xff] %v1711
        %1718 = vst [vmem:[#allocation2 + $0x78] sm:$0xff] %v1712
        %1719 = vst [vmem:[#allocation2 + $0x80] sm:$0xff] %v1713
        %1720 = vst [vmem:[#allocation2 + $0x88] sm:$0xff] %v1714
        %v1721 = vld [vmem:[#allocation2] sm:$0xff]
        %v1722 = vld [vmem:[#allocation2 + $0x8] sm:$0xff]
        %v1723 = vld [vmem:[#allocation2 + $0x10] sm:$0xff]
        %v1724 = vld [vmem:[#allocation2 + $0x18] sm:$0xff]
        %v1725 = vld [vmem:[#allocation2 + $0x20] sm:$0xff]
        %v1726 = vld [vmem:[#allocation2 + $0x28] sm:$0xff]
        %v1727 = vld [vmem:[#allocation2 + $0x30] sm:$0xff]
        %v1728 = vld [vmem:[#allocation2 + $0x38] sm:$0xff]
        %v1729 = vld [vmem:[#allocation2 + $0x40] sm:$0xff]
        %v1730 = vld [vmem:[#allocation2 + $0x48] sm:$0xff]
        %v1731 = vld [vmem:[#allocation2 + $0x50] sm:$0xff]
        %v1732 = vld [vmem:[#allocation2 + $0x58] sm:$0xff]
        %v1733 = vld [vmem:[#allocation2 + $0x60] sm:$0xff]
        %v1734 = vld [vmem:[#allocation2 + $0x68] sm:$0xff]
        %v1735 = vld [vmem:[#allocation2 + $0x70] sm:$0xff]
        %v1736 = vld [vmem:[#allocation2 + $0x78] sm:$0xff]
        %v1737 = vld [vmem:[#allocation2 + $0x80] sm:$0xff]
        %v1738 = vld [vmem:[#allocation2 + $0x88] sm:$0xff]
        %v1739 = vld [vmem:[%s3] sm:$0xf]
        %v1740 = vld [vmem:[%s3 + $0x4] sm:$0xf]
        %v1741 = vld [vmem:[%s3 + $0x8] sm:$0xf]
        %v1742 = vld [vmem:[%s3 + $0xc] sm:$0xf]
        %v1743 = vld [vmem:[%s3 + $0x10] sm:$0xf]
        %v1744 = vld [vmem:[%s3 + $0x14] sm:$0xf]
        %v1745 = vld [vmem:[%s3 + $0x18] sm:$0xf]
        %v1746 = vld [vmem:[%s3 + $0x1c] sm:$0xf]
        %v1747 = vld [vmem:[%s3 + $0x20] sm:$0xf]
        %v1748 = vld [vmem:[%s3 + $0x24] sm:$0xf]
        %v1749 = vld [vmem:[%s3 + $0x28] sm:$0xf]
        %v1750 = vld [vmem:[%s3 + $0x2c] sm:$0xf]
        %v1751 = vld [vmem:[%s3 + $0x30] sm:$0xf]
        %v1752 = vld [vmem:[%s3 + $0x34] sm:$0xf]
        %v1753 = vld [vmem:[%s3 + $0x38] sm:$0xf]
        %v1754 = vld [vmem:[%s3 + $0x3c] sm:$0xf]
        %v1755 = vld [vmem:[%s3 + $0x40] sm:$0xf]
        %v1756 = vld [vmem:[%s3 + $0x44] sm:$0xf]
        %v1757 = vld [vmem:[%s3 + $0x48] sm:$0xf]
        %v1758 = vld [vmem:[%s3 + $0x4c] sm:$0xf]
        %v1759 = vld [vmem:[%s3 + $0x50] sm:$0xf]
        %v1760 = vld [vmem:[%s3 + $0x54] sm:$0xf]
        %v1761 = vld [vmem:[%s3 + $0x58] sm:$0xf]
        %v1762 = vld [vmem:[%s3 + $0x5c] sm:$0xf]
        %v1763 = vld [vmem:[%s3 + $0x60] sm:$0xf]
        %v1764 = vld [vmem:[%s3 + $0x64] sm:$0xf]
        %v1765 = vld [vmem:[%s3 + $0x68] sm:$0xf]
        %v1766 = vld [vmem:[%s3 + $0x6c] sm:$0xf]
        %v1767 = vld [vmem:[%s3 + $0x70] sm:$0xf]
        %v1768 = vld [vmem:[%s3 + $0x74] sm:$0xf]
        %v1769 = vld [vmem:[%s3 + $0x78] sm:$0xf]
        %v1770 = vld [vmem:[%s3 + $0x7c] sm:$0xf]
        %v1771 = vld [vmem:[%s3 + $0x80] sm:$0xf]
        %v1772 = vld [vmem:[%s3 + $0x84] sm:$0xf]
        %v1773 = vld [vmem:[%s3 + $0x88] sm:$0xf]
        %v1774 = vld [vmem:[%s3 + $0x8c] sm:$0xf]
        %v1811 = vunpack.c.l.b16 %v1739
        %v1812 = vunpack.c.l.b16 %v1740
        %v1813 = vunpack.c.l.b16 %v1741
        %v1814 = vunpack.c.l.b16 %v1742
        %v1815 = vunpack.c.l.b16 %v1743
        %v1816 = vunpack.c.l.b16 %v1744
        %v1817 = vunpack.c.l.b16 %v1745
        %v1818 = vunpack.c.l.b16 %v1746
        %v1819 = vunpack.c.l.b16 %v1747
        %v1820 = vunpack.c.l.b16 %v1748
        %v1821 = vunpack.c.l.b16 %v1749
        %v1822 = vunpack.c.l.b16 %v1750
        %v1823 = vunpack.c.l.b16 %v1751
        %v1824 = vunpack.c.l.b16 %v1752
        %v1825 = vunpack.c.l.b16 %v1753
        %v1826 = vunpack.c.l.b16 %v1754
        %v1827 = vunpack.c.l.b16 %v1755
        %v1828 = vunpack.c.l.b16 %v1756
        %v1829 = vunpack.c.l.b16 %v1757
        %v1830 = vunpack.c.l.b16 %v1758
        %v1831 = vunpack.c.l.b16 %v1759
        %v1832 = vunpack.c.l.b16 %v1760
        %v1833 = vunpack.c.l.b16 %v1761
        %v1834 = vunpack.c.l.b16 %v1762
        %v1835 = vunpack.c.l.b16 %v1763
        %v1836 = vunpack.c.l.b16 %v1764
        %v1837 = vunpack.c.l.b16 %v1765
        %v1838 = vunpack.c.l.b16 %v1766
        %v1839 = vunpack.c.l.b16 %v1767
        %v1840 = vunpack.c.l.b16 %v1768
        %v1841 = vunpack.c.l.b16 %v1769
        %v1842 = vunpack.c.l.b16 %v1770
        %v1843 = vunpack.c.l.b16 %v1771
        %v1844 = vunpack.c.l.b16 %v1772
        %v1845 = vunpack.c.l.b16 %v1773
        %v1846 = vunpack.c.l.b16 %v1774
        %v1847 = vpack.c.b16 %v1812, %v1811
        %v1848 = vpack.c.b16 %v1814, %v1813
        %v1849 = vpack.c.b16 %v1816, %v1815
        %v1850 = vpack.c.b16 %v1818, %v1817
        %v1851 = vpack.c.b16 %v1820, %v1819
        %v1852 = vpack.c.b16 %v1822, %v1821
        %v1853 = vpack.c.b16 %v1824, %v1823
        %v1854 = vpack.c.b16 %v1826, %v1825
        %v1855 = vpack.c.b16 %v1828, %v1827
        %v1856 = vpack.c.b16 %v1830, %v1829
        %v1857 = vpack.c.b16 %v1832, %v1831
        %v1858 = vpack.c.b16 %v1834, %v1833
        %v1859 = vpack.c.b16 %v1836, %v1835
        %v1860 = vpack.c.b16 %v1838, %v1837
        %v1861 = vpack.c.b16 %v1840, %v1839
        %v1862 = vpack.c.b16 %v1842, %v1841
        %v1863 = vpack.c.b16 %v1844, %v1843
        %v1864 = vpack.c.b16 %v1846, %v1845
        %vm1865 = vcmask 785408
        %v1867 = vsel %vm1865, %v1847, 0
        %v1870 = vsel %vm1865, %v1848, 0
        %v1873 = vsel %vm1865, %v1849, 0
        %v1876 = vsel %vm1865, %v1850, 0
        %v1879 = vsel %vm1865, %v1851, 0
        %v1882 = vsel %vm1865, %v1852, 0
        %v1885 = vsel %vm1865, %v1853, 0
        %v1888 = vsel %vm1865, %v1854, 0
        %v1891 = vsel %vm1865, %v1855, 0
        %v1894 = vsel %vm1865, %v1856, 0
        %v1897 = vsel %vm1865, %v1857, 0
        %v1900 = vsel %vm1865, %v1858, 0
        %v1903 = vsel %vm1865, %v1859, 0
        %v1906 = vsel %vm1865, %v1860, 0
        %v1909 = vsel %vm1865, %v1861, 0
        %v1912 = vsel %vm1865, %v1862, 0
        %v1915 = vsel %vm1865, %v1863, 0
        %v1918 = vsel %vm1865, %v1864, 0
        %1920 = vmatprep.subr.bf16.mxu0 %v1722
        %1921 = vmatpush1.bf16.msra.mxu0 %v1721
        %1922 = vmatprep.subr.bf16.mxu0 %v1725
        %1923 = vmatpush1.bf16.msra.mxu0 %v1724
        %1924 = vmatprep.subr.bf16.mxu0 %v1728
        %1925 = vmatpush1.bf16.msra.mxu0 %v1727
        %1926 = vmatprep.subr.bf16.mxu0 %v1731
        %1927 = vmatpush1.bf16.msra.mxu0 %v1730
        %1928 = vmatprep.subr.bf16.mxu0 %v1734
        %1929 = vmatpush1.bf16.msra.mxu0 %v1733
        %1930 = vmatprep.subr.bf16.mxu0 %v1737
        %1931 = vmatpush1.bf16.msra.mxu0 %v1736
        %1932 = vmatprep.subr.bf16.mxu0 0
        %1933 = vmatpush1.bf16.msra.mxu0 0
        %1934 = vmatprep.subr.bf16.mxu0 0
        %1935 = vmatpush1.bf16.msra.mxu0 0
        %1936 = vmatprep.subr.bf16.mxu0 0
        %1937 = vmatpush1.bf16.msra.mxu0 0
        %1938 = vmatprep.subr.bf16.mxu0 0
        %1939 = vmatpush1.bf16.msra.mxu0 0
        %1940 = vmatprep.subr.bf16.mxu0 0
        %1941 = vmatpush1.bf16.msra.mxu0 0
        %1942 = vmatprep.subr.bf16.mxu0 0
        %1943 = vmatpush1.bf16.msra.mxu0 0
        %1944 = vmatprep.subr.bf16.mxu0 0
        %1945 = vmatpush1.bf16.msra.mxu0 0
        %1946 = vmatprep.subr.bf16.mxu0 0
        %1947 = vmatpush1.bf16.msra.mxu0 0
        %1948 = vmatprep.subr.bf16.mxu0 0
        %1949 = vmatpush1.bf16.msra.mxu0 0
        %1950 = vmatprep.subr.bf16.mxu0 0
        %1951 = vmatpush1.bf16.msra.mxu0 0
        %1952 = vmatprep.mubr.bf16.mxu0 0
        %1953 = vmatmul.mubr.bf16.gmra.mrb[0].mxu0 %v1867
        %v1954 = vpop.f32.mrb[0].mxu0
        %v1955 = vadd.f32 0.0, %v1954
        %v1956 = vpop.f32.mrb[0].mxu0
        %v1957 = vadd.f32 0.0, %v1956
        %v1958 = vpop.f32.mrb[0].mxu0
        %v1959 = vadd.f32 0.0, %v1958
        %v1960 = vpop.f32.mrb[0].mxu0
        %v1961 = vadd.f32 0.0, %v1960
        %1962 = vmatprep.mubr.bf16.mxu0 0
        %1963 = vmatmul.mubr.bf16.gmra.mrb[0].mxu0 %v1870
        %v1964 = vpop.f32.mrb[0].mxu0
        %v1965 = vadd.f32 0.0, %v1964
        %v1966 = vpop.f32.mrb[0].mxu0
        %v1967 = vadd.f32 0.0, %v1966
        %v1968 = vpop.f32.mrb[0].mxu0
        %v1969 = vadd.f32 0.0, %v1968
        %v1970 = vpop.f32.mrb[0].mxu0
        %v1971 = vadd.f32 0.0, %v1970
        %1972 = vmatprep.mubr.bf16.mxu0 0
        %1973 = vmatmul.mubr.bf16.gmra.mrb[0].mxu0 %v1873
        %v1974 = vpop.f32.mrb[0].mxu0
        %v1975 = vadd.f32 0.0, %v1974
        %v1976 = vpop.f32.mrb[0].mxu0
        %v1977 = vadd.f32 0.0, %v1976
        %v1978 = vpop.f32.mrb[0].mxu0
        %v1979 = vadd.f32 0.0, %v1978
        %v1980 = vpop.f32.mrb[0].mxu0
        %v1981 = vadd.f32 0.0, %v1980
        %1982 = vmatprep.mubr.bf16.mxu0 0
        %1983 = vmatmul.mubr.bf16.gmra.mrb[0].mxu0 %v1876
        %v1984 = vpop.f32.mrb[0].mxu0
        %v1985 = vadd.f32 0.0, %v1984
        %v1986 = vpop.f32.mrb[0].mxu0
        %v1987 = vadd.f32 0.0, %v1986
        %v1988 = vpop.f32.mrb[0].mxu0
        %v1989 = vadd.f32 0.0, %v1988
        %v1990 = vpop.f32.mrb[0].mxu0
        %v1991 = vadd.f32 0.0, %v1990
        %1992 = vmatprep.mubr.bf16.mxu0 0
        %1993 = vmatmul.mubr.bf16.gmra.mrb[0].mxu0 %v1879
        %v1994 = vpop.f32.mrb[0].mxu0
        %v1995 = vadd.f32 0.0, %v1994
        %v1996 = vpop.f32.mrb[0].mxu0
        %v1997 = vadd.f32 0.0, %v1996
        %v1998 = vpop.f32.mrb[0].mxu0
        %v1999 = vadd.f32 0.0, %v1998
        %v2000 = vpop.f32.mrb[0].mxu0
        %v2001 = vadd.f32 0.0, %v2000
        %2002 = vmatprep.mubr.bf16.mxu0 0
        %2003 = vmatmul.mubr.bf16.gmra.mrb[0].mxu0 %v1882
        %v2004 = vpop.f32.mrb[0].mxu0
        %v2005 = vadd.f32 0.0, %v2004
        %v2006 = vpop.f32.mrb[0].mxu0
        %v2007 = vadd.f32 0.0, %v2006
        %v2008 = vpop.f32.mrb[0].mxu0
        %v2009 = vadd.f32 0.0, %v2008
        %v2010 = vpop.f32.mrb[0].mxu0
        %v2011 = vadd.f32 0.0, %v2010
        %2012 = vmatprep.mubr.bf16.mxu0 0
        %2013 = vmatmul.mubr.bf16.gmra.mrb[0].mxu0 %v1885
        %v2014 = vpop.f32.mrb[0].mxu0
        %v2015 = vadd.f32 0.0, %v2014
        %v2016 = vpop.f32.mrb[0].mxu0
        %v2017 = vadd.f32 0.0, %v2016
        %v2018 = vpop.f32.mrb[0].mxu0
        %v2019 = vadd.f32 0.0, %v2018
        %v2020 = vpop.f32.mrb[0].mxu0
        %v2021 = vadd.f32 0.0, %v2020
        %2022 = vmatprep.mubr.bf16.mxu0 0
        %2023 = vmatmul.mubr.bf16.gmra.mrb[0].mxu0 %v1888
        %v2024 = vpop.f32.mrb[0].mxu0
        %v2025 = vadd.f32 0.0, %v2024
        %v2026 = vpop.f32.mrb[0].mxu0
        %v2027 = vadd.f32 0.0, %v2026
        %v2028 = vpop.f32.mrb[0].mxu0
        %v2029 = vadd.f32 0.0, %v2028
        %v2030 = vpop.f32.mrb[0].mxu0
        %v2031 = vadd.f32 0.0, %v2030
        %2032 = vmatprep.mubr.bf16.mxu0 0
        %2033 = vmatmul.mubr.bf16.gmra.mrb[0].mxu0 %v1891
        %v2034 = vpop.f32.mrb[0].mxu0
        %v2035 = vadd.f32 0.0, %v2034
        %v2036 = vpop.f32.mrb[0].mxu0
        %v2037 = vadd.f32 0.0, %v2036
        %v2038 = vpop.f32.mrb[0].mxu0
        %v2039 = vadd.f32 0.0, %v2038
        %v2040 = vpop.f32.mrb[0].mxu0
        %v2041 = vadd.f32 0.0, %v2040
        %2042 = vmatprep.mubr.bf16.mxu0 0
        %2043 = vmatmul.mubr.bf16.gmra.mrb[0].mxu0 %v1894
        %v2044 = vpop.f32.mrb[0].mxu0
        %v2045 = vadd.f32 0.0, %v2044
        %v2046 = vpop.f32.mrb[0].mxu0
        %v2047 = vadd.f32 0.0, %v2046
        %v2048 = vpop.f32.mrb[0].mxu0
        %v2049 = vadd.f32 0.0, %v2048
        %v2050 = vpop.f32.mrb[0].mxu0
        %v2051 = vadd.f32 0.0, %v2050
        %2052 = vmatprep.mubr.bf16.mxu0 0
        %2053 = vmatmul.mubr.bf16.gmra.mrb[0].mxu0 %v1897
        %v2054 = vpop.f32.mrb[0].mxu0
        %v2055 = vadd.f32 0.0, %v2054
        %v2056 = vpop.f32.mrb[0].mxu0
        %v2057 = vadd.f32 0.0, %v2056
        %v2058 = vpop.f32.mrb[0].mxu0
        %v2059 = vadd.f32 0.0, %v2058
        %v2060 = vpop.f32.mrb[0].mxu0
        %v2061 = vadd.f32 0.0, %v2060
        %2062 = vmatprep.mubr.bf16.mxu0 0
        %2063 = vmatmul.mubr.bf16.gmra.mrb[0].mxu0 %v1900
        %v2064 = vpop.f32.mrb[0].mxu0
        %v2065 = vadd.f32 0.0, %v2064
        %v2066 = vpop.f32.mrb[0].mxu0
        %v2067 = vadd.f32 0.0, %v2066
        %v2068 = vpop.f32.mrb[0].mxu0
        %v2069 = vadd.f32 0.0, %v2068
        %v2070 = vpop.f32.mrb[0].mxu0
        %v2071 = vadd.f32 0.0, %v2070
        %2072 = vmatprep.mubr.bf16.mxu0 0
        %2073 = vmatmul.mubr.bf16.gmra.mrb[0].mxu0 %v1903
        %v2074 = vpop.f32.mrb[0].mxu0
        %v2075 = vadd.f32 0.0, %v2074
        %v2076 = vpop.f32.mrb[0].mxu0
        %v2077 = vadd.f32 0.0, %v2076
        %v2078 = vpop.f32.mrb[0].mxu0
        %v2079 = vadd.f32 0.0, %v2078
        %v2080 = vpop.f32.mrb[0].mxu0
        %v2081 = vadd.f32 0.0, %v2080
        %2082 = vmatprep.mubr.bf16.mxu0 0
        %2083 = vmatmul.mubr.bf16.gmra.mrb[0].mxu0 %v1906
        %v2084 = vpop.f32.mrb[0].mxu0
        %v2085 = vadd.f32 0.0, %v2084
        %v2086 = vpop.f32.mrb[0].mxu0
        %v2087 = vadd.f32 0.0, %v2086
        %v2088 = vpop.f32.mrb[0].mxu0
        %v2089 = vadd.f32 0.0, %v2088
        %v2090 = vpop.f32.mrb[0].mxu0
        %v2091 = vadd.f32 0.0, %v2090
        %2092 = vmatprep.mubr.bf16.mxu0 0
        %2093 = vmatmul.mubr.bf16.gmra.mrb[0].mxu0 %v1909
        %v2094 = vpop.f32.mrb[0].mxu0
        %v2095 = vadd.f32 0.0, %v2094
        %v2096 = vpop.f32.mrb[0].mxu0
        %v2097 = vadd.f32 0.0, %v2096
        %v2098 = vpop.f32.mrb[0].mxu0
        %v2099 = vadd.f32 0.0, %v2098
        %v2100 = vpop.f32.mrb[0].mxu0
        %v2101 = vadd.f32 0.0, %v2100
        %2102 = vmatprep.mubr.bf16.mxu0 0
        %2103 = vmatmul.mubr.bf16.gmra.mrb[0].mxu0 %v1912
        %v2104 = vpop.f32.mrb[0].mxu0
        %v2105 = vadd.f32 0.0, %v2104
        %v2106 = vpop.f32.mrb[0].mxu0
        %v2107 = vadd.f32 0.0, %v2106
        %v2108 = vpop.f32.mrb[0].mxu0
        %v2109 = vadd.f32 0.0, %v2108
        %v2110 = vpop.f32.mrb[0].mxu0
        %v2111 = vadd.f32 0.0, %v2110
        %2112 = vmatprep.mubr.bf16.mxu0 0
        %2113 = vmatmul.mubr.bf16.gmra.mrb[0].mxu0 %v1915
        %v2114 = vpop.f32.mrb[0].mxu0
        %v2115 = vadd.f32 0.0, %v2114
        %v2116 = vpop.f32.mrb[0].mxu0
        %v2117 = vadd.f32 0.0, %v2116
        %v2118 = vpop.f32.mrb[0].mxu0
        %v2119 = vadd.f32 0.0, %v2118
        %v2120 = vpop.f32.mrb[0].mxu0
        %v2121 = vadd.f32 0.0, %v2120
        %2122 = vmatprep.mubr.bf16.mxu0 0
        %2123 = vmatmul.mubr.bf16.gmra.mrb[0].mxu0 %v1918
        %v2124 = vpop.f32.mrb[0].mxu0
        %v2125 = vadd.f32 0.0, %v2124
        %v2126 = vpop.f32.mrb[0].mxu0
        %v2127 = vadd.f32 0.0, %v2126
        %v2128 = vpop.f32.mrb[0].mxu0
        %v2129 = vadd.f32 0.0, %v2128
        %v2130 = vpop.f32.mrb[0].mxu0
        %v2131 = vadd.f32 0.0, %v2130
        %2132 = vdwg.mxu0
        %2133 = vmatprep.subr.bf16.mxu0 0
        %2134 = vmatpush1.bf16.msra.mxu0 %v1723
        %2135 = vmatprep.subr.bf16.mxu0 0
        %2136 = vmatpush1.bf16.msra.mxu0 %v1726
        %2137 = vmatprep.subr.bf16.mxu0 0
        %2138 = vmatpush1.bf16.msra.mxu0 %v1729
        %2139 = vmatprep.subr.bf16.mxu0 0
        %2140 = vmatpush1.bf16.msra.mxu0 %v1732
        %2141 = vmatprep.subr.bf16.mxu0 0
        %2142 = vmatpush1.bf16.msra.mxu0 %v1735
        %2143 = vmatprep.subr.bf16.mxu0 0
        %2144 = vmatpush1.bf16.msra.mxu0 %v1738
        %2145 = vmatprep.subr.bf16.mxu0 0
        %2146 = vmatpush1.bf16.msra.mxu0 0
        %2147 = vmatprep.subr.bf16.mxu0 0
        %2148 = vmatpush1.bf16.msra.mxu0 0
        %2149 = vmatprep.subr.bf16.mxu0 0
        %2150 = vmatpush1.bf16.msra.mxu0 0
        %2151 = vmatprep.subr.bf16.mxu0 0
        %2152 = vmatpush1.bf16.msra.mxu0 0
        %2153 = vmatprep.subr.bf16.mxu0 0
        %2154 = vmatpush1.bf16.msra.mxu0 0
        %2155 = vmatprep.subr.bf16.mxu0 0
        %2156 = vmatpush1.bf16.msra.mxu0 0
        %2157 = vmatprep.subr.bf16.mxu0 0
        %2158 = vmatpush1.bf16.msra.mxu0 0
        %2159 = vmatprep.subr.bf16.mxu0 0
        %2160 = vmatpush1.bf16.msra.mxu0 0
        %2161 = vmatprep.subr.bf16.mxu0 0
        %2162 = vmatpush1.bf16.msra.mxu0 0
        %2163 = vmatprep.subr.bf16.mxu0 0
        %2164 = vmatpush1.bf16.msra.mxu0 0
        %2165 = vmatprep.mubr.bf16.mxu0 0
        %2166 = vmatmul.mubr.bf16.gmra.mrb[0].mxu0 %v1867
        %v2167 = vpop.f32.mrb[0].mxu0
        %v2168 = vadd.f32 0.0, %v2167
        %v2169 = vpop.f32.mrb[0].mxu0
        %v2170 = vpop.f32.mrb[0].mxu0
        %v2171 = vadd.f32 0.0, %v2170
        %v2172 = vpop.f32.mrb[0].mxu0
        %2173 = vmatprep.mubr.bf16.mxu0 0
        %2174 = vmatmul.mubr.bf16.gmra.mrb[0].mxu0 %v1870
        %v2175 = vpop.f32.mrb[0].mxu0
        %v2176 = vadd.f32 0.0, %v2175
        %v2177 = vpop.f32.mrb[0].mxu0
        %v2178 = vpop.f32.mrb[0].mxu0
        %v2179 = vadd.f32 0.0, %v2178
        %v2180 = vpop.f32.mrb[0].mxu0
        %2181 = vmatprep.mubr.bf16.mxu0 0
        %2182 = vmatmul.mubr.bf16.gmra.mrb[0].mxu0 %v1873
        %v2183 = vpop.f32.mrb[0].mxu0
        %v2184 = vadd.f32 0.0, %v2183
        %v2185 = vpop.f32.mrb[0].mxu0
        %v2186 = vpop.f32.mrb[0].mxu0
        %v2187 = vadd.f32 0.0, %v2186
        %v2188 = vpop.f32.mrb[0].mxu0
        %2189 = vmatprep.mubr.bf16.mxu0 0
        %2190 = vmatmul.mubr.bf16.gmra.mrb[0].mxu0 %v1876
        %v2191 = vpop.f32.mrb[0].mxu0
        %v2192 = vadd.f32 0.0, %v2191
        %v2193 = vpop.f32.mrb[0].mxu0
        %v2194 = vpop.f32.mrb[0].mxu0
        %v2195 = vadd.f32 0.0, %v2194
        %v2196 = vpop.f32.mrb[0].mxu0
        %2197 = vmatprep.mubr.bf16.mxu0 0
        %2198 = vmatmul.mubr.bf16.gmra.mrb[0].mxu0 %v1879
        %v2199 = vpop.f32.mrb[0].mxu0
        %v2200 = vadd.f32 0.0, %v2199
        %v2201 = vpop.f32.mrb[0].mxu0
        %v2202 = vpop.f32.mrb[0].mxu0
        %v2203 = vadd.f32 0.0, %v2202
        %v2204 = vpop.f32.mrb[0].mxu0
        %2205 = vmatprep.mubr.bf16.mxu0 0
        %2206 = vmatmul.mubr.bf16.gmra.mrb[0].mxu0 %v1882
        %v2207 = vpop.f32.mrb[0].mxu0
        %v2208 = vadd.f32 0.0, %v2207
        %v2209 = vpop.f32.mrb[0].mxu0
        %v2210 = vpop.f32.mrb[0].mxu0
        %v2211 = vadd.f32 0.0, %v2210
        %v2212 = vpop.f32.mrb[0].mxu0
        %2213 = vmatprep.mubr.bf16.mxu0 0
        %2214 = vmatmul.mubr.bf16.gmra.mrb[0].mxu0 %v1885
        %v2215 = vpop.f32.mrb[0].mxu0
        %v2216 = vadd.f32 0.0, %v2215
        %v2217 = vpop.f32.mrb[0].mxu0
        %v2218 = vpop.f32.mrb[0].mxu0
        %v2219 = vadd.f32 0.0, %v2218
        %v2220 = vpop.f32.mrb[0].mxu0
        %2221 = vmatprep.mubr.bf16.mxu0 0
        %2222 = vmatmul.mubr.bf16.gmra.mrb[0].mxu0 %v1888
        %v2223 = vpop.f32.mrb[0].mxu0
        %v2224 = vadd.f32 0.0, %v2223
        %v2225 = vpop.f32.mrb[0].mxu0
        %v2226 = vpop.f32.mrb[0].mxu0
        %v2227 = vadd.f32 0.0, %v2226
        %v2228 = vpop.f32.mrb[0].mxu0
        %2229 = vmatprep.mubr.bf16.mxu0 0
        %2230 = vmatmul.mubr.bf16.gmra.mrb[0].mxu0 %v1891
        %v2231 = vpop.f32.mrb[0].mxu0
        %v2232 = vadd.f32 0.0, %v2231
        %v2233 = vpop.f32.mrb[0].mxu0
        %v2234 = vpop.f32.mrb[0].mxu0
        %v2235 = vadd.f32 0.0, %v2234
        %v2236 = vpop.f32.mrb[0].mxu0
        %2237 = vmatprep.mubr.bf16.mxu0 0
        %2238 = vmatmul.mubr.bf16.gmra.mrb[0].mxu0 %v1894
        %v2239 = vpop.f32.mrb[0].mxu0
        %v2240 = vadd.f32 0.0, %v2239
        %v2241 = vpop.f32.mrb[0].mxu0
        %v2242 = vpop.f32.mrb[0].mxu0
        %v2243 = vadd.f32 0.0, %v2242
        %v2244 = vpop.f32.mrb[0].mxu0
        %2245 = vmatprep.mubr.bf16.mxu0 0
        %2246 = vmatmul.mubr.bf16.gmra.mrb[0].mxu0 %v1897
        %v2247 = vpop.f32.mrb[0].mxu0
        %v2248 = vadd.f32 0.0, %v2247
        %v2249 = vpop.f32.mrb[0].mxu0
        %v2250 = vpop.f32.mrb[0].mxu0
        %v2251 = vadd.f32 0.0, %v2250
        %v2252 = vpop.f32.mrb[0].mxu0
        %2253 = vmatprep.mubr.bf16.mxu0 0
        %2254 = vmatmul.mubr.bf16.gmra.mrb[0].mxu0 %v1900
        %v2255 = vpop.f32.mrb[0].mxu0
        %v2256 = vadd.f32 0.0, %v2255
        %v2257 = vpop.f32.mrb[0].mxu0
        %v2258 = vpop.f32.mrb[0].mxu0
        %v2259 = vadd.f32 0.0, %v2258
        %v2260 = vpop.f32.mrb[0].mxu0
        %2261 = vmatprep.mubr.bf16.mxu0 0
        %2262 = vmatmul.mubr.bf16.gmra.mrb[0].mxu0 %v1903
        %v2263 = vpop.f32.mrb[0].mxu0
        %v2264 = vadd.f32 0.0, %v2263
        %v2265 = vpop.f32.mrb[0].mxu0
        %v2266 = vpop.f32.mrb[0].mxu0
        %v2267 = vadd.f32 0.0, %v2266
        %v2268 = vpop.f32.mrb[0].mxu0
        %2269 = vmatprep.mubr.bf16.mxu0 0
        %2270 = vmatmul.mubr.bf16.gmra.mrb[0].mxu0 %v1906
        %v2271 = vpop.f32.mrb[0].mxu0
        %v2272 = vadd.f32 0.0, %v2271
        %v2273 = vpop.f32.mrb[0].mxu0
        %v2274 = vpop.f32.mrb[0].mxu0
        %v2275 = vadd.f32 0.0, %v2274
        %v2276 = vpop.f32.mrb[0].mxu0
        %2277 = vmatprep.mubr.bf16.mxu0 0
        %2278 = vmatmul.mubr.bf16.gmra.mrb[0].mxu0 %v1909
        %v2279 = vpop.f32.mrb[0].mxu0
        %v2280 = vadd.f32 0.0, %v2279
        %v2281 = vpop.f32.mrb[0].mxu0
        %v2282 = vpop.f32.mrb[0].mxu0
        %v2283 = vadd.f32 0.0, %v2282
        %v2284 = vpop.f32.mrb[0].mxu0
        %2285 = vmatprep.mubr.bf16.mxu0 0
        %2286 = vmatmul.mubr.bf16.gmra.mrb[0].mxu0 %v1912
        %v2287 = vpop.f32.mrb[0].mxu0
        %v2288 = vadd.f32 0.0, %v2287
        %v2289 = vpop.f32.mrb[0].mxu0
        %v2290 = vpop.f32.mrb[0].mxu0
        %v2291 = vadd.f32 0.0, %v2290
        %v2292 = vpop.f32.mrb[0].mxu0
        %2293 = vmatprep.mubr.bf16.mxu0 0
        %2294 = vmatmul.mubr.bf16.gmra.mrb[0].mxu0 %v1915
        %v2295 = vpop.f32.mrb[0].mxu0
        %v2296 = vadd.f32 0.0, %v2295
        %v2297 = vpop.f32.mrb[0].mxu0
        %v2298 = vpop.f32.mrb[0].mxu0
        %v2299 = vadd.f32 0.0, %v2298
        %v2300 = vpop.f32.mrb[0].mxu0
        %2301 = vmatprep.mubr.bf16.mxu0 0
        %2302 = vmatmul.mubr.bf16.gmra.mrb[0].mxu0 %v1918
        %v2303 = vpop.f32.mrb[0].mxu0
        %v2304 = vadd.f32 0.0, %v2303
        %v2305 = vpop.f32.mrb[0].mxu0
        %v2306 = vpop.f32.mrb[0].mxu0
        %v2307 = vadd.f32 0.0, %v2306
        %v2308 = vpop.f32.mrb[0].mxu0
        %2309 = vdwg.mxu0
        %2310 = vrot.lane.b32.xlu0 %v1955, 17
        %v2311 = vpop.permute.xlu0 %2310
        %2312 = vrot.lane.b32.xlu0 %v1959, 17
        %v2313 = vpop.permute.xlu0 %2312
        %2314 = vrot.lane.b32.xlu0 %v1965, 17
        %v2315 = vpop.permute.xlu0 %2314
        %2316 = vrot.lane.b32.xlu0 %v1969, 17
        %v2317 = vpop.permute.xlu0 %2316
        %2318 = vrot.lane.b32.xlu0 %v1957, 17
        %v2319 = vpop.permute.xlu0 %2318
        %2320 = vrot.lane.b32.xlu0 %v1961, 17
        %v2321 = vpop.permute.xlu0 %2320
        %2322 = vrot.lane.b32.xlu0 %v1967, 17
        %v2323 = vpop.permute.xlu0 %2322
        %2324 = vrot.lane.b32.xlu0 %v1971, 17
        %v2325 = vpop.permute.xlu0 %2324
        %2326 = vrot.lane.b32.xlu0 %v2168, 17
        %v2327 = vpop.permute.xlu0 %2326
        %2328 = vrot.lane.b32.xlu0 %v2171, 17
        %v2329 = vpop.permute.xlu0 %2328
        %2330 = vrot.lane.b32.xlu0 %v2176, 17
        %v2331 = vpop.permute.xlu0 %2330
        %2332 = vrot.lane.b32.xlu0 %v2179, 17
        %v2333 = vpop.permute.xlu0 %2332
        %v2334 = vsel %vm1045, %v2319, %v2327
        %v2335 = vsel %vm1045, %v2321, %v2329
        %v2336 = vsel %vm1045, %v2323, %v2331
        %v2337 = vsel %vm1045, %v2325, %v2333
        %v2338 = vsel %vm1045, %v2311, %v2319
        %v2339 = vsel %vm1045, %v2313, %v2321
        %v2340 = vsel %vm1045, %v2315, %v2323
        %v2341 = vsel %vm1045, %v2317, %v2325
        %v2342 = vsel %vm1045, %v2327, %v2311
        %v2343 = vsel %vm1045, %v2329, %v2313
        %v2344 = vsel %vm1045, %v2331, %v2315
        %v2345 = vsel %vm1045, %v2333, %v2317
        %v2346 = vsel %vm1071, %v2342, 0.0
        %v2347 = vsel %vm1072, %v2338, 0.0
        %v2348 = vsel %vm1073, %v2334, 0.0
        %v2349 = vsel %vm1071, %v2343, 0.0
        %v2350 = vsel %vm1072, %v2339, 0.0
        %v2351 = vsel %vm1073, %v2335, 0.0
        %v2352 = vsel %vm1071, %v2344, 0.0
        %v2353 = vsel %vm1072, %v2340, 0.0
        %v2354 = vsel %vm1073, %v2336, 0.0
        %v2355 = vsel %vm1071, %v2345, 0.0
        %v2356 = vsel %vm1072, %v2341, 0.0
        %v2357 = vsel %vm1073, %v2337, 0.0
        %v2358 = vadd.f32 %v2035, %v2346
        %v2359 = vadd.f32 %v2037, %v2347
        %v2360 = vadd.f32 %v2232, %v2348
        %v2361 = vadd.f32 %v2039, %v2349
        %v2362 = vadd.f32 %v2041, %v2350
        %v2363 = vadd.f32 %v2235, %v2351
        %v2364 = vadd.f32 %v2045, %v2352
        %v2365 = vadd.f32 %v2047, %v2353
        %v2366 = vadd.f32 %v2240, %v2354
        %v2367 = vadd.f32 %v2049, %v2355
        %v2368 = vadd.f32 %v2051, %v2356
        %v2369 = vadd.f32 %v2243, %v2357
        %2370 = vrot.lane.b32.xlu0 %v1975, 16
        %v2371 = vpop.permute.xlu0 %2370
        %2372 = vrot.lane.b32.xlu0 %v1979, 16
        %v2373 = vpop.permute.xlu0 %2372
        %2374 = vrot.lane.b32.xlu0 %v1985, 16
        %v2375 = vpop.permute.xlu0 %2374
        %2376 = vrot.lane.b32.xlu0 %v1989, 16
        %v2377 = vpop.permute.xlu0 %2376
        %2378 = vrot.lane.b32.xlu0 %v1977, 16
        %v2379 = vpop.permute.xlu0 %2378
        %2380 = vrot.lane.b32.xlu0 %v1981, 16
        %v2381 = vpop.permute.xlu0 %2380
        %2382 = vrot.lane.b32.xlu0 %v1987, 16
        %v2383 = vpop.permute.xlu0 %2382
        %2384 = vrot.lane.b32.xlu0 %v1991, 16
        %v2385 = vpop.permute.xlu0 %2384
        %2386 = vrot.lane.b32.xlu0 %v2184, 16
        %v2387 = vpop.permute.xlu0 %2386
        %2388 = vrot.lane.b32.xlu0 %v2187, 16
        %v2389 = vpop.permute.xlu0 %2388
        %2390 = vrot.lane.b32.xlu0 %v2192, 16
        %v2391 = vpop.permute.xlu0 %2390
        %2392 = vrot.lane.b32.xlu0 %v2195, 16
        %v2393 = vpop.permute.xlu0 %2392
        %v2394 = vsel %vm1122, %v2379, %v2387
        %v2395 = vsel %vm1122, %v2381, %v2389
        %v2396 = vsel %vm1122, %v2383, %v2391
        %v2397 = vsel %vm1122, %v2385, %v2393
        %v2398 = vsel %vm1122, %v2371, %v2379
        %v2399 = vsel %vm1122, %v2373, %v2381
        %v2400 = vsel %vm1122, %v2375, %v2383
        %v2401 = vsel %vm1122, %v2377, %v2385
        %v2402 = vsel %vm1122, %v2387, %v2371
        %v2403 = vsel %vm1122, %v2389, %v2373
        %v2404 = vsel %vm1122, %v2391, %v2375
        %v2405 = vsel %vm1122, %v2393, %v2377
        %v2406 = vsel %vm1148, %v2402, 0.0
        %v2407 = vsel %vm1149, %v2398, 0.0
        %v2408 = vsel %vm1150, %v2394, 0.0
        %v2409 = vsel %vm1148, %v2403, 0.0
        %v2410 = vsel %vm1149, %v2399, 0.0
        %v2411 = vsel %vm1150, %v2395, 0.0
        %v2412 = vsel %vm1148, %v2404, 0.0
        %v2413 = vsel %vm1149, %v2400, 0.0
        %v2414 = vsel %vm1150, %v2396, 0.0
        %v2415 = vsel %vm1148, %v2405, 0.0
        %v2416 = vsel %vm1149, %v2401, 0.0
        %v2417 = vsel %vm1150, %v2397, 0.0
        %v2418 = vadd.f32 %v2358, %v2406
        %v2419 = vadd.f32 %v2359, %v2407
        %v2420 = vadd.f32 %v2360, %v2408
        %v2421 = vadd.f32 %v2361, %v2409
        %v2422 = vadd.f32 %v2362, %v2410
        %v2423 = vadd.f32 %v2363, %v2411
        %v2424 = vadd.f32 %v2364, %v2412
        %v2425 = vadd.f32 %v2365, %v2413
        %v2426 = vadd.f32 %v2366, %v2414
        %v2427 = vadd.f32 %v2367, %v2415
        %v2428 = vadd.f32 %v2368, %v2416
        %v2429 = vadd.f32 %v2369, %v2417
        %2430 = vrot.lane.b32.xlu0 %v1995, 15
        %v2431 = vpop.permute.xlu0 %2430
        %2432 = vrot.lane.b32.xlu0 %v1999, 15
        %v2433 = vpop.permute.xlu0 %2432
        %2434 = vrot.lane.b32.xlu0 %v2005, 15
        %v2435 = vpop.permute.xlu0 %2434
        %2436 = vrot.lane.b32.xlu0 %v2009, 15
        %v2437 = vpop.permute.xlu0 %2436
        %2438 = vrot.lane.b32.xlu0 %v1997, 15
        %v2439 = vpop.permute.xlu0 %2438
        %2440 = vrot.lane.b32.xlu0 %v2001, 15
        %v2441 = vpop.permute.xlu0 %2440
        %2442 = vrot.lane.b32.xlu0 %v2007, 15
        %v2443 = vpop.permute.xlu0 %2442
        %2444 = vrot.lane.b32.xlu0 %v2011, 15
        %v2445 = vpop.permute.xlu0 %2444
        %2446 = vrot.lane.b32.xlu0 %v2200, 15
        %v2447 = vpop.permute.xlu0 %2446
        %2448 = vrot.lane.b32.xlu0 %v2203, 15
        %v2449 = vpop.permute.xlu0 %2448
        %2450 = vrot.lane.b32.xlu0 %v2208, 15
        %v2451 = vpop.permute.xlu0 %2450
        %2452 = vrot.lane.b32.xlu0 %v2211, 15
        %v2453 = vpop.permute.xlu0 %2452
        %v2454 = vsel %vm1199, %v2439, %v2447
        %v2455 = vsel %vm1199, %v2441, %v2449
        %v2456 = vsel %vm1199, %v2443, %v2451
        %v2457 = vsel %vm1199, %v2445, %v2453
        %v2458 = vsel %vm1199, %v2431, %v2439
        %v2459 = vsel %vm1199, %v2433, %v2441
        %v2460 = vsel %vm1199, %v2435, %v2443
        %v2461 = vsel %vm1199, %v2437, %v2445
        %v2462 = vsel %vm1199, %v2447, %v2431
        %v2463 = vsel %vm1199, %v2449, %v2433
        %v2464 = vsel %vm1199, %v2451, %v2435
        %v2465 = vsel %vm1199, %v2453, %v2437
        %v2466 = vsel %vm1225, %v2462, 0.0
        %v2467 = vsel %vm1226, %v2458, 0.0
        %v2468 = vsel %vm1227, %v2454, 0.0
        %v2469 = vsel %vm1225, %v2463, 0.0
        %v2470 = vsel %vm1226, %v2459, 0.0
        %v2471 = vsel %vm1227, %v2455, 0.0
        %v2472 = vsel %vm1225, %v2464, 0.0
        %v2473 = vsel %vm1226, %v2460, 0.0
        %v2474 = vsel %vm1227, %v2456, 0.0
        %v2475 = vsel %vm1225, %v2465, 0.0
        %v2476 = vsel %vm1226, %v2461, 0.0
        %v2477 = vsel %vm1227, %v2457, 0.0
        %v2478 = vadd.f32 %v2418, %v2466
        %v2479 = vadd.f32 %v2419, %v2467
        %v2480 = vadd.f32 %v2420, %v2468
        %v2481 = vadd.f32 %v2421, %v2469
        %v2482 = vadd.f32 %v2422, %v2470
        %v2483 = vadd.f32 %v2423, %v2471
        %v2484 = vadd.f32 %v2424, %v2472
        %v2485 = vadd.f32 %v2425, %v2473
        %v2486 = vadd.f32 %v2426, %v2474
        %v2487 = vadd.f32 %v2427, %v2475
        %v2488 = vadd.f32 %v2428, %v2476
        %v2489 = vadd.f32 %v2429, %v2477
        %2490 = vrot.lane.b32.xlu0 %v2015, 1
        %v2491 = vpop.permute.xlu0 %2490
        %2492 = vrot.lane.b32.xlu0 %v2019, 1
        %v2493 = vpop.permute.xlu0 %2492
        %2494 = vrot.lane.b32.xlu0 %v2025, 1
        %v2495 = vpop.permute.xlu0 %2494
        %2496 = vrot.lane.b32.xlu0 %v2029, 1
        %v2497 = vpop.permute.xlu0 %2496
        %2498 = vrot.lane.b32.xlu0 %v2017, 1
        %v2499 = vpop.permute.xlu0 %2498
        %2500 = vrot.lane.b32.xlu0 %v2021, 1
        %v2501 = vpop.permute.xlu0 %2500
        %2502 = vrot.lane.b32.xlu0 %v2027, 1
        %v2503 = vpop.permute.xlu0 %2502
        %2504 = vrot.lane.b32.xlu0 %v2031, 1
        %v2505 = vpop.permute.xlu0 %2504
        %2506 = vrot.lane.b32.xlu0 %v2216, 1
        %v2507 = vpop.permute.xlu0 %2506
        %2508 = vrot.lane.b32.xlu0 %v2219, 1
        %v2509 = vpop.permute.xlu0 %2508
        %2510 = vrot.lane.b32.xlu0 %v2224, 1
        %v2511 = vpop.permute.xlu0 %2510
        %2512 = vrot.lane.b32.xlu0 %v2227, 1
        %v2513 = vpop.permute.xlu0 %2512
        %v2514 = vsel %vm1276, %v2499, %v2507
        %v2515 = vsel %vm1276, %v2501, %v2509
        %v2516 = vsel %vm1276, %v2503, %v2511
        %v2517 = vsel %vm1276, %v2505, %v2513
        %v2518 = vsel %vm1276, %v2491, %v2499
        %v2519 = vsel %vm1276, %v2493, %v2501
        %v2520 = vsel %vm1276, %v2495, %v2503
        %v2521 = vsel %vm1276, %v2497, %v2505
        %v2522 = vsel %vm1276, %v2507, %v2491
        %v2523 = vsel %vm1276, %v2509, %v2493
        %v2524 = vsel %vm1276, %v2511, %v2495
        %v2525 = vsel %vm1276, %v2513, %v2497
        %v2526 = vsel %vm1302, %v2522, 0.0
        %v2527 = vsel %vm1303, %v2518, 0.0
        %v2528 = vsel %vm1304, %v2514, 0.0
        %v2529 = vsel %vm1302, %v2523, 0.0
        %v2530 = vsel %vm1303, %v2519, 0.0
        %v2531 = vsel %vm1304, %v2515, 0.0
        %v2532 = vsel %vm1302, %v2524, 0.0
        %v2533 = vsel %vm1303, %v2520, 0.0
        %v2534 = vsel %vm1304, %v2516, 0.0
        %v2535 = vsel %vm1302, %v2525, 0.0
        %v2536 = vsel %vm1303, %v2521, 0.0
        %v2537 = vsel %vm1304, %v2517, 0.0
        %v2538 = vadd.f32 %v2478, %v2526
        %v2539 = vadd.f32 %v2479, %v2527
        %v2540 = vadd.f32 %v2480, %v2528
        %v2541 = vadd.f32 %v2481, %v2529
        %v2542 = vadd.f32 %v2482, %v2530
        %v2543 = vadd.f32 %v2483, %v2531
        %v2544 = vadd.f32 %v2484, %v2532
        %v2545 = vadd.f32 %v2485, %v2533
        %v2546 = vadd.f32 %v2486, %v2534
        %v2547 = vadd.f32 %v2487, %v2535
        %v2548 = vadd.f32 %v2488, %v2536
        %v2549 = vadd.f32 %v2489, %v2537
        %2550 = vrot.lane.b32.xlu0 %v2055, 127
        %v2551 = vpop.permute.xlu0 %2550
        %2552 = vrot.lane.b32.xlu0 %v2059, 127
        %v2553 = vpop.permute.xlu0 %2552
        %2554 = vrot.lane.b32.xlu0 %v2065, 127
        %v2555 = vpop.permute.xlu0 %2554
        %2556 = vrot.lane.b32.xlu0 %v2069, 127
        %v2557 = vpop.permute.xlu0 %2556
        %2558 = vrot.lane.b32.xlu0 %v2057, 127
        %v2559 = vpop.permute.xlu0 %2558
        %2560 = vrot.lane.b32.xlu0 %v2061, 127
        %v2561 = vpop.permute.xlu0 %2560
        %2562 = vrot.lane.b32.xlu0 %v2067, 127
        %v2563 = vpop.permute.xlu0 %2562
        %2564 = vrot.lane.b32.xlu0 %v2071, 127
        %v2565 = vpop.permute.xlu0 %2564
        %2566 = vrot.lane.b32.xlu0 %v2248, 127
        %v2567 = vpop.permute.xlu0 %2566
        %2568 = vrot.lane.b32.xlu0 %v2251, 127
        %v2569 = vpop.permute.xlu0 %2568
        %2570 = vrot.lane.b32.xlu0 %v2256, 127
        %v2571 = vpop.permute.xlu0 %2570
        %2572 = vrot.lane.b32.xlu0 %v2259, 127
        %v2573 = vpop.permute.xlu0 %2572
        %v2574 = vsel %vm1353, %v2559, %v2567
        %v2575 = vsel %vm1353, %v2561, %v2569
        %v2576 = vsel %vm1353, %v2563, %v2571
        %v2577 = vsel %vm1353, %v2565, %v2573
        %v2578 = vsel %vm1353, %v2551, %v2559
        %v2579 = vsel %vm1353, %v2553, %v2561
        %v2580 = vsel %vm1353, %v2555, %v2563
        %v2581 = vsel %vm1353, %v2557, %v2565
        %v2582 = vsel %vm1353, %v2567, %v2551
        %v2583 = vsel %vm1353, %v2569, %v2553
        %v2584 = vsel %vm1353, %v2571, %v2555
        %v2585 = vsel %vm1353, %v2573, %v2557
        %v2586 = vsel %vm1379, %v2578, 0.0
        %v2587 = vsel %vm1380, %v2574, 0.0
        %v2588 = vsel %vm1381, %v2582, 0.0
        %v2589 = vsel %vm1379, %v2579, 0.0
        %v2590 = vsel %vm1380, %v2575, 0.0
        %v2591 = vsel %vm1381, %v2583, 0.0
        %v2592 = vsel %vm1379, %v2580, 0.0
        %v2593 = vsel %vm1380, %v2576, 0.0
        %v2594 = vsel %vm1381, %v2584, 0.0
        %v2595 = vsel %vm1379, %v2581, 0.0
        %v2596 = vsel %vm1380, %v2577, 0.0
        %v2597 = vsel %vm1381, %v2585, 0.0
        %v2598 = vadd.f32 %v2538, %v2586
        %v2599 = vadd.f32 %v2539, %v2587
        %v2600 = vadd.f32 %v2540, %v2588
        %v2601 = vadd.f32 %v2541, %v2589
        %v2602 = vadd.f32 %v2542, %v2590
        %v2603 = vadd.f32 %v2543, %v2591
        %v2604 = vadd.f32 %v2544, %v2592
        %v2605 = vadd.f32 %v2545, %v2593
        %v2606 = vadd.f32 %v2546, %v2594
        %v2607 = vadd.f32 %v2547, %v2595
        %v2608 = vadd.f32 %v2548, %v2596
        %v2609 = vadd.f32 %v2549, %v2597
        %2610 = vrot.lane.b32.xlu0 %v2075, 113
        %v2611 = vpop.permute.xlu0 %2610
        %2612 = vrot.lane.b32.xlu0 %v2079, 113
        %v2613 = vpop.permute.xlu0 %2612
        %2614 = vrot.lane.b32.xlu0 %v2085, 113
        %v2615 = vpop.permute.xlu0 %2614
        %2616 = vrot.lane.b32.xlu0 %v2089, 113
        %v2617 = vpop.permute.xlu0 %2616
        %2618 = vrot.lane.b32.xlu0 %v2077, 113
        %v2619 = vpop.permute.xlu0 %2618
        %2620 = vrot.lane.b32.xlu0 %v2081, 113
        %v2621 = vpop.permute.xlu0 %2620
        %2622 = vrot.lane.b32.xlu0 %v2087, 113
        %v2623 = vpop.permute.xlu0 %2622
        %2624 = vrot.lane.b32.xlu0 %v2091, 113
        %v2625 = vpop.permute.xlu0 %2624
        %2626 = vrot.lane.b32.xlu0 %v2264, 113
        %v2627 = vpop.permute.xlu0 %2626
        %2628 = vrot.lane.b32.xlu0 %v2267, 113
        %v2629 = vpop.permute.xlu0 %2628
        %2630 = vrot.lane.b32.xlu0 %v2272, 113
        %v2631 = vpop.permute.xlu0 %2630
        %2632 = vrot.lane.b32.xlu0 %v2275, 113
        %v2633 = vpop.permute.xlu0 %2632
        %v2634 = vsel %vm1430, %v2619, %v2627
        %v2635 = vsel %vm1430, %v2621, %v2629
        %v2636 = vsel %vm1430, %v2623, %v2631
        %v2637 = vsel %vm1430, %v2625, %v2633
        %v2638 = vsel %vm1430, %v2611, %v2619
        %v2639 = vsel %vm1430, %v2613, %v2621
        %v2640 = vsel %vm1430, %v2615, %v2623
        %v2641 = vsel %vm1430, %v2617, %v2625
        %v2642 = vsel %vm1430, %v2627, %v2611
        %v2643 = vsel %vm1430, %v2629, %v2613
        %v2644 = vsel %vm1430, %v2631, %v2615
        %v2645 = vsel %vm1430, %v2633, %v2617
        %v2646 = vsel %vm1456, %v2638, 0.0
        %v2647 = vsel %vm1457, %v2634, 0.0
        %v2648 = vsel %vm1458, %v2642, 0.0
        %v2649 = vsel %vm1456, %v2639, 0.0
        %v2650 = vsel %vm1457, %v2635, 0.0
        %v2651 = vsel %vm1458, %v2643, 0.0
        %v2652 = vsel %vm1456, %v2640, 0.0
        %v2653 = vsel %vm1457, %v2636, 0.0
        %v2654 = vsel %vm1458, %v2644, 0.0
        %v2655 = vsel %vm1456, %v2641, 0.0
        %v2656 = vsel %vm1457, %v2637, 0.0
        %v2657 = vsel %vm1458, %v2645, 0.0
        %v2658 = vadd.f32 %v2598, %v2646
        %v2659 = vadd.f32 %v2599, %v2647
        %v2660 = vadd.f32 %v2600, %v2648
        %v2661 = vadd.f32 %v2601, %v2649
        %v2662 = vadd.f32 %v2602, %v2650
        %v2663 = vadd.f32 %v2603, %v2651
        %v2664 = vadd.f32 %v2604, %v2652
        %v2665 = vadd.f32 %v2605, %v2653
        %v2666 = vadd.f32 %v2606, %v2654
        %v2667 = vadd.f32 %v2607, %v2655
        %v2668 = vadd.f32 %v2608, %v2656
        %v2669 = vadd.f32 %v2609, %v2657
        %2670 = vrot.lane.b32.xlu0 %v2095, 112
        %v2671 = vpop.permute.xlu0 %2670
        %2672 = vrot.lane.b32.xlu0 %v2099, 112
        %v2673 = vpop.permute.xlu0 %2672
        %2674 = vrot.lane.b32.xlu0 %v2105, 112
        %v2675 = vpop.permute.xlu0 %2674
        %2676 = vrot.lane.b32.xlu0 %v2109, 112
        %v2677 = vpop.permute.xlu0 %2676
        %2678 = vrot.lane.b32.xlu0 %v2097, 112
        %v2679 = vpop.permute.xlu0 %2678
        %2680 = vrot.lane.b32.xlu0 %v2101, 112
        %v2681 = vpop.permute.xlu0 %2680
        %2682 = vrot.lane.b32.xlu0 %v2107, 112
        %v2683 = vpop.permute.xlu0 %2682
        %2684 = vrot.lane.b32.xlu0 %v2111, 112
        %v2685 = vpop.permute.xlu0 %2684
        %2686 = vrot.lane.b32.xlu0 %v2280, 112
        %v2687 = vpop.permute.xlu0 %2686
        %2688 = vrot.lane.b32.xlu0 %v2283, 112
        %v2689 = vpop.permute.xlu0 %2688
        %2690 = vrot.lane.b32.xlu0 %v2288, 112
        %v2691 = vpop.permute.xlu0 %2690
        %2692 = vrot.lane.b32.xlu0 %v2291, 112
        %v2693 = vpop.permute.xlu0 %2692
        %v2694 = vsel %vm1507, %v2679, %v2687
        %v2695 = vsel %vm1507, %v2681, %v2689
        %v2696 = vsel %vm1507, %v2683, %v2691
        %v2697 = vsel %vm1507, %v2685, %v2693
        %v2698 = vsel %vm1507, %v2671, %v2679
        %v2699 = vsel %vm1507, %v2673, %v2681
        %v2700 = vsel %vm1507, %v2675, %v2683
        %v2701 = vsel %vm1507, %v2677, %v2685
        %v2702 = vsel %vm1507, %v2687, %v2671
        %v2703 = vsel %vm1507, %v2689, %v2673
        %v2704 = vsel %vm1507, %v2691, %v2675
        %v2705 = vsel %vm1507, %v2693, %v2677
        %v2706 = vsel %vm1533, %v2698, 0.0
        %v2707 = vsel %vm1534, %v2694, 0.0
        %v2708 = vsel %vm1535, %v2702, 0.0
        %v2709 = vsel %vm1533, %v2699, 0.0
        %v2710 = vsel %vm1534, %v2695, 0.0
        %v2711 = vsel %vm1535, %v2703, 0.0
        %v2712 = vsel %vm1533, %v2700, 0.0
        %v2713 = vsel %vm1534, %v2696, 0.0
        %v2714 = vsel %vm1535, %v2704, 0.0
        %v2715 = vsel %vm1533, %v2701, 0.0
        %v2716 = vsel %vm1534, %v2697, 0.0
        %v2717 = vsel %vm1535, %v2705, 0.0
        %v2718 = vadd.f32 %v2658, %v2706
        %v2719 = vadd.f32 %v2659, %v2707
        %v2720 = vadd.f32 %v2660, %v2708
        %v2721 = vadd.f32 %v2661, %v2709
        %v2722 = vadd.f32 %v2662, %v2710
        %v2723 = vadd.f32 %v2663, %v2711
        %v2724 = vadd.f32 %v2664, %v2712
        %v2725 = vadd.f32 %v2665, %v2713
        %v2726 = vadd.f32 %v2666, %v2714
        %v2727 = vadd.f32 %v2667, %v2715
        %v2728 = vadd.f32 %v2668, %v2716
        %v2729 = vadd.f32 %v2669, %v2717
        %2730 = vrot.lane.b32.xlu0 %v2115, 111
        %v2731 = vpop.permute.xlu0 %2730
        %2732 = vrot.lane.b32.xlu0 %v2119, 111
        %v2733 = vpop.permute.xlu0 %2732
        %2734 = vrot.lane.b32.xlu0 %v2125, 111
        %v2735 = vpop.permute.xlu0 %2734
        %2736 = vrot.lane.b32.xlu0 %v2129, 111
        %v2737 = vpop.permute.xlu0 %2736
        %2738 = vrot.lane.b32.xlu0 %v2117, 111
        %v2739 = vpop.permute.xlu0 %2738
        %2740 = vrot.lane.b32.xlu0 %v2121, 111
        %v2741 = vpop.permute.xlu0 %2740
        %2742 = vrot.lane.b32.xlu0 %v2127, 111
        %v2743 = vpop.permute.xlu0 %2742
        %2744 = vrot.lane.b32.xlu0 %v2131, 111
        %v2745 = vpop.permute.xlu0 %2744
        %2746 = vrot.lane.b32.xlu0 %v2296, 111
        %v2747 = vpop.permute.xlu0 %2746
        %2748 = vrot.lane.b32.xlu0 %v2299, 111
        %v2749 = vpop.permute.xlu0 %2748
        %2750 = vrot.lane.b32.xlu0 %v2304, 111
        %v2751 = vpop.permute.xlu0 %2750
        %2752 = vrot.lane.b32.xlu0 %v2307, 111
        %v2753 = vpop.permute.xlu0 %2752
        %v2754 = vsel %vm1584, %v2739, %v2747
        %v2755 = vsel %vm1584, %v2741, %v2749
        %v2756 = vsel %vm1584, %v2743, %v2751
        %v2757 = vsel %vm1584, %v2745, %v2753
        %v2758 = vsel %vm1584, %v2731, %v2739
        %v2759 = vsel %vm1584, %v2733, %v2741
        %v2760 = vsel %vm1584, %v2735, %v2743
        %v2761 = vsel %vm1584, %v2737, %v2745
        %v2762 = vsel %vm1584, %v2747, %v2731
        %v2763 = vsel %vm1584, %v2749, %v2733
        %v2764 = vsel %vm1584, %v2751, %v2735
        %v2765 = vsel %vm1584, %v2753, %v2737
        %v2766 = vsel %vm1610, %v2758, 0.0
        %v2767 = vsel %vm1611, %v2754, 0.0
        %v2768 = vsel %vm1612, %v2762, 0.0
        %v2769 = vsel %vm1610, %v2759, 0.0
        %v2770 = vsel %vm1611, %v2755, 0.0
        %v2771 = vsel %vm1612, %v2763, 0.0
        %v2772 = vsel %vm1610, %v2760, 0.0
        %v2773 = vsel %vm1611, %v2756, 0.0
        %v2774 = vsel %vm1612, %v2764, 0.0
        %v2775 = vsel %vm1610, %v2761, 0.0
        %v2776 = vsel %vm1611, %v2757, 0.0
        %v2777 = vsel %vm1612, %v2765, 0.0
        %v2778 = vadd.f32 %v2718, %v2766
        %v2779 = vadd.f32 %v2719, %v2767
        %v2780 = vadd.f32 %v2720, %v2768
        %v2781 = vadd.f32 %v2721, %v2769
        %v2782 = vadd.f32 %v2722, %v2770
        %v2783 = vadd.f32 %v2723, %v2771
        %v2784 = vadd.f32 %v2724, %v2772
        %v2785 = vadd.f32 %v2725, %v2773
        %v2786 = vadd.f32 %v2726, %v2774
        %v2787 = vadd.f32 %v2727, %v2775
        %v2788 = vadd.f32 %v2728, %v2776
        %v2789 = vadd.f32 %v2729, %v2777
        %s2790 = scalar_lea.vmem %s7, 32
        %v2791 = vld [vmem:[%s2790] sm:$0xff]
        %v2792 = vld [vmem:[%s2790 + $0x8] sm:$0xff]
        %v2793 = vld [vmem:[%s2790 + $0x10] sm:$0xff]
        %v2794 = vld [vmem:[%s2790 + $0x18] sm:$0xff]
        %2796 = vset.pattern.permute.xlu0 0
        %2797 = vperm.xlu0 %2796, %v2791
        %v2798 = vpop.permute.xlu0 %2797
        %2801 = vset.pattern.permute.xlu0 0
        %2802 = vperm.xlu0 %2801, %v2792
        %v2803 = vpop.permute.xlu0 %2802
        %2806 = vset.pattern.permute.xlu0 0
        %2807 = vperm.xlu0 %2806, %v2793
        %v2808 = vpop.permute.xlu0 %2807
        %2811 = vset.pattern.permute.xlu0 0
        %2812 = vperm.xlu0 %2811, %v2794
        %v2813 = vpop.permute.xlu0 %2812
        %v2815 = vadd.f32 %v2778, %v2798
        %v2816 = vadd.f32 %v2779, %v2798
        %v2817 = vadd.f32 %v2780, %v2798
        %v2818 = vadd.f32 %v2781, %v2803
        %v2819 = vadd.f32 %v2782, %v2803
        %v2820 = vadd.f32 %v2783, %v2803
        %v2821 = vadd.f32 %v2784, %v2808
        %v2822 = vadd.f32 %v2785, %v2808
        %v2823 = vadd.f32 %v2786, %v2808
        %v2824 = vadd.f32 %v2787, %v2813
        %v2825 = vadd.f32 %v2788, %v2813
        %v2826 = vadd.f32 %v2789, %v2813
        %vm2827 = vcmp.ge.f32.partialorder %v2815, 0.0
        %vm2828 = vcmp.ge.f32.partialorder %v2816, 0.0
        %vm2829 = vcmp.ge.f32.partialorder %v2817, 0.0
        %vm2830 = vcmp.ge.f32.partialorder %v2818, 0.0
        %vm2831 = vcmp.ge.f32.partialorder %v2819, 0.0
        %vm2832 = vcmp.ge.f32.partialorder %v2820, 0.0
        %vm2833 = vcmp.ge.f32.partialorder %v2821, 0.0
        %vm2834 = vcmp.ge.f32.partialorder %v2822, 0.0
        %vm2835 = vcmp.ge.f32.partialorder %v2823, 0.0
        %vm2836 = vcmp.ge.f32.partialorder %v2824, 0.0
        %vm2837 = vcmp.ge.f32.partialorder %v2825, 0.0
        %vm2838 = vcmp.ge.f32.partialorder %v2826, 0.0
        %v2839 = vmul.f32 %v2815, 0.01
        %v2840 = vmul.f32 %v2816, 0.01
        %v2841 = vmul.f32 %v2817, 0.01
        %v2842 = vmul.f32 %v2818, 0.01
        %v2843 = vmul.f32 %v2819, 0.01
        %v2844 = vmul.f32 %v2820, 0.01
        %v2845 = vmul.f32 %v2821, 0.01
        %v2846 = vmul.f32 %v2822, 0.01
        %v2847 = vmul.f32 %v2823, 0.01
        %v2848 = vmul.f32 %v2824, 0.01
        %v2849 = vmul.f32 %v2825, 0.01
        %v2850 = vmul.f32 %v2826, 0.01
        %v2851 = vsel %vm2827, %v2815, %v2839
        %v2852 = vsel %vm2828, %v2816, %v2840
        %v2853 = vsel %vm2829, %v2817, %v2841
        %v2854 = vsel %vm2830, %v2818, %v2842
        %v2855 = vsel %vm2831, %v2819, %v2843
        %v2856 = vsel %vm2832, %v2820, %v2844
        %v2857 = vsel %vm2833, %v2821, %v2845
        %v2858 = vsel %vm2834, %v2822, %v2846
        %v2859 = vsel %vm2835, %v2823, %v2847
        %v2860 = vsel %vm2836, %v2824, %v2848
        %v2861 = vsel %vm2837, %v2825, %v2849
        %v2862 = vsel %vm2838, %v2826, %v2850
        %v2863 = vpack.c.bf16 %v2854, %v2851
        %v2864 = vpack.c.bf16 %v2855, %v2852
        %v2865 = vpack.c.bf16 %v2856, %v2853
        %v2866 = vpack.c.bf16 %v2860, %v2857
        %v2867 = vpack.c.bf16 %v2861, %v2858
        %v2868 = vpack.c.bf16 %v2862, %v2859
        %2869 = vst [vmem:[#allocation2 + $0x90] sm:$0xff] %v2863
        %2870 = vst [vmem:[#allocation2 + $0x98] sm:$0xff] %v2864
        %2871 = vst [vmem:[#allocation2 + $0xa0] sm:$0xff] %v2865
        %2872 = vst [vmem:[#allocation2 + $0xa8] sm:$0xff] %v2866
        %2873 = vst [vmem:[#allocation2 + $0xb0] sm:$0xff] %v2867
        %2874 = vst [vmem:[#allocation2 + $0xb8] sm:$0xff] %v2868
        %v2875 = vld [vmem:[#allocation2] sm:$0xff]
        %v2876 = vld [vmem:[#allocation2 + $0x8] sm:$0xff]
        %v2877 = vld [vmem:[#allocation2 + $0x10] sm:$0xff]
        %v2878 = vld [vmem:[#allocation2 + $0x18] sm:$0xff]
        %v2879 = vld [vmem:[#allocation2 + $0x20] sm:$0xff]
        %v2880 = vld [vmem:[#allocation2 + $0x28] sm:$0xff]
        %v2881 = vld [vmem:[#allocation2 + $0x30] sm:$0xff]
        %v2882 = vld [vmem:[#allocation2 + $0x38] sm:$0xff]
        %v2883 = vld [vmem:[#allocation2 + $0x40] sm:$0xff]
        %v2884 = vld [vmem:[#allocation2 + $0x48] sm:$0xff]
        %v2885 = vld [vmem:[#allocation2 + $0x50] sm:$0xff]
        %v2886 = vld [vmem:[#allocation2 + $0x58] sm:$0xff]
        %v2887 = vld [vmem:[#allocation2 + $0x60] sm:$0xff]
        %v2888 = vld [vmem:[#allocation2 + $0x68] sm:$0xff]
        %v2889 = vld [vmem:[#allocation2 + $0x70] sm:$0xff]
        %v2890 = vld [vmem:[#allocation2 + $0x78] sm:$0xff]
        %v2891 = vld [vmem:[#allocation2 + $0x80] sm:$0xff]
        %v2892 = vld [vmem:[#allocation2 + $0x88] sm:$0xff]
        %v2893 = vld [vmem:[#allocation2 + $0x90] sm:$0xff]
        %v2894 = vld [vmem:[#allocation2 + $0x98] sm:$0xff]
        %v2895 = vld [vmem:[#allocation2 + $0xa0] sm:$0xff]
        %v2896 = vld [vmem:[#allocation2 + $0xa8] sm:$0xff]
        %v2897 = vld [vmem:[#allocation2 + $0xb0] sm:$0xff]
        %v2898 = vld [vmem:[#allocation2 + $0xb8] sm:$0xff]
        %v2899 = vld [vmem:[%s4] sm:$0xf]
        %v2900 = vld [vmem:[%s4 + $0x4] sm:$0xf]
        %v2901 = vld [vmem:[%s4 + $0x8] sm:$0xf]
        %v2902 = vld [vmem:[%s4 + $0xc] sm:$0xf]
        %v2903 = vld [vmem:[%s4 + $0x10] sm:$0xf]
        %v2904 = vld [vmem:[%s4 + $0x14] sm:$0xf]
        %v2905 = vld [vmem:[%s4 + $0x18] sm:$0xf]
        %v2906 = vld [vmem:[%s4 + $0x1c] sm:$0xf]
        %v2907 = vld [vmem:[%s4 + $0x20] sm:$0xf]
        %v2908 = vld [vmem:[%s4 + $0x24] sm:$0xf]
        %v2909 = vld [vmem:[%s4 + $0x28] sm:$0xf]
        %v2910 = vld [vmem:[%s4 + $0x2c] sm:$0xf]
        %v2911 = vld [vmem:[%s4 + $0x30] sm:$0xf]
        %v2912 = vld [vmem:[%s4 + $0x34] sm:$0xf]
        %v2913 = vld [vmem:[%s4 + $0x38] sm:$0xf]
        %v2914 = vld [vmem:[%s4 + $0x3c] sm:$0xf]
        %v2915 = vld [vmem:[%s4 + $0x40] sm:$0xf]
        %v2916 = vld [vmem:[%s4 + $0x44] sm:$0xf]
        %v2917 = vld [vmem:[%s4 + $0x48] sm:$0xf]
        %v2918 = vld [vmem:[%s4 + $0x4c] sm:$0xf]
        %v2919 = vld [vmem:[%s4 + $0x50] sm:$0xf]
        %v2920 = vld [vmem:[%s4 + $0x54] sm:$0xf]
        %v2921 = vld [vmem:[%s4 + $0x58] sm:$0xf]
        %v2922 = vld [vmem:[%s4 + $0x5c] sm:$0xf]
        %v2923 = vld [vmem:[%s4 + $0x60] sm:$0xf]
        %v2924 = vld [vmem:[%s4 + $0x64] sm:$0xf]
        %v2925 = vld [vmem:[%s4 + $0x68] sm:$0xf]
        %v2926 = vld [vmem:[%s4 + $0x6c] sm:$0xf]
        %v2927 = vld [vmem:[%s4 + $0x70] sm:$0xf]
        %v2928 = vld [vmem:[%s4 + $0x74] sm:$0xf]
        %v2929 = vld [vmem:[%s4 + $0x78] sm:$0xf]
        %v2930 = vld [vmem:[%s4 + $0x7c] sm:$0xf]
        %v2931 = vld [vmem:[%s4 + $0x80] sm:$0xf]
        %v2932 = vld [vmem:[%s4 + $0x84] sm:$0xf]
        %v2933 = vld [vmem:[%s4 + $0x88] sm:$0xf]
        %v2934 = vld [vmem:[%s4 + $0x8c] sm:$0xf]
        %v2971 = vunpack.c.l.b16 %v2899
        %v2972 = vunpack.c.l.b16 %v2900
        %v2973 = vunpack.c.l.b16 %v2901
        %v2974 = vunpack.c.l.b16 %v2902
        %v2975 = vunpack.c.l.b16 %v2903
        %v2976 = vunpack.c.l.b16 %v2904
        %v2977 = vunpack.c.l.b16 %v2905
        %v2978 = vunpack.c.l.b16 %v2906
        %v2979 = vunpack.c.l.b16 %v2907
        %v2980 = vunpack.c.l.b16 %v2908
        %v2981 = vunpack.c.l.b16 %v2909
        %v2982 = vunpack.c.l.b16 %v2910
        %v2983 = vunpack.c.l.b16 %v2911
        %v2984 = vunpack.c.l.b16 %v2912
        %v2985 = vunpack.c.l.b16 %v2913
        %v2986 = vunpack.c.l.b16 %v2914
        %v2987 = vunpack.c.l.b16 %v2915
        %v2988 = vunpack.c.l.b16 %v2916
        %v2989 = vunpack.c.l.b16 %v2917
        %v2990 = vunpack.c.l.b16 %v2918
        %v2991 = vunpack.c.l.b16 %v2919
        %v2992 = vunpack.c.l.b16 %v2920
        %v2993 = vunpack.c.l.b16 %v2921
        %v2994 = vunpack.c.l.b16 %v2922
        %v2995 = vunpack.c.l.b16 %v2923
        %v2996 = vunpack.c.l.b16 %v2924
        %v2997 = vunpack.c.l.b16 %v2925
        %v2998 = vunpack.c.l.b16 %v2926
        %v2999 = vunpack.c.l.b16 %v2927
        %v3000 = vunpack.c.l.b16 %v2928
        %v3001 = vunpack.c.l.b16 %v2929
        %v3002 = vunpack.c.l.b16 %v2930
        %v3003 = vunpack.c.l.b16 %v2931
        %v3004 = vunpack.c.l.b16 %v2932
        %v3005 = vunpack.c.l.b16 %v2933
        %v3006 = vunpack.c.l.b16 %v2934
        %v3007 = vpack.c.b16 %v2972, %v2971
        %v3008 = vpack.c.b16 %v2974, %v2973
        %v3009 = vpack.c.b16 %v2976, %v2975
        %v3010 = vpack.c.b16 %v2978, %v2977
        %v3011 = vpack.c.b16 %v2980, %v2979
        %v3012 = vpack.c.b16 %v2982, %v2981
        %v3013 = vpack.c.b16 %v2984, %v2983
        %v3014 = vpack.c.b16 %v2986, %v2985
        %v3015 = vpack.c.b16 %v2988, %v2987
        %v3016 = vpack.c.b16 %v2990, %v2989
        %v3017 = vpack.c.b16 %v2992, %v2991
        %v3018 = vpack.c.b16 %v2994, %v2993
        %v3019 = vpack.c.b16 %v2996, %v2995
        %v3020 = vpack.c.b16 %v2998, %v2997
        %v3021 = vpack.c.b16 %v3000, %v2999
        %v3022 = vpack.c.b16 %v3002, %v3001
        %v3023 = vpack.c.b16 %v3004, %v3003
        %v3024 = vpack.c.b16 %v3006, %v3005
        %3043 = vmatprep.subr.bf16.mxu0 %v2876
        %3044 = vmatpush1.bf16.msra.mxu0 %v2875
        %3045 = vmatprep.subr.bf16.mxu0 %v2879
        %3046 = vmatpush1.bf16.msra.mxu0 %v2878
        %3047 = vmatprep.subr.bf16.mxu0 %v2882
        %3048 = vmatpush1.bf16.msra.mxu0 %v2881
        %3049 = vmatprep.subr.bf16.mxu0 %v2885
        %3050 = vmatpush1.bf16.msra.mxu0 %v2884
        %3051 = vmatprep.subr.bf16.mxu0 %v2888
        %3052 = vmatpush1.bf16.msra.mxu0 %v2887
        %3053 = vmatprep.subr.bf16.mxu0 %v2891
        %3054 = vmatpush1.bf16.msra.mxu0 %v2890
        %3055 = vmatprep.subr.bf16.mxu0 %v2894
        %3056 = vmatpush1.bf16.msra.mxu0 %v2893
        %3057 = vmatprep.subr.bf16.mxu0 %v2897
        %3058 = vmatpush1.bf16.msra.mxu0 %v2896
        %3059 = vmatprep.subr.bf16.mxu0 0
        %3060 = vmatpush1.bf16.msra.mxu0 0
        %3061 = vmatprep.subr.bf16.mxu0 0
        %3062 = vmatpush1.bf16.msra.mxu0 0
        %3063 = vmatprep.subr.bf16.mxu0 0
        %3064 = vmatpush1.bf16.msra.mxu0 0
        %3065 = vmatprep.subr.bf16.mxu0 0
        %3066 = vmatpush1.bf16.msra.mxu0 0
        %3067 = vmatprep.subr.bf16.mxu0 0
        %3068 = vmatpush1.bf16.msra.mxu0 0
        %3069 = vmatprep.subr.bf16.mxu0 0
        %3070 = vmatpush1.bf16.msra.mxu0 0
        %3071 = vmatprep.subr.bf16.mxu0 0
        %3072 = vmatpush1.bf16.msra.mxu0 0
        %3073 = vmatprep.subr.bf16.mxu0 0
        %3074 = vmatpush1.bf16.msra.mxu0 0
        %3075 = vmatprep.mubr.bf16.mxu0 0
        %3076 = vmatmul.mubr.bf16.gmra.mrb[0].mxu0 %v3007
        %v3077 = vpop.f32.mrb[0].mxu0
        %v3078 = vadd.f32 0.0, %v3077
        %v3079 = vpop.f32.mrb[0].mxu0
        %v3080 = vadd.f32 0.0, %v3079
        %v3081 = vpop.f32.mrb[0].mxu0
        %v3082 = vadd.f32 0.0, %v3081
        %v3083 = vpop.f32.mrb[0].mxu0
        %v3084 = vadd.f32 0.0, %v3083
        %3085 = vmatprep.mubr.bf16.mxu0 0
        %3086 = vmatmul.mubr.bf16.gmra.mrb[0].mxu0 %v3008
        %v3087 = vpop.f32.mrb[0].mxu0
        %v3088 = vadd.f32 0.0, %v3087
        %v3089 = vpop.f32.mrb[0].mxu0
        %v3090 = vadd.f32 0.0, %v3089
        %v3091 = vpop.f32.mrb[0].mxu0
        %v3092 = vadd.f32 0.0, %v3091
        %v3093 = vpop.f32.mrb[0].mxu0
        %v3094 = vadd.f32 0.0, %v3093
        %3095 = vmatprep.mubr.bf16.mxu0 0
        %3096 = vmatmul.mubr.bf16.gmra.mrb[0].mxu0 %v3009
        %v3097 = vpop.f32.mrb[0].mxu0
        %v3098 = vadd.f32 0.0, %v3097
        %v3099 = vpop.f32.mrb[0].mxu0
        %v3100 = vadd.f32 0.0, %v3099
        %v3101 = vpop.f32.mrb[0].mxu0
        %v3102 = vadd.f32 0.0, %v3101
        %v3103 = vpop.f32.mrb[0].mxu0
        %v3104 = vadd.f32 0.0, %v3103
        %3105 = vmatprep.mubr.bf16.mxu0 0
        %3106 = vmatmul.mubr.bf16.gmra.mrb[0].mxu0 %v3010
        %v3107 = vpop.f32.mrb[0].mxu0
        %v3108 = vadd.f32 0.0, %v3107
        %v3109 = vpop.f32.mrb[0].mxu0
        %v3110 = vadd.f32 0.0, %v3109
        %v3111 = vpop.f32.mrb[0].mxu0
        %v3112 = vadd.f32 0.0, %v3111
        %v3113 = vpop.f32.mrb[0].mxu0
        %v3114 = vadd.f32 0.0, %v3113
        %3115 = vmatprep.mubr.bf16.mxu0 0
        %3116 = vmatmul.mubr.bf16.gmra.mrb[0].mxu0 %v3011
        %v3117 = vpop.f32.mrb[0].mxu0
        %v3118 = vadd.f32 0.0, %v3117
        %v3119 = vpop.f32.mrb[0].mxu0
        %v3120 = vadd.f32 0.0, %v3119
        %v3121 = vpop.f32.mrb[0].mxu0
        %v3122 = vadd.f32 0.0, %v3121
        %v3123 = vpop.f32.mrb[0].mxu0
        %v3124 = vadd.f32 0.0, %v3123
        %3125 = vmatprep.mubr.bf16.mxu0 0
        %3126 = vmatmul.mubr.bf16.gmra.mrb[0].mxu0 %v3012
        %v3127 = vpop.f32.mrb[0].mxu0
        %v3128 = vadd.f32 0.0, %v3127
        %v3129 = vpop.f32.mrb[0].mxu0
        %v3130 = vadd.f32 0.0, %v3129
        %v3131 = vpop.f32.mrb[0].mxu0
        %v3132 = vadd.f32 0.0, %v3131
        %v3133 = vpop.f32.mrb[0].mxu0
        %v3134 = vadd.f32 0.0, %v3133
        %3135 = vmatprep.mubr.bf16.mxu0 0
        %3136 = vmatmul.mubr.bf16.gmra.mrb[0].mxu0 %v3013
        %v3137 = vpop.f32.mrb[0].mxu0
        %v3138 = vadd.f32 0.0, %v3137
        %v3139 = vpop.f32.mrb[0].mxu0
        %v3140 = vadd.f32 0.0, %v3139
        %v3141 = vpop.f32.mrb[0].mxu0
        %v3142 = vadd.f32 0.0, %v3141
        %v3143 = vpop.f32.mrb[0].mxu0
        %v3144 = vadd.f32 0.0, %v3143
        %3145 = vmatprep.mubr.bf16.mxu0 0
        %3146 = vmatmul.mubr.bf16.gmra.mrb[0].mxu0 %v3014
        %v3147 = vpop.f32.mrb[0].mxu0
        %v3148 = vadd.f32 0.0, %v3147
        %v3149 = vpop.f32.mrb[0].mxu0
        %v3150 = vadd.f32 0.0, %v3149
        %v3151 = vpop.f32.mrb[0].mxu0
        %v3152 = vadd.f32 0.0, %v3151
        %v3153 = vpop.f32.mrb[0].mxu0
        %v3154 = vadd.f32 0.0, %v3153
        %3155 = vmatprep.mubr.bf16.mxu0 0
        %3156 = vmatmul.mubr.bf16.gmra.mrb[0].mxu0 %v3015
        %v3157 = vpop.f32.mrb[0].mxu0
        %v3158 = vadd.f32 0.0, %v3157
        %v3159 = vpop.f32.mrb[0].mxu0
        %v3160 = vadd.f32 0.0, %v3159
        %v3161 = vpop.f32.mrb[0].mxu0
        %v3162 = vadd.f32 0.0, %v3161
        %v3163 = vpop.f32.mrb[0].mxu0
        %v3164 = vadd.f32 0.0, %v3163
        %3165 = vmatprep.mubr.bf16.mxu0 0
        %3166 = vmatmul.mubr.bf16.gmra.mrb[0].mxu0 %v3016
        %v3167 = vpop.f32.mrb[0].mxu0
        %v3168 = vadd.f32 0.0, %v3167
        %v3169 = vpop.f32.mrb[0].mxu0
        %v3170 = vadd.f32 0.0, %v3169
        %v3171 = vpop.f32.mrb[0].mxu0
        %v3172 = vadd.f32 0.0, %v3171
        %v3173 = vpop.f32.mrb[0].mxu0
        %v3174 = vadd.f32 0.0, %v3173
        %3175 = vmatprep.mubr.bf16.mxu0 0
        %3176 = vmatmul.mubr.bf16.gmra.mrb[0].mxu0 %v3017
        %v3177 = vpop.f32.mrb[0].mxu0
        %v3178 = vadd.f32 0.0, %v3177
        %v3179 = vpop.f32.mrb[0].mxu0
        %v3180 = vadd.f32 0.0, %v3179
        %v3181 = vpop.f32.mrb[0].mxu0
        %v3182 = vadd.f32 0.0, %v3181
        %v3183 = vpop.f32.mrb[0].mxu0
        %v3184 = vadd.f32 0.0, %v3183
        %3185 = vmatprep.mubr.bf16.mxu0 0
        %3186 = vmatmul.mubr.bf16.gmra.mrb[0].mxu0 %v3018
        %v3187 = vpop.f32.mrb[0].mxu0
        %v3188 = vadd.f32 0.0, %v3187
        %v3189 = vpop.f32.mrb[0].mxu0
        %v3190 = vadd.f32 0.0, %v3189
        %v3191 = vpop.f32.mrb[0].mxu0
        %v3192 = vadd.f32 0.0, %v3191
        %v3193 = vpop.f32.mrb[0].mxu0
        %v3194 = vadd.f32 0.0, %v3193
        %3195 = vmatprep.mubr.bf16.mxu0 0
        %3196 = vmatmul.mubr.bf16.gmra.mrb[0].mxu0 %v3019
        %v3197 = vpop.f32.mrb[0].mxu0
        %v3198 = vadd.f32 0.0, %v3197
        %v3199 = vpop.f32.mrb[0].mxu0
        %v3200 = vadd.f32 0.0, %v3199
        %v3201 = vpop.f32.mrb[0].mxu0
        %v3202 = vadd.f32 0.0, %v3201
        %v3203 = vpop.f32.mrb[0].mxu0
        %v3204 = vadd.f32 0.0, %v3203
        %3205 = vmatprep.mubr.bf16.mxu0 0
        %3206 = vmatmul.mubr.bf16.gmra.mrb[0].mxu0 %v3020
        %v3207 = vpop.f32.mrb[0].mxu0
        %v3208 = vadd.f32 0.0, %v3207
        %v3209 = vpop.f32.mrb[0].mxu0
        %v3210 = vadd.f32 0.0, %v3209
        %v3211 = vpop.f32.mrb[0].mxu0
        %v3212 = vadd.f32 0.0, %v3211
        %v3213 = vpop.f32.mrb[0].mxu0
        %v3214 = vadd.f32 0.0, %v3213
        %3215 = vmatprep.mubr.bf16.mxu0 0
        %3216 = vmatmul.mubr.bf16.gmra.mrb[0].mxu0 %v3021
        %v3217 = vpop.f32.mrb[0].mxu0
        %v3218 = vadd.f32 0.0, %v3217
        %v3219 = vpop.f32.mrb[0].mxu0
        %v3220 = vadd.f32 0.0, %v3219
        %v3221 = vpop.f32.mrb[0].mxu0
        %v3222 = vadd.f32 0.0, %v3221
        %v3223 = vpop.f32.mrb[0].mxu0
        %v3224 = vadd.f32 0.0, %v3223
        %3225 = vmatprep.mubr.bf16.mxu0 0
        %3226 = vmatmul.mubr.bf16.gmra.mrb[0].mxu0 %v3022
        %v3227 = vpop.f32.mrb[0].mxu0
        %v3228 = vadd.f32 0.0, %v3227
        %v3229 = vpop.f32.mrb[0].mxu0
        %v3230 = vadd.f32 0.0, %v3229
        %v3231 = vpop.f32.mrb[0].mxu0
        %v3232 = vadd.f32 0.0, %v3231
        %v3233 = vpop.f32.mrb[0].mxu0
        %v3234 = vadd.f32 0.0, %v3233
        %3235 = vmatprep.mubr.bf16.mxu0 0
        %3236 = vmatmul.mubr.bf16.gmra.mrb[0].mxu0 %v3023
        %v3237 = vpop.f32.mrb[0].mxu0
        %v3238 = vadd.f32 0.0, %v3237
        %v3239 = vpop.f32.mrb[0].mxu0
        %v3240 = vadd.f32 0.0, %v3239
        %v3241 = vpop.f32.mrb[0].mxu0
        %v3242 = vadd.f32 0.0, %v3241
        %v3243 = vpop.f32.mrb[0].mxu0
        %v3244 = vadd.f32 0.0, %v3243
        %3245 = vmatprep.mubr.bf16.mxu0 0
        %3246 = vmatmul.mubr.bf16.gmra.mrb[0].mxu0 %v3024
        %v3247 = vpop.f32.mrb[0].mxu0
        %v3248 = vadd.f32 0.0, %v3247
        %v3249 = vpop.f32.mrb[0].mxu0
        %v3250 = vadd.f32 0.0, %v3249
        %v3251 = vpop.f32.mrb[0].mxu0
        %v3252 = vadd.f32 0.0, %v3251
        %v3253 = vpop.f32.mrb[0].mxu0
        %v3254 = vadd.f32 0.0, %v3253
        %3255 = vdwg.mxu0
        %3256 = vmatprep.subr.bf16.mxu0 0
        %3257 = vmatpush1.bf16.msra.mxu0 %v2877
        %3258 = vmatprep.subr.bf16.mxu0 0
        %3259 = vmatpush1.bf16.msra.mxu0 %v2880
        %3260 = vmatprep.subr.bf16.mxu0 0
        %3261 = vmatpush1.bf16.msra.mxu0 %v2883
        %3262 = vmatprep.subr.bf16.mxu0 0
        %3263 = vmatpush1.bf16.msra.mxu0 %v2886
        %3264 = vmatprep.subr.bf16.mxu0 0
        %3265 = vmatpush1.bf16.msra.mxu0 %v2889
        %3266 = vmatprep.subr.bf16.mxu0 0
        %3267 = vmatpush1.bf16.msra.mxu0 %v2892
        %3268 = vmatprep.subr.bf16.mxu0 0
        %3269 = vmatpush1.bf16.msra.mxu0 %v2895
        %3270 = vmatprep.subr.bf16.mxu0 0
        %3271 = vmatpush1.bf16.msra.mxu0 %v2898
        %3272 = vmatprep.subr.bf16.mxu0 0
        %3273 = vmatpush1.bf16.msra.mxu0 0
        %3274 = vmatprep.subr.bf16.mxu0 0
        %3275 = vmatpush1.bf16.msra.mxu0 0
        %3276 = vmatprep.subr.bf16.mxu0 0
        %3277 = vmatpush1.bf16.msra.mxu0 0
        %3278 = vmatprep.subr.bf16.mxu0 0
        %3279 = vmatpush1.bf16.msra.mxu0 0
        %3280 = vmatprep.subr.bf16.mxu0 0
        %3281 = vmatpush1.bf16.msra.mxu0 0
        %3282 = vmatprep.subr.bf16.mxu0 0
        %3283 = vmatpush1.bf16.msra.mxu0 0
        %3284 = vmatprep.subr.bf16.mxu0 0
        %3285 = vmatpush1.bf16.msra.mxu0 0
        %3286 = vmatprep.subr.bf16.mxu0 0
        %3287 = vmatpush1.bf16.msra.mxu0 0
        %3288 = vmatprep.mubr.bf16.mxu0 0
        %3289 = vmatmul.mubr.bf16.gmra.mrb[0].mxu0 %v3007
        %v3290 = vpop.f32.mrb[0].mxu0
        %v3291 = vadd.f32 0.0, %v3290
        %v3292 = vpop.f32.mrb[0].mxu0
        %v3293 = vpop.f32.mrb[0].mxu0
        %v3294 = vadd.f32 0.0, %v3293
        %v3295 = vpop.f32.mrb[0].mxu0
        %3296 = vmatprep.mubr.bf16.mxu0 0
        %3297 = vmatmul.mubr.bf16.gmra.mrb[0].mxu0 %v3008
        %v3298 = vpop.f32.mrb[0].mxu0
        %v3299 = vadd.f32 0.0, %v3298
        %v3300 = vpop.f32.mrb[0].mxu0
        %v3301 = vpop.f32.mrb[0].mxu0
        %v3302 = vadd.f32 0.0, %v3301
        %v3303 = vpop.f32.mrb[0].mxu0
        %3304 = vmatprep.mubr.bf16.mxu0 0
        %3305 = vmatmul.mubr.bf16.gmra.mrb[0].mxu0 %v3009
        %v3306 = vpop.f32.mrb[0].mxu0
        %v3307 = vadd.f32 0.0, %v3306
        %v3308 = vpop.f32.mrb[0].mxu0
        %v3309 = vpop.f32.mrb[0].mxu0
        %v3310 = vadd.f32 0.0, %v3309
        %v3311 = vpop.f32.mrb[0].mxu0
        %3312 = vmatprep.mubr.bf16.mxu0 0
        %3313 = vmatmul.mubr.bf16.gmra.mrb[0].mxu0 %v3010
        %v3314 = vpop.f32.mrb[0].mxu0
        %v3315 = vadd.f32 0.0, %v3314
        %v3316 = vpop.f32.mrb[0].mxu0
        %v3317 = vpop.f32.mrb[0].mxu0
        %v3318 = vadd.f32 0.0, %v3317
        %v3319 = vpop.f32.mrb[0].mxu0
        %3320 = vmatprep.mubr.bf16.mxu0 0
        %3321 = vmatmul.mubr.bf16.gmra.mrb[0].mxu0 %v3011
        %v3322 = vpop.f32.mrb[0].mxu0
        %v3323 = vadd.f32 0.0, %v3322
        %v3324 = vpop.f32.mrb[0].mxu0
        %v3325 = vpop.f32.mrb[0].mxu0
        %v3326 = vadd.f32 0.0, %v3325
        %v3327 = vpop.f32.mrb[0].mxu0
        %3328 = vmatprep.mubr.bf16.mxu0 0
        %3329 = vmatmul.mubr.bf16.gmra.mrb[0].mxu0 %v3012
        %v3330 = vpop.f32.mrb[0].mxu0
        %v3331 = vadd.f32 0.0, %v3330
        %v3332 = vpop.f32.mrb[0].mxu0
        %v3333 = vpop.f32.mrb[0].mxu0
        %v3334 = vadd.f32 0.0, %v3333
        %v3335 = vpop.f32.mrb[0].mxu0
        %3336 = vmatprep.mubr.bf16.mxu0 0
        %3337 = vmatmul.mubr.bf16.gmra.mrb[0].mxu0 %v3013
        %v3338 = vpop.f32.mrb[0].mxu0
        %v3339 = vadd.f32 0.0, %v3338
        %v3340 = vpop.f32.mrb[0].mxu0
        %v3341 = vpop.f32.mrb[0].mxu0
        %v3342 = vadd.f32 0.0, %v3341
        %v3343 = vpop.f32.mrb[0].mxu0
        %3344 = vmatprep.mubr.bf16.mxu0 0
        %3345 = vmatmul.mubr.bf16.gmra.mrb[0].mxu0 %v3014
        %v3346 = vpop.f32.mrb[0].mxu0
        %v3347 = vadd.f32 0.0, %v3346
        %v3348 = vpop.f32.mrb[0].mxu0
        %v3349 = vpop.f32.mrb[0].mxu0
        %v3350 = vadd.f32 0.0, %v3349
        %v3351 = vpop.f32.mrb[0].mxu0
        %3352 = vmatprep.mubr.bf16.mxu0 0
        %3353 = vmatmul.mubr.bf16.gmra.mrb[0].mxu0 %v3015
        %v3354 = vpop.f32.mrb[0].mxu0
        %v3355 = vadd.f32 0.0, %v3354
        %v3356 = vpop.f32.mrb[0].mxu0
        %v3357 = vpop.f32.mrb[0].mxu0
        %v3358 = vadd.f32 0.0, %v3357
        %v3359 = vpop.f32.mrb[0].mxu0
        %3360 = vmatprep.mubr.bf16.mxu0 0
        %3361 = vmatmul.mubr.bf16.gmra.mrb[0].mxu0 %v3016
        %v3362 = vpop.f32.mrb[0].mxu0
        %v3363 = vadd.f32 0.0, %v3362
        %v3364 = vpop.f32.mrb[0].mxu0
        %v3365 = vpop.f32.mrb[0].mxu0
        %v3366 = vadd.f32 0.0, %v3365
        %v3367 = vpop.f32.mrb[0].mxu0
        %3368 = vmatprep.mubr.bf16.mxu0 0
        %3369 = vmatmul.mubr.bf16.gmra.mrb[0].mxu0 %v3017
        %v3370 = vpop.f32.mrb[0].mxu0
        %v3371 = vadd.f32 0.0, %v3370
        %v3372 = vpop.f32.mrb[0].mxu0
        %v3373 = vpop.f32.mrb[0].mxu0
        %v3374 = vadd.f32 0.0, %v3373
        %v3375 = vpop.f32.mrb[0].mxu0
        %3376 = vmatprep.mubr.bf16.mxu0 0
        %3377 = vmatmul.mubr.bf16.gmra.mrb[0].mxu0 %v3018
        %v3378 = vpop.f32.mrb[0].mxu0
        %v3379 = vadd.f32 0.0, %v3378
        %v3380 = vpop.f32.mrb[0].mxu0
        %v3381 = vpop.f32.mrb[0].mxu0
        %v3382 = vadd.f32 0.0, %v3381
        %v3383 = vpop.f32.mrb[0].mxu0
        %3384 = vmatprep.mubr.bf16.mxu0 0
        %3385 = vmatmul.mubr.bf16.gmra.mrb[0].mxu0 %v3019
        %v3386 = vpop.f32.mrb[0].mxu0
        %v3387 = vadd.f32 0.0, %v3386
        %v3388 = vpop.f32.mrb[0].mxu0
        %v3389 = vpop.f32.mrb[0].mxu0
        %v3390 = vadd.f32 0.0, %v3389
        %v3391 = vpop.f32.mrb[0].mxu0
        %3392 = vmatprep.mubr.bf16.mxu0 0
        %3393 = vmatmul.mubr.bf16.gmra.mrb[0].mxu0 %v3020
        %v3394 = vpop.f32.mrb[0].mxu0
        %v3395 = vadd.f32 0.0, %v3394
        %v3396 = vpop.f32.mrb[0].mxu0
        %v3397 = vpop.f32.mrb[0].mxu0
        %v3398 = vadd.f32 0.0, %v3397
        %v3399 = vpop.f32.mrb[0].mxu0
        %3400 = vmatprep.mubr.bf16.mxu0 0
        %3401 = vmatmul.mubr.bf16.gmra.mrb[0].mxu0 %v3021
        %v3402 = vpop.f32.mrb[0].mxu0
        %v3403 = vadd.f32 0.0, %v3402
        %v3404 = vpop.f32.mrb[0].mxu0
        %v3405 = vpop.f32.mrb[0].mxu0
        %v3406 = vadd.f32 0.0, %v3405
        %v3407 = vpop.f32.mrb[0].mxu0
        %3408 = vmatprep.mubr.bf16.mxu0 0
        %3409 = vmatmul.mubr.bf16.gmra.mrb[0].mxu0 %v3022
        %v3410 = vpop.f32.mrb[0].mxu0
        %v3411 = vadd.f32 0.0, %v3410
        %v3412 = vpop.f32.mrb[0].mxu0
        %v3413 = vpop.f32.mrb[0].mxu0
        %v3414 = vadd.f32 0.0, %v3413
        %v3415 = vpop.f32.mrb[0].mxu0
        %3416 = vmatprep.mubr.bf16.mxu0 0
        %3417 = vmatmul.mubr.bf16.gmra.mrb[0].mxu0 %v3023
        %v3418 = vpop.f32.mrb[0].mxu0
        %v3419 = vadd.f32 0.0, %v3418
        %v3420 = vpop.f32.mrb[0].mxu0
        %v3421 = vpop.f32.mrb[0].mxu0
        %v3422 = vadd.f32 0.0, %v3421
        %v3423 = vpop.f32.mrb[0].mxu0
        %3424 = vmatprep.mubr.bf16.mxu0 0
        %3425 = vmatmul.mubr.bf16.gmra.mrb[0].mxu0 %v3024
        %v3426 = vpop.f32.mrb[0].mxu0
        %v3427 = vadd.f32 0.0, %v3426
        %v3428 = vpop.f32.mrb[0].mxu0
        %v3429 = vpop.f32.mrb[0].mxu0
        %v3430 = vadd.f32 0.0, %v3429
        %v3431 = vpop.f32.mrb[0].mxu0
        %3432 = vdwg.mxu0
        %3433 = vrot.lane.b32.xlu0 %v3078, 17
        %v3434 = vpop.permute.xlu0 %3433
        %3435 = vrot.lane.b32.xlu0 %v3082, 17
        %v3436 = vpop.permute.xlu0 %3435
        %3437 = vrot.lane.b32.xlu0 %v3088, 17
        %v3438 = vpop.permute.xlu0 %3437
        %3439 = vrot.lane.b32.xlu0 %v3092, 17
        %v3440 = vpop.permute.xlu0 %3439
        %3441 = vrot.lane.b32.xlu0 %v3080, 17
        %v3442 = vpop.permute.xlu0 %3441
        %3443 = vrot.lane.b32.xlu0 %v3084, 17
        %v3444 = vpop.permute.xlu0 %3443
        %3445 = vrot.lane.b32.xlu0 %v3090, 17
        %v3446 = vpop.permute.xlu0 %3445
        %3447 = vrot.lane.b32.xlu0 %v3094, 17
        %v3448 = vpop.permute.xlu0 %3447
        %3449 = vrot.lane.b32.xlu0 %v3291, 17
        %v3450 = vpop.permute.xlu0 %3449
        %3451 = vrot.lane.b32.xlu0 %v3294, 17
        %v3452 = vpop.permute.xlu0 %3451
        %3453 = vrot.lane.b32.xlu0 %v3299, 17
        %v3454 = vpop.permute.xlu0 %3453
        %3455 = vrot.lane.b32.xlu0 %v3302, 17
        %v3456 = vpop.permute.xlu0 %3455
        %v3457 = vsel %vm1045, %v3442, %v3450
        %v3458 = vsel %vm1045, %v3444, %v3452
        %v3459 = vsel %vm1045, %v3446, %v3454
        %v3460 = vsel %vm1045, %v3448, %v3456
        %v3461 = vsel %vm1045, %v3434, %v3442
        %v3462 = vsel %vm1045, %v3436, %v3444
        %v3463 = vsel %vm1045, %v3438, %v3446
        %v3464 = vsel %vm1045, %v3440, %v3448
        %v3465 = vsel %vm1045, %v3450, %v3434
        %v3466 = vsel %vm1045, %v3452, %v3436
        %v3467 = vsel %vm1045, %v3454, %v3438
        %v3468 = vsel %vm1045, %v3456, %v3440
        %v3469 = vsel %vm1071, %v3465, 0.0
        %v3470 = vsel %vm1072, %v3461, 0.0
        %v3471 = vsel %vm1073, %v3457, 0.0
        %v3472 = vsel %vm1071, %v3466, 0.0
        %v3473 = vsel %vm1072, %v3462, 0.0
        %v3474 = vsel %vm1073, %v3458, 0.0
        %v3475 = vsel %vm1071, %v3467, 0.0
        %v3476 = vsel %vm1072, %v3463, 0.0
        %v3477 = vsel %vm1073, %v3459, 0.0
        %v3478 = vsel %vm1071, %v3468, 0.0
        %v3479 = vsel %vm1072, %v3464, 0.0
        %v3480 = vsel %vm1073, %v3460, 0.0
        %v3481 = vadd.f32 %v3158, %v3469
        %v3482 = vadd.f32 %v3160, %v3470
        %v3483 = vadd.f32 %v3355, %v3471
        %v3484 = vadd.f32 %v3162, %v3472
        %v3485 = vadd.f32 %v3164, %v3473
        %v3486 = vadd.f32 %v3358, %v3474
        %v3487 = vadd.f32 %v3168, %v3475
        %v3488 = vadd.f32 %v3170, %v3476
        %v3489 = vadd.f32 %v3363, %v3477
        %v3490 = vadd.f32 %v3172, %v3478
        %v3491 = vadd.f32 %v3174, %v3479
        %v3492 = vadd.f32 %v3366, %v3480
        %3493 = vrot.lane.b32.xlu0 %v3098, 16
        %v3494 = vpop.permute.xlu0 %3493
        %3495 = vrot.lane.b32.xlu0 %v3102, 16
        %v3496 = vpop.permute.xlu0 %3495
        %3497 = vrot.lane.b32.xlu0 %v3108, 16
        %v3498 = vpop.permute.xlu0 %3497
        %3499 = vrot.lane.b32.xlu0 %v3112, 16
        %v3500 = vpop.permute.xlu0 %3499
        %3501 = vrot.lane.b32.xlu0 %v3100, 16
        %v3502 = vpop.permute.xlu0 %3501
        %3503 = vrot.lane.b32.xlu0 %v3104, 16
        %v3504 = vpop.permute.xlu0 %3503
        %3505 = vrot.lane.b32.xlu0 %v3110, 16
        %v3506 = vpop.permute.xlu0 %3505
        %3507 = vrot.lane.b32.xlu0 %v3114, 16
        %v3508 = vpop.permute.xlu0 %3507
        %3509 = vrot.lane.b32.xlu0 %v3307, 16
        %v3510 = vpop.permute.xlu0 %3509
        %3511 = vrot.lane.b32.xlu0 %v3310, 16
        %v3512 = vpop.permute.xlu0 %3511
        %3513 = vrot.lane.b32.xlu0 %v3315, 16
        %v3514 = vpop.permute.xlu0 %3513
        %3515 = vrot.lane.b32.xlu0 %v3318, 16
        %v3516 = vpop.permute.xlu0 %3515
        %v3517 = vsel %vm1122, %v3502, %v3510
        %v3518 = vsel %vm1122, %v3504, %v3512
        %v3519 = vsel %vm1122, %v3506, %v3514
        %v3520 = vsel %vm1122, %v3508, %v3516
        %v3521 = vsel %vm1122, %v3494, %v3502
        %v3522 = vsel %vm1122, %v3496, %v3504
        %v3523 = vsel %vm1122, %v3498, %v3506
        %v3524 = vsel %vm1122, %v3500, %v3508
        %v3525 = vsel %vm1122, %v3510, %v3494
        %v3526 = vsel %vm1122, %v3512, %v3496
        %v3527 = vsel %vm1122, %v3514, %v3498
        %v3528 = vsel %vm1122, %v3516, %v3500
        %v3529 = vsel %vm1148, %v3525, 0.0
        %v3530 = vsel %vm1149, %v3521, 0.0
        %v3531 = vsel %vm1150, %v3517, 0.0
        %v3532 = vsel %vm1148, %v3526, 0.0
        %v3533 = vsel %vm1149, %v3522, 0.0
        %v3534 = vsel %vm1150, %v3518, 0.0
        %v3535 = vsel %vm1148, %v3527, 0.0
        %v3536 = vsel %vm1149, %v3523, 0.0
        %v3537 = vsel %vm1150, %v3519, 0.0
        %v3538 = vsel %vm1148, %v3528, 0.0
        %v3539 = vsel %vm1149, %v3524, 0.0
        %v3540 = vsel %vm1150, %v3520, 0.0
        %v3541 = vadd.f32 %v3481, %v3529
        %v3542 = vadd.f32 %v3482, %v3530
        %v3543 = vadd.f32 %v3483, %v3531
        %v3544 = vadd.f32 %v3484, %v3532
        %v3545 = vadd.f32 %v3485, %v3533
        %v3546 = vadd.f32 %v3486, %v3534
        %v3547 = vadd.f32 %v3487, %v3535
        %v3548 = vadd.f32 %v3488, %v3536
        %v3549 = vadd.f32 %v3489, %v3537
        %v3550 = vadd.f32 %v3490, %v3538
        %v3551 = vadd.f32 %v3491, %v3539
        %v3552 = vadd.f32 %v3492, %v3540
        %3553 = vrot.lane.b32.xlu0 %v3118, 15
        %v3554 = vpop.permute.xlu0 %3553
        %3555 = vrot.lane.b32.xlu0 %v3122, 15
        %v3556 = vpop.permute.xlu0 %3555
        %3557 = vrot.lane.b32.xlu0 %v3128, 15
        %v3558 = vpop.permute.xlu0 %3557
        %3559 = vrot.lane.b32.xlu0 %v3132, 15
        %v3560 = vpop.permute.xlu0 %3559
        %3561 = vrot.lane.b32.xlu0 %v3120, 15
        %v3562 = vpop.permute.xlu0 %3561
        %3563 = vrot.lane.b32.xlu0 %v3124, 15
        %v3564 = vpop.permute.xlu0 %3563
        %3565 = vrot.lane.b32.xlu0 %v3130, 15
        %v3566 = vpop.permute.xlu0 %3565
        %3567 = vrot.lane.b32.xlu0 %v3134, 15
        %v3568 = vpop.permute.xlu0 %3567
        %3569 = vrot.lane.b32.xlu0 %v3323, 15
        %v3570 = vpop.permute.xlu0 %3569
        %3571 = vrot.lane.b32.xlu0 %v3326, 15
        %v3572 = vpop.permute.xlu0 %3571
        %3573 = vrot.lane.b32.xlu0 %v3331, 15
        %v3574 = vpop.permute.xlu0 %3573
        %3575 = vrot.lane.b32.xlu0 %v3334, 15
        %v3576 = vpop.permute.xlu0 %3575
        %v3577 = vsel %vm1199, %v3562, %v3570
        %v3578 = vsel %vm1199, %v3564, %v3572
        %v3579 = vsel %vm1199, %v3566, %v3574
        %v3580 = vsel %vm1199, %v3568, %v3576
        %v3581 = vsel %vm1199, %v3554, %v3562
        %v3582 = vsel %vm1199, %v3556, %v3564
        %v3583 = vsel %vm1199, %v3558, %v3566
        %v3584 = vsel %vm1199, %v3560, %v3568
        %v3585 = vsel %vm1199, %v3570, %v3554
        %v3586 = vsel %vm1199, %v3572, %v3556
        %v3587 = vsel %vm1199, %v3574, %v3558
        %v3588 = vsel %vm1199, %v3576, %v3560
        %v3589 = vsel %vm1225, %v3585, 0.0
        %v3590 = vsel %vm1226, %v3581, 0.0
        %v3591 = vsel %vm1227, %v3577, 0.0
        %v3592 = vsel %vm1225, %v3586, 0.0
        %v3593 = vsel %vm1226, %v3582, 0.0
        %v3594 = vsel %vm1227, %v3578, 0.0
        %v3595 = vsel %vm1225, %v3587, 0.0
        %v3596 = vsel %vm1226, %v3583, 0.0
        %v3597 = vsel %vm1227, %v3579, 0.0
        %v3598 = vsel %vm1225, %v3588, 0.0
        %v3599 = vsel %vm1226, %v3584, 0.0
        %v3600 = vsel %vm1227, %v3580, 0.0
        %v3601 = vadd.f32 %v3541, %v3589
        %v3602 = vadd.f32 %v3542, %v3590
        %v3603 = vadd.f32 %v3543, %v3591
        %v3604 = vadd.f32 %v3544, %v3592
        %v3605 = vadd.f32 %v3545, %v3593
        %v3606 = vadd.f32 %v3546, %v3594
        %v3607 = vadd.f32 %v3547, %v3595
        %v3608 = vadd.f32 %v3548, %v3596
        %v3609 = vadd.f32 %v3549, %v3597
        %v3610 = vadd.f32 %v3550, %v3598
        %v3611 = vadd.f32 %v3551, %v3599
        %v3612 = vadd.f32 %v3552, %v3600
        %3613 = vrot.lane.b32.xlu0 %v3138, 1
        %v3614 = vpop.permute.xlu0 %3613
        %3615 = vrot.lane.b32.xlu0 %v3142, 1
        %v3616 = vpop.permute.xlu0 %3615
        %3617 = vrot.lane.b32.xlu0 %v3148, 1
        %v3618 = vpop.permute.xlu0 %3617
        %3619 = vrot.lane.b32.xlu0 %v3152, 1
        %v3620 = vpop.permute.xlu0 %3619
        %3621 = vrot.lane.b32.xlu0 %v3140, 1
        %v3622 = vpop.permute.xlu0 %3621
        %3623 = vrot.lane.b32.xlu0 %v3144, 1
        %v3624 = vpop.permute.xlu0 %3623
        %3625 = vrot.lane.b32.xlu0 %v3150, 1
        %v3626 = vpop.permute.xlu0 %3625
        %3627 = vrot.lane.b32.xlu0 %v3154, 1
        %v3628 = vpop.permute.xlu0 %3627
        %3629 = vrot.lane.b32.xlu0 %v3339, 1
        %v3630 = vpop.permute.xlu0 %3629
        %3631 = vrot.lane.b32.xlu0 %v3342, 1
        %v3632 = vpop.permute.xlu0 %3631
        %3633 = vrot.lane.b32.xlu0 %v3347, 1
        %v3634 = vpop.permute.xlu0 %3633
        %3635 = vrot.lane.b32.xlu0 %v3350, 1
        %v3636 = vpop.permute.xlu0 %3635
        %v3637 = vsel %vm1276, %v3622, %v3630
        %v3638 = vsel %vm1276, %v3624, %v3632
        %v3639 = vsel %vm1276, %v3626, %v3634
        %v3640 = vsel %vm1276, %v3628, %v3636
        %v3641 = vsel %vm1276, %v3614, %v3622
        %v3642 = vsel %vm1276, %v3616, %v3624
        %v3643 = vsel %vm1276, %v3618, %v3626
        %v3644 = vsel %vm1276, %v3620, %v3628
        %v3645 = vsel %vm1276, %v3630, %v3614
        %v3646 = vsel %vm1276, %v3632, %v3616
        %v3647 = vsel %vm1276, %v3634, %v3618
        %v3648 = vsel %vm1276, %v3636, %v3620
        %v3649 = vsel %vm1302, %v3645, 0.0
        %v3650 = vsel %vm1303, %v3641, 0.0
        %v3651 = vsel %vm1304, %v3637, 0.0
        %v3652 = vsel %vm1302, %v3646, 0.0
        %v3653 = vsel %vm1303, %v3642, 0.0
        %v3654 = vsel %vm1304, %v3638, 0.0
        %v3655 = vsel %vm1302, %v3647, 0.0
        %v3656 = vsel %vm1303, %v3643, 0.0
        %v3657 = vsel %vm1304, %v3639, 0.0
        %v3658 = vsel %vm1302, %v3648, 0.0
        %v3659 = vsel %vm1303, %v3644, 0.0
        %v3660 = vsel %vm1304, %v3640, 0.0
        %v3661 = vadd.f32 %v3601, %v3649
        %v3662 = vadd.f32 %v3602, %v3650
        %v3663 = vadd.f32 %v3603, %v3651
        %v3664 = vadd.f32 %v3604, %v3652
        %v3665 = vadd.f32 %v3605, %v3653
        %v3666 = vadd.f32 %v3606, %v3654
        %v3667 = vadd.f32 %v3607, %v3655
        %v3668 = vadd.f32 %v3608, %v3656
        %v3669 = vadd.f32 %v3609, %v3657
        %v3670 = vadd.f32 %v3610, %v3658
        %v3671 = vadd.f32 %v3611, %v3659
        %v3672 = vadd.f32 %v3612, %v3660
        %3673 = vrot.lane.b32.xlu0 %v3178, 127
        %v3674 = vpop.permute.xlu0 %3673
        %3675 = vrot.lane.b32.xlu0 %v3182, 127
        %v3676 = vpop.permute.xlu0 %3675
        %3677 = vrot.lane.b32.xlu0 %v3188, 127
        %v3678 = vpop.permute.xlu0 %3677
        %3679 = vrot.lane.b32.xlu0 %v3192, 127
        %v3680 = vpop.permute.xlu0 %3679
        %3681 = vrot.lane.b32.xlu0 %v3180, 127
        %v3682 = vpop.permute.xlu0 %3681
        %3683 = vrot.lane.b32.xlu0 %v3184, 127
        %v3684 = vpop.permute.xlu0 %3683
        %3685 = vrot.lane.b32.xlu0 %v3190, 127
        %v3686 = vpop.permute.xlu0 %3685
        %3687 = vrot.lane.b32.xlu0 %v3194, 127
        %v3688 = vpop.permute.xlu0 %3687
        %3689 = vrot.lane.b32.xlu0 %v3371, 127
        %v3690 = vpop.permute.xlu0 %3689
        %3691 = vrot.lane.b32.xlu0 %v3374, 127
        %v3692 = vpop.permute.xlu0 %3691
        %3693 = vrot.lane.b32.xlu0 %v3379, 127
        %v3694 = vpop.permute.xlu0 %3693
        %3695 = vrot.lane.b32.xlu0 %v3382, 127
        %v3696 = vpop.permute.xlu0 %3695
        %v3697 = vsel %vm1353, %v3682, %v3690
        %v3698 = vsel %vm1353, %v3684, %v3692
        %v3699 = vsel %vm1353, %v3686, %v3694
        %v3700 = vsel %vm1353, %v3688, %v3696
        %v3701 = vsel %vm1353, %v3674, %v3682
        %v3702 = vsel %vm1353, %v3676, %v3684
        %v3703 = vsel %vm1353, %v3678, %v3686
        %v3704 = vsel %vm1353, %v3680, %v3688
        %v3705 = vsel %vm1353, %v3690, %v3674
        %v3706 = vsel %vm1353, %v3692, %v3676
        %v3707 = vsel %vm1353, %v3694, %v3678
        %v3708 = vsel %vm1353, %v3696, %v3680
        %v3709 = vsel %vm1379, %v3701, 0.0
        %v3710 = vsel %vm1380, %v3697, 0.0
        %v3711 = vsel %vm1381, %v3705, 0.0
        %v3712 = vsel %vm1379, %v3702, 0.0
        %v3713 = vsel %vm1380, %v3698, 0.0
        %v3714 = vsel %vm1381, %v3706, 0.0
        %v3715 = vsel %vm1379, %v3703, 0.0
        %v3716 = vsel %vm1380, %v3699, 0.0
        %v3717 = vsel %vm1381, %v3707, 0.0
        %v3718 = vsel %vm1379, %v3704, 0.0
        %v3719 = vsel %vm1380, %v3700, 0.0
        %v3720 = vsel %vm1381, %v3708, 0.0
        %v3721 = vadd.f32 %v3661, %v3709
        %v3722 = vadd.f32 %v3662, %v3710
        %v3723 = vadd.f32 %v3663, %v3711
        %v3724 = vadd.f32 %v3664, %v3712
        %v3725 = vadd.f32 %v3665, %v3713
        %v3726 = vadd.f32 %v3666, %v3714
        %v3727 = vadd.f32 %v3667, %v3715
        %v3728 = vadd.f32 %v3668, %v3716
        %v3729 = vadd.f32 %v3669, %v3717
        %v3730 = vadd.f32 %v3670, %v3718
        %v3731 = vadd.f32 %v3671, %v3719
        %v3732 = vadd.f32 %v3672, %v3720
        %3733 = vrot.lane.b32.xlu0 %v3198, 113
        %v3734 = vpop.permute.xlu0 %3733
        %3735 = vrot.lane.b32.xlu0 %v3202, 113
        %v3736 = vpop.permute.xlu0 %3735
        %3737 = vrot.lane.b32.xlu0 %v3208, 113
        %v3738 = vpop.permute.xlu0 %3737
        %3739 = vrot.lane.b32.xlu0 %v3212, 113
        %v3740 = vpop.permute.xlu0 %3739
        %3741 = vrot.lane.b32.xlu0 %v3200, 113
        %v3742 = vpop.permute.xlu0 %3741
        %3743 = vrot.lane.b32.xlu0 %v3204, 113
        %v3744 = vpop.permute.xlu0 %3743
        %3745 = vrot.lane.b32.xlu0 %v3210, 113
        %v3746 = vpop.permute.xlu0 %3745
        %3747 = vrot.lane.b32.xlu0 %v3214, 113
        %v3748 = vpop.permute.xlu0 %3747
        %3749 = vrot.lane.b32.xlu0 %v3387, 113
        %v3750 = vpop.permute.xlu0 %3749
        %3751 = vrot.lane.b32.xlu0 %v3390, 113
        %v3752 = vpop.permute.xlu0 %3751
        %3753 = vrot.lane.b32.xlu0 %v3395, 113
        %v3754 = vpop.permute.xlu0 %3753
        %3755 = vrot.lane.b32.xlu0 %v3398, 113
        %v3756 = vpop.permute.xlu0 %3755
        %v3757 = vsel %vm1430, %v3742, %v3750
        %v3758 = vsel %vm1430, %v3744, %v3752
        %v3759 = vsel %vm1430, %v3746, %v3754
        %v3760 = vsel %vm1430, %v3748, %v3756
        %v3761 = vsel %vm1430, %v3734, %v3742
        %v3762 = vsel %vm1430, %v3736, %v3744
        %v3763 = vsel %vm1430, %v3738, %v3746
        %v3764 = vsel %vm1430, %v3740, %v3748
        %v3765 = vsel %vm1430, %v3750, %v3734
        %v3766 = vsel %vm1430, %v3752, %v3736
        %v3767 = vsel %vm1430, %v3754, %v3738
        %v3768 = vsel %vm1430, %v3756, %v3740
        %v3769 = vsel %vm1456, %v3761, 0.0
        %v3770 = vsel %vm1457, %v3757, 0.0
        %v3771 = vsel %vm1458, %v3765, 0.0
        %v3772 = vsel %vm1456, %v3762, 0.0
        %v3773 = vsel %vm1457, %v3758, 0.0
        %v3774 = vsel %vm1458, %v3766, 0.0
        %v3775 = vsel %vm1456, %v3763, 0.0
        %v3776 = vsel %vm1457, %v3759, 0.0
        %v3777 = vsel %vm1458, %v3767, 0.0
        %v3778 = vsel %vm1456, %v3764, 0.0
        %v3779 = vsel %vm1457, %v3760, 0.0
        %v3780 = vsel %vm1458, %v3768, 0.0
        %v3781 = vadd.f32 %v3721, %v3769
        %v3782 = vadd.f32 %v3722, %v3770
        %v3783 = vadd.f32 %v3723, %v3771
        %v3784 = vadd.f32 %v3724, %v3772
        %v3785 = vadd.f32 %v3725, %v3773
        %v3786 = vadd.f32 %v3726, %v3774
        %v3787 = vadd.f32 %v3727, %v3775
        %v3788 = vadd.f32 %v3728, %v3776
        %v3789 = vadd.f32 %v3729, %v3777
        %v3790 = vadd.f32 %v3730, %v3778
        %v3791 = vadd.f32 %v3731, %v3779
        %v3792 = vadd.f32 %v3732, %v3780
        %3793 = vrot.lane.b32.xlu0 %v3218, 112
        %v3794 = vpop.permute.xlu0 %3793
        %3795 = vrot.lane.b32.xlu0 %v3222, 112
        %v3796 = vpop.permute.xlu0 %3795
        %3797 = vrot.lane.b32.xlu0 %v3228, 112
        %v3798 = vpop.permute.xlu0 %3797
        %3799 = vrot.lane.b32.xlu0 %v3232, 112
        %v3800 = vpop.permute.xlu0 %3799
        %3801 = vrot.lane.b32.xlu0 %v3220, 112
        %v3802 = vpop.permute.xlu0 %3801
        %3803 = vrot.lane.b32.xlu0 %v3224, 112
        %v3804 = vpop.permute.xlu0 %3803
        %3805 = vrot.lane.b32.xlu0 %v3230, 112
        %v3806 = vpop.permute.xlu0 %3805
        %3807 = vrot.lane.b32.xlu0 %v3234, 112
        %v3808 = vpop.permute.xlu0 %3807
        %3809 = vrot.lane.b32.xlu0 %v3403, 112
        %v3810 = vpop.permute.xlu0 %3809
        %3811 = vrot.lane.b32.xlu0 %v3406, 112
        %v3812 = vpop.permute.xlu0 %3811
        %3813 = vrot.lane.b32.xlu0 %v3411, 112
        %v3814 = vpop.permute.xlu0 %3813
        %3815 = vrot.lane.b32.xlu0 %v3414, 112
        %v3816 = vpop.permute.xlu0 %3815
        %v3817 = vsel %vm1507, %v3802, %v3810
        %v3818 = vsel %vm1507, %v3804, %v3812
        %v3819 = vsel %vm1507, %v3806, %v3814
        %v3820 = vsel %vm1507, %v3808, %v3816
        %v3821 = vsel %vm1507, %v3794, %v3802
        %v3822 = vsel %vm1507, %v3796, %v3804
        %v3823 = vsel %vm1507, %v3798, %v3806
        %v3824 = vsel %vm1507, %v3800, %v3808
        %v3825 = vsel %vm1507, %v3810, %v3794
        %v3826 = vsel %vm1507, %v3812, %v3796
        %v3827 = vsel %vm1507, %v3814, %v3798
        %v3828 = vsel %vm1507, %v3816, %v3800
        %v3829 = vsel %vm1533, %v3821, 0.0
        %v3830 = vsel %vm1534, %v3817, 0.0
        %v3831 = vsel %vm1535, %v3825, 0.0
        %v3832 = vsel %vm1533, %v3822, 0.0
        %v3833 = vsel %vm1534, %v3818, 0.0
        %v3834 = vsel %vm1535, %v3826, 0.0
        %v3835 = vsel %vm1533, %v3823, 0.0
        %v3836 = vsel %vm1534, %v3819, 0.0
        %v3837 = vsel %vm1535, %v3827, 0.0
        %v3838 = vsel %vm1533, %v3824, 0.0
        %v3839 = vsel %vm1534, %v3820, 0.0
        %v3840 = vsel %vm1535, %v3828, 0.0
        %v3841 = vadd.f32 %v3781, %v3829
        %v3842 = vadd.f32 %v3782, %v3830
        %v3843 = vadd.f32 %v3783, %v3831
        %v3844 = vadd.f32 %v3784, %v3832
        %v3845 = vadd.f32 %v3785, %v3833
        %v3846 = vadd.f32 %v3786, %v3834
        %v3847 = vadd.f32 %v3787, %v3835
        %v3848 = vadd.f32 %v3788, %v3836
        %v3849 = vadd.f32 %v3789, %v3837
        %v3850 = vadd.f32 %v3790, %v3838
        %v3851 = vadd.f32 %v3791, %v3839
        %v3852 = vadd.f32 %v3792, %v3840
        %3853 = vrot.lane.b32.xlu0 %v3238, 111
        %v3854 = vpop.permute.xlu0 %3853
        %3855 = vrot.lane.b32.xlu0 %v3242, 111
        %v3856 = vpop.permute.xlu0 %3855
        %3857 = vrot.lane.b32.xlu0 %v3248, 111
        %v3858 = vpop.permute.xlu0 %3857
        %3859 = vrot.lane.b32.xlu0 %v3252, 111
        %v3860 = vpop.permute.xlu0 %3859
        %3861 = vrot.lane.b32.xlu0 %v3240, 111
        %v3862 = vpop.permute.xlu0 %3861
        %3863 = vrot.lane.b32.xlu0 %v3244, 111
        %v3864 = vpop.permute.xlu0 %3863
        %3865 = vrot.lane.b32.xlu0 %v3250, 111
        %v3866 = vpop.permute.xlu0 %3865
        %3867 = vrot.lane.b32.xlu0 %v3254, 111
        %v3868 = vpop.permute.xlu0 %3867
        %3869 = vrot.lane.b32.xlu0 %v3419, 111
        %v3870 = vpop.permute.xlu0 %3869
        %3871 = vrot.lane.b32.xlu0 %v3422, 111
        %v3872 = vpop.permute.xlu0 %3871
        %3873 = vrot.lane.b32.xlu0 %v3427, 111
        %v3874 = vpop.permute.xlu0 %3873
        %3875 = vrot.lane.b32.xlu0 %v3430, 111
        %v3876 = vpop.permute.xlu0 %3875
        %v3877 = vsel %vm1584, %v3862, %v3870
        %v3878 = vsel %vm1584, %v3864, %v3872
        %v3879 = vsel %vm1584, %v3866, %v3874
        %v3880 = vsel %vm1584, %v3868, %v3876
        %v3881 = vsel %vm1584, %v3854, %v3862
        %v3882 = vsel %vm1584, %v3856, %v3864
        %v3883 = vsel %vm1584, %v3858, %v3866
        %v3884 = vsel %vm1584, %v3860, %v3868
        %v3885 = vsel %vm1584, %v3870, %v3854
        %v3886 = vsel %vm1584, %v3872, %v3856
        %v3887 = vsel %vm1584, %v3874, %v3858
        %v3888 = vsel %vm1584, %v3876, %v3860
        %v3889 = vsel %vm1610, %v3881, 0.0
        %v3890 = vsel %vm1611, %v3877, 0.0
        %v3891 = vsel %vm1612, %v3885, 0.0
        %v3892 = vsel %vm1610, %v3882, 0.0
        %v3893 = vsel %vm1611, %v3878, 0.0
        %v3894 = vsel %vm1612, %v3886, 0.0
        %v3895 = vsel %vm1610, %v3883, 0.0
        %v3896 = vsel %vm1611, %v3879, 0.0
        %v3897 = vsel %vm1612, %v3887, 0.0
        %v3898 = vsel %vm1610, %v3884, 0.0
        %v3899 = vsel %vm1611, %v3880, 0.0
        %v3900 = vsel %vm1612, %v3888, 0.0
        %v3901 = vadd.f32 %v3841, %v3889
        %v3902 = vadd.f32 %v3842, %v3890
        %v3903 = vadd.f32 %v3843, %v3891
        %v3904 = vadd.f32 %v3844, %v3892
        %v3905 = vadd.f32 %v3845, %v3893
        %v3906 = vadd.f32 %v3846, %v3894
        %v3907 = vadd.f32 %v3847, %v3895
        %v3908 = vadd.f32 %v3848, %v3896
        %v3909 = vadd.f32 %v3849, %v3897
        %v3910 = vadd.f32 %v3850, %v3898
        %v3911 = vadd.f32 %v3851, %v3899
        %v3912 = vadd.f32 %v3852, %v3900
        %s3913 = scalar_lea.vmem %s7, 64
        %v3914 = vld [vmem:[%s3913] sm:$0xff]
        %v3915 = vld [vmem:[%s3913 + $0x8] sm:$0xff]
        %v3916 = vld [vmem:[%s3913 + $0x10] sm:$0xff]
        %v3917 = vld [vmem:[%s3913 + $0x18] sm:$0xff]
        %3919 = vset.pattern.permute.xlu0 0
        %3920 = vperm.xlu0 %3919, %v3914
        %v3921 = vpop.permute.xlu0 %3920
        %3924 = vset.pattern.permute.xlu0 0
        %3925 = vperm.xlu0 %3924, %v3915
        %v3926 = vpop.permute.xlu0 %3925
        %3929 = vset.pattern.permute.xlu0 0
        %3930 = vperm.xlu0 %3929, %v3916
        %v3931 = vpop.permute.xlu0 %3930
        %3934 = vset.pattern.permute.xlu0 0
        %3935 = vperm.xlu0 %3934, %v3917
        %v3936 = vpop.permute.xlu0 %3935
        %v3938 = vadd.f32 %v3901, %v3921
        %v3939 = vadd.f32 %v3902, %v3921
        %v3940 = vadd.f32 %v3903, %v3921
        %v3941 = vadd.f32 %v3904, %v3926
        %v3942 = vadd.f32 %v3905, %v3926
        %v3943 = vadd.f32 %v3906, %v3926
        %v3944 = vadd.f32 %v3907, %v3931
        %v3945 = vadd.f32 %v3908, %v3931
        %v3946 = vadd.f32 %v3909, %v3931
        %v3947 = vadd.f32 %v3910, %v3936
        %v3948 = vadd.f32 %v3911, %v3936
        %v3949 = vadd.f32 %v3912, %v3936
        %vm3950 = vcmp.ge.f32.partialorder %v3938, 0.0
        %vm3951 = vcmp.ge.f32.partialorder %v3939, 0.0
        %vm3952 = vcmp.ge.f32.partialorder %v3940, 0.0
        %vm3953 = vcmp.ge.f32.partialorder %v3941, 0.0
        %vm3954 = vcmp.ge.f32.partialorder %v3942, 0.0
        %vm3955 = vcmp.ge.f32.partialorder %v3943, 0.0
        %vm3956 = vcmp.ge.f32.partialorder %v3944, 0.0
        %vm3957 = vcmp.ge.f32.partialorder %v3945, 0.0
        %vm3958 = vcmp.ge.f32.partialorder %v3946, 0.0
        %vm3959 = vcmp.ge.f32.partialorder %v3947, 0.0
        %vm3960 = vcmp.ge.f32.partialorder %v3948, 0.0
        %vm3961 = vcmp.ge.f32.partialorder %v3949, 0.0
        %v3962 = vmul.f32 %v3938, 0.01
        %v3963 = vmul.f32 %v3939, 0.01
        %v3964 = vmul.f32 %v3940, 0.01
        %v3965 = vmul.f32 %v3941, 0.01
        %v3966 = vmul.f32 %v3942, 0.01
        %v3967 = vmul.f32 %v3943, 0.01
        %v3968 = vmul.f32 %v3944, 0.01
        %v3969 = vmul.f32 %v3945, 0.01
        %v3970 = vmul.f32 %v3946, 0.01
        %v3971 = vmul.f32 %v3947, 0.01
        %v3972 = vmul.f32 %v3948, 0.01
        %v3973 = vmul.f32 %v3949, 0.01
        %v3974 = vsel %vm3950, %v3938, %v3962
        %v3975 = vsel %vm3951, %v3939, %v3963
        %v3976 = vsel %vm3952, %v3940, %v3964
        %v3977 = vsel %vm3953, %v3941, %v3965
        %v3978 = vsel %vm3954, %v3942, %v3966
        %v3979 = vsel %vm3955, %v3943, %v3967
        %v3980 = vsel %vm3956, %v3944, %v3968
        %v3981 = vsel %vm3957, %v3945, %v3969
        %v3982 = vsel %vm3958, %v3946, %v3970
        %v3983 = vsel %vm3959, %v3947, %v3971
        %v3984 = vsel %vm3960, %v3948, %v3972
        %v3985 = vsel %vm3961, %v3949, %v3973
        %v3986 = vpack.c.bf16 %v3977, %v3974
        %v3987 = vpack.c.bf16 %v3978, %v3975
        %v3988 = vpack.c.bf16 %v3979, %v3976
        %v3989 = vpack.c.bf16 %v3983, %v3980
        %v3990 = vpack.c.bf16 %v3984, %v3981
        %v3991 = vpack.c.bf16 %v3985, %v3982
        %3992 = vst [vmem:[#allocation2 + $0xc0] sm:$0xff] %v3986
        %3993 = vst [vmem:[#allocation2 + $0xc8] sm:$0xff] %v3987
        %3994 = vst [vmem:[#allocation2 + $0xd0] sm:$0xff] %v3988
        %3995 = vst [vmem:[#allocation2 + $0xd8] sm:$0xff] %v3989
        %3996 = vst [vmem:[#allocation2 + $0xe0] sm:$0xff] %v3990
        %3997 = vst [vmem:[#allocation2 + $0xe8] sm:$0xff] %v3991
        %v3998 = vld [vmem:[#allocation2] sm:$0xff]
        %v3999 = vld [vmem:[#allocation2 + $0x8] sm:$0xff]
        %v4000 = vld [vmem:[#allocation2 + $0x10] sm:$0xff]
        %v4001 = vld [vmem:[#allocation2 + $0x18] sm:$0xff]
        %v4002 = vld [vmem:[#allocation2 + $0x20] sm:$0xff]
        %v4003 = vld [vmem:[#allocation2 + $0x28] sm:$0xff]
        %v4004 = vld [vmem:[#allocation2 + $0x30] sm:$0xff]
        %v4005 = vld [vmem:[#allocation2 + $0x38] sm:$0xff]
        %v4006 = vld [vmem:[#allocation2 + $0x40] sm:$0xff]
        %v4007 = vld [vmem:[#allocation2 + $0x48] sm:$0xff]
        %v4008 = vld [vmem:[#allocation2 + $0x50] sm:$0xff]
        %v4009 = vld [vmem:[#allocation2 + $0x58] sm:$0xff]
        %v4010 = vld [vmem:[#allocation2 + $0x60] sm:$0xff]
        %v4011 = vld [vmem:[#allocation2 + $0x68] sm:$0xff]
        %v4012 = vld [vmem:[#allocation2 + $0x70] sm:$0xff]
        %v4013 = vld [vmem:[#allocation2 + $0x78] sm:$0xff]
        %v4014 = vld [vmem:[#allocation2 + $0x80] sm:$0xff]
        %v4015 = vld [vmem:[#allocation2 + $0x88] sm:$0xff]
        %v4016 = vld [vmem:[#allocation2 + $0x90] sm:$0xff]
        %v4017 = vld [vmem:[#allocation2 + $0x98] sm:$0xff]
        %v4018 = vld [vmem:[#allocation2 + $0xa0] sm:$0xff]
        %v4019 = vld [vmem:[#allocation2 + $0xa8] sm:$0xff]
        %v4020 = vld [vmem:[#allocation2 + $0xb0] sm:$0xff]
        %v4021 = vld [vmem:[#allocation2 + $0xb8] sm:$0xff]
        %v4022 = vld [vmem:[#allocation2 + $0xc0] sm:$0xff]
        %v4023 = vld [vmem:[#allocation2 + $0xc8] sm:$0xff]
        %v4024 = vld [vmem:[#allocation2 + $0xd0] sm:$0xff]
        %v4025 = vld [vmem:[#allocation2 + $0xd8] sm:$0xff]
        %v4026 = vld [vmem:[#allocation2 + $0xe0] sm:$0xff]
        %v4027 = vld [vmem:[#allocation2 + $0xe8] sm:$0xff]
        %v4028 = vld [vmem:[%s5] sm:$0xff]
        %v4029 = vld [vmem:[%s5 + $0x8] sm:$0xff]
        %v4030 = vld [vmem:[%s5 + $0x10] sm:$0xff]
        %v4031 = vld [vmem:[%s5 + $0x18] sm:$0xff]
        %v4032 = vld [vmem:[%s5 + $0x20] sm:$0xff]
        %v4033 = vld [vmem:[%s5 + $0x28] sm:$0xff]
        %v4034 = vld [vmem:[%s5 + $0x30] sm:$0xff]
        %v4035 = vld [vmem:[%s5 + $0x38] sm:$0xff]
        %v4036 = vld [vmem:[%s5 + $0x40] sm:$0xff]
        %v4037 = vld [vmem:[%s5 + $0x48] sm:$0xff]
        %v4038 = vld [vmem:[%s5 + $0x50] sm:$0xff]
        %v4039 = vld [vmem:[%s5 + $0x58] sm:$0xff]
        %v4040 = vld [vmem:[%s5 + $0x60] sm:$0xff]
        %v4041 = vld [vmem:[%s5 + $0x68] sm:$0xff]
        %v4042 = vld [vmem:[%s5 + $0x70] sm:$0xff]
        %v4043 = vld [vmem:[%s5 + $0x78] sm:$0xff]
        %v4044 = vld [vmem:[%s5 + $0x80] sm:$0xff]
        %v4045 = vld [vmem:[%s5 + $0x88] sm:$0xff]
        %v4046 = vld [vmem:[%s5 + $0x90] sm:$0xff]
        %v4047 = vld [vmem:[%s5 + $0x98] sm:$0xff]
        %v4048 = vld [vmem:[%s5 + $0xa0] sm:$0xff]
        %v4049 = vld [vmem:[%s5 + $0xa8] sm:$0xff]
        %v4050 = vld [vmem:[%s5 + $0xb0] sm:$0xff]
        %v4051 = vld [vmem:[%s5 + $0xb8] sm:$0xff]
        %v4052 = vld [vmem:[%s5 + $0xc0] sm:$0xff]
        %v4053 = vld [vmem:[%s5 + $0xc8] sm:$0xff]
        %v4054 = vld [vmem:[%s5 + $0xd0] sm:$0xff]
        %v4055 = vld [vmem:[%s5 + $0xd8] sm:$0xff]
        %v4056 = vld [vmem:[%s5 + $0xe0] sm:$0xff]
        %v4057 = vld [vmem:[%s5 + $0xe8] sm:$0xff]
        %v4058 = vld [vmem:[%s5 + $0xf0] sm:$0xff]
        %v4059 = vld [vmem:[%s5 + $0xf8] sm:$0xff]
        %v4060 = vld [vmem:[%s5 + $0x100] sm:$0xff]
        %v4061 = vld [vmem:[%s5 + $0x108] sm:$0xff]
        %v4062 = vld [vmem:[%s5 + $0x110] sm:$0xff]
        %v4063 = vld [vmem:[%s5 + $0x118] sm:$0xff]
        %v4100 = vunpack.c.l.b16 %v4028
        %v4101 = vunpack.c.h.b16 %v4028
        %v4102 = vunpack.c.l.b16 %v4029
        %v4103 = vunpack.c.h.b16 %v4029
        %v4104 = vunpack.c.l.b16 %v4030
        %v4105 = vunpack.c.h.b16 %v4030
        %v4106 = vunpack.c.l.b16 %v4031
        %v4107 = vunpack.c.h.b16 %v4031
        %v4108 = vunpack.c.l.b16 %v4032
        %v4109 = vunpack.c.h.b16 %v4032
        %v4110 = vunpack.c.l.b16 %v4033
        %v4111 = vunpack.c.h.b16 %v4033
        %v4112 = vunpack.c.l.b16 %v4034
        %v4113 = vunpack.c.h.b16 %v4034
        %v4114 = vunpack.c.l.b16 %v4035
        %v4115 = vunpack.c.h.b16 %v4035
        %v4116 = vunpack.c.l.b16 %v4036
        %v4117 = vunpack.c.h.b16 %v4036
        %v4118 = vunpack.c.l.b16 %v4037
        %v4119 = vunpack.c.h.b16 %v4037
        %v4120 = vunpack.c.l.b16 %v4038
        %v4121 = vunpack.c.h.b16 %v4038
        %v4122 = vunpack.c.l.b16 %v4039
        %v4123 = vunpack.c.h.b16 %v4039
        %v4124 = vunpack.c.l.b16 %v4040
        %v4125 = vunpack.c.h.b16 %v4040
        %v4126 = vunpack.c.l.b16 %v4041
        %v4127 = vunpack.c.h.b16 %v4041
        %v4128 = vunpack.c.l.b16 %v4042
        %v4129 = vunpack.c.h.b16 %v4042
        %v4130 = vunpack.c.l.b16 %v4043
        %v4131 = vunpack.c.h.b16 %v4043
        %v4132 = vunpack.c.l.b16 %v4044
        %v4133 = vunpack.c.h.b16 %v4044
        %v4134 = vunpack.c.l.b16 %v4045
        %v4135 = vunpack.c.h.b16 %v4045
        %v4136 = vunpack.c.l.b16 %v4046
        %v4137 = vunpack.c.h.b16 %v4046
        %v4138 = vunpack.c.l.b16 %v4047
        %v4139 = vunpack.c.h.b16 %v4047
        %v4140 = vunpack.c.l.b16 %v4048
        %v4141 = vunpack.c.h.b16 %v4048
        %v4142 = vunpack.c.l.b16 %v4049
        %v4143 = vunpack.c.h.b16 %v4049
        %v4144 = vunpack.c.l.b16 %v4050
        %v4145 = vunpack.c.h.b16 %v4050
        %v4146 = vunpack.c.l.b16 %v4051
        %v4147 = vunpack.c.h.b16 %v4051
        %v4148 = vunpack.c.l.b16 %v4052
        %v4149 = vunpack.c.h.b16 %v4052
        %v4150 = vunpack.c.l.b16 %v4053
        %v4151 = vunpack.c.h.b16 %v4053
        %v4152 = vunpack.c.l.b16 %v4054
        %v4153 = vunpack.c.h.b16 %v4054
        %v4154 = vunpack.c.l.b16 %v4055
        %v4155 = vunpack.c.h.b16 %v4055
        %v4156 = vunpack.c.l.b16 %v4056
        %v4157 = vunpack.c.h.b16 %v4056
        %v4158 = vunpack.c.l.b16 %v4057
        %v4159 = vunpack.c.h.b16 %v4057
        %v4160 = vunpack.c.l.b16 %v4058
        %v4161 = vunpack.c.h.b16 %v4058
        %v4162 = vunpack.c.l.b16 %v4059
        %v4163 = vunpack.c.h.b16 %v4059
        %v4164 = vunpack.c.l.b16 %v4060
        %v4165 = vunpack.c.h.b16 %v4060
        %v4166 = vunpack.c.l.b16 %v4061
        %v4167 = vunpack.c.h.b16 %v4061
        %v4168 = vunpack.c.l.b16 %v4062
        %v4169 = vunpack.c.h.b16 %v4062
        %v4170 = vunpack.c.l.b16 %v4063
        %v4171 = vunpack.c.h.b16 %v4063
        %v4172 = vpack.c.b16 %v4102, %v4100
        %v4173 = vpack.c.b16 %v4103, %v4101
        %v4174 = vpack.c.b16 %v4106, %v4104
        %v4175 = vpack.c.b16 %v4107, %v4105
        %v4176 = vpack.c.b16 %v4110, %v4108
        %v4177 = vpack.c.b16 %v4111, %v4109
        %v4178 = vpack.c.b16 %v4114, %v4112
        %v4179 = vpack.c.b16 %v4115, %v4113
        %v4180 = vpack.c.b16 %v4118, %v4116
        %v4181 = vpack.c.b16 %v4119, %v4117
        %v4182 = vpack.c.b16 %v4122, %v4120
        %v4183 = vpack.c.b16 %v4123, %v4121
        %v4184 = vpack.c.b16 %v4126, %v4124
        %v4185 = vpack.c.b16 %v4127, %v4125
        %v4186 = vpack.c.b16 %v4130, %v4128
        %v4187 = vpack.c.b16 %v4131, %v4129
        %v4188 = vpack.c.b16 %v4134, %v4132
        %v4189 = vpack.c.b16 %v4135, %v4133
        %v4190 = vpack.c.b16 %v4138, %v4136
        %v4191 = vpack.c.b16 %v4139, %v4137
        %v4192 = vpack.c.b16 %v4142, %v4140
        %v4193 = vpack.c.b16 %v4143, %v4141
        %v4194 = vpack.c.b16 %v4146, %v4144
        %v4195 = vpack.c.b16 %v4147, %v4145
        %v4196 = vpack.c.b16 %v4150, %v4148
        %v4197 = vpack.c.b16 %v4151, %v4149
        %v4198 = vpack.c.b16 %v4154, %v4152
        %v4199 = vpack.c.b16 %v4155, %v4153
        %v4200 = vpack.c.b16 %v4158, %v4156
        %v4201 = vpack.c.b16 %v4159, %v4157
        %v4202 = vpack.c.b16 %v4162, %v4160
        %v4203 = vpack.c.b16 %v4163, %v4161
        %v4204 = vpack.c.b16 %v4166, %v4164
        %v4205 = vpack.c.b16 %v4167, %v4165
        %v4206 = vpack.c.b16 %v4170, %v4168
        %v4207 = vpack.c.b16 %v4171, %v4169
        %vm4226 = vcmask 261120
        %v4228 = vsel %vm4226, %v4173, 0
        %v4231 = vsel %vm4226, %v4175, 0
        %v4234 = vsel %vm4226, %v4177, 0
        %v4237 = vsel %vm4226, %v4179, 0
        %v4240 = vsel %vm4226, %v4181, 0
        %v4243 = vsel %vm4226, %v4183, 0
        %v4246 = vsel %vm4226, %v4185, 0
        %v4249 = vsel %vm4226, %v4187, 0
        %v4252 = vsel %vm4226, %v4189, 0
        %v4255 = vsel %vm4226, %v4191, 0
        %v4258 = vsel %vm4226, %v4193, 0
        %v4261 = vsel %vm4226, %v4195, 0
        %v4264 = vsel %vm4226, %v4197, 0
        %v4267 = vsel %vm4226, %v4199, 0
        %v4270 = vsel %vm4226, %v4201, 0
        %v4273 = vsel %vm4226, %v4203, 0
        %v4276 = vsel %vm4226, %v4205, 0
        %v4279 = vsel %vm4226, %v4207, 0
        %4281 = vmatprep.subr.bf16.mxu0 %v3999
        %4282 = vmatpush1.bf16.msra.mxu0 %v3998
        %4283 = vmatprep.subr.bf16.mxu0 %v4002
        %4284 = vmatpush1.bf16.msra.mxu0 %v4001
        %4285 = vmatprep.subr.bf16.mxu0 %v4005
        %4286 = vmatpush1.bf16.msra.mxu0 %v4004
        %4287 = vmatprep.subr.bf16.mxu0 %v4008
        %4288 = vmatpush1.bf16.msra.mxu0 %v4007
        %4289 = vmatprep.subr.bf16.mxu0 %v4011
        %4290 = vmatpush1.bf16.msra.mxu0 %v4010
        %4291 = vmatprep.subr.bf16.mxu0 %v4014
        %4292 = vmatpush1.bf16.msra.mxu0 %v4013
        %4293 = vmatprep.subr.bf16.mxu0 %v4017
        %4294 = vmatpush1.bf16.msra.mxu0 %v4016
        %4295 = vmatprep.subr.bf16.mxu0 %v4020
        %4296 = vmatpush1.bf16.msra.mxu0 %v4019
        %4297 = vmatprep.subr.bf16.mxu0 %v4023
        %4298 = vmatpush1.bf16.msra.mxu0 %v4022
        %4299 = vmatprep.subr.bf16.mxu0 %v4026
        %4300 = vmatpush1.bf16.msra.mxu0 %v4025
        %4301 = vmatprep.subr.bf16.mxu0 0
        %4302 = vmatpush1.bf16.msra.mxu0 0
        %4303 = vmatprep.subr.bf16.mxu0 0
        %4304 = vmatpush1.bf16.msra.mxu0 0
        %4305 = vmatprep.subr.bf16.mxu0 0
        %4306 = vmatpush1.bf16.msra.mxu0 0
        %4307 = vmatprep.subr.bf16.mxu0 0
        %4308 = vmatpush1.bf16.msra.mxu0 0
        %4309 = vmatprep.subr.bf16.mxu0 0
        %4310 = vmatpush1.bf16.msra.mxu0 0
        %4311 = vmatprep.subr.bf16.mxu0 0
        %4312 = vmatpush1.bf16.msra.mxu0 0
        %4313 = vmatprep.mubr.bf16.mxu0 %v4228
        %4314 = vmatmul.mubr.bf16.gmra.mrb[0].mxu0 %v4172
        %v4315 = vpop.f32.mrb[0].mxu0
        %v4316 = vadd.f32 0.0, %v4315
        %v4317 = vpop.f32.mrb[0].mxu0
        %v4318 = vadd.f32 0.0, %v4317
        %v4319 = vpop.f32.mrb[0].mxu0
        %v4320 = vadd.f32 0.0, %v4319
        %v4321 = vpop.f32.mrb[0].mxu0
        %v4322 = vadd.f32 0.0, %v4321
        %4323 = vmatprep.mubr.bf16.mxu0 %v4231
        %4324 = vmatmul.mubr.bf16.gmra.mrb[0].mxu0 %v4174
        %v4325 = vpop.f32.mrb[0].mxu0
        %v4326 = vadd.f32 0.0, %v4325
        %v4327 = vpop.f32.mrb[0].mxu0
        %v4328 = vadd.f32 0.0, %v4327
        %v4329 = vpop.f32.mrb[0].mxu0
        %v4330 = vadd.f32 0.0, %v4329
        %v4331 = vpop.f32.mrb[0].mxu0
        %v4332 = vadd.f32 0.0, %v4331
        %4333 = vmatprep.mubr.bf16.mxu0 %v4234
        %4334 = vmatmul.mubr.bf16.gmra.mrb[0].mxu0 %v4176
        %v4335 = vpop.f32.mrb[0].mxu0
        %v4336 = vadd.f32 0.0, %v4335
        %v4337 = vpop.f32.mrb[0].mxu0
        %v4338 = vadd.f32 0.0, %v4337
        %v4339 = vpop.f32.mrb[0].mxu0
        %v4340 = vadd.f32 0.0, %v4339
        %v4341 = vpop.f32.mrb[0].mxu0
        %v4342 = vadd.f32 0.0, %v4341
        %4343 = vmatprep.mubr.bf16.mxu0 %v4237
        %4344 = vmatmul.mubr.bf16.gmra.mrb[0].mxu0 %v4178
        %v4345 = vpop.f32.mrb[0].mxu0
        %v4346 = vadd.f32 0.0, %v4345
        %v4347 = vpop.f32.mrb[0].mxu0
        %v4348 = vadd.f32 0.0, %v4347
        %v4349 = vpop.f32.mrb[0].mxu0
        %v4350 = vadd.f32 0.0, %v4349
        %v4351 = vpop.f32.mrb[0].mxu0
        %v4352 = vadd.f32 0.0, %v4351
        %4353 = vmatprep.mubr.bf16.mxu0 %v4240
        %4354 = vmatmul.mubr.bf16.gmra.mrb[0].mxu0 %v4180
        %v4355 = vpop.f32.mrb[0].mxu0
        %v4356 = vadd.f32 0.0, %v4355
        %v4357 = vpop.f32.mrb[0].mxu0
        %v4358 = vadd.f32 0.0, %v4357
        %v4359 = vpop.f32.mrb[0].mxu0
        %v4360 = vadd.f32 0.0, %v4359
        %v4361 = vpop.f32.mrb[0].mxu0
        %v4362 = vadd.f32 0.0, %v4361
        %4363 = vmatprep.mubr.bf16.mxu0 %v4243
        %4364 = vmatmul.mubr.bf16.gmra.mrb[0].mxu0 %v4182
        %v4365 = vpop.f32.mrb[0].mxu0
        %v4366 = vadd.f32 0.0, %v4365
        %v4367 = vpop.f32.mrb[0].mxu0
        %v4368 = vadd.f32 0.0, %v4367
        %v4369 = vpop.f32.mrb[0].mxu0
        %v4370 = vadd.f32 0.0, %v4369
        %v4371 = vpop.f32.mrb[0].mxu0
        %v4372 = vadd.f32 0.0, %v4371
        %4373 = vmatprep.mubr.bf16.mxu0 %v4246
        %4374 = vmatmul.mubr.bf16.gmra.mrb[0].mxu0 %v4184
        %v4375 = vpop.f32.mrb[0].mxu0
        %v4376 = vadd.f32 0.0, %v4375
        %v4377 = vpop.f32.mrb[0].mxu0
        %v4378 = vadd.f32 0.0, %v4377
        %v4379 = vpop.f32.mrb[0].mxu0
        %v4380 = vadd.f32 0.0, %v4379
        %v4381 = vpop.f32.mrb[0].mxu0
        %v4382 = vadd.f32 0.0, %v4381
        %4383 = vmatprep.mubr.bf16.mxu0 %v4249
        %4384 = vmatmul.mubr.bf16.gmra.mrb[0].mxu0 %v4186
        %v4385 = vpop.f32.mrb[0].mxu0
        %v4386 = vadd.f32 0.0, %v4385
        %v4387 = vpop.f32.mrb[0].mxu0
        %v4388 = vadd.f32 0.0, %v4387
        %v4389 = vpop.f32.mrb[0].mxu0
        %v4390 = vadd.f32 0.0, %v4389
        %v4391 = vpop.f32.mrb[0].mxu0
        %v4392 = vadd.f32 0.0, %v4391
        %4393 = vmatprep.mubr.bf16.mxu0 %v4252
        %4394 = vmatmul.mubr.bf16.gmra.mrb[0].mxu0 %v4188
        %v4395 = vpop.f32.mrb[0].mxu0
        %v4396 = vadd.f32 0.0, %v4395
        %v4397 = vpop.f32.mrb[0].mxu0
        %v4398 = vadd.f32 0.0, %v4397
        %v4399 = vpop.f32.mrb[0].mxu0
        %v4400 = vadd.f32 0.0, %v4399
        %v4401 = vpop.f32.mrb[0].mxu0
        %v4402 = vadd.f32 0.0, %v4401
        %4403 = vmatprep.mubr.bf16.mxu0 %v4255
        %4404 = vmatmul.mubr.bf16.gmra.mrb[0].mxu0 %v4190
        %v4405 = vpop.f32.mrb[0].mxu0
        %v4406 = vadd.f32 0.0, %v4405
        %v4407 = vpop.f32.mrb[0].mxu0
        %v4408 = vadd.f32 0.0, %v4407
        %v4409 = vpop.f32.mrb[0].mxu0
        %v4410 = vadd.f32 0.0, %v4409
        %v4411 = vpop.f32.mrb[0].mxu0
        %v4412 = vadd.f32 0.0, %v4411
        %4413 = vmatprep.mubr.bf16.mxu0 %v4258
        %4414 = vmatmul.mubr.bf16.gmra.mrb[0].mxu0 %v4192
        %v4415 = vpop.f32.mrb[0].mxu0
        %v4416 = vadd.f32 0.0, %v4415
        %v4417 = vpop.f32.mrb[0].mxu0
        %v4418 = vadd.f32 0.0, %v4417
        %v4419 = vpop.f32.mrb[0].mxu0
        %v4420 = vadd.f32 0.0, %v4419
        %v4421 = vpop.f32.mrb[0].mxu0
        %v4422 = vadd.f32 0.0, %v4421
        %4423 = vmatprep.mubr.bf16.mxu0 %v4261
        %4424 = vmatmul.mubr.bf16.gmra.mrb[0].mxu0 %v4194
        %v4425 = vpop.f32.mrb[0].mxu0
        %v4426 = vadd.f32 0.0, %v4425
        %v4427 = vpop.f32.mrb[0].mxu0
        %v4428 = vadd.f32 0.0, %v4427
        %v4429 = vpop.f32.mrb[0].mxu0
        %v4430 = vadd.f32 0.0, %v4429
        %v4431 = vpop.f32.mrb[0].mxu0
        %v4432 = vadd.f32 0.0, %v4431
        %4433 = vmatprep.mubr.bf16.mxu0 %v4264
        %4434 = vmatmul.mubr.bf16.gmra.mrb[0].mxu0 %v4196
        %v4435 = vpop.f32.mrb[0].mxu0
        %v4436 = vadd.f32 0.0, %v4435
        %v4437 = vpop.f32.mrb[0].mxu0
        %v4438 = vadd.f32 0.0, %v4437
        %v4439 = vpop.f32.mrb[0].mxu0
        %v4440 = vadd.f32 0.0, %v4439
        %v4441 = vpop.f32.mrb[0].mxu0
        %v4442 = vadd.f32 0.0, %v4441
        %4443 = vmatprep.mubr.bf16.mxu0 %v4267
        %4444 = vmatmul.mubr.bf16.gmra.mrb[0].mxu0 %v4198
        %v4445 = vpop.f32.mrb[0].mxu0
        %v4446 = vadd.f32 0.0, %v4445
        %v4447 = vpop.f32.mrb[0].mxu0
        %v4448 = vadd.f32 0.0, %v4447
        %v4449 = vpop.f32.mrb[0].mxu0
        %v4450 = vadd.f32 0.0, %v4449
        %v4451 = vpop.f32.mrb[0].mxu0
        %v4452 = vadd.f32 0.0, %v4451
        %4453 = vmatprep.mubr.bf16.mxu0 %v4270
        %4454 = vmatmul.mubr.bf16.gmra.mrb[0].mxu0 %v4200
        %v4455 = vpop.f32.mrb[0].mxu0
        %v4456 = vadd.f32 0.0, %v4455
        %v4457 = vpop.f32.mrb[0].mxu0
        %v4458 = vadd.f32 0.0, %v4457
        %v4459 = vpop.f32.mrb[0].mxu0
        %v4460 = vadd.f32 0.0, %v4459
        %v4461 = vpop.f32.mrb[0].mxu0
        %v4462 = vadd.f32 0.0, %v4461
        %4463 = vmatprep.mubr.bf16.mxu0 %v4273
        %4464 = vmatmul.mubr.bf16.gmra.mrb[0].mxu0 %v4202
        %v4465 = vpop.f32.mrb[0].mxu0
        %v4466 = vadd.f32 0.0, %v4465
        %v4467 = vpop.f32.mrb[0].mxu0
        %v4468 = vadd.f32 0.0, %v4467
        %v4469 = vpop.f32.mrb[0].mxu0
        %v4470 = vadd.f32 0.0, %v4469
        %v4471 = vpop.f32.mrb[0].mxu0
        %v4472 = vadd.f32 0.0, %v4471
        %4473 = vmatprep.mubr.bf16.mxu0 %v4276
        %4474 = vmatmul.mubr.bf16.gmra.mrb[0].mxu0 %v4204
        %v4475 = vpop.f32.mrb[0].mxu0
        %v4476 = vadd.f32 0.0, %v4475
        %v4477 = vpop.f32.mrb[0].mxu0
        %v4478 = vadd.f32 0.0, %v4477
        %v4479 = vpop.f32.mrb[0].mxu0
        %v4480 = vadd.f32 0.0, %v4479
        %v4481 = vpop.f32.mrb[0].mxu0
        %v4482 = vadd.f32 0.0, %v4481
        %4483 = vmatprep.mubr.bf16.mxu0 %v4279
        %4484 = vmatmul.mubr.bf16.gmra.mrb[0].mxu0 %v4206
        %v4485 = vpop.f32.mrb[0].mxu0
        %v4486 = vadd.f32 0.0, %v4485
        %v4487 = vpop.f32.mrb[0].mxu0
        %v4488 = vadd.f32 0.0, %v4487
        %v4489 = vpop.f32.mrb[0].mxu0
        %v4490 = vadd.f32 0.0, %v4489
        %v4491 = vpop.f32.mrb[0].mxu0
        %v4492 = vadd.f32 0.0, %v4491
        %4493 = vdwg.mxu0
        %4494 = vmatprep.subr.bf16.mxu0 0
        %4495 = vmatpush1.bf16.msra.mxu0 %v4000
        %4496 = vmatprep.subr.bf16.mxu0 0
        %4497 = vmatpush1.bf16.msra.mxu0 %v4003
        %4498 = vmatprep.subr.bf16.mxu0 0
        %4499 = vmatpush1.bf16.msra.mxu0 %v4006
        %4500 = vmatprep.subr.bf16.mxu0 0
        %4501 = vmatpush1.bf16.msra.mxu0 %v4009
        %4502 = vmatprep.subr.bf16.mxu0 0
        %4503 = vmatpush1.bf16.msra.mxu0 %v4012
        %4504 = vmatprep.subr.bf16.mxu0 0
        %4505 = vmatpush1.bf16.msra.mxu0 %v4015
        %4506 = vmatprep.subr.bf16.mxu0 0
        %4507 = vmatpush1.bf16.msra.mxu0 %v4018
        %4508 = vmatprep.subr.bf16.mxu0 0
        %4509 = vmatpush1.bf16.msra.mxu0 %v4021
        %4510 = vmatprep.subr.bf16.mxu0 0
        %4511 = vmatpush1.bf16.msra.mxu0 %v4024
        %4512 = vmatprep.subr.bf16.mxu0 0
        %4513 = vmatpush1.bf16.msra.mxu0 %v4027
        %4514 = vmatprep.subr.bf16.mxu0 0
        %4515 = vmatpush1.bf16.msra.mxu0 0
        %4516 = vmatprep.subr.bf16.mxu0 0
        %4517 = vmatpush1.bf16.msra.mxu0 0
        %4518 = vmatprep.subr.bf16.mxu0 0
        %4519 = vmatpush1.bf16.msra.mxu0 0
        %4520 = vmatprep.subr.bf16.mxu0 0
        %4521 = vmatpush1.bf16.msra.mxu0 0
        %4522 = vmatprep.subr.bf16.mxu0 0
        %4523 = vmatpush1.bf16.msra.mxu0 0
        %4524 = vmatprep.subr.bf16.mxu0 0
        %4525 = vmatpush1.bf16.msra.mxu0 0
        %4526 = vmatprep.mubr.bf16.mxu0 %v4228
        %4527 = vmatmul.mubr.bf16.gmra.mrb[0].mxu0 %v4172
        %v4528 = vpop.f32.mrb[0].mxu0
        %v4529 = vadd.f32 0.0, %v4528
        %v4530 = vpop.f32.mrb[0].mxu0
        %v4531 = vpop.f32.mrb[0].mxu0
        %v4532 = vadd.f32 0.0, %v4531
        %v4533 = vpop.f32.mrb[0].mxu0
        %4534 = vmatprep.mubr.bf16.mxu0 %v4231
        %4535 = vmatmul.mubr.bf16.gmra.mrb[0].mxu0 %v4174
        %v4536 = vpop.f32.mrb[0].mxu0
        %v4537 = vadd.f32 0.0, %v4536
        %v4538 = vpop.f32.mrb[0].mxu0
        %v4539 = vpop.f32.mrb[0].mxu0
        %v4540 = vadd.f32 0.0, %v4539
        %v4541 = vpop.f32.mrb[0].mxu0
        %4542 = vmatprep.mubr.bf16.mxu0 %v4234
        %4543 = vmatmul.mubr.bf16.gmra.mrb[0].mxu0 %v4176
        %v4544 = vpop.f32.mrb[0].mxu0
        %v4545 = vadd.f32 0.0, %v4544
        %v4546 = vpop.f32.mrb[0].mxu0
        %v4547 = vpop.f32.mrb[0].mxu0
        %v4548 = vadd.f32 0.0, %v4547
        %v4549 = vpop.f32.mrb[0].mxu0
        %4550 = vmatprep.mubr.bf16.mxu0 %v4237
        %4551 = vmatmul.mubr.bf16.gmra.mrb[0].mxu0 %v4178
        %v4552 = vpop.f32.mrb[0].mxu0
        %v4553 = vadd.f32 0.0, %v4552
        %v4554 = vpop.f32.mrb[0].mxu0
        %v4555 = vpop.f32.mrb[0].mxu0
        %v4556 = vadd.f32 0.0, %v4555
        %v4557 = vpop.f32.mrb[0].mxu0
        %4558 = vmatprep.mubr.bf16.mxu0 %v4240
        %4559 = vmatmul.mubr.bf16.gmra.mrb[0].mxu0 %v4180
        %v4560 = vpop.f32.mrb[0].mxu0
        %v4561 = vadd.f32 0.0, %v4560
        %v4562 = vpop.f32.mrb[0].mxu0
        %v4563 = vpop.f32.mrb[0].mxu0
        %v4564 = vadd.f32 0.0, %v4563
        %v4565 = vpop.f32.mrb[0].mxu0
        %4566 = vmatprep.mubr.bf16.mxu0 %v4243
        %4567 = vmatmul.mubr.bf16.gmra.mrb[0].mxu0 %v4182
        %v4568 = vpop.f32.mrb[0].mxu0
        %v4569 = vadd.f32 0.0, %v4568
        %v4570 = vpop.f32.mrb[0].mxu0
        %v4571 = vpop.f32.mrb[0].mxu0
        %v4572 = vadd.f32 0.0, %v4571
        %v4573 = vpop.f32.mrb[0].mxu0
        %4574 = vmatprep.mubr.bf16.mxu0 %v4246
        %4575 = vmatmul.mubr.bf16.gmra.mrb[0].mxu0 %v4184
        %v4576 = vpop.f32.mrb[0].mxu0
        %v4577 = vadd.f32 0.0, %v4576
        %v4578 = vpop.f32.mrb[0].mxu0
        %v4579 = vpop.f32.mrb[0].mxu0
        %v4580 = vadd.f32 0.0, %v4579
        %v4581 = vpop.f32.mrb[0].mxu0
        %4582 = vmatprep.mubr.bf16.mxu0 %v4249
        %4583 = vmatmul.mubr.bf16.gmra.mrb[0].mxu0 %v4186
        %v4584 = vpop.f32.mrb[0].mxu0
        %v4585 = vadd.f32 0.0, %v4584
        %v4586 = vpop.f32.mrb[0].mxu0
        %v4587 = vpop.f32.mrb[0].mxu0
        %v4588 = vadd.f32 0.0, %v4587
        %v4589 = vpop.f32.mrb[0].mxu0
        %4590 = vmatprep.mubr.bf16.mxu0 %v4252
        %4591 = vmatmul.mubr.bf16.gmra.mrb[0].mxu0 %v4188
        %v4592 = vpop.f32.mrb[0].mxu0
        %v4593 = vadd.f32 0.0, %v4592
        %v4594 = vpop.f32.mrb[0].mxu0
        %v4595 = vpop.f32.mrb[0].mxu0
        %v4596 = vadd.f32 0.0, %v4595
        %v4597 = vpop.f32.mrb[0].mxu0
        %4598 = vmatprep.mubr.bf16.mxu0 %v4255
        %4599 = vmatmul.mubr.bf16.gmra.mrb[0].mxu0 %v4190
        %v4600 = vpop.f32.mrb[0].mxu0
        %v4601 = vadd.f32 0.0, %v4600
        %v4602 = vpop.f32.mrb[0].mxu0
        %v4603 = vpop.f32.mrb[0].mxu0
        %v4604 = vadd.f32 0.0, %v4603
        %v4605 = vpop.f32.mrb[0].mxu0
        %4606 = vmatprep.mubr.bf16.mxu0 %v4258
        %4607 = vmatmul.mubr.bf16.gmra.mrb[0].mxu0 %v4192
        %v4608 = vpop.f32.mrb[0].mxu0
        %v4609 = vadd.f32 0.0, %v4608
        %v4610 = vpop.f32.mrb[0].mxu0
        %v4611 = vpop.f32.mrb[0].mxu0
        %v4612 = vadd.f32 0.0, %v4611
        %v4613 = vpop.f32.mrb[0].mxu0
        %4614 = vmatprep.mubr.bf16.mxu0 %v4261
        %4615 = vmatmul.mubr.bf16.gmra.mrb[0].mxu0 %v4194
        %v4616 = vpop.f32.mrb[0].mxu0
        %v4617 = vadd.f32 0.0, %v4616
        %v4618 = vpop.f32.mrb[0].mxu0
        %v4619 = vpop.f32.mrb[0].mxu0
        %v4620 = vadd.f32 0.0, %v4619
        %v4621 = vpop.f32.mrb[0].mxu0
        %4622 = vmatprep.mubr.bf16.mxu0 %v4264
        %4623 = vmatmul.mubr.bf16.gmra.mrb[0].mxu0 %v4196
        %v4624 = vpop.f32.mrb[0].mxu0
        %v4625 = vadd.f32 0.0, %v4624
        %v4626 = vpop.f32.mrb[0].mxu0
        %v4627 = vpop.f32.mrb[0].mxu0
        %v4628 = vadd.f32 0.0, %v4627
        %v4629 = vpop.f32.mrb[0].mxu0
        %4630 = vmatprep.mubr.bf16.mxu0 %v4267
        %4631 = vmatmul.mubr.bf16.gmra.mrb[0].mxu0 %v4198
        %v4632 = vpop.f32.mrb[0].mxu0
        %v4633 = vadd.f32 0.0, %v4632
        %v4634 = vpop.f32.mrb[0].mxu0
        %v4635 = vpop.f32.mrb[0].mxu0
        %v4636 = vadd.f32 0.0, %v4635
        %v4637 = vpop.f32.mrb[0].mxu0
        %4638 = vmatprep.mubr.bf16.mxu0 %v4270
        %4639 = vmatmul.mubr.bf16.gmra.mrb[0].mxu0 %v4200
        %v4640 = vpop.f32.mrb[0].mxu0
        %v4641 = vadd.f32 0.0, %v4640
        %v4642 = vpop.f32.mrb[0].mxu0
        %v4643 = vpop.f32.mrb[0].mxu0
        %v4644 = vadd.f32 0.0, %v4643
        %v4645 = vpop.f32.mrb[0].mxu0
        %4646 = vmatprep.mubr.bf16.mxu0 %v4273
        %4647 = vmatmul.mubr.bf16.gmra.mrb[0].mxu0 %v4202
        %v4648 = vpop.f32.mrb[0].mxu0
        %v4649 = vadd.f32 0.0, %v4648
        %v4650 = vpop.f32.mrb[0].mxu0
        %v4651 = vpop.f32.mrb[0].mxu0
        %v4652 = vadd.f32 0.0, %v4651
        %v4653 = vpop.f32.mrb[0].mxu0
        %4654 = vmatprep.mubr.bf16.mxu0 %v4276
        %4655 = vmatmul.mubr.bf16.gmra.mrb[0].mxu0 %v4204
        %v4656 = vpop.f32.mrb[0].mxu0
        %v4657 = vadd.f32 0.0, %v4656
        %v4658 = vpop.f32.mrb[0].mxu0
        %v4659 = vpop.f32.mrb[0].mxu0
        %v4660 = vadd.f32 0.0, %v4659
        %v4661 = vpop.f32.mrb[0].mxu0
        %4662 = vmatprep.mubr.bf16.mxu0 %v4279
        %4663 = vmatmul.mubr.bf16.gmra.mrb[0].mxu0 %v4206
        %v4664 = vpop.f32.mrb[0].mxu0
        %v4665 = vadd.f32 0.0, %v4664
        %v4666 = vpop.f32.mrb[0].mxu0
        %v4667 = vpop.f32.mrb[0].mxu0
        %v4668 = vadd.f32 0.0, %v4667
        %v4669 = vpop.f32.mrb[0].mxu0
        %4670 = vdwg.mxu0
        %4671 = vrot.lane.b32.xlu0 %v4316, 17
        %v4672 = vpop.permute.xlu0 %4671
        %4673 = vrot.lane.b32.xlu0 %v4320, 17
        %v4674 = vpop.permute.xlu0 %4673
        %4675 = vrot.lane.b32.xlu0 %v4326, 17
        %v4676 = vpop.permute.xlu0 %4675
        %4677 = vrot.lane.b32.xlu0 %v4330, 17
        %v4678 = vpop.permute.xlu0 %4677
        %4679 = vrot.lane.b32.xlu0 %v4318, 17
        %v4680 = vpop.permute.xlu0 %4679
        %4681 = vrot.lane.b32.xlu0 %v4322, 17
        %v4682 = vpop.permute.xlu0 %4681
        %4683 = vrot.lane.b32.xlu0 %v4328, 17
        %v4684 = vpop.permute.xlu0 %4683
        %4685 = vrot.lane.b32.xlu0 %v4332, 17
        %v4686 = vpop.permute.xlu0 %4685
        %4687 = vrot.lane.b32.xlu0 %v4529, 17
        %v4688 = vpop.permute.xlu0 %4687
        %4689 = vrot.lane.b32.xlu0 %v4532, 17
        %v4690 = vpop.permute.xlu0 %4689
        %4691 = vrot.lane.b32.xlu0 %v4537, 17
        %v4692 = vpop.permute.xlu0 %4691
        %4693 = vrot.lane.b32.xlu0 %v4540, 17
        %v4694 = vpop.permute.xlu0 %4693
        %v4695 = vsel %vm1045, %v4680, %v4688
        %v4696 = vsel %vm1045, %v4682, %v4690
        %v4697 = vsel %vm1045, %v4684, %v4692
        %v4698 = vsel %vm1045, %v4686, %v4694
        %v4699 = vsel %vm1045, %v4672, %v4680
        %v4700 = vsel %vm1045, %v4674, %v4682
        %v4701 = vsel %vm1045, %v4676, %v4684
        %v4702 = vsel %vm1045, %v4678, %v4686
        %v4703 = vsel %vm1045, %v4688, %v4672
        %v4704 = vsel %vm1045, %v4690, %v4674
        %v4705 = vsel %vm1045, %v4692, %v4676
        %v4706 = vsel %vm1045, %v4694, %v4678
        %v4707 = vsel %vm1071, %v4703, 0.0
        %v4708 = vsel %vm1072, %v4699, 0.0
        %v4709 = vsel %vm1073, %v4695, 0.0
        %v4710 = vsel %vm1071, %v4704, 0.0
        %v4711 = vsel %vm1072, %v4700, 0.0
        %v4712 = vsel %vm1073, %v4696, 0.0
        %v4713 = vsel %vm1071, %v4705, 0.0
        %v4714 = vsel %vm1072, %v4701, 0.0
        %v4715 = vsel %vm1073, %v4697, 0.0
        %v4716 = vsel %vm1071, %v4706, 0.0
        %v4717 = vsel %vm1072, %v4702, 0.0
        %v4718 = vsel %vm1073, %v4698, 0.0
        %v4719 = vadd.f32 %v4396, %v4707
        %v4720 = vadd.f32 %v4398, %v4708
        %v4721 = vadd.f32 %v4593, %v4709
        %v4722 = vadd.f32 %v4400, %v4710
        %v4723 = vadd.f32 %v4402, %v4711
        %v4724 = vadd.f32 %v4596, %v4712
        %v4725 = vadd.f32 %v4406, %v4713
        %v4726 = vadd.f32 %v4408, %v4714
        %v4727 = vadd.f32 %v4601, %v4715
        %v4728 = vadd.f32 %v4410, %v4716
        %v4729 = vadd.f32 %v4412, %v4717
        %v4730 = vadd.f32 %v4604, %v4718
        %4731 = vrot.lane.b32.xlu0 %v4336, 16
        %v4732 = vpop.permute.xlu0 %4731
        %4733 = vrot.lane.b32.xlu0 %v4340, 16
        %v4734 = vpop.permute.xlu0 %4733
        %4735 = vrot.lane.b32.xlu0 %v4346, 16
        %v4736 = vpop.permute.xlu0 %4735
        %4737 = vrot.lane.b32.xlu0 %v4350, 16
        %v4738 = vpop.permute.xlu0 %4737
        %4739 = vrot.lane.b32.xlu0 %v4338, 16
        %v4740 = vpop.permute.xlu0 %4739
        %4741 = vrot.lane.b32.xlu0 %v4342, 16
        %v4742 = vpop.permute.xlu0 %4741
        %4743 = vrot.lane.b32.xlu0 %v4348, 16
        %v4744 = vpop.permute.xlu0 %4743
        %4745 = vrot.lane.b32.xlu0 %v4352, 16
        %v4746 = vpop.permute.xlu0 %4745
        %4747 = vrot.lane.b32.xlu0 %v4545, 16
        %v4748 = vpop.permute.xlu0 %4747
        %4749 = vrot.lane.b32.xlu0 %v4548, 16
        %v4750 = vpop.permute.xlu0 %4749
        %4751 = vrot.lane.b32.xlu0 %v4553, 16
        %v4752 = vpop.permute.xlu0 %4751
        %4753 = vrot.lane.b32.xlu0 %v4556, 16
        %v4754 = vpop.permute.xlu0 %4753
        %v4755 = vsel %vm1122, %v4740, %v4748
        %v4756 = vsel %vm1122, %v4742, %v4750
        %v4757 = vsel %vm1122, %v4744, %v4752
        %v4758 = vsel %vm1122, %v4746, %v4754
        %v4759 = vsel %vm1122, %v4732, %v4740
        %v4760 = vsel %vm1122, %v4734, %v4742
        %v4761 = vsel %vm1122, %v4736, %v4744
        %v4762 = vsel %vm1122, %v4738, %v4746
        %v4763 = vsel %vm1122, %v4748, %v4732
        %v4764 = vsel %vm1122, %v4750, %v4734
        %v4765 = vsel %vm1122, %v4752, %v4736
        %v4766 = vsel %vm1122, %v4754, %v4738
        %v4767 = vsel %vm1148, %v4763, 0.0
        %v4768 = vsel %vm1149, %v4759, 0.0
        %v4769 = vsel %vm1150, %v4755, 0.0
        %v4770 = vsel %vm1148, %v4764, 0.0
        %v4771 = vsel %vm1149, %v4760, 0.0
        %v4772 = vsel %vm1150, %v4756, 0.0
        %v4773 = vsel %vm1148, %v4765, 0.0
        %v4774 = vsel %vm1149, %v4761, 0.0
        %v4775 = vsel %vm1150, %v4757, 0.0
        %v4776 = vsel %vm1148, %v4766, 0.0
        %v4777 = vsel %vm1149, %v4762, 0.0
        %v4778 = vsel %vm1150, %v4758, 0.0
        %v4779 = vadd.f32 %v4719, %v4767
        %v4780 = vadd.f32 %v4720, %v4768
        %v4781 = vadd.f32 %v4721, %v4769
        %v4782 = vadd.f32 %v4722, %v4770
        %v4783 = vadd.f32 %v4723, %v4771
        %v4784 = vadd.f32 %v4724, %v4772
        %v4785 = vadd.f32 %v4725, %v4773
        %v4786 = vadd.f32 %v4726, %v4774
        %v4787 = vadd.f32 %v4727, %v4775
        %v4788 = vadd.f32 %v4728, %v4776
        %v4789 = vadd.f32 %v4729, %v4777
        %v4790 = vadd.f32 %v4730, %v4778
        %4791 = vrot.lane.b32.xlu0 %v4356, 15
        %v4792 = vpop.permute.xlu0 %4791
        %4793 = vrot.lane.b32.xlu0 %v4360, 15
        %v4794 = vpop.permute.xlu0 %4793
        %4795 = vrot.lane.b32.xlu0 %v4366, 15
        %v4796 = vpop.permute.xlu0 %4795
        %4797 = vrot.lane.b32.xlu0 %v4370, 15
        %v4798 = vpop.permute.xlu0 %4797
        %4799 = vrot.lane.b32.xlu0 %v4358, 15
        %v4800 = vpop.permute.xlu0 %4799
        %4801 = vrot.lane.b32.xlu0 %v4362, 15
        %v4802 = vpop.permute.xlu0 %4801
        %4803 = vrot.lane.b32.xlu0 %v4368, 15
        %v4804 = vpop.permute.xlu0 %4803
        %4805 = vrot.lane.b32.xlu0 %v4372, 15
        %v4806 = vpop.permute.xlu0 %4805
        %4807 = vrot.lane.b32.xlu0 %v4561, 15
        %v4808 = vpop.permute.xlu0 %4807
        %4809 = vrot.lane.b32.xlu0 %v4564, 15
        %v4810 = vpop.permute.xlu0 %4809
        %4811 = vrot.lane.b32.xlu0 %v4569, 15
        %v4812 = vpop.permute.xlu0 %4811
        %4813 = vrot.lane.b32.xlu0 %v4572, 15
        %v4814 = vpop.permute.xlu0 %4813
        %v4815 = vsel %vm1199, %v4800, %v4808
        %v4816 = vsel %vm1199, %v4802, %v4810
        %v4817 = vsel %vm1199, %v4804, %v4812
        %v4818 = vsel %vm1199, %v4806, %v4814
        %v4819 = vsel %vm1199, %v4792, %v4800
        %v4820 = vsel %vm1199, %v4794, %v4802
        %v4821 = vsel %vm1199, %v4796, %v4804
        %v4822 = vsel %vm1199, %v4798, %v4806
        %v4823 = vsel %vm1199, %v4808, %v4792
        %v4824 = vsel %vm1199, %v4810, %v4794
        %v4825 = vsel %vm1199, %v4812, %v4796
        %v4826 = vsel %vm1199, %v4814, %v4798
        %v4827 = vsel %vm1225, %v4823, 0.0
        %v4828 = vsel %vm1226, %v4819, 0.0
        %v4829 = vsel %vm1227, %v4815, 0.0
        %v4830 = vsel %vm1225, %v4824, 0.0
        %v4831 = vsel %vm1226, %v4820, 0.0
        %v4832 = vsel %vm1227, %v4816, 0.0
        %v4833 = vsel %vm1225, %v4825, 0.0
        %v4834 = vsel %vm1226, %v4821, 0.0
        %v4835 = vsel %vm1227, %v4817, 0.0
        %v4836 = vsel %vm1225, %v4826, 0.0
        %v4837 = vsel %vm1226, %v4822, 0.0
        %v4838 = vsel %vm1227, %v4818, 0.0
        %v4839 = vadd.f32 %v4779, %v4827
        %v4840 = vadd.f32 %v4780, %v4828
        %v4841 = vadd.f32 %v4781, %v4829
        %v4842 = vadd.f32 %v4782, %v4830
        %v4843 = vadd.f32 %v4783, %v4831
        %v4844 = vadd.f32 %v4784, %v4832
        %v4845 = vadd.f32 %v4785, %v4833
        %v4846 = vadd.f32 %v4786, %v4834
        %v4847 = vadd.f32 %v4787, %v4835
        %v4848 = vadd.f32 %v4788, %v4836
        %v4849 = vadd.f32 %v4789, %v4837
        %v4850 = vadd.f32 %v4790, %v4838
        %4851 = vrot.lane.b32.xlu0 %v4376, 1
        %v4852 = vpop.permute.xlu0 %4851
        %4853 = vrot.lane.b32.xlu0 %v4380, 1
        %v4854 = vpop.permute.xlu0 %4853
        %4855 = vrot.lane.b32.xlu0 %v4386, 1
        %v4856 = vpop.permute.xlu0 %4855
        %4857 = vrot.lane.b32.xlu0 %v4390, 1
        %v4858 = vpop.permute.xlu0 %4857
        %4859 = vrot.lane.b32.xlu0 %v4378, 1
        %v4860 = vpop.permute.xlu0 %4859
        %4861 = vrot.lane.b32.xlu0 %v4382, 1
        %v4862 = vpop.permute.xlu0 %4861
        %4863 = vrot.lane.b32.xlu0 %v4388, 1
        %v4864 = vpop.permute.xlu0 %4863
        %4865 = vrot.lane.b32.xlu0 %v4392, 1
        %v4866 = vpop.permute.xlu0 %4865
        %4867 = vrot.lane.b32.xlu0 %v4577, 1
        %v4868 = vpop.permute.xlu0 %4867
        %4869 = vrot.lane.b32.xlu0 %v4580, 1
        %v4870 = vpop.permute.xlu0 %4869
        %4871 = vrot.lane.b32.xlu0 %v4585, 1
        %v4872 = vpop.permute.xlu0 %4871
        %4873 = vrot.lane.b32.xlu0 %v4588, 1
        %v4874 = vpop.permute.xlu0 %4873
        %v4875 = vsel %vm1276, %v4860, %v4868
        %v4876 = vsel %vm1276, %v4862, %v4870
        %v4877 = vsel %vm1276, %v4864, %v4872
        %v4878 = vsel %vm1276, %v4866, %v4874
        %v4879 = vsel %vm1276, %v4852, %v4860
        %v4880 = vsel %vm1276, %v4854, %v4862
        %v4881 = vsel %vm1276, %v4856, %v4864
        %v4882 = vsel %vm1276, %v4858, %v4866
        %v4883 = vsel %vm1276, %v4868, %v4852
        %v4884 = vsel %vm1276, %v4870, %v4854
        %v4885 = vsel %vm1276, %v4872, %v4856
        %v4886 = vsel %vm1276, %v4874, %v4858
        %v4887 = vsel %vm1302, %v4883, 0.0
        %v4888 = vsel %vm1303, %v4879, 0.0
        %v4889 = vsel %vm1304, %v4875, 0.0
        %v4890 = vsel %vm1302, %v4884, 0.0
        %v4891 = vsel %vm1303, %v4880, 0.0
        %v4892 = vsel %vm1304, %v4876, 0.0
        %v4893 = vsel %vm1302, %v4885, 0.0
        %v4894 = vsel %vm1303, %v4881, 0.0
        %v4895 = vsel %vm1304, %v4877, 0.0
        %v4896 = vsel %vm1302, %v4886, 0.0
        %v4897 = vsel %vm1303, %v4882, 0.0
        %v4898 = vsel %vm1304, %v4878, 0.0
        %v4899 = vadd.f32 %v4839, %v4887
        %v4900 = vadd.f32 %v4840, %v4888
        %v4901 = vadd.f32 %v4841, %v4889
        %v4902 = vadd.f32 %v4842, %v4890
        %v4903 = vadd.f32 %v4843, %v4891
        %v4904 = vadd.f32 %v4844, %v4892
        %v4905 = vadd.f32 %v4845, %v4893
        %v4906 = vadd.f32 %v4846, %v4894
        %v4907 = vadd.f32 %v4847, %v4895
        %v4908 = vadd.f32 %v4848, %v4896
        %v4909 = vadd.f32 %v4849, %v4897
        %v4910 = vadd.f32 %v4850, %v4898
        %4911 = vrot.lane.b32.xlu0 %v4416, 127
        %v4912 = vpop.permute.xlu0 %4911
        %4913 = vrot.lane.b32.xlu0 %v4420, 127
        %v4914 = vpop.permute.xlu0 %4913
        %4915 = vrot.lane.b32.xlu0 %v4426, 127
        %v4916 = vpop.permute.xlu0 %4915
        %4917 = vrot.lane.b32.xlu0 %v4430, 127
        %v4918 = vpop.permute.xlu0 %4917
        %4919 = vrot.lane.b32.xlu0 %v4418, 127
        %v4920 = vpop.permute.xlu0 %4919
        %4921 = vrot.lane.b32.xlu0 %v4422, 127
        %v4922 = vpop.permute.xlu0 %4921
        %4923 = vrot.lane.b32.xlu0 %v4428, 127
        %v4924 = vpop.permute.xlu0 %4923
        %4925 = vrot.lane.b32.xlu0 %v4432, 127
        %v4926 = vpop.permute.xlu0 %4925
        %4927 = vrot.lane.b32.xlu0 %v4609, 127
        %v4928 = vpop.permute.xlu0 %4927
        %4929 = vrot.lane.b32.xlu0 %v4612, 127
        %v4930 = vpop.permute.xlu0 %4929
        %4931 = vrot.lane.b32.xlu0 %v4617, 127
        %v4932 = vpop.permute.xlu0 %4931
        %4933 = vrot.lane.b32.xlu0 %v4620, 127
        %v4934 = vpop.permute.xlu0 %4933
        %v4935 = vsel %vm1353, %v4920, %v4928
        %v4936 = vsel %vm1353, %v4922, %v4930
        %v4937 = vsel %vm1353, %v4924, %v4932
        %v4938 = vsel %vm1353, %v4926, %v4934
        %v4939 = vsel %vm1353, %v4912, %v4920
        %v4940 = vsel %vm1353, %v4914, %v4922
        %v4941 = vsel %vm1353, %v4916, %v4924
        %v4942 = vsel %vm1353, %v4918, %v4926
        %v4943 = vsel %vm1353, %v4928, %v4912
        %v4944 = vsel %vm1353, %v4930, %v4914
        %v4945 = vsel %vm1353, %v4932, %v4916
        %v4946 = vsel %vm1353, %v4934, %v4918
        %v4947 = vsel %vm1379, %v4939, 0.0
        %v4948 = vsel %vm1380, %v4935, 0.0
        %v4949 = vsel %vm1381, %v4943, 0.0
        %v4950 = vsel %vm1379, %v4940, 0.0
        %v4951 = vsel %vm1380, %v4936, 0.0
        %v4952 = vsel %vm1381, %v4944, 0.0
        %v4953 = vsel %vm1379, %v4941, 0.0
        %v4954 = vsel %vm1380, %v4937, 0.0
        %v4955 = vsel %vm1381, %v4945, 0.0
        %v4956 = vsel %vm1379, %v4942, 0.0
        %v4957 = vsel %vm1380, %v4938, 0.0
        %v4958 = vsel %vm1381, %v4946, 0.0
        %v4959 = vadd.f32 %v4899, %v4947
        %v4960 = vadd.f32 %v4900, %v4948
        %v4961 = vadd.f32 %v4901, %v4949
        %v4962 = vadd.f32 %v4902, %v4950
        %v4963 = vadd.f32 %v4903, %v4951
        %v4964 = vadd.f32 %v4904, %v4952
        %v4965 = vadd.f32 %v4905, %v4953
        %v4966 = vadd.f32 %v4906, %v4954
        %v4967 = vadd.f32 %v4907, %v4955
        %v4968 = vadd.f32 %v4908, %v4956
        %v4969 = vadd.f32 %v4909, %v4957
        %v4970 = vadd.f32 %v4910, %v4958
        %4971 = vrot.lane.b32.xlu0 %v4436, 113
        %v4972 = vpop.permute.xlu0 %4971
        %4973 = vrot.lane.b32.xlu0 %v4440, 113
        %v4974 = vpop.permute.xlu0 %4973
        %4975 = vrot.lane.b32.xlu0 %v4446, 113
        %v4976 = vpop.permute.xlu0 %4975
        %4977 = vrot.lane.b32.xlu0 %v4450, 113
        %v4978 = vpop.permute.xlu0 %4977
        %4979 = vrot.lane.b32.xlu0 %v4438, 113
        %v4980 = vpop.permute.xlu0 %4979
        %4981 = vrot.lane.b32.xlu0 %v4442, 113
        %v4982 = vpop.permute.xlu0 %4981
        %4983 = vrot.lane.b32.xlu0 %v4448, 113
        %v4984 = vpop.permute.xlu0 %4983
        %4985 = vrot.lane.b32.xlu0 %v4452, 113
        %v4986 = vpop.permute.xlu0 %4985
        %4987 = vrot.lane.b32.xlu0 %v4625, 113
        %v4988 = vpop.permute.xlu0 %4987
        %4989 = vrot.lane.b32.xlu0 %v4628, 113
        %v4990 = vpop.permute.xlu0 %4989
        %4991 = vrot.lane.b32.xlu0 %v4633, 113
        %v4992 = vpop.permute.xlu0 %4991
        %4993 = vrot.lane.b32.xlu0 %v4636, 113
        %v4994 = vpop.permute.xlu0 %4993
        %v4995 = vsel %vm1430, %v4980, %v4988
        %v4996 = vsel %vm1430, %v4982, %v4990
        %v4997 = vsel %vm1430, %v4984, %v4992
        %v4998 = vsel %vm1430, %v4986, %v4994
        %v4999 = vsel %vm1430, %v4972, %v4980
        %v5000 = vsel %vm1430, %v4974, %v4982
        %v5001 = vsel %vm1430, %v4976, %v4984
        %v5002 = vsel %vm1430, %v4978, %v4986
        %v5003 = vsel %vm1430, %v4988, %v4972
        %v5004 = vsel %vm1430, %v4990, %v4974
        %v5005 = vsel %vm1430, %v4992, %v4976
        %v5006 = vsel %vm1430, %v4994, %v4978
        %v5007 = vsel %vm1456, %v4999, 0.0
        %v5008 = vsel %vm1457, %v4995, 0.0
        %v5009 = vsel %vm1458, %v5003, 0.0
        %v5010 = vsel %vm1456, %v5000, 0.0
        %v5011 = vsel %vm1457, %v4996, 0.0
        %v5012 = vsel %vm1458, %v5004, 0.0
        %v5013 = vsel %vm1456, %v5001, 0.0
        %v5014 = vsel %vm1457, %v4997, 0.0
        %v5015 = vsel %vm1458, %v5005, 0.0
        %v5016 = vsel %vm1456, %v5002, 0.0
        %v5017 = vsel %vm1457, %v4998, 0.0
        %v5018 = vsel %vm1458, %v5006, 0.0
        %v5019 = vadd.f32 %v4959, %v5007
        %v5020 = vadd.f32 %v4960, %v5008
        %v5021 = vadd.f32 %v4961, %v5009
        %v5022 = vadd.f32 %v4962, %v5010
        %v5023 = vadd.f32 %v4963, %v5011
        %v5024 = vadd.f32 %v4964, %v5012
        %v5025 = vadd.f32 %v4965, %v5013
        %v5026 = vadd.f32 %v4966, %v5014
        %v5027 = vadd.f32 %v4967, %v5015
        %v5028 = vadd.f32 %v4968, %v5016
        %v5029 = vadd.f32 %v4969, %v5017
        %v5030 = vadd.f32 %v4970, %v5018
        %5031 = vrot.lane.b32.xlu0 %v4456, 112
        %v5032 = vpop.permute.xlu0 %5031
        %5033 = vrot.lane.b32.xlu0 %v4460, 112
        %v5034 = vpop.permute.xlu0 %5033
        %5035 = vrot.lane.b32.xlu0 %v4466, 112
        %v5036 = vpop.permute.xlu0 %5035
        %5037 = vrot.lane.b32.xlu0 %v4470, 112
        %v5038 = vpop.permute.xlu0 %5037
        %5039 = vrot.lane.b32.xlu0 %v4458, 112
        %v5040 = vpop.permute.xlu0 %5039
        %5041 = vrot.lane.b32.xlu0 %v4462, 112
        %v5042 = vpop.permute.xlu0 %5041
        %5043 = vrot.lane.b32.xlu0 %v4468, 112
        %v5044 = vpop.permute.xlu0 %5043
        %5045 = vrot.lane.b32.xlu0 %v4472, 112
        %v5046 = vpop.permute.xlu0 %5045
        %5047 = vrot.lane.b32.xlu0 %v4641, 112
        %v5048 = vpop.permute.xlu0 %5047
        %5049 = vrot.lane.b32.xlu0 %v4644, 112
        %v5050 = vpop.permute.xlu0 %5049
        %5051 = vrot.lane.b32.xlu0 %v4649, 112
        %v5052 = vpop.permute.xlu0 %5051
        %5053 = vrot.lane.b32.xlu0 %v4652, 112
        %v5054 = vpop.permute.xlu0 %5053
        %v5055 = vsel %vm1507, %v5040, %v5048
        %v5056 = vsel %vm1507, %v5042, %v5050
        %v5057 = vsel %vm1507, %v5044, %v5052
        %v5058 = vsel %vm1507, %v5046, %v5054
        %v5059 = vsel %vm1507, %v5032, %v5040
        %v5060 = vsel %vm1507, %v5034, %v5042
        %v5061 = vsel %vm1507, %v5036, %v5044
        %v5062 = vsel %vm1507, %v5038, %v5046
        %v5063 = vsel %vm1507, %v5048, %v5032
        %v5064 = vsel %vm1507, %v5050, %v5034
        %v5065 = vsel %vm1507, %v5052, %v5036
        %v5066 = vsel %vm1507, %v5054, %v5038
        %v5067 = vsel %vm1533, %v5059, 0.0
        %v5068 = vsel %vm1534, %v5055, 0.0
        %v5069 = vsel %vm1535, %v5063, 0.0
        %v5070 = vsel %vm1533, %v5060, 0.0
        %v5071 = vsel %vm1534, %v5056, 0.0
        %v5072 = vsel %vm1535, %v5064, 0.0
        %v5073 = vsel %vm1533, %v5061, 0.0
        %v5074 = vsel %vm1534, %v5057, 0.0
        %v5075 = vsel %vm1535, %v5065, 0.0
        %v5076 = vsel %vm1533, %v5062, 0.0
        %v5077 = vsel %vm1534, %v5058, 0.0
        %v5078 = vsel %vm1535, %v5066, 0.0
        %v5079 = vadd.f32 %v5019, %v5067
        %v5080 = vadd.f32 %v5020, %v5068
        %v5081 = vadd.f32 %v5021, %v5069
        %v5082 = vadd.f32 %v5022, %v5070
        %v5083 = vadd.f32 %v5023, %v5071
        %v5084 = vadd.f32 %v5024, %v5072
        %v5085 = vadd.f32 %v5025, %v5073
        %v5086 = vadd.f32 %v5026, %v5074
        %v5087 = vadd.f32 %v5027, %v5075
        %v5088 = vadd.f32 %v5028, %v5076
        %v5089 = vadd.f32 %v5029, %v5077
        %v5090 = vadd.f32 %v5030, %v5078
        %5091 = vrot.lane.b32.xlu0 %v4476, 111
        %v5092 = vpop.permute.xlu0 %5091
        %5093 = vrot.lane.b32.xlu0 %v4480, 111
        %v5094 = vpop.permute.xlu0 %5093
        %5095 = vrot.lane.b32.xlu0 %v4486, 111
        %v5096 = vpop.permute.xlu0 %5095
        %5097 = vrot.lane.b32.xlu0 %v4490, 111
        %v5098 = vpop.permute.xlu0 %5097
        %5099 = vrot.lane.b32.xlu0 %v4478, 111
        %v5100 = vpop.permute.xlu0 %5099
        %5101 = vrot.lane.b32.xlu0 %v4482, 111
        %v5102 = vpop.permute.xlu0 %5101
        %5103 = vrot.lane.b32.xlu0 %v4488, 111
        %v5104 = vpop.permute.xlu0 %5103
        %5105 = vrot.lane.b32.xlu0 %v4492, 111
        %v5106 = vpop.permute.xlu0 %5105
        %5107 = vrot.lane.b32.xlu0 %v4657, 111
        %v5108 = vpop.permute.xlu0 %5107
        %5109 = vrot.lane.b32.xlu0 %v4660, 111
        %v5110 = vpop.permute.xlu0 %5109
        %5111 = vrot.lane.b32.xlu0 %v4665, 111
        %v5112 = vpop.permute.xlu0 %5111
        %5113 = vrot.lane.b32.xlu0 %v4668, 111
        %v5114 = vpop.permute.xlu0 %5113
        %v5115 = vsel %vm1584, %v5100, %v5108
        %v5116 = vsel %vm1584, %v5102, %v5110
        %v5117 = vsel %vm1584, %v5104, %v5112
        %v5118 = vsel %vm1584, %v5106, %v5114
        %v5119 = vsel %vm1584, %v5092, %v5100
        %v5120 = vsel %vm1584, %v5094, %v5102
        %v5121 = vsel %vm1584, %v5096, %v5104
        %v5122 = vsel %vm1584, %v5098, %v5106
        %v5123 = vsel %vm1584, %v5108, %v5092
        %v5124 = vsel %vm1584, %v5110, %v5094
        %v5125 = vsel %vm1584, %v5112, %v5096
        %v5126 = vsel %vm1584, %v5114, %v5098
        %v5127 = vsel %vm1610, %v5119, 0.0
        %v5128 = vsel %vm1611, %v5115, 0.0
        %v5129 = vsel %vm1612, %v5123, 0.0
        %v5130 = vsel %vm1610, %v5120, 0.0
        %v5131 = vsel %vm1611, %v5116, 0.0
        %v5132 = vsel %vm1612, %v5124, 0.0
        %v5133 = vsel %vm1610, %v5121, 0.0
        %v5134 = vsel %vm1611, %v5117, 0.0
        %v5135 = vsel %vm1612, %v5125, 0.0
        %v5136 = vsel %vm1610, %v5122, 0.0
        %v5137 = vsel %vm1611, %v5118, 0.0
        %v5138 = vsel %vm1612, %v5126, 0.0
        %v5139 = vadd.f32 %v5079, %v5127
        %v5140 = vadd.f32 %v5080, %v5128
        %v5141 = vadd.f32 %v5081, %v5129
        %v5142 = vadd.f32 %v5082, %v5130
        %v5143 = vadd.f32 %v5083, %v5131
        %v5144 = vadd.f32 %v5084, %v5132
        %v5145 = vadd.f32 %v5085, %v5133
        %v5146 = vadd.f32 %v5086, %v5134
        %v5147 = vadd.f32 %v5087, %v5135
        %v5148 = vadd.f32 %v5088, %v5136
        %v5149 = vadd.f32 %v5089, %v5137
        %v5150 = vadd.f32 %v5090, %v5138
        %s5151 = scalar_lea.vmem %s7, 96
        %v5152 = vld [vmem:[%s5151] sm:$0xff]
        %v5153 = vld [vmem:[%s5151 + $0x8] sm:$0xff]
        %v5154 = vld [vmem:[%s5151 + $0x10] sm:$0xff]
        %v5155 = vld [vmem:[%s5151 + $0x18] sm:$0xff]
        %5157 = vset.pattern.permute.xlu0 0
        %5158 = vperm.xlu0 %5157, %v5152
        %v5159 = vpop.permute.xlu0 %5158
        %5162 = vset.pattern.permute.xlu0 0
        %5163 = vperm.xlu0 %5162, %v5153
        %v5164 = vpop.permute.xlu0 %5163
        %5167 = vset.pattern.permute.xlu0 0
        %5168 = vperm.xlu0 %5167, %v5154
        %v5169 = vpop.permute.xlu0 %5168
        %5172 = vset.pattern.permute.xlu0 0
        %5173 = vperm.xlu0 %5172, %v5155
        %v5174 = vpop.permute.xlu0 %5173
        %v5176 = vadd.f32 %v5139, %v5159
        %v5177 = vadd.f32 %v5140, %v5159
        %v5178 = vadd.f32 %v5141, %v5159
        %v5179 = vadd.f32 %v5142, %v5164
        %v5180 = vadd.f32 %v5143, %v5164
        %v5181 = vadd.f32 %v5144, %v5164
        %v5182 = vadd.f32 %v5145, %v5169
        %v5183 = vadd.f32 %v5146, %v5169
        %v5184 = vadd.f32 %v5147, %v5169
        %v5185 = vadd.f32 %v5148, %v5174
        %v5186 = vadd.f32 %v5149, %v5174
        %v5187 = vadd.f32 %v5150, %v5174
        %vm5188 = vcmp.ge.f32.partialorder %v5176, 0.0
        %vm5189 = vcmp.ge.f32.partialorder %v5177, 0.0
        %vm5190 = vcmp.ge.f32.partialorder %v5178, 0.0
        %vm5191 = vcmp.ge.f32.partialorder %v5179, 0.0
        %vm5192 = vcmp.ge.f32.partialorder %v5180, 0.0
        %vm5193 = vcmp.ge.f32.partialorder %v5181, 0.0
        %vm5194 = vcmp.ge.f32.partialorder %v5182, 0.0
        %vm5195 = vcmp.ge.f32.partialorder %v5183, 0.0
        %vm5196 = vcmp.ge.f32.partialorder %v5184, 0.0
        %vm5197 = vcmp.ge.f32.partialorder %v5185, 0.0
        %vm5198 = vcmp.ge.f32.partialorder %v5186, 0.0
        %vm5199 = vcmp.ge.f32.partialorder %v5187, 0.0
        %v5200 = vmul.f32 %v5176, 0.01
        %v5201 = vmul.f32 %v5177, 0.01
        %v5202 = vmul.f32 %v5178, 0.01
        %v5203 = vmul.f32 %v5179, 0.01
        %v5204 = vmul.f32 %v5180, 0.01
        %v5205 = vmul.f32 %v5181, 0.01
        %v5206 = vmul.f32 %v5182, 0.01
        %v5207 = vmul.f32 %v5183, 0.01
        %v5208 = vmul.f32 %v5184, 0.01
        %v5209 = vmul.f32 %v5185, 0.01
        %v5210 = vmul.f32 %v5186, 0.01
        %v5211 = vmul.f32 %v5187, 0.01
        %v5212 = vsel %vm5188, %v5176, %v5200
        %v5213 = vsel %vm5189, %v5177, %v5201
        %v5214 = vsel %vm5190, %v5178, %v5202
        %v5215 = vsel %vm5191, %v5179, %v5203
        %v5216 = vsel %vm5192, %v5180, %v5204
        %v5217 = vsel %vm5193, %v5181, %v5205
        %v5218 = vsel %vm5194, %v5182, %v5206
        %v5219 = vsel %vm5195, %v5183, %v5207
        %v5220 = vsel %vm5196, %v5184, %v5208
        %v5221 = vsel %vm5197, %v5185, %v5209
        %v5222 = vsel %vm5198, %v5186, %v5210
        %v5223 = vsel %vm5199, %v5187, %v5211
        %v5224 = vpack.c.bf16 %v5215, %v5212
        %v5225 = vpack.c.bf16 %v5216, %v5213
        %v5226 = vpack.c.bf16 %v5217, %v5214
        %v5227 = vpack.c.bf16 %v5221, %v5218
        %v5228 = vpack.c.bf16 %v5222, %v5219
        %v5229 = vpack.c.bf16 %v5223, %v5220
        %5230 = vst [vmem:[#allocation2 + $0xf0] sm:$0xff] %v5224
        %5231 = vst [vmem:[#allocation2 + $0xf8] sm:$0xff] %v5225
        %5232 = vst [vmem:[#allocation2 + $0x100] sm:$0xff] %v5226
        %5233 = vst [vmem:[#allocation2 + $0x108] sm:$0xff] %v5227
        %5234 = vst [vmem:[#allocation2 + $0x110] sm:$0xff] %v5228
        %5235 = vst [vmem:[#allocation2 + $0x118] sm:$0xff] %v5229
        %v5236 = vld [vmem:[#allocation2] sm:$0xff]
        %v5237 = vld [vmem:[#allocation2 + $0x8] sm:$0xff]
        %v5238 = vld [vmem:[#allocation2 + $0x10] sm:$0xff]
        %v5239 = vld [vmem:[#allocation2 + $0x18] sm:$0xff]
        %v5240 = vld [vmem:[#allocation2 + $0x20] sm:$0xff]
        %v5241 = vld [vmem:[#allocation2 + $0x28] sm:$0xff]
        %v5242 = vld [vmem:[#allocation2 + $0x30] sm:$0xff]
        %v5243 = vld [vmem:[#allocation2 + $0x38] sm:$0xff]
        %v5244 = vld [vmem:[#allocation2 + $0x40] sm:$0xff]
        %v5245 = vld [vmem:[#allocation2 + $0x48] sm:$0xff]
        %v5246 = vld [vmem:[#allocation2 + $0x50] sm:$0xff]
        %v5247 = vld [vmem:[#allocation2 + $0x58] sm:$0xff]
        %v5248 = vld [vmem:[#allocation2 + $0x60] sm:$0xff]
        %v5249 = vld [vmem:[#allocation2 + $0x68] sm:$0xff]
        %v5250 = vld [vmem:[#allocation2 + $0x70] sm:$0xff]
        %v5251 = vld [vmem:[#allocation2 + $0x78] sm:$0xff]
        %v5252 = vld [vmem:[#allocation2 + $0x80] sm:$0xff]
        %v5253 = vld [vmem:[#allocation2 + $0x88] sm:$0xff]
        %v5254 = vld [vmem:[#allocation2 + $0x90] sm:$0xff]
        %v5255 = vld [vmem:[#allocation2 + $0x98] sm:$0xff]
        %v5256 = vld [vmem:[#allocation2 + $0xa0] sm:$0xff]
        %v5257 = vld [vmem:[#allocation2 + $0xa8] sm:$0xff]
        %v5258 = vld [vmem:[#allocation2 + $0xb0] sm:$0xff]
        %v5259 = vld [vmem:[#allocation2 + $0xb8] sm:$0xff]
        %v5260 = vld [vmem:[#allocation2 + $0xc0] sm:$0xff]
        %v5261 = vld [vmem:[#allocation2 + $0xc8] sm:$0xff]
        %v5262 = vld [vmem:[#allocation2 + $0xd0] sm:$0xff]
        %v5263 = vld [vmem:[#allocation2 + $0xd8] sm:$0xff]
        %v5264 = vld [vmem:[#allocation2 + $0xe0] sm:$0xff]
        %v5265 = vld [vmem:[#allocation2 + $0xe8] sm:$0xff]
        %v5266 = vld [vmem:[#allocation2 + $0xf0] sm:$0xff]
        %v5267 = vld [vmem:[#allocation2 + $0xf8] sm:$0xff]
        %v5268 = vld [vmem:[#allocation2 + $0x100] sm:$0xff]
        %v5269 = vld [vmem:[#allocation2 + $0x108] sm:$0xff]
        %v5270 = vld [vmem:[#allocation2 + $0x110] sm:$0xff]
        %v5271 = vld [vmem:[#allocation2 + $0x118] sm:$0xff]
        %v5272 = vld [vmem:[%s6] sm:$0xff]
        %v5273 = vld [vmem:[%s6 + $0x8] sm:$0xff]
        %v5274 = vld [vmem:[%s6 + $0x10] sm:$0xff]
        %v5275 = vld [vmem:[%s6 + $0x18] sm:$0xff]
        %v5276 = vld [vmem:[%s6 + $0x20] sm:$0xff]
        %v5277 = vld [vmem:[%s6 + $0x28] sm:$0xff]
        %v5278 = vld [vmem:[%s6 + $0x30] sm:$0xff]
        %v5279 = vld [vmem:[%s6 + $0x38] sm:$0xff]
        %v5280 = vld [vmem:[%s6 + $0x40] sm:$0xff]
        %v5281 = vld [vmem:[%s6 + $0x48] sm:$0xff]
        %v5282 = vld [vmem:[%s6 + $0x50] sm:$0xff]
        %v5283 = vld [vmem:[%s6 + $0x58] sm:$0xff]
        %v5284 = vld [vmem:[%s6 + $0x60] sm:$0xff]
        %v5285 = vld [vmem:[%s6 + $0x68] sm:$0xff]
        %v5286 = vld [vmem:[%s6 + $0x70] sm:$0xff]
        %v5287 = vld [vmem:[%s6 + $0x78] sm:$0xff]
        %v5288 = vld [vmem:[%s6 + $0x80] sm:$0xff]
        %v5289 = vld [vmem:[%s6 + $0x88] sm:$0xff]
        %v5290 = vld [vmem:[%s6 + $0x90] sm:$0xff]
        %v5291 = vld [vmem:[%s6 + $0x98] sm:$0xff]
        %v5292 = vld [vmem:[%s6 + $0xa0] sm:$0xff]
        %v5293 = vld [vmem:[%s6 + $0xa8] sm:$0xff]
        %v5294 = vld [vmem:[%s6 + $0xb0] sm:$0xff]
        %v5295 = vld [vmem:[%s6 + $0xb8] sm:$0xff]
        %v5296 = vld [vmem:[%s6 + $0xc0] sm:$0xff]
        %v5297 = vld [vmem:[%s6 + $0xc8] sm:$0xff]
        %v5298 = vld [vmem:[%s6 + $0xd0] sm:$0xff]
        %v5299 = vld [vmem:[%s6 + $0xd8] sm:$0xff]
        %v5300 = vld [vmem:[%s6 + $0xe0] sm:$0xff]
        %v5301 = vld [vmem:[%s6 + $0xe8] sm:$0xff]
        %v5302 = vld [vmem:[%s6 + $0xf0] sm:$0xff]
        %v5303 = vld [vmem:[%s6 + $0xf8] sm:$0xff]
        %v5304 = vld [vmem:[%s6 + $0x100] sm:$0xff]
        %v5305 = vld [vmem:[%s6 + $0x108] sm:$0xff]
        %v5306 = vld [vmem:[%s6 + $0x110] sm:$0xff]
        %v5307 = vld [vmem:[%s6 + $0x118] sm:$0xff]
        %v5344 = vunpack.c.l.b16 %v5272
        %v5345 = vunpack.c.h.b16 %v5272
        %v5346 = vunpack.c.l.b16 %v5273
        %v5347 = vunpack.c.h.b16 %v5273
        %v5348 = vunpack.c.l.b16 %v5274
        %v5349 = vunpack.c.h.b16 %v5274
        %v5350 = vunpack.c.l.b16 %v5275
        %v5351 = vunpack.c.h.b16 %v5275
        %v5352 = vunpack.c.l.b16 %v5276
        %v5353 = vunpack.c.h.b16 %v5276
        %v5354 = vunpack.c.l.b16 %v5277
        %v5355 = vunpack.c.h.b16 %v5277
        %v5356 = vunpack.c.l.b16 %v5278
        %v5357 = vunpack.c.h.b16 %v5278
        %v5358 = vunpack.c.l.b16 %v5279
        %v5359 = vunpack.c.h.b16 %v5279
        %v5360 = vunpack.c.l.b16 %v5280
        %v5361 = vunpack.c.h.b16 %v5280
        %v5362 = vunpack.c.l.b16 %v5281
        %v5363 = vunpack.c.h.b16 %v5281
        %v5364 = vunpack.c.l.b16 %v5282
        %v5365 = vunpack.c.h.b16 %v5282
        %v5366 = vunpack.c.l.b16 %v5283
        %v5367 = vunpack.c.h.b16 %v5283
        %v5368 = vunpack.c.l.b16 %v5284
        %v5369 = vunpack.c.h.b16 %v5284
        %v5370 = vunpack.c.l.b16 %v5285
        %v5371 = vunpack.c.h.b16 %v5285
        %v5372 = vunpack.c.l.b16 %v5286
        %v5373 = vunpack.c.h.b16 %v5286
        %v5374 = vunpack.c.l.b16 %v5287
        %v5375 = vunpack.c.h.b16 %v5287
        %v5376 = vunpack.c.l.b16 %v5288
        %v5377 = vunpack.c.h.b16 %v5288
        %v5378 = vunpack.c.l.b16 %v5289
        %v5379 = vunpack.c.h.b16 %v5289
        %v5380 = vunpack.c.l.b16 %v5290
        %v5381 = vunpack.c.h.b16 %v5290
        %v5382 = vunpack.c.l.b16 %v5291
        %v5383 = vunpack.c.h.b16 %v5291
        %v5384 = vunpack.c.l.b16 %v5292
        %v5385 = vunpack.c.h.b16 %v5292
        %v5386 = vunpack.c.l.b16 %v5293
        %v5387 = vunpack.c.h.b16 %v5293
        %v5388 = vunpack.c.l.b16 %v5294
        %v5389 = vunpack.c.h.b16 %v5294
        %v5390 = vunpack.c.l.b16 %v5295
        %v5391 = vunpack.c.h.b16 %v5295
        %v5392 = vunpack.c.l.b16 %v5296
        %v5393 = vunpack.c.h.b16 %v5296
        %v5394 = vunpack.c.l.b16 %v5297
        %v5395 = vunpack.c.h.b16 %v5297
        %v5396 = vunpack.c.l.b16 %v5298
        %v5397 = vunpack.c.h.b16 %v5298
        %v5398 = vunpack.c.l.b16 %v5299
        %v5399 = vunpack.c.h.b16 %v5299
        %v5400 = vunpack.c.l.b16 %v5300
        %v5401 = vunpack.c.h.b16 %v5300
        %v5402 = vunpack.c.l.b16 %v5301
        %v5403 = vunpack.c.h.b16 %v5301
        %v5404 = vunpack.c.l.b16 %v5302
        %v5405 = vunpack.c.h.b16 %v5302
        %v5406 = vunpack.c.l.b16 %v5303
        %v5407 = vunpack.c.h.b16 %v5303
        %v5408 = vunpack.c.l.b16 %v5304
        %v5409 = vunpack.c.h.b16 %v5304
        %v5410 = vunpack.c.l.b16 %v5305
        %v5411 = vunpack.c.h.b16 %v5305
        %v5412 = vunpack.c.l.b16 %v5306
        %v5413 = vunpack.c.h.b16 %v5306
        %v5414 = vunpack.c.l.b16 %v5307
        %v5415 = vunpack.c.h.b16 %v5307
        %v5416 = vpack.c.b16 %v5346, %v5344
        %v5417 = vpack.c.b16 %v5347, %v5345
        %v5418 = vpack.c.b16 %v5350, %v5348
        %v5419 = vpack.c.b16 %v5351, %v5349
        %v5420 = vpack.c.b16 %v5354, %v5352
        %v5421 = vpack.c.b16 %v5355, %v5353
        %v5422 = vpack.c.b16 %v5358, %v5356
        %v5423 = vpack.c.b16 %v5359, %v5357
        %v5424 = vpack.c.b16 %v5362, %v5360
        %v5425 = vpack.c.b16 %v5363, %v5361
        %v5426 = vpack.c.b16 %v5366, %v5364
        %v5427 = vpack.c.b16 %v5367, %v5365
        %v5428 = vpack.c.b16 %v5370, %v5368
        %v5429 = vpack.c.b16 %v5371, %v5369
        %v5430 = vpack.c.b16 %v5374, %v5372
        %v5431 = vpack.c.b16 %v5375, %v5373
        %v5432 = vpack.c.b16 %v5378, %v5376
        %v5433 = vpack.c.b16 %v5379, %v5377
        %v5434 = vpack.c.b16 %v5382, %v5380
        %v5435 = vpack.c.b16 %v5383, %v5381
        %v5436 = vpack.c.b16 %v5386, %v5384
        %v5437 = vpack.c.b16 %v5387, %v5385
        %v5438 = vpack.c.b16 %v5390, %v5388
        %v5439 = vpack.c.b16 %v5391, %v5389
        %v5440 = vpack.c.b16 %v5394, %v5392
        %v5441 = vpack.c.b16 %v5395, %v5393
        %v5442 = vpack.c.b16 %v5398, %v5396
        %v5443 = vpack.c.b16 %v5399, %v5397
        %v5444 = vpack.c.b16 %v5402, %v5400
        %v5445 = vpack.c.b16 %v5403, %v5401
        %v5446 = vpack.c.b16 %v5406, %v5404
        %v5447 = vpack.c.b16 %v5407, %v5405
        %v5448 = vpack.c.b16 %v5410, %v5408
        %v5449 = vpack.c.b16 %v5411, %v5409
        %v5450 = vpack.c.b16 %v5414, %v5412
        %v5451 = vpack.c.b16 %v5415, %v5413
        %v5471 = vsel %vm574, %v5417, 0
        %v5474 = vsel %vm574, %v5419, 0
        %v5477 = vsel %vm574, %v5421, 0
        %v5480 = vsel %vm574, %v5423, 0
        %v5483 = vsel %vm574, %v5425, 0
        %v5486 = vsel %vm574, %v5427, 0
        %v5489 = vsel %vm574, %v5429, 0
        %v5492 = vsel %vm574, %v5431, 0
        %v5495 = vsel %vm574, %v5433, 0
        %v5498 = vsel %vm574, %v5435, 0
        %v5501 = vsel %vm574, %v5437, 0
        %v5504 = vsel %vm574, %v5439, 0
        %v5507 = vsel %vm574, %v5441, 0
        %v5510 = vsel %vm574, %v5443, 0
        %v5513 = vsel %vm574, %v5445, 0
        %v5516 = vsel %vm574, %v5447, 0
        %v5519 = vsel %vm574, %v5449, 0
        %v5522 = vsel %vm574, %v5451, 0
        %5524 = vmatprep.subr.bf16.mxu0 %v5237
        %5525 = vmatpush1.bf16.msra.mxu0 %v5236
        %5526 = vmatprep.subr.bf16.mxu0 %v5240
        %5527 = vmatpush1.bf16.msra.mxu0 %v5239
        %5528 = vmatprep.subr.bf16.mxu0 %v5243
        %5529 = vmatpush1.bf16.msra.mxu0 %v5242
        %5530 = vmatprep.subr.bf16.mxu0 %v5246
        %5531 = vmatpush1.bf16.msra.mxu0 %v5245
        %5532 = vmatprep.subr.bf16.mxu0 %v5249
        %5533 = vmatpush1.bf16.msra.mxu0 %v5248
        %5534 = vmatprep.subr.bf16.mxu0 %v5252
        %5535 = vmatpush1.bf16.msra.mxu0 %v5251
        %5536 = vmatprep.subr.bf16.mxu0 %v5255
        %5537 = vmatpush1.bf16.msra.mxu0 %v5254
        %5538 = vmatprep.subr.bf16.mxu0 %v5258
        %5539 = vmatpush1.bf16.msra.mxu0 %v5257
        %5540 = vmatprep.subr.bf16.mxu0 %v5261
        %5541 = vmatpush1.bf16.msra.mxu0 %v5260
        %5542 = vmatprep.subr.bf16.mxu0 %v5264
        %5543 = vmatpush1.bf16.msra.mxu0 %v5263
        %5544 = vmatprep.subr.bf16.mxu0 %v5267
        %5545 = vmatpush1.bf16.msra.mxu0 %v5266
        %5546 = vmatprep.subr.bf16.mxu0 %v5270
        %5547 = vmatpush1.bf16.msra.mxu0 %v5269
        %5548 = vmatprep.subr.bf16.mxu0 0
        %5549 = vmatpush1.bf16.msra.mxu0 0
        %5550 = vmatprep.subr.bf16.mxu0 0
        %5551 = vmatpush1.bf16.msra.mxu0 0
        %5552 = vmatprep.subr.bf16.mxu0 0
        %5553 = vmatpush1.bf16.msra.mxu0 0
        %5554 = vmatprep.subr.bf16.mxu0 0
        %5555 = vmatpush1.bf16.msra.mxu0 0
        %5556 = vmatprep.mubr.bf16.mxu0 %v5471
        %5557 = vmatmul.mubr.bf16.gmra.mrb[0].mxu0 %v5416
        %v5558 = vpop.f32.mrb[0].mxu0
        %v5559 = vadd.f32 0.0, %v5558
        %v5560 = vpop.f32.mrb[0].mxu0
        %v5561 = vadd.f32 0.0, %v5560
        %v5562 = vpop.f32.mrb[0].mxu0
        %v5563 = vadd.f32 0.0, %v5562
        %v5564 = vpop.f32.mrb[0].mxu0
        %v5565 = vadd.f32 0.0, %v5564
        %5566 = vmatprep.mubr.bf16.mxu0 %v5474
        %5567 = vmatmul.mubr.bf16.gmra.mrb[0].mxu0 %v5418
        %v5568 = vpop.f32.mrb[0].mxu0
        %v5569 = vadd.f32 0.0, %v5568
        %v5570 = vpop.f32.mrb[0].mxu0
        %v5571 = vadd.f32 0.0, %v5570
        %v5572 = vpop.f32.mrb[0].mxu0
        %v5573 = vadd.f32 0.0, %v5572
        %v5574 = vpop.f32.mrb[0].mxu0
        %v5575 = vadd.f32 0.0, %v5574
        %5576 = vmatprep.mubr.bf16.mxu0 %v5477
        %5577 = vmatmul.mubr.bf16.gmra.mrb[0].mxu0 %v5420
        %v5578 = vpop.f32.mrb[0].mxu0
        %v5579 = vadd.f32 0.0, %v5578
        %v5580 = vpop.f32.mrb[0].mxu0
        %v5581 = vadd.f32 0.0, %v5580
        %v5582 = vpop.f32.mrb[0].mxu0
        %v5583 = vadd.f32 0.0, %v5582
        %v5584 = vpop.f32.mrb[0].mxu0
        %v5585 = vadd.f32 0.0, %v5584
        %5586 = vmatprep.mubr.bf16.mxu0 %v5480
        %5587 = vmatmul.mubr.bf16.gmra.mrb[0].mxu0 %v5422
        %v5588 = vpop.f32.mrb[0].mxu0
        %v5589 = vadd.f32 0.0, %v5588
        %v5590 = vpop.f32.mrb[0].mxu0
        %v5591 = vadd.f32 0.0, %v5590
        %v5592 = vpop.f32.mrb[0].mxu0
        %v5593 = vadd.f32 0.0, %v5592
        %v5594 = vpop.f32.mrb[0].mxu0
        %v5595 = vadd.f32 0.0, %v5594
        %5596 = vmatprep.mubr.bf16.mxu0 %v5483
        %5597 = vmatmul.mubr.bf16.gmra.mrb[0].mxu0 %v5424
        %v5598 = vpop.f32.mrb[0].mxu0
        %v5599 = vadd.f32 0.0, %v5598
        %v5600 = vpop.f32.mrb[0].mxu0
        %v5601 = vadd.f32 0.0, %v5600
        %v5602 = vpop.f32.mrb[0].mxu0
        %v5603 = vadd.f32 0.0, %v5602
        %v5604 = vpop.f32.mrb[0].mxu0
        %v5605 = vadd.f32 0.0, %v5604
        %5606 = vmatprep.mubr.bf16.mxu0 %v5486
        %5607 = vmatmul.mubr.bf16.gmra.mrb[0].mxu0 %v5426
        %v5608 = vpop.f32.mrb[0].mxu0
        %v5609 = vadd.f32 0.0, %v5608
        %v5610 = vpop.f32.mrb[0].mxu0
        %v5611 = vadd.f32 0.0, %v5610
        %v5612 = vpop.f32.mrb[0].mxu0
        %v5613 = vadd.f32 0.0, %v5612
        %v5614 = vpop.f32.mrb[0].mxu0
        %v5615 = vadd.f32 0.0, %v5614
        %5616 = vmatprep.mubr.bf16.mxu0 %v5489
        %5617 = vmatmul.mubr.bf16.gmra.mrb[0].mxu0 %v5428
        %v5618 = vpop.f32.mrb[0].mxu0
        %v5619 = vadd.f32 0.0, %v5618
        %v5620 = vpop.f32.mrb[0].mxu0
        %v5621 = vadd.f32 0.0, %v5620
        %v5622 = vpop.f32.mrb[0].mxu0
        %v5623 = vadd.f32 0.0, %v5622
        %v5624 = vpop.f32.mrb[0].mxu0
        %v5625 = vadd.f32 0.0, %v5624
        %5626 = vmatprep.mubr.bf16.mxu0 %v5492
        %5627 = vmatmul.mubr.bf16.gmra.mrb[0].mxu0 %v5430
        %v5628 = vpop.f32.mrb[0].mxu0
        %v5629 = vadd.f32 0.0, %v5628
        %v5630 = vpop.f32.mrb[0].mxu0
        %v5631 = vadd.f32 0.0, %v5630
        %v5632 = vpop.f32.mrb[0].mxu0
        %v5633 = vadd.f32 0.0, %v5632
        %v5634 = vpop.f32.mrb[0].mxu0
        %v5635 = vadd.f32 0.0, %v5634
        %5636 = vmatprep.mubr.bf16.mxu0 %v5495
        %5637 = vmatmul.mubr.bf16.gmra.mrb[0].mxu0 %v5432
        %v5638 = vpop.f32.mrb[0].mxu0
        %v5639 = vpop.f32.mrb[0].mxu0
        %v5640 = vadd.f32 0.0, %v5639
        %v5641 = vpop.f32.mrb[0].mxu0
        %v5642 = vpop.f32.mrb[0].mxu0
        %v5643 = vadd.f32 0.0, %v5642
        %5644 = vmatprep.mubr.bf16.mxu0 %v5498
        %5645 = vmatmul.mubr.bf16.gmra.mrb[0].mxu0 %v5434
        %v5646 = vpop.f32.mrb[0].mxu0
        %v5647 = vpop.f32.mrb[0].mxu0
        %v5648 = vadd.f32 0.0, %v5647
        %v5649 = vpop.f32.mrb[0].mxu0
        %v5650 = vpop.f32.mrb[0].mxu0
        %v5651 = vadd.f32 0.0, %v5650
        %5652 = vmatprep.mubr.bf16.mxu0 %v5501
        %5653 = vmatmul.mubr.bf16.gmra.mrb[0].mxu0 %v5436
        %v5654 = vpop.f32.mrb[0].mxu0
        %v5655 = vpop.f32.mrb[0].mxu0
        %v5656 = vadd.f32 0.0, %v5655
        %v5657 = vpop.f32.mrb[0].mxu0
        %v5658 = vpop.f32.mrb[0].mxu0
        %v5659 = vadd.f32 0.0, %v5658
        %5660 = vmatprep.mubr.bf16.mxu0 %v5504
        %5661 = vmatmul.mubr.bf16.gmra.mrb[0].mxu0 %v5438
        %v5662 = vpop.f32.mrb[0].mxu0
        %v5663 = vpop.f32.mrb[0].mxu0
        %v5664 = vadd.f32 0.0, %v5663
        %v5665 = vpop.f32.mrb[0].mxu0
        %v5666 = vpop.f32.mrb[0].mxu0
        %v5667 = vadd.f32 0.0, %v5666
        %5668 = vmatprep.mubr.bf16.mxu0 %v5507
        %5669 = vmatmul.mubr.bf16.gmra.mrb[0].mxu0 %v5440
        %v5670 = vpop.f32.mrb[0].mxu0
        %v5671 = vpop.f32.mrb[0].mxu0
        %v5672 = vadd.f32 0.0, %v5671
        %v5673 = vpop.f32.mrb[0].mxu0
        %v5674 = vpop.f32.mrb[0].mxu0
        %v5675 = vadd.f32 0.0, %v5674
        %5676 = vmatprep.mubr.bf16.mxu0 %v5510
        %5677 = vmatmul.mubr.bf16.gmra.mrb[0].mxu0 %v5442
        %v5678 = vpop.f32.mrb[0].mxu0
        %v5679 = vpop.f32.mrb[0].mxu0
        %v5680 = vadd.f32 0.0, %v5679
        %v5681 = vpop.f32.mrb[0].mxu0
        %v5682 = vpop.f32.mrb[0].mxu0
        %v5683 = vadd.f32 0.0, %v5682
        %5684 = vmatprep.mubr.bf16.mxu0 %v5513
        %5685 = vmatmul.mubr.bf16.gmra.mrb[0].mxu0 %v5444
        %v5686 = vpop.f32.mrb[0].mxu0
        %v5687 = vpop.f32.mrb[0].mxu0
        %v5688 = vadd.f32 0.0, %v5687
        %v5689 = vpop.f32.mrb[0].mxu0
        %v5690 = vpop.f32.mrb[0].mxu0
        %v5691 = vadd.f32 0.0, %v5690
        %5692 = vmatprep.mubr.bf16.mxu0 %v5516
        %5693 = vmatmul.mubr.bf16.gmra.mrb[0].mxu0 %v5446
        %v5694 = vpop.f32.mrb[0].mxu0
        %v5695 = vpop.f32.mrb[0].mxu0
        %v5696 = vadd.f32 0.0, %v5695
        %v5697 = vpop.f32.mrb[0].mxu0
        %v5698 = vpop.f32.mrb[0].mxu0
        %v5699 = vadd.f32 0.0, %v5698
        %5700 = vmatprep.mubr.bf16.mxu0 %v5519
        %5701 = vmatmul.mubr.bf16.gmra.mrb[0].mxu0 %v5448
        %v5702 = vpop.f32.mrb[0].mxu0
        %v5703 = vpop.f32.mrb[0].mxu0
        %v5704 = vadd.f32 0.0, %v5703
        %v5705 = vpop.f32.mrb[0].mxu0
        %v5706 = vpop.f32.mrb[0].mxu0
        %v5707 = vadd.f32 0.0, %v5706
        %5708 = vmatprep.mubr.bf16.mxu0 %v5522
        %5709 = vmatmul.mubr.bf16.gmra.mrb[0].mxu0 %v5450
        %v5710 = vpop.f32.mrb[0].mxu0
        %v5711 = vpop.f32.mrb[0].mxu0
        %v5712 = vadd.f32 0.0, %v5711
        %v5713 = vpop.f32.mrb[0].mxu0
        %v5714 = vpop.f32.mrb[0].mxu0
        %v5715 = vadd.f32 0.0, %v5714
        %5716 = vdwg.mxu0
        %5717 = vmatprep.subr.bf16.mxu0 0
        %5718 = vmatpush1.bf16.msra.mxu0 %v5238
        %5719 = vmatprep.subr.bf16.mxu0 0
        %5720 = vmatpush1.bf16.msra.mxu0 %v5241
        %5721 = vmatprep.subr.bf16.mxu0 0
        %5722 = vmatpush1.bf16.msra.mxu0 %v5244
        %5723 = vmatprep.subr.bf16.mxu0 0
        %5724 = vmatpush1.bf16.msra.mxu0 %v5247
        %5725 = vmatprep.subr.bf16.mxu0 0
        %5726 = vmatpush1.bf16.msra.mxu0 %v5250
        %5727 = vmatprep.subr.bf16.mxu0 0
        %5728 = vmatpush1.bf16.msra.mxu0 %v5253
        %5729 = vmatprep.subr.bf16.mxu0 0
        %5730 = vmatpush1.bf16.msra.mxu0 %v5256
        %5731 = vmatprep.subr.bf16.mxu0 0
        %5732 = vmatpush1.bf16.msra.mxu0 %v5259
        %5733 = vmatprep.subr.bf16.mxu0 0
        %5734 = vmatpush1.bf16.msra.mxu0 %v5262
        %5735 = vmatprep.subr.bf16.mxu0 0
        %5736 = vmatpush1.bf16.msra.mxu0 %v5265
        %5737 = vmatprep.subr.bf16.mxu0 0
        %5738 = vmatpush1.bf16.msra.mxu0 %v5268
        %5739 = vmatprep.subr.bf16.mxu0 0
        %5740 = vmatpush1.bf16.msra.mxu0 %v5271
        %5741 = vmatprep.subr.bf16.mxu0 0
        %5742 = vmatpush1.bf16.msra.mxu0 0
        %5743 = vmatprep.subr.bf16.mxu0 0
        %5744 = vmatpush1.bf16.msra.mxu0 0
        %5745 = vmatprep.subr.bf16.mxu0 0
        %5746 = vmatpush1.bf16.msra.mxu0 0
        %5747 = vmatprep.subr.bf16.mxu0 0
        %5748 = vmatpush1.bf16.msra.mxu0 0
        %5749 = vmatprep.mubr.bf16.mxu0 %v5471
        %5750 = vmatmul.mubr.bf16.gmra.mrb[0].mxu0 %v5416
        %v5751 = vpop.f32.mrb[0].mxu0
        %v5752 = vpop.f32.mrb[0].mxu0
        %v5753 = vpop.f32.mrb[0].mxu0
        %v5754 = vpop.f32.mrb[0].mxu0
        %5755 = vmatprep.mubr.bf16.mxu0 %v5474
        %5756 = vmatmul.mubr.bf16.gmra.mrb[0].mxu0 %v5418
        %v5757 = vpop.f32.mrb[0].mxu0
        %v5758 = vpop.f32.mrb[0].mxu0
        %v5759 = vpop.f32.mrb[0].mxu0
        %v5760 = vpop.f32.mrb[0].mxu0
        %5761 = vmatprep.mubr.bf16.mxu0 %v5477
        %5762 = vmatmul.mubr.bf16.gmra.mrb[0].mxu0 %v5420
        %v5763 = vpop.f32.mrb[0].mxu0
        %v5764 = vpop.f32.mrb[0].mxu0
        %v5765 = vpop.f32.mrb[0].mxu0
        %v5766 = vpop.f32.mrb[0].mxu0
        %5767 = vmatprep.mubr.bf16.mxu0 %v5480
        %5768 = vmatmul.mubr.bf16.gmra.mrb[0].mxu0 %v5422
        %v5769 = vpop.f32.mrb[0].mxu0
        %v5770 = vpop.f32.mrb[0].mxu0
        %v5771 = vpop.f32.mrb[0].mxu0
        %v5772 = vpop.f32.mrb[0].mxu0
        %5773 = vmatprep.mubr.bf16.mxu0 %v5483
        %5774 = vmatmul.mubr.bf16.gmra.mrb[0].mxu0 %v5424
        %v5775 = vpop.f32.mrb[0].mxu0
        %v5776 = vpop.f32.mrb[0].mxu0
        %v5777 = vpop.f32.mrb[0].mxu0
        %v5778 = vpop.f32.mrb[0].mxu0
        %5779 = vmatprep.mubr.bf16.mxu0 %v5486
        %5780 = vmatmul.mubr.bf16.gmra.mrb[0].mxu0 %v5426
        %v5781 = vpop.f32.mrb[0].mxu0
        %v5782 = vpop.f32.mrb[0].mxu0
        %v5783 = vpop.f32.mrb[0].mxu0
        %v5784 = vpop.f32.mrb[0].mxu0
        %5785 = vmatprep.mubr.bf16.mxu0 %v5489
        %5786 = vmatmul.mubr.bf16.gmra.mrb[0].mxu0 %v5428
        %v5787 = vpop.f32.mrb[0].mxu0
        %v5788 = vpop.f32.mrb[0].mxu0
        %v5789 = vpop.f32.mrb[0].mxu0
        %v5790 = vpop.f32.mrb[0].mxu0
        %5791 = vmatprep.mubr.bf16.mxu0 %v5492
        %5792 = vmatmul.mubr.bf16.gmra.mrb[0].mxu0 %v5430
        %v5793 = vpop.f32.mrb[0].mxu0
        %v5794 = vpop.f32.mrb[0].mxu0
        %v5795 = vpop.f32.mrb[0].mxu0
        %v5796 = vpop.f32.mrb[0].mxu0
        %5797 = vmatprep.mubr.bf16.mxu0 %v5495
        %5798 = vmatmul.mubr.bf16.gmra.mrb[0].mxu0 %v5432
        %v5799 = vpop.f32.mrb[0].mxu0
        %v5800 = vpop.f32.mrb[0].mxu0
        %v5801 = vpop.f32.mrb[0].mxu0
        %v5802 = vpop.f32.mrb[0].mxu0
        %5803 = vmatprep.mubr.bf16.mxu0 %v5498
        %5804 = vmatmul.mubr.bf16.gmra.mrb[0].mxu0 %v5434
        %v5805 = vpop.f32.mrb[0].mxu0
        %v5806 = vpop.f32.mrb[0].mxu0
        %v5807 = vpop.f32.mrb[0].mxu0
        %v5808 = vpop.f32.mrb[0].mxu0
        %5809 = vmatprep.mubr.bf16.mxu0 %v5501
        %5810 = vmatmul.mubr.bf16.gmra.mrb[0].mxu0 %v5436
        %v5811 = vpop.f32.mrb[0].mxu0
        %v5812 = vadd.f32 0.0, %v5811
        %v5813 = vpop.f32.mrb[0].mxu0
        %v5814 = vpop.f32.mrb[0].mxu0
        %v5815 = vadd.f32 0.0, %v5814
        %v5816 = vpop.f32.mrb[0].mxu0
        %5817 = vmatprep.mubr.bf16.mxu0 %v5504
        %5818 = vmatmul.mubr.bf16.gmra.mrb[0].mxu0 %v5438
        %v5819 = vpop.f32.mrb[0].mxu0
        %v5820 = vadd.f32 0.0, %v5819
        %v5821 = vpop.f32.mrb[0].mxu0
        %v5822 = vpop.f32.mrb[0].mxu0
        %v5823 = vadd.f32 0.0, %v5822
        %v5824 = vpop.f32.mrb[0].mxu0
        %5825 = vmatprep.mubr.bf16.mxu0 %v5507
        %5826 = vmatmul.mubr.bf16.gmra.mrb[0].mxu0 %v5440
        %v5827 = vpop.f32.mrb[0].mxu0
        %v5828 = vadd.f32 0.0, %v5827
        %v5829 = vpop.f32.mrb[0].mxu0
        %v5830 = vpop.f32.mrb[0].mxu0
        %v5831 = vadd.f32 0.0, %v5830
        %v5832 = vpop.f32.mrb[0].mxu0
        %5833 = vmatprep.mubr.bf16.mxu0 %v5510
        %5834 = vmatmul.mubr.bf16.gmra.mrb[0].mxu0 %v5442
        %v5835 = vpop.f32.mrb[0].mxu0
        %v5836 = vadd.f32 0.0, %v5835
        %v5837 = vpop.f32.mrb[0].mxu0
        %v5838 = vpop.f32.mrb[0].mxu0
        %v5839 = vadd.f32 0.0, %v5838
        %v5840 = vpop.f32.mrb[0].mxu0
        %5841 = vmatprep.mubr.bf16.mxu0 %v5513
        %5842 = vmatmul.mubr.bf16.gmra.mrb[0].mxu0 %v5444
        %v5843 = vpop.f32.mrb[0].mxu0
        %v5844 = vadd.f32 0.0, %v5843
        %v5845 = vpop.f32.mrb[0].mxu0
        %v5846 = vpop.f32.mrb[0].mxu0
        %v5847 = vadd.f32 0.0, %v5846
        %v5848 = vpop.f32.mrb[0].mxu0
        %5849 = vmatprep.mubr.bf16.mxu0 %v5516
        %5850 = vmatmul.mubr.bf16.gmra.mrb[0].mxu0 %v5446
        %v5851 = vpop.f32.mrb[0].mxu0
        %v5852 = vadd.f32 0.0, %v5851
        %v5853 = vpop.f32.mrb[0].mxu0
        %v5854 = vpop.f32.mrb[0].mxu0
        %v5855 = vadd.f32 0.0, %v5854
        %v5856 = vpop.f32.mrb[0].mxu0
        %5857 = vmatprep.mubr.bf16.mxu0 %v5519
        %5858 = vmatmul.mubr.bf16.gmra.mrb[0].mxu0 %v5448
        %v5859 = vpop.f32.mrb[0].mxu0
        %v5860 = vadd.f32 0.0, %v5859
        %v5861 = vpop.f32.mrb[0].mxu0
        %v5862 = vpop.f32.mrb[0].mxu0
        %v5863 = vadd.f32 0.0, %v5862
        %v5864 = vpop.f32.mrb[0].mxu0
        %5865 = vmatprep.mubr.bf16.mxu0 %v5522
        %5866 = vmatmul.mubr.bf16.gmra.mrb[0].mxu0 %v5450
        %v5867 = vpop.f32.mrb[0].mxu0
        %v5868 = vadd.f32 0.0, %v5867
        %v5869 = vpop.f32.mrb[0].mxu0
        %v5870 = vpop.f32.mrb[0].mxu0
        %v5871 = vadd.f32 0.0, %v5870
        %v5872 = vpop.f32.mrb[0].mxu0
        %5873 = vdwg.mxu0
        %5874 = vrot.lane.b32.xlu0 %v5559, 17
        %v5875 = vpop.permute.xlu0 %5874
        %5876 = vrot.lane.b32.xlu0 %v5563, 17
        %v5877 = vpop.permute.xlu0 %5876
        %5878 = vrot.lane.b32.xlu0 %v5569, 17
        %v5879 = vpop.permute.xlu0 %5878
        %5880 = vrot.lane.b32.xlu0 %v5573, 17
        %v5881 = vpop.permute.xlu0 %5880
        %5882 = vrot.lane.b32.xlu0 %v5561, 17
        %v5883 = vpop.permute.xlu0 %5882
        %5884 = vrot.lane.b32.xlu0 %v5565, 17
        %v5885 = vpop.permute.xlu0 %5884
        %5886 = vrot.lane.b32.xlu0 %v5571, 17
        %v5887 = vpop.permute.xlu0 %5886
        %5888 = vrot.lane.b32.xlu0 %v5575, 17
        %v5889 = vpop.permute.xlu0 %5888
        %v5890 = vsel %vm1045, %v5875, %v5883
        %v5891 = vsel %vm1045, %v5877, %v5885
        %v5892 = vsel %vm1045, %v5879, %v5887
        %v5893 = vsel %vm1045, %v5881, %v5889
        %v5894 = vsel %vm1072, %v5890, 0.0
        %v5895 = vsel %vm1072, %v5891, 0.0
        %v5896 = vsel %vm1072, %v5892, 0.0
        %v5897 = vsel %vm1072, %v5893, 0.0
        %v5898 = vadd.f32 %v5640, %v5894
        %v5899 = vadd.f32 %v5643, %v5895
        %v5900 = vadd.f32 %v5648, %v5896
        %v5901 = vadd.f32 %v5651, %v5897
        %5902 = vrot.lane.b32.xlu0 %v5579, 16
        %v5903 = vpop.permute.xlu0 %5902
        %5904 = vrot.lane.b32.xlu0 %v5583, 16
        %v5905 = vpop.permute.xlu0 %5904
        %5906 = vrot.lane.b32.xlu0 %v5589, 16
        %v5907 = vpop.permute.xlu0 %5906
        %5908 = vrot.lane.b32.xlu0 %v5593, 16
        %v5909 = vpop.permute.xlu0 %5908
        %5910 = vrot.lane.b32.xlu0 %v5581, 16
        %v5911 = vpop.permute.xlu0 %5910
        %5912 = vrot.lane.b32.xlu0 %v5585, 16
        %v5913 = vpop.permute.xlu0 %5912
        %5914 = vrot.lane.b32.xlu0 %v5591, 16
        %v5915 = vpop.permute.xlu0 %5914
        %5916 = vrot.lane.b32.xlu0 %v5595, 16
        %v5917 = vpop.permute.xlu0 %5916
        %v5918 = vsel %vm1122, %v5903, %v5911
        %v5919 = vsel %vm1122, %v5905, %v5913
        %v5920 = vsel %vm1122, %v5907, %v5915
        %v5921 = vsel %vm1122, %v5909, %v5917
        %v5922 = vsel %vm1149, %v5918, 0.0
        %v5923 = vsel %vm1149, %v5919, 0.0
        %v5924 = vsel %vm1149, %v5920, 0.0
        %v5925 = vsel %vm1149, %v5921, 0.0
        %v5926 = vadd.f32 %v5898, %v5922
        %v5927 = vadd.f32 %v5899, %v5923
        %v5928 = vadd.f32 %v5900, %v5924
        %v5929 = vadd.f32 %v5901, %v5925
        %5930 = vrot.lane.b32.xlu0 %v5599, 15
        %v5931 = vpop.permute.xlu0 %5930
        %5932 = vrot.lane.b32.xlu0 %v5603, 15
        %v5933 = vpop.permute.xlu0 %5932
        %5934 = vrot.lane.b32.xlu0 %v5609, 15
        %v5935 = vpop.permute.xlu0 %5934
        %5936 = vrot.lane.b32.xlu0 %v5613, 15
        %v5937 = vpop.permute.xlu0 %5936
        %5938 = vrot.lane.b32.xlu0 %v5601, 15
        %v5939 = vpop.permute.xlu0 %5938
        %5940 = vrot.lane.b32.xlu0 %v5605, 15
        %v5941 = vpop.permute.xlu0 %5940
        %5942 = vrot.lane.b32.xlu0 %v5611, 15
        %v5943 = vpop.permute.xlu0 %5942
        %5944 = vrot.lane.b32.xlu0 %v5615, 15
        %v5945 = vpop.permute.xlu0 %5944
        %v5946 = vsel %vm1199, %v5931, %v5939
        %v5947 = vsel %vm1199, %v5933, %v5941
        %v5948 = vsel %vm1199, %v5935, %v5943
        %v5949 = vsel %vm1199, %v5937, %v5945
        %v5950 = vsel %vm1226, %v5946, 0.0
        %v5951 = vsel %vm1226, %v5947, 0.0
        %v5952 = vsel %vm1226, %v5948, 0.0
        %v5953 = vsel %vm1226, %v5949, 0.0
        %v5954 = vadd.f32 %v5926, %v5950
        %v5955 = vadd.f32 %v5927, %v5951
        %v5956 = vadd.f32 %v5928, %v5952
        %v5957 = vadd.f32 %v5929, %v5953
        %5958 = vrot.lane.b32.xlu0 %v5619, 1
        %v5959 = vpop.permute.xlu0 %5958
        %5960 = vrot.lane.b32.xlu0 %v5623, 1
        %v5961 = vpop.permute.xlu0 %5960
        %5962 = vrot.lane.b32.xlu0 %v5629, 1
        %v5963 = vpop.permute.xlu0 %5962
        %5964 = vrot.lane.b32.xlu0 %v5633, 1
        %v5965 = vpop.permute.xlu0 %5964
        %5966 = vrot.lane.b32.xlu0 %v5621, 1
        %v5967 = vpop.permute.xlu0 %5966
        %5968 = vrot.lane.b32.xlu0 %v5625, 1
        %v5969 = vpop.permute.xlu0 %5968
        %5970 = vrot.lane.b32.xlu0 %v5631, 1
        %v5971 = vpop.permute.xlu0 %5970
        %5972 = vrot.lane.b32.xlu0 %v5635, 1
        %v5973 = vpop.permute.xlu0 %5972
        %v5974 = vsel %vm1276, %v5959, %v5967
        %v5975 = vsel %vm1276, %v5961, %v5969
        %v5976 = vsel %vm1276, %v5963, %v5971
        %v5977 = vsel %vm1276, %v5965, %v5973
        %v5978 = vsel %vm1303, %v5974, 0.0
        %v5979 = vsel %vm1303, %v5975, 0.0
        %v5980 = vsel %vm1303, %v5976, 0.0
        %v5981 = vsel %vm1303, %v5977, 0.0
        %v5982 = vadd.f32 %v5954, %v5978
        %v5983 = vadd.f32 %v5955, %v5979
        %v5984 = vadd.f32 %v5956, %v5980
        %v5985 = vadd.f32 %v5957, %v5981
        %5986 = vrot.lane.b32.xlu0 %v5656, 127
        %v5987 = vpop.permute.xlu0 %5986
        %5988 = vrot.lane.b32.xlu0 %v5659, 127
        %v5989 = vpop.permute.xlu0 %5988
        %5990 = vrot.lane.b32.xlu0 %v5664, 127
        %v5991 = vpop.permute.xlu0 %5990
        %5992 = vrot.lane.b32.xlu0 %v5667, 127
        %v5993 = vpop.permute.xlu0 %5992
        %5994 = vrot.lane.b32.xlu0 %v5812, 127
        %v5995 = vpop.permute.xlu0 %5994
        %5996 = vrot.lane.b32.xlu0 %v5815, 127
        %v5997 = vpop.permute.xlu0 %5996
        %5998 = vrot.lane.b32.xlu0 %v5820, 127
        %v5999 = vpop.permute.xlu0 %5998
        %6000 = vrot.lane.b32.xlu0 %v5823, 127
        %v6001 = vpop.permute.xlu0 %6000
        %v6002 = vsel %vm1353, %v5987, %v5995
        %v6003 = vsel %vm1353, %v5989, %v5997
        %v6004 = vsel %vm1353, %v5991, %v5999
        %v6005 = vsel %vm1353, %v5993, %v6001
        %v6006 = vsel %vm1380, %v6002, 0.0
        %v6007 = vsel %vm1380, %v6003, 0.0
        %v6008 = vsel %vm1380, %v6004, 0.0
        %v6009 = vsel %vm1380, %v6005, 0.0
        %v6010 = vadd.f32 %v5982, %v6006
        %v6011 = vadd.f32 %v5983, %v6007
        %v6012 = vadd.f32 %v5984, %v6008
        %v6013 = vadd.f32 %v5985, %v6009
        %6014 = vrot.lane.b32.xlu0 %v5672, 113
        %v6015 = vpop.permute.xlu0 %6014
        %6016 = vrot.lane.b32.xlu0 %v5675, 113
        %v6017 = vpop.permute.xlu0 %6016
        %6018 = vrot.lane.b32.xlu0 %v5680, 113
        %v6019 = vpop.permute.xlu0 %6018
        %6020 = vrot.lane.b32.xlu0 %v5683, 113
        %v6021 = vpop.permute.xlu0 %6020
        %6022 = vrot.lane.b32.xlu0 %v5828, 113
        %v6023 = vpop.permute.xlu0 %6022
        %6024 = vrot.lane.b32.xlu0 %v5831, 113
        %v6025 = vpop.permute.xlu0 %6024
        %6026 = vrot.lane.b32.xlu0 %v5836, 113
        %v6027 = vpop.permute.xlu0 %6026
        %6028 = vrot.lane.b32.xlu0 %v5839, 113
        %v6029 = vpop.permute.xlu0 %6028
        %v6030 = vsel %vm1430, %v6015, %v6023
        %v6031 = vsel %vm1430, %v6017, %v6025
        %v6032 = vsel %vm1430, %v6019, %v6027
        %v6033 = vsel %vm1430, %v6021, %v6029
        %v6034 = vsel %vm1457, %v6030, 0.0
        %v6035 = vsel %vm1457, %v6031, 0.0
        %v6036 = vsel %vm1457, %v6032, 0.0
        %v6037 = vsel %vm1457, %v6033, 0.0
        %v6038 = vadd.f32 %v6010, %v6034
        %v6039 = vadd.f32 %v6011, %v6035
        %v6040 = vadd.f32 %v6012, %v6036
        %v6041 = vadd.f32 %v6013, %v6037
        %6042 = vrot.lane.b32.xlu0 %v5688, 112
        %v6043 = vpop.permute.xlu0 %6042
        %6044 = vrot.lane.b32.xlu0 %v5691, 112
        %v6045 = vpop.permute.xlu0 %6044
        %6046 = vrot.lane.b32.xlu0 %v5696, 112
        %v6047 = vpop.permute.xlu0 %6046
        %6048 = vrot.lane.b32.xlu0 %v5699, 112
        %v6049 = vpop.permute.xlu0 %6048
        %6050 = vrot.lane.b32.xlu0 %v5844, 112
        %v6051 = vpop.permute.xlu0 %6050
        %6052 = vrot.lane.b32.xlu0 %v5847, 112
        %v6053 = vpop.permute.xlu0 %6052
        %6054 = vrot.lane.b32.xlu0 %v5852, 112
        %v6055 = vpop.permute.xlu0 %6054
        %6056 = vrot.lane.b32.xlu0 %v5855, 112
        %v6057 = vpop.permute.xlu0 %6056
        %v6058 = vsel %vm1507, %v6043, %v6051
        %v6059 = vsel %vm1507, %v6045, %v6053
        %v6060 = vsel %vm1507, %v6047, %v6055
        %v6061 = vsel %vm1507, %v6049, %v6057
        %v6062 = vsel %vm1534, %v6058, 0.0
        %v6063 = vsel %vm1534, %v6059, 0.0
        %v6064 = vsel %vm1534, %v6060, 0.0
        %v6065 = vsel %vm1534, %v6061, 0.0
        %v6066 = vadd.f32 %v6038, %v6062
        %v6067 = vadd.f32 %v6039, %v6063
        %v6068 = vadd.f32 %v6040, %v6064
        %v6069 = vadd.f32 %v6041, %v6065
        %6070 = vrot.lane.b32.xlu0 %v5704, 111
        %v6071 = vpop.permute.xlu0 %6070
        %6072 = vrot.lane.b32.xlu0 %v5707, 111
        %v6073 = vpop.permute.xlu0 %6072
        %6074 = vrot.lane.b32.xlu0 %v5712, 111
        %v6075 = vpop.permute.xlu0 %6074
        %6076 = vrot.lane.b32.xlu0 %v5715, 111
        %v6077 = vpop.permute.xlu0 %6076
        %6078 = vrot.lane.b32.xlu0 %v5860, 111
        %v6079 = vpop.permute.xlu0 %6078
        %6080 = vrot.lane.b32.xlu0 %v5863, 111
        %v6081 = vpop.permute.xlu0 %6080
        %6082 = vrot.lane.b32.xlu0 %v5868, 111
        %v6083 = vpop.permute.xlu0 %6082
        %6084 = vrot.lane.b32.xlu0 %v5871, 111
        %v6085 = vpop.permute.xlu0 %6084
        %v6086 = vsel %vm1584, %v6071, %v6079
        %v6087 = vsel %vm1584, %v6073, %v6081
        %v6088 = vsel %vm1584, %v6075, %v6083
        %v6089 = vsel %vm1584, %v6077, %v6085
        %v6090 = vsel %vm1611, %v6086, 0.0
        %v6091 = vsel %vm1611, %v6087, 0.0
        %v6092 = vsel %vm1611, %v6088, 0.0
        %v6093 = vsel %vm1611, %v6089, 0.0
        %v6094 = vadd.f32 %v6066, %v6090
        %v6095 = vadd.f32 %v6067, %v6091
        %v6096 = vadd.f32 %v6068, %v6092
        %v6097 = vadd.f32 %v6069, %v6093
        %s6098 = scalar_lea.vmem %s7, 128
        %v6099 = vld [vmem:[%s6098] sm:$0xff]
        %v6100 = vld [vmem:[%s6098 + $0x8] sm:$0xff]
        %v6101 = vld [vmem:[%s6098 + $0x10] sm:$0xff]
        %v6102 = vld [vmem:[%s6098 + $0x18] sm:$0xff]
        %6104 = vset.pattern.permute.xlu0 0
        %6105 = vperm.xlu0 %6104, %v6099
        %v6106 = vpop.permute.xlu0 %6105
        %6109 = vset.pattern.permute.xlu0 0
        %6110 = vperm.xlu0 %6109, %v6100
        %v6111 = vpop.permute.xlu0 %6110
        %6114 = vset.pattern.permute.xlu0 0
        %6115 = vperm.xlu0 %6114, %v6101
        %v6116 = vpop.permute.xlu0 %6115
        %6119 = vset.pattern.permute.xlu0 0
        %6120 = vperm.xlu0 %6119, %v6102
        %v6121 = vpop.permute.xlu0 %6120
        %v6123 = vadd.f32 %v6094, %v6106
        %v6124 = vadd.f32 %v6095, %v6111
        %v6125 = vadd.f32 %v6096, %v6116
        %v6126 = vadd.f32 %v6097, %v6121
        %6127 = vst [vmem:[%s318] sm:$0xff] %v6123
        %6128 = vst [vmem:[%s318 + $0x8] sm:$0xff] %v6124
        %6129 = vst [vmem:[%s318 + $0x10] sm:$0xff] %v6125
        %6130 = vst [vmem:[%s318 + $0x18] sm:$0xff] %v6126
        %s6131 = sand.u32 %s216, 1
        %s6132 = sand.u32 %s216, 1
        %s6133 = smul.addr %s6132, 32
        %s6134 = scalar_lea.vmem [#allocation3], %s6133
        // Predicated region
        $region53: #{dense_block.1} parent=51 // pred_check
          %p6135 = pneg %p226
        $region54: #{dense_block.1} parent=51 // pred_check_branch
          %6137 = sbr.rel (%p6135) target = $region56
        $region55: #{dense_block.1} parent=51 // pred_region
          %s6138 = smul.addr %s23, 8
          %s6139 = sadd.s32 %s24, %s6138
          %s6140 = smul.addr %s6139, 8
          %s6141 = scalar_lea.vmem %s8, %s6140
          // Predicated region
          $region57: #{dense_block.1} parent=55 // pred_check
            _
          $region58: #{dense_block.1} parent=55 // pred_check_branch
            %6143 = sbr.rel (0) target = $region60
          $region59: #{dense_block.1} parent=55 // pred_region
            // Predicated region
            $region61: #{dense_block.1} parent=59 // pred_check
              _
            $region62: #{dense_block.1} parent=59 // pred_check_branch
              %6145 = sbr.rel (0) target = $region64
            $region63: #{dense_block.1} parent=59 // pred_region
              // Predicated region
              $region76: #{dense_block.1} parent=63 // pred_check
                _
              $region77: #{dense_block.1} parent=63 // pred_check_branch
                %6166 = sbr.rel (0) target = $region79
              $region78: #{dense_block.1} parent=63 // pred_region
                loop: start=0, step=1, limit=1
                $region80: #{dense_block.1} parent=78 // loop_pre_header
                  _
                $region81: #{dense_block.1} parent=78 // loop_header
                  %s6168 = sphi 0, %s6172
                  %p6169 = scmp.ge.s32.totalorder %s6168, 1
                  %s6173 = sphi %s6134, %s6134
                  %s6174 = sphi %s6141, %s6141
                $region82: #{dense_block.1} parent=78 // loop_header_branch
                  %6171 = sbr.rel (%p6169) target = $region86
                $region83: #{dense_block.1} parent=78 // loop_body
                  %v6175 = vld [vmem:[%s6173] sm:$0xff]
                  %6176 = vst [vmem:[%s6174] sm:$0xff] %v6175
                  %v6177 = vld [vmem:[%s6173 + $0x8] sm:$0xff]
                  %6178 = vst [vmem:[%s6174 + $0x10] sm:$0xff] %v6177
                  %v6179 = vld [vmem:[%s6173 + $0x10] sm:$0xff]
                  %6180 = vst [vmem:[%s6174 + $0x20] sm:$0xff] %v6179
                  %v6181 = vld [vmem:[%s6173 + $0x18] sm:$0xff]
                  %6182 = vst [vmem:[%s6174 + $0x30] sm:$0xff] %v6181
                $region84: #{dense_block.1} parent=78 // loop_footer
                  %s6172 = sadd.s32 1, %s6168
                $region85: #{dense_block.1} parent=78 // loop_footer_branch
                  %6167 = sbr.rel target = $region81
                $region86: #{dense_block.1} parent=78 // loop_exit
                  _
              $region79: #{dense_block.1} parent=63 // pred_fallthru
                _
              // Predicated region
              $region87: #{dense_block.1} parent=63 // pred_check
                _
              $region88: #{dense_block.1} parent=63 // pred_check_branch
                %6184 = sbr.rel target = $region90
              $region89: #{dense_block.1} parent=63 // pred_region
                _
              $region90: #{dense_block.1} parent=63 // pred_fallthru
                _
            $region64: #{dense_block.1} parent=59 // pred_fallthru
              _
            // Predicated region
            $region65: #{dense_block.1} parent=59 // pred_check
              _
            $region66: #{dense_block.1} parent=59 // pred_check_branch
              %6147 = sbr.rel target = $region68
            $region67: #{dense_block.1} parent=59 // pred_region
              loop: start=0, step=1, limit=1
              $region69: #{dense_block.1} parent=67 // loop_pre_header
                _
              $region70: #{dense_block.1} parent=67 // loop_header
                %s6150 = sphi 0, %s6154
                %p6151 = scmp.ge.s32.totalorder %s6150, 1
                %s6155 = sphi %s6134, %s6134
                %s6156 = sphi %s6141, %s6141
              $region71: #{dense_block.1} parent=67 // loop_header_branch
                %6153 = sbr.rel (%p6151) target = $region75
              $region72: #{dense_block.1} parent=67 // loop_body
                %v6157 = vld [vmem:[%s6155] sm:$0xff]
                %6158 = vst [vmem:[%s6156] sm:$0xff] %v6157
                %v6159 = vld [vmem:[%s6155 + $0x8] sm:$0xff]
                %6160 = vst [vmem:[%s6156 + $0x10] sm:$0xff] %v6159
                %v6161 = vld [vmem:[%s6155 + $0x10] sm:$0xff]
                %6162 = vst [vmem:[%s6156 + $0x20] sm:$0xff] %v6161
                %v6163 = vld [vmem:[%s6155 + $0x18] sm:$0xff]
                %6164 = vst [vmem:[%s6156 + $0x30] sm:$0xff] %v6163
              $region73: #{dense_block.1} parent=67 // loop_footer
                %s6154 = sadd.s32 1, %s6150
              $region74: #{dense_block.1} parent=67 // loop_footer_branch
                %6149 = sbr.rel target = $region70
              $region75: #{dense_block.1} parent=67 // loop_exit
                _
            $region68: #{dense_block.1} parent=59 // pred_fallthru
              _
          $region60: #{dense_block.1} parent=55 // pred_fallthru
            _
          %6185 = vnop
        $region56: #{dense_block.1} parent=51 // pred_fallthru
          _
      $region52: #{dense_block.1} parent=5 // pred_fallthru
        _
      %p6186 = scmp.le.s32.totalorder 2, %s14
      // Predicated region
      $region91: #{dense_block.1} parent=5 // pred_check
        %p6187 = pneg %p6186
      $region92: #{dense_block.1} parent=5 // pred_check_branch
        %6189 = sbr.rel (%p6187) target = $region94
      $region93: #{dense_block.1} parent=5 // pred_region
        %s6190 = ssub.s32 %s14, 2
        // Predicated region
        $region95: #{dense_block.1} parent=93 // pred_check
          %p6191 = pneg %p232
        $region96: #{dense_block.1} parent=93 // pred_check_branch
          %6193 = sbr.rel (%p6191) target = $region98
        $region97: #{dense_block.1} parent=93 // pred_region
          %s6194 = sand.u32 %s217, 1
          %s6195 = sand.u32 %s217, 1
          %s6196 = smul.addr %s6195, 32
          %s6197 = scalar_lea.vmem [#allocation3], %s6196
        $region98: #{dense_block.1} parent=93 // pred_fallthru
          _
      $region94: #{dense_block.1} parent=5 // pred_fallthru
        _
    $region6: #{dense_block.1} parent=1 // loop_footer
      %s18 = sadd.s32 1, %s14
    $region7: #{dense_block.1} parent=1 // loop_footer_branch
      %13 = sbr.rel target = $region3
    $region8: #{dense_block.1} parent=1 // loop_exit
      _

</llo_original>
